<compile_context>
chip_gen: v7x
topology: tpu7x:2x2x1
jax: 0.10.0
libtpu: 0.0.40
codegen_flags: <defaults>
</compile_context>

<pallas_src>
import numpy as np
import jax
import jax.numpy as jnp
from jax import lax
from jax.experimental import pallas as pl
from jax.experimental.pallas import tpu as pltpu

# ----------------------- model hyper-parameters -----------------------------
C_IN, H_IN, W_IN = 1, 2, 16          # input_shape (C, H, W)
NUM_CLASSES = 10

PAD_L, PAD_R = 2, 2                  # nn.ZeroPad2d((2, 2, 0, 0))
W_PAD = W_IN + PAD_L + PAD_R         # 20
KH1, KW1, C1_OUT = 2, 3, 64          # conv1
KH2, KW2, C2_OUT = 1, 3, 80          # conv2
H1 = H_IN - KH1 + 1                  # 1
W1 = W_PAD - KW1 + 1                 # 18
H2 = H1 - KH2 + 1                    # 1
W2 = W1 - KW2 + 1                    # 16
FLAT = C2_OUT * H2 * W2              # 1280  (== torch.flatten size)
FC1_OUT = 128

NCOL_IN = C_IN * H_IN * W_IN         # 32    flattened (unpadded) input taps
NCOL_Y1 = W1 * C1_OUT                # 1152  conv1 activations per sample
NCOL_Y2 = C2_OUT * W2                # 1280  conv2 activations, flatten order
NC_PAD = 128                         # fc2 output padded to a full lane group

assert H1 == 1 and H2 == 1, "kernel is specialized to H=2 inputs (H1=H2=1)"
assert NCOL_Y1 % 128 == 0 and NCOL_Y2 % 128 == 0

# bias-slab lane offsets (all multiples of 128 -> clean static lane slices)
_B1_OFF = 0
_B2_OFF = _B1_OFF + NCOL_Y1          # 1152
_FB1_OFF = _B2_OFF + NCOL_Y2         # 2432
_FB2_OFF = _FB1_OFF + FC1_OUT        # 2560
_BIAS_LEN = _FB2_OFF + NC_PAD        # 2688


# ------------------------------ Pallas kernel -------------------------------
def cnn_kernel(x_ref, w1_ref, w2_ref, fcw_ref, bias_ref, out_ref):
    # x_ref:    (TB, 32)     f32   flattened unpadded input, row = sample
    # w1_ref:   (32, 1152)   bf16  conv1 as banded matmul (ZeroPad2d folded in)
    # w2_ref:   (1152, 1280) bf16  conv2 as banded matmul, cols in flatten order
    # fcw_ref:  (1408, 128)  bf16  rows 0:1280 = fc1.T, rows 1280:1408 = fc2.T (padded)
    # bias_ref: (1, 2688)    f32   [b1 | b2 | fb1 | fb2] lane-aligned slab
    # out_ref:  (TB, 128)    f32   fc2 output (cols >= NUM_CLASSES are padding)

    xb = x_ref[...].astype(jnp.bfloat16)

    # ---- conv1 + bias + ReLU (dropout1: identity, eval-mode semantics)
    y1 = jnp.dot(xb, w1_ref[...], preferred_element_type=jnp.float32)
    y1 = jnp.maximum(y1 + bias_ref[:, _B1_OFF:_B2_OFF], 0.0)         # (TB, 1152)

    # ---- conv2 + bias + ReLU (dropout2: identity, eval-mode semantics)
    # TODO(synk): training-mode stochastic dropout masking not implemented.
    y2 = jnp.dot(y1.astype(jnp.bfloat16), w2_ref[...],
                 preferred_element_type=jnp.float32)
    y2 = jnp.maximum(y2 + bias_ref[:, _B2_OFF:_FB1_OFF], 0.0)        # (TB, 1280)

    # ---- flatten is free: y2 columns already follow torch.flatten(x, 1).
    # ---- fc1 + ReLU: one K=1280 MXU contraction.
    h = jnp.dot(y2.astype(jnp.bfloat16), fcw_ref[0:FLAT, :],
                preferred_element_type=jnp.float32)
    h = jnp.maximum(h + bias_ref[:, _FB1_OFF:_FB2_OFF], 0.0)         # (TB, 128)

    # ---- fc2: lane-dense (TB, 128) store; wrapper slices back to NUM_CLASSES.
    out = jnp.dot(h.astype(jnp.bfloat16), fcw_ref[FLAT:FLAT + FC1_OUT, :],
                  preferred_element_type=jnp.float32)
    out_ref[...] = out + bias_ref[:, _FB2_OFF:_BIAS_LEN]


# --------------------- one-time weight re-packing (hoisted) ------------------
def prepare_params(params):
    """Repack PyTorch-layout weights into the kernel layout (bf16). Run once."""
    w1, b1, w2, b2, fw1, fb1, fw2, fb2 = (
        np.asarray(jax.device_get(p), np.float32) for p in params)

    # conv1 -> (32, 1152) banded matmul; column index = p*64 + c1.
    w1big = np.zeros((NCOL_IN, NCOL_Y1), np.float32)
    for p in range(W1):                      # conv1 output position
        for kh in range(KH1):
            for kw in range(KW1):
                q = p + kw - PAD_L           # column of the *unpadded* input
                if 0 <= q < W_IN:
                    w1big[kh * W_IN + q,
                          p * C1_OUT:(p + 1) * C1_OUT] += w1[:, 0, kh, kw]

    # conv2 -> (1152, 1280) banded matmul; column index = c2*W2 + w, i.e. the
    # torch.flatten(x, 1) order, so fc1 needs no permutation at all.
    w2big = np.zeros((NCOL_Y1, NCOL_Y2), np.float32)
    for w in range(W2):                      # conv2 output position
        for kw in range(KW2):
            p = w + kw                       # conv1 position feeding this tap
            w2big[p * C1_OUT:(p + 1) * C1_OUT, w::W2] += w2[:, :, 0, kw].T

    b1big = np.tile(b1, W1)                  # (1152,)  index p*64 + c1
    b2big = np.repeat(b2, W2)                # (1280,)  index c2*16 + w

    fw1k = fw1.T                             # (1280, 128)
    fw2p = np.zeros((FC1_OUT, NC_PAD), np.float32)
    fw2p[:, :NUM_CLASSES] = fw2.T            # (128, 128), lane-dense fc2
    fcw = np.concatenate([fw1k, fw2p], axis=0)            # (1408, 128)

    fb2p = np.zeros((NC_PAD,), np.float32)
    fb2p[:NUM_CLASSES] = fb2
    biases = np.concatenate([b1big, b2big, fb1, fb2p])[None, :]    # (1, 2688)

    return (jnp.asarray(w1big, jnp.bfloat16),
            jnp.asarray(w2big, jnp.bfloat16),
            jnp.asarray(fcw, jnp.bfloat16),
            jnp.asarray(biases, jnp.float32))


# ------------------------------ wrapper --------------------------------------
@jax.jit
def cnn_forward(x, packed):
    w1big, w2big, fcw, biases = packed
    B = x.shape[0]
    xf = x.reshape(B, NCOL_IN).astype(jnp.float32)        # (B, 32)

    tile_b = 128 if B >= 128 else ((B + 7) // 8) * 8
    n_tiles = pl.cdiv(B, tile_b)
    b_pad = n_tiles * tile_b
    if b_pad != B:
        xf = jnp.pad(xf, ((0, b_pad - B), (0, 0)))

    const = lambda shape: pl.BlockSpec(shape, lambda i: (0, 0))  # weights resident
    out = pl.pallas_call(
        cnn_kernel,
        out_shape=jax.ShapeDtypeStruct((b_pad, NC_PAD), jnp.float32),
        grid=(n_tiles,),
        in_specs=[
            pl.BlockSpec((tile_b, NCOL_IN), lambda i: (i, 0)),
            const((NCOL_IN, NCOL_Y1)),
            const((NCOL_Y1, NCOL_Y2)),
            const((FLAT + FC1_OUT, NC_PAD)),
            const((1, _BIAS_LEN)),
        ],
        out_specs=pl.BlockSpec((tile_b, NC_PAD), lambda i: (i, 0)),
        compiler_params=pltpu.CompilerParams(
            dimension_semantics=("parallel",)),   # v7x: 2 TCs split batch tiles
    )(xf, w1big, w2big, fcw, biases)
    return out[:B, :NUM_CLASSES]


# --------------------------- reference (plain JAX) ---------------------------
def reference_forward(x, params):
    w1, b1, w2, b2, fw1, fb1, fw2, fb2 = params
    dn = ("NCHW", "OIHW", "NCHW")
    hp = lax.Precision.HIGHEST
    xp = jnp.pad(x, ((0, 0), (0, 0), (0, 0), (PAD_L, PAD_R)))
    y = lax.conv_general_dilated(xp, w1, (1, 1), "VALID",
                                 dimension_numbers=dn, precision=hp)
    y = jax.nn.relu(y + b1[None, :, None, None])
    y = lax.conv_general_dilated(y, w2, (1, 1), "VALID",
                                 dimension_numbers=dn, precision=hp)
    y = jax.nn.relu(y + b2[None, :, None, None])
    y = y.reshape(y.shape[0], -1)
    y = jax.nn.relu(jnp.dot(y, fw1.T, precision=hp) + fb1)
    return jnp.dot(y, fw2.T, precision=hp) + fb2


# ------------------------- deterministic parameters --------------------------
def init_params(key):
    ks = jax.random.split(key, 8)

    def u(k, shape, scale):
        return jax.random.uniform(k, shape, jnp.float32, -1.0, 1.0) * scale

    w1 = u(ks[0], (C1_OUT, C_IN, KH1, KW1), 0.3)
    b1 = u(ks[1], (C1_OUT,), 0.1)
    w2 = u(ks[2], (C2_OUT, C1_OUT, KH2, KW2), 0.1)
    b2 = u(ks[3], (C2_OUT,), 0.1)
    fw1 = u(ks[4], (FC1_OUT, FLAT), 0.03)
    fb1 = u(ks[5], (FC1_OUT,), 0.1)
    fw2 = u(ks[6], (NUM_CLASSES, FC1_OUT), 0.1)
    fb2 = u(ks[7], (NUM_CLASSES,), 0.1)
    return (w1, b1, w2, b2, fw1, fb1, fw2, fb2)


if __name__ == "__main__":
    key = jax.random.PRNGKey(0)
    kx, kp = jax.random.split(key)
    params = init_params(kp)
    packed = prepare_params(params)   # one-time repacking, outside the jitted path

    # Batched path (2 parallel grid tiles of 128) and a tiny-batch path.
    for batch in (256, 2):
        x = jax.random.normal(jax.random.fold_in(kx, batch),
                              (batch, C_IN, H_IN, W_IN), jnp.float32)
        out = cnn_forward(x, packed)
        jax.block_until_ready(out)

        ref = reference_forward(x, params)
        assert out.shape == (batch, NUM_CLASSES), out.shape
        max_err = float(jnp.max(jnp.abs(out - ref)))
        # bf16 weights/activations (f32 accumulate) -> loosened tolerance.
        assert jnp.allclose(out, ref, atol=2e-2, rtol=2e-2), (
            f"batch={batch} max abs err={max_err}")
    print("KERNEL_OK")
</pallas_src>

<mosaic_0001>
module attributes {stable_mosaic.version = 11 : i64} {
  func.func @cnn_kernel(%arg0: i32, %arg1: memref<128x32xf32, #tpu.memory_space<vmem>>, %arg2: memref<32x1152xbf16, #tpu.memory_space<vmem>>, %arg3: memref<1152x1280xbf16, #tpu.memory_space<vmem>>, %arg4: memref<1408x128xbf16, #tpu.memory_space<vmem>>, %arg5: memref<1x2688xf32, #tpu.memory_space<vmem>>, %arg6: memref<128x128xf32, #tpu.memory_space<vmem>>) attributes {dimension_semantics = [#tpu.dimension_semantics<parallel>], iteration_bounds = array<i64: 2>, scalar_prefetch = 0 : i64, scratch_operands = 0 : i64, tpu.core_type = #tpu.core_type<tc>, window_params = [{transform_indices = @transform_0, window_bounds = array<i64: 128, 32>}, {pipeline_mode = #tpu.pipeline_mode<synchronous>, transform_indices = @transform_1, window_bounds = array<i64: 32, 1152>}, {pipeline_mode = #tpu.pipeline_mode<synchronous>, transform_indices = @transform_2, window_bounds = array<i64: 1152, 1280>}, {pipeline_mode = #tpu.pipeline_mode<synchronous>, transform_indices = @transform_3, window_bounds = array<i64: 1408, 128>}, {pipeline_mode = #tpu.pipeline_mode<synchronous>, transform_indices = @transform_4, window_bounds = array<i64: 1, 2688>}, {transform_indices = @transform_5, window_bounds = array<i64: 128, 128>}]} {
    %c0 = arith.constant 0 : index
    %c0_0 = arith.constant 0 : index
    %0 = vector.load %arg1[%c0, %c0_0] : memref<128x32xf32, #tpu.memory_space<vmem>>, vector<128x32xf32>
    %1 = arith.truncf %0 : vector<128x32xf32> to vector<128x32xbf16>
    %c0_1 = arith.constant 0 : index
    %c0_2 = arith.constant 0 : index
    %2 = vector.load %arg2[%c0_1, %c0_2] : memref<32x1152xbf16, #tpu.memory_space<vmem>>, vector<32x1152xbf16>
    %cst = arith.constant dense<0.000000e+00> : vector<128x1152xf32>
    %3 = tpu.matmul %1, %2, %cst {dimension_numbers = #tpu.dot_dimension_numbers<[1], [0], [0], [1], [0, 0, 1, 1], [], []>} : vector<128x32xbf16>, vector<32x1152xbf16>, vector<128x1152xf32> -> vector<128x1152xf32>
    %c0_3 = arith.constant 0 : index
    %c0_4 = arith.constant 0 : index
    %4 = vector.load %arg5[%c0_3, %c0_4] : memref<1x2688xf32, #tpu.memory_space<vmem>>, vector<1x1152xf32>
    %5 = vector.broadcast %4 : vector<1x1152xf32> to vector<128x1152xf32>
    %6 = arith.addf %3, %5 : vector<128x1152xf32>
    %cst_5 = arith.constant 0.000000e+00 : f32
    %7 = vector.broadcast %cst_5 : f32 to vector<128x1152xf32>
    %8 = arith.maximumf %6, %7 : vector<128x1152xf32>
    %9 = arith.truncf %8 : vector<128x1152xf32> to vector<128x1152xbf16>
    %c0_6 = arith.constant 0 : index
    %c0_7 = arith.constant 0 : index
    %10 = vector.load %arg3[%c0_6, %c0_7] : memref<1152x1280xbf16, #tpu.memory_space<vmem>>, vector<1152x1280xbf16>
    %cst_8 = arith.constant dense<0.000000e+00> : vector<128x1280xf32>
    %11 = tpu.matmul %9, %10, %cst_8 {dimension_numbers = #tpu.dot_dimension_numbers<[1], [0], [0], [1], [0, 0, 1, 1], [], []>} : vector<128x1152xbf16>, vector<1152x1280xbf16>, vector<128x1280xf32> -> vector<128x1280xf32>
    %c0_9 = arith.constant 0 : index
    %c1152 = arith.constant 1152 : index
    %12 = vector.load %arg5[%c0_9, %c1152] : memref<1x2688xf32, #tpu.memory_space<vmem>>, vector<1x1280xf32>
    %13 = vector.broadcast %12 : vector<1x1280xf32> to vector<128x1280xf32>
    %14 = arith.addf %11, %13 : vector<128x1280xf32>
    %cst_10 = arith.constant 0.000000e+00 : f32
    %15 = vector.broadcast %cst_10 : f32 to vector<128x1280xf32>
    %16 = arith.maximumf %14, %15 : vector<128x1280xf32>
    %17 = arith.truncf %16 : vector<128x1280xf32> to vector<128x1280xbf16>
    %c0_11 = arith.constant 0 : index
    %c0_12 = arith.constant 0 : index
    %18 = vector.load %arg4[%c0_11, %c0_12] : memref<1408x128xbf16, #tpu.memory_space<vmem>>, vector<1280x128xbf16>
    %cst_13 = arith.constant dense<0.000000e+00> : vector<128x128xf32>
    %19 = tpu.matmul %17, %18, %cst_13 {dimension_numbers = #tpu.dot_dimension_numbers<[1], [0], [0], [1], [0, 0, 1, 1], [], []>} : vector<128x1280xbf16>, vector<1280x128xbf16>, vector<128x128xf32> -> vector<128x128xf32>
    %c0_14 = arith.constant 0 : index
    %c2432 = arith.constant 2432 : index
    %20 = vector.load %arg5[%c0_14, %c2432] : memref<1x2688xf32, #tpu.memory_space<vmem>>, vector<1x128xf32>
    %21 = vector.broadcast %20 : vector<1x128xf32> to vector<128x128xf32>
    %22 = arith.addf %19, %21 : vector<128x128xf32>
    %cst_15 = arith.constant 0.000000e+00 : f32
    %23 = vector.broadcast %cst_15 : f32 to vector<128x128xf32>
    %24 = arith.maximumf %22, %23 : vector<128x128xf32>
    %25 = arith.truncf %24 : vector<128x128xf32> to vector<128x128xbf16>
    %c1280 = arith.constant 1280 : index
    %c0_16 = arith.constant 0 : index
    %26 = vector.load %arg4[%c1280, %c0_16] : memref<1408x128xbf16, #tpu.memory_space<vmem>>, vector<128x128xbf16>
    %cst_17 = arith.constant dense<0.000000e+00> : vector<128x128xf32>
    %27 = tpu.matmul %25, %26, %cst_17 {dimension_numbers = #tpu.dot_dimension_numbers<[1], [0], [0], [1], [0, 0, 1, 1], [], []>} : vector<128x128xbf16>, vector<128x128xbf16>, vector<128x128xf32> -> vector<128x128xf32>
    %c0_18 = arith.constant 0 : index
    %c2560 = arith.constant 2560 : index
    %28 = vector.load %arg5[%c0_18, %c2560] : memref<1x2688xf32, #tpu.memory_space<vmem>>, vector<1x128xf32>
    %29 = vector.broadcast %28 : vector<1x128xf32> to vector<128x128xf32>
    %30 = arith.addf %27, %29 : vector<128x128xf32>
    %c0_19 = arith.constant 0 : index
    %c0_20 = arith.constant 0 : index
    %31 = vector.load %arg6[%c0_19, %c0_20] : memref<128x128xf32, #tpu.memory_space<vmem>>, vector<128x128xf32>
    tpu.vector_store %arg6[%c0_19, %c0_20], %30 {strides = array<i32>} : memref<128x128xf32, #tpu.memory_space<vmem>>, vector<128x128xf32>,
    return
  }
  func.func @transform_0(%arg0: i32) -> (i32, i32) {
    %c0_i32 = arith.constant 0 : i32
    %c0_i32_0 = arith.constant 0 : i32
    return %arg0, %c0_i32 : i32, i32
  }
  func.func @transform_1(%arg0: i32) -> (i32, i32) {
    %c0_i32 = arith.constant 0 : i32
    %c0_i32_0 = arith.constant 0 : i32
    %c0_i32_1 = arith.constant 0 : i32
    return %c0_i32, %c0_i32_0 : i32, i32
  }
  func.func @transform_2(%arg0: i32) -> (i32, i32) {
    %c0_i32 = arith.constant 0 : i32
    %c0_i32_0 = arith.constant 0 : i32
    %c0_i32_1 = arith.constant 0 : i32
    return %c0_i32, %c0_i32_0 : i32, i32
  }
  func.func @transform_3(%arg0: i32) -> (i32, i32) {
    %c0_i32 = arith.constant 0 : i32
    %c0_i32_0 = arith.constant 0 : i32
    %c0_i32_1 = arith.constant 0 : i32
    return %c0_i32, %c0_i32_0 : i32, i32
  }
  func.func @transform_4(%arg0: i32) -> (i32, i32) {
    %c0_i32 = arith.constant 0 : i32
    %c0_i32_0 = arith.constant 0 : i32
    %c0_i32_1 = arith.constant 0 : i32
    return %c0_i32, %c0_i32_0 : i32, i32
  }
  func.func @transform_5(%arg0: i32) -> (i32, i32) {
    %c0_i32 = arith.constant 0 : i32
    %c0_i32_0 = arith.constant 0 : i32
    return %arg0, %c0_i32 : i32, i32
  }
}

</mosaic_0001>

<llo_original>
// kernel: cnn_forward.1
$region0: #{cnn_forward.1}
  #allocation0 [shape = 'u32[]', space=smem, size = 0x4, offset = 0x4, fixed_abs, tag = 'smem constant byte address 0x4 - core index']
  #allocation1 [shape = 'u32[144,128]{1,0:T(1,128)}', space=vmem, size = 0x12000, scoped, tag = 'internal scratch']
  %s0 = inlined_call_operand.vmem [shape: f32[256,32], index: 0, kind: input, shape index: {}]
  %s1 = inlined_call_operand.hbm [shape: bf16[32,1152], index: 1, kind: input, shape index: {}]
  %s2 = inlined_call_operand.hbm [shape: bf16[1152,1280], index: 2, kind: input, shape index: {}]
  %s3 = inlined_call_operand.hbm [shape: bf16[1408,128], index: 3, kind: input, shape index: {}]
  %s4 = inlined_call_operand.hbm [shape: f32[1,2688], index: 4, kind: input, shape index: {}]
  %s5 = inlined_call_operand.vmem [shape: f32[256,128], index: 5, kind: output, shape index: {}]
  %s6 = sld [smem:[#allocation0]]
  $region69: #{cnn_forward.1} parent=0
    _
  %s8 = ssub.s32 1, %s6
  %s9 = scalar_select 0, %s8, %s6
  $region1: #{cnn_forward.1} parent=0
    #allocation2 [shape = 'u8[73728]{0}', space=vmem, size = 0x12000, scoped, tag = 'input window, operand 1, single buffered']
    #allocation3 [shape = 's32[2]{0}', space=sflag, size = 0x8, scoped, tag = 'scoped memory for cnn_forward.1']
    #allocation4 [shape = 'u8[2949120]{0}', space=vmem, size = 0x2d0000, scoped, tag = 'input window, operand 2, single buffered']
    #allocation5 [shape = 's32[1]{0}', space=sflag, size = 0x4, scoped, tag = 'scoped memory for cnn_forward.1']
    #allocation6 [shape = 'u8[360448]{0}', space=vmem, size = 0x58000, scoped, tag = 'input window, operand 3, single buffered']
    #allocation7 [shape = 'u8[10752]{0}', space=vmem, size = 0x2c00, scoped, tag = 'input window, operand 4, single buffered']
    #allocation8 [shape = 's32[1]{0}', space=sflag, size = 0x4, scoped, tag = 'scoped memory for cnn_forward.1']
    %10 = vsyncpa [#allocation3], 0
    %11 = vsyncpa [#allocation5], 0
    %12 = vsyncpa [#allocation8], 0
    loop: start=0, step=1, limit=4
    $region2: #{cnn_forward.1} parent=1 // loop_pre_header
      _
    $region3: #{cnn_forward.1} parent=1 // loop_header
      %s14 = sphi 0, %s18
      %p15 = scmp.ge.s32.totalorder %s14, 4
      %s24 = sphi 0, %s26
      %s27 = sphi 0, %s24
      %s28 = sphi 0, %s27
      %s44 = sphi 0, %s28
      %s48 = sphi 0, %s48
      %s50 = sphi 0, %s48
      %s51 = sphi 0, %s50
      %s65 = sphi 0, %s51
      %s69 = sphi 0, %s69
      %s71 = sphi 0, %s69
      %s72 = sphi 0, %s71
      %s86 = sphi 0, %s72
      %s90 = sphi 0, %s90
      %s92 = sphi 0, %s90
      %s93 = sphi 0, %s92
      %s107 = sphi 0, %s93
      %s111 = sphi 0, %s111
      %s113 = sphi 0, %s111
      %s114 = sphi 0, %s113
      %s128 = sphi 0, %s114
      %s134 = sphi 0, %s136
      %s137 = sphi 0, %s134
      %s138 = sphi 0, %s137
      %s154 = sphi 0, %s138
    $region4: #{cnn_forward.1} parent=1 // loop_header_branch
      %17 = sbr.rel (%p15) target = $region8
    $region5: #{cnn_forward.1} parent=1 // loop_body
      %s19 = ssub.s32 %s14, 1
      %s20 = ssub.s32 %s14, 2
      %s21 = sadd.s32 %s14, 1
      %s22 = ssub.s32 %s14, %s21
      %p23 = scmp.eq.s32.totalorder %s22, 0
      %s25 = sadd.s32 %s24, 1
      %s26 = scalar_select %p23, %s24, %s25
      %p29 = pneg %p23
      %p30 = scmp.eq.s32.totalorder %s14, 1
      %p31 = por %p29, %p30
      %p32 = scmp.ne.s32.totalorder %s24, %s27
      %p33 = scmp.eq.s32.totalorder %s14, 0
      %p34 = por %p32, %p33
      %p35 = scmp.ne.s32.totalorder %s24, %s27
      %p36 = scmp.eq.s32.totalorder %s19, 1
      %p37 = por %p35, %p36
      %p38 = scmp.ne.s32.totalorder %s27, %s28
      %p39 = scmp.eq.s32.totalorder %s19, 0
      %p40 = por %p38, %p39
      %p41 = scmp.ne.s32.totalorder %s27, %s28
      %p42 = scmp.eq.s32.totalorder %s20, 1
      %p43 = por %p41, %p42
      %p45 = scmp.ne.s32.totalorder %s28, %s44
      %p46 = scmp.eq.s32.totalorder %s20, 0
      %p47 = por %p45, %p46
      %s49 = sadd.s32 %s48, 1
      %p52 = scmp.eq.s32.totalorder %s14, 1
      %p53 = scmp.ne.s32.totalorder %s48, %s50
      %p54 = scmp.eq.s32.totalorder %s14, 0
      %p55 = por %p53, %p54
      %p56 = scmp.ne.s32.totalorder %s48, %s50
      %p57 = scmp.eq.s32.totalorder %s19, 1
      %p58 = por %p56, %p57
      %p59 = scmp.ne.s32.totalorder %s50, %s51
      %p60 = scmp.eq.s32.totalorder %s19, 0
      %p61 = por %p59, %p60
      %p62 = scmp.ne.s32.totalorder %s50, %s51
      %p63 = scmp.eq.s32.totalorder %s20, 1
      %p64 = por %p62, %p63
      %p66 = scmp.ne.s32.totalorder %s51, %s65
      %p67 = scmp.eq.s32.totalorder %s20, 0
      %p68 = por %p66, %p67
      %s70 = sadd.s32 %s69, 1
      %p73 = scmp.eq.s32.totalorder %s14, 1
      %p74 = scmp.ne.s32.totalorder %s69, %s71
      %p75 = scmp.eq.s32.totalorder %s14, 0
      %p76 = por %p74, %p75
      %p77 = scmp.ne.s32.totalorder %s69, %s71
      %p78 = scmp.eq.s32.totalorder %s19, 1
      %p79 = por %p77, %p78
      %p80 = scmp.ne.s32.totalorder %s71, %s72
      %p81 = scmp.eq.s32.totalorder %s19, 0
      %p82 = por %p80, %p81
      %p83 = scmp.ne.s32.totalorder %s71, %s72
      %p84 = scmp.eq.s32.totalorder %s20, 1
      %p85 = por %p83, %p84
      %p87 = scmp.ne.s32.totalorder %s72, %s86
      %p88 = scmp.eq.s32.totalorder %s20, 0
      %p89 = por %p87, %p88
      %s91 = sadd.s32 %s90, 1
      %p94 = scmp.eq.s32.totalorder %s14, 1
      %p95 = scmp.ne.s32.totalorder %s90, %s92
      %p96 = scmp.eq.s32.totalorder %s14, 0
      %p97 = por %p95, %p96
      %p98 = scmp.ne.s32.totalorder %s90, %s92
      %p99 = scmp.eq.s32.totalorder %s19, 1
      %p100 = por %p98, %p99
      %p101 = scmp.ne.s32.totalorder %s92, %s93
      %p102 = scmp.eq.s32.totalorder %s19, 0
      %p103 = por %p101, %p102
      %p104 = scmp.ne.s32.totalorder %s92, %s93
      %p105 = scmp.eq.s32.totalorder %s20, 1
      %p106 = por %p104, %p105
      %p108 = scmp.ne.s32.totalorder %s93, %s107
      %p109 = scmp.eq.s32.totalorder %s20, 0
      %p110 = por %p108, %p109
      %s112 = sadd.s32 %s111, 1
      %p115 = scmp.eq.s32.totalorder %s14, 1
      %p116 = scmp.ne.s32.totalorder %s111, %s113
      %p117 = scmp.eq.s32.totalorder %s14, 0
      %p118 = por %p116, %p117
      %p119 = scmp.ne.s32.totalorder %s111, %s113
      %p120 = scmp.eq.s32.totalorder %s19, 1
      %p121 = por %p119, %p120
      %p122 = scmp.ne.s32.totalorder %s113, %s114
      %p123 = scmp.eq.s32.totalorder %s19, 0
      %p124 = por %p122, %p123
      %p125 = scmp.ne.s32.totalorder %s113, %s114
      %p126 = scmp.eq.s32.totalorder %s20, 1
      %p127 = por %p125, %p126
      %p129 = scmp.ne.s32.totalorder %s114, %s128
      %p130 = scmp.eq.s32.totalorder %s20, 0
      %p131 = por %p129, %p130
      %s132 = ssub.s32 %s14, %s21
      %p133 = scmp.eq.s32.totalorder %s132, 0
      %s135 = sadd.s32 %s134, 1
      %s136 = scalar_select %p133, %s134, %s135
      %p139 = pneg %p133
      %p140 = scmp.eq.s32.totalorder %s14, 1
      %p141 = por %p139, %p140
      %p142 = scmp.ne.s32.totalorder %s134, %s137
      %p143 = scmp.eq.s32.totalorder %s14, 0
      %p144 = por %p142, %p143
      %p145 = scmp.ne.s32.totalorder %s134, %s137
      %p146 = scmp.eq.s32.totalorder %s19, 1
      %p147 = por %p145, %p146
      %p148 = scmp.ne.s32.totalorder %s137, %s138
      %p149 = scmp.eq.s32.totalorder %s19, 0
      %p150 = por %p148, %p149
      %p151 = scmp.ne.s32.totalorder %s137, %s138
      %p152 = scmp.eq.s32.totalorder %s20, 1
      %p153 = por %p151, %p152
      %p155 = scmp.ne.s32.totalorder %s138, %s154
      %p156 = scmp.eq.s32.totalorder %s20, 0
      %p157 = por %p155, %p156
      %p158 = scmp.le.s32.totalorder 1, %s14
      %p159 = scmp.lt.s32.totalorder %s14, 3
      %p160 = pnand %p158, %p159
      %p161 = pneg %p160
      // Predicated region
      $region9: #{cnn_forward.1} parent=5 // pred_check
        _
      $region10: #{cnn_forward.1} parent=5 // pred_check_branch
        %163 = sbr.rel (%p160) target = $region12
      $region11: #{cnn_forward.1} parent=5 // pred_region
        %s164 = ssub.s32 %s14, 1
        // Predicated region
        $region13: #{cnn_forward.1} parent=11 // pred_check
          %p165 = pneg %p61
        $region14: #{cnn_forward.1} parent=11 // pred_check_branch
          %167 = sbr.rel (%p165) target = $region16
        $region15: #{cnn_forward.1} parent=11 // pred_region
          %s169 = ssub.s32 2304, 2304
          %170 = vsyncadd [#allocation3], %s169
          %s171 = sshll.u32 [#allocation2], 4
          %s172 = int_to_ptr.vmem [resolvable:$true] %s171
          %177 = dma.hbm_to_vmem [thread:$0]  %s1, 2304, %s172, [#allocation3], 576, 576, 36
        $region16: #{cnn_forward.1} parent=11 // pred_fallthru
          _
        // Predicated region
        $region17: #{cnn_forward.1} parent=11 // pred_check
          %p178 = pneg %p82
        $region18: #{cnn_forward.1} parent=11 // pred_check_branch
          %180 = sbr.rel (%p178) target = $region20
        $region19: #{cnn_forward.1} parent=11 // pred_region
          %s182 = ssub.s32 92160, 92160
          %183 = vsyncadd [#allocation5], %s182
          %s184 = sshll.u32 [#allocation4], 4
          %s185 = int_to_ptr.vmem [resolvable:$true] %s184
          %190 = dma.hbm_to_vmem [thread:$0]  %s2, 92160, %s185, [#allocation5], 640, 640, 40
        $region20: #{cnn_forward.1} parent=11 // pred_fallthru
          _
        // Predicated region
        $region21: #{cnn_forward.1} parent=11 // pred_check
          %p191 = pneg %p103
        $region22: #{cnn_forward.1} parent=11 // pred_check_branch
          %193 = sbr.rel (%p191) target = $region24
        $region23: #{cnn_forward.1} parent=11 // pred_region
          %s195 = ssub.s32 11264, 11264
          %196 = vsyncadd [#allocation5], %s195
          %s197 = sshll.u32 [#allocation6], 4
          %s198 = int_to_ptr.vmem [resolvable:$true] %s197
          %203 = dma.hbm_to_vmem [thread:$0]  %s3, 11264, %s198, [#allocation5], 64, 64, 4
        $region24: #{cnn_forward.1} parent=11 // pred_fallthru
          _
        // Predicated region
        $region25: #{cnn_forward.1} parent=11 // pred_check
          %p204 = pneg %p124
        $region26: #{cnn_forward.1} parent=11 // pred_check_branch
          %206 = sbr.rel (%p204) target = $region28
        $region27: #{cnn_forward.1} parent=11 // pred_region
          %s208 = ssub.s32 336, 336
          %209 = vsyncadd [#allocation8], %s208
          %s211 = sshll.u32 [#allocation7], 4
          %s212 = int_to_ptr.vmem [resolvable:$true] %s211
          %214 = dma.hbm_to_vmem [thread:$0]  %s4, 336, %s212, [#allocation8]
        $region28: #{cnn_forward.1} parent=11 // pred_fallthru
          _
      $region12: #{cnn_forward.1} parent=5 // pred_fallthru
        _
      %p215 = scmp.lt.s32.totalorder %s14, 2
      // Predicated region
      $region29: #{cnn_forward.1} parent=5 // pred_check
        %p216 = pneg %p215
      $region30: #{cnn_forward.1} parent=5 // pred_check_branch
        %218 = sbr.rel (%p216) target = $region32
      $region31: #{cnn_forward.1} parent=5 // pred_region
        // Predicated region
        $region33: #{cnn_forward.1} parent=31 // pred_check
          %p219 = pneg %p34
        $region34: #{cnn_forward.1} parent=31 // pred_check_branch
          %221 = sbr.rel (%p219) target = $region36
        $region35: #{cnn_forward.1} parent=31 // pred_region
          %s222 = smul.u32 16, %s14
          %p223 = scmp.lt.s32.totalorder %s222, 31
          %s224 = scalar_select %p223, %s222, 31
          %s225 = smul.addr %s224, 8
          %s226 = scalar_lea.vmem %s0, %s225
          %s227 = smul.u32 16, %s14
        $region36: #{cnn_forward.1} parent=31 // pred_fallthru
          _
      $region32: #{cnn_forward.1} parent=5 // pred_fallthru
        _
      %p228 = scmp.le.s32.totalorder 1, %s14
      %p229 = scmp.lt.s32.totalorder %s14, 3
      %p230 = pnand %p228, %p229
      %p231 = pneg %p230
      // Predicated region
      $region37: #{cnn_forward.1} parent=5 // pred_check
        _
      $region38: #{cnn_forward.1} parent=5 // pred_check_branch
        %233 = sbr.rel (%p230) target = $region40
      $region39: #{cnn_forward.1} parent=5 // pred_region
        %s234 = ssub.s32 %s14, 1
        // Predicated region
        $region41: #{cnn_forward.1} parent=39 // pred_check
          %p235 = pneg %p61
        $region42: #{cnn_forward.1} parent=39 // pred_check_branch
          %237 = sbr.rel (%p235) target = $region44
        $region43: #{cnn_forward.1} parent=39 // pred_region
          %238 = dma.done [#allocation3], 2304
        $region44: #{cnn_forward.1} parent=39 // pred_fallthru
          _
        // Predicated region
        $region45: #{cnn_forward.1} parent=39 // pred_check
          %p239 = pneg %p82
        $region46: #{cnn_forward.1} parent=39 // pred_check_branch
          %241 = sbr.rel (%p239) target = $region48
        $region47: #{cnn_forward.1} parent=39 // pred_region
          %242 = dma.done [#allocation5], 92160
        $region48: #{cnn_forward.1} parent=39 // pred_fallthru
          _
        // Predicated region
        $region49: #{cnn_forward.1} parent=39 // pred_check
          %p243 = pneg %p103
        $region50: #{cnn_forward.1} parent=39 // pred_check_branch
          %245 = sbr.rel (%p243) target = $region52
        $region51: #{cnn_forward.1} parent=39 // pred_region
          %246 = dma.done [#allocation5], 11264
        $region52: #{cnn_forward.1} parent=39 // pred_fallthru
          _
        // Predicated region
        $region53: #{cnn_forward.1} parent=39 // pred_check
          %p247 = pneg %p124
        $region54: #{cnn_forward.1} parent=39 // pred_check_branch
          %249 = sbr.rel (%p247) target = $region56
        $region55: #{cnn_forward.1} parent=39 // pred_region
          %250 = dma.done [#allocation8], 336
        $region56: #{cnn_forward.1} parent=39 // pred_fallthru
          _
        %s251 = smul.u32 16, %s19
        %p252 = scmp.lt.s32.totalorder %s251, 31
        %s253 = scalar_select %p252, %s251, 31
        %s254 = smul.addr %s253, 8
        %s255 = scalar_lea.vmem %s0, %s254
        %p256 = pneg %p40
        %p257 = pneg %p37
        %p258 = pneg %p61
        %p259 = pneg %p58
        %p260 = pneg %p82
        %p261 = pneg %p79
        %p262 = pneg %p103
        %p263 = pneg %p100
        %p264 = pneg %p124
        %p265 = pneg %p121
        %p266 = pneg %p150
        %p267 = pneg %p147
        %s268 = smul.u32 16, %s19
        %p269 = scmp.lt.s32.totalorder %s268, 31
        %s270 = scalar_select %p269, %s268, 31
        %s271 = smul.addr %s270, 8
        %s272 = scalar_lea.vmem %s5, %s271
        %s273 = smul.u32 16, %s19
        %p274 = scmp.lt.s32.totalorder %s273, 31
        %s275 = scalar_select %p274, %s273, 31
        %s276 = smul.addr %s275, 8
        %s277 = scalar_lea.vmem %s0, %s276
        %s278 = smul.u32 16, %s19
        %s279 = smul.u32 16, %s19
        %p280 = scmp.lt.s32.totalorder %s279, 31
        %s281 = scalar_select %p280, %s279, 31
        %s282 = smul.addr %s281, 8
        %s283 = scalar_lea.vmem %s5, %s282
        %s284 = smul.u32 16, %s19
        %v286 = vld [vmem:[%s277] sm:$0xff]
        %v287 = vld [vmem:[%s277 + $0x8] sm:$0xff]
        %v288 = vld [vmem:[%s277 + $0x10] sm:$0xff]
        %v289 = vld [vmem:[%s277 + $0x18] sm:$0xff]
        %v290 = vld [vmem:[%s277 + $0x20] sm:$0xff]
        %v291 = vld [vmem:[%s277 + $0x28] sm:$0xff]
        %v292 = vld [vmem:[%s277 + $0x30] sm:$0xff]
        %v293 = vld [vmem:[%s277 + $0x38] sm:$0xff]
        %v294 = vld [vmem:[%s277 + $0x40] sm:$0xff]
        %v295 = vld [vmem:[%s277 + $0x48] sm:$0xff]
        %v296 = vld [vmem:[%s277 + $0x50] sm:$0xff]
        %v297 = vld [vmem:[%s277 + $0x58] sm:$0xff]
        %v298 = vld [vmem:[%s277 + $0x60] sm:$0xff]
        %v299 = vld [vmem:[%s277 + $0x68] sm:$0xff]
        %v300 = vld [vmem:[%s277 + $0x70] sm:$0xff]
        %v301 = vld [vmem:[%s277 + $0x78] sm:$0xff]
        %v302 = vpack.c.bf16 %v287, %v286
        %v303 = vpack.c.bf16 %v289, %v288
        %v304 = vpack.c.bf16 %v291, %v290
        %v305 = vpack.c.bf16 %v293, %v292
        %v306 = vpack.c.bf16 %v295, %v294
        %v307 = vpack.c.bf16 %v297, %v296
        %v308 = vpack.c.bf16 %v299, %v298
        %v309 = vpack.c.bf16 %v301, %v300
        %v310 = vld [vmem:[#allocation2] sm:$0xff]
        %v311 = vld [vmem:[#allocation2 + $0x8] sm:$0xff]
        %v312 = vld [vmem:[#allocation2 + $0x10] sm:$0xff]
        %v313 = vld [vmem:[#allocation2 + $0x18] sm:$0xff]
        %v314 = vld [vmem:[#allocation2 + $0x20] sm:$0xf]
        %v315 = vld [vmem:[#allocation2 + $0x24] sm:$0xff]
        %v316 = vld [vmem:[#allocation2 + $0x2c] sm:$0xff]
        %v317 = vld [vmem:[#allocation2 + $0x34] sm:$0xff]
        %v318 = vld [vmem:[#allocation2 + $0x3c] sm:$0xff]
        %v319 = vld [vmem:[#allocation2 + $0x44] sm:$0xf]
        %v320 = vld [vmem:[#allocation2 + $0x48] sm:$0xff]
        %v321 = vld [vmem:[#allocation2 + $0x50] sm:$0xff]
        %v322 = vld [vmem:[#allocation2 + $0x58] sm:$0xff]
        %v323 = vld [vmem:[#allocation2 + $0x60] sm:$0xff]
        %v324 = vld [vmem:[#allocation2 + $0x68] sm:$0xf]
        %v325 = vld [vmem:[#allocation2 + $0x6c] sm:$0xff]
        %v326 = vld [vmem:[#allocation2 + $0x74] sm:$0xff]
        %v327 = vld [vmem:[#allocation2 + $0x7c] sm:$0xff]
        %v328 = vld [vmem:[#allocation2 + $0x84] sm:$0xff]
        %v329 = vld [vmem:[#allocation2 + $0x8c] sm:$0xf]
        %v330 = vld [vmem:[#allocation7] sm:$0xff]
        %v331 = vld [vmem:[#allocation7 + $0x8] sm:$0x1]
        %v334 = vlaneseq
        %v335 = vshrl.u32 %v334, 7
        %v336 = vsub.s32 0, %v335
        %v337 = vrot.slane %v330, %v336
        %v338 = vlaneseq
        %v339 = vshrl.u32 %v338, 7
        %v340 = vsub.s32 1, %v339
        %v341 = vrot.slane %v330, %v340
        %v342 = vlaneseq
        %v343 = vshrl.u32 %v342, 7
        %v344 = vsub.s32 2, %v343
        %v345 = vrot.slane %v330, %v344
        %v346 = vlaneseq
        %v347 = vshrl.u32 %v346, 7
        %v348 = vsub.s32 3, %v347
        %v349 = vrot.slane %v330, %v348
        %v350 = vlaneseq
        %v351 = vshrl.u32 %v350, 7
        %v352 = vsub.s32 4, %v351
        %v353 = vrot.slane %v330, %v352
        %v354 = vlaneseq
        %v355 = vshrl.u32 %v354, 7
        %v356 = vsub.s32 5, %v355
        %v357 = vrot.slane %v330, %v356
        %v358 = vlaneseq
        %v359 = vshrl.u32 %v358, 7
        %v360 = vsub.s32 6, %v359
        %v361 = vrot.slane %v330, %v360
        %v362 = vlaneseq
        %v363 = vshrl.u32 %v362, 7
        %v364 = vsub.s32 7, %v363
        %v365 = vrot.slane %v330, %v364
        %v366 = vlaneseq
        %v367 = vshrl.u32 %v366, 7
        %v368 = vsub.s32 0, %v367
        %v369 = vrot.slane %v331, %v368
        %v399 = vunpack.c.l.b16 %v310
        %v400 = vunpack.c.h.b16 %v310
        %v401 = vunpack.c.l.b16 %v311
        %v402 = vunpack.c.h.b16 %v311
        %v403 = vunpack.c.l.b16 %v312
        %v404 = vunpack.c.h.b16 %v312
        %v405 = vunpack.c.l.b16 %v313
        %v406 = vunpack.c.h.b16 %v313
        %v407 = vunpack.c.l.b16 %v314
        %v408 = vunpack.c.l.b16 %v315
        %v409 = vunpack.c.h.b16 %v315
        %v410 = vunpack.c.l.b16 %v316
        %v411 = vunpack.c.h.b16 %v316
        %v412 = vunpack.c.l.b16 %v317
        %v413 = vunpack.c.h.b16 %v317
        %v414 = vunpack.c.l.b16 %v318
        %v415 = vunpack.c.h.b16 %v318
        %v416 = vunpack.c.l.b16 %v319
        %v417 = vunpack.c.l.b16 %v320
        %v418 = vunpack.c.h.b16 %v320
        %v419 = vunpack.c.l.b16 %v321
        %v420 = vunpack.c.h.b16 %v321
        %v421 = vunpack.c.l.b16 %v322
        %v422 = vunpack.c.h.b16 %v322
        %v423 = vunpack.c.l.b16 %v323
        %v424 = vunpack.c.h.b16 %v323
        %v425 = vunpack.c.l.b16 %v324
        %v426 = vunpack.c.l.b16 %v325
        %v427 = vunpack.c.h.b16 %v325
        %v428 = vunpack.c.l.b16 %v326
        %v429 = vunpack.c.h.b16 %v326
        %v430 = vunpack.c.l.b16 %v327
        %v431 = vunpack.c.h.b16 %v327
        %v432 = vunpack.c.l.b16 %v328
        %v433 = vunpack.c.h.b16 %v328
        %v434 = vunpack.c.l.b16 %v329
        %v435 = vpack.c.b16 %v408, %v399
        %v436 = vpack.c.b16 %v409, %v400
        %v437 = vpack.c.b16 %v410, %v401
        %v438 = vpack.c.b16 %v411, %v402
        %v439 = vpack.c.b16 %v412, %v403
        %v440 = vpack.c.b16 %v413, %v404
        %v441 = vpack.c.b16 %v414, %v405
        %v442 = vpack.c.b16 %v415, %v406
        %v443 = vpack.c.b16 %v416, %v407
        %v444 = vpack.c.b16 %v426, %v417
        %v445 = vpack.c.b16 %v427, %v418
        %v446 = vpack.c.b16 %v428, %v419
        %v447 = vpack.c.b16 %v429, %v420
        %v448 = vpack.c.b16 %v430, %v421
        %v449 = vpack.c.b16 %v431, %v422
        %v450 = vpack.c.b16 %v432, %v423
        %v451 = vpack.c.b16 %v433, %v424
        %v452 = vpack.c.b16 %v434, %v425
        %vm471 = vcmask 261120
        %v473 = vsel %vm471, %v302, 0
        %v476 = vsel %vm471, %v303, 0
        %v479 = vsel %vm471, %v304, 0
        %v482 = vsel %vm471, %v305, 0
        %v485 = vsel %vm471, %v306, 0
        %v488 = vsel %vm471, %v307, 0
        %v491 = vsel %vm471, %v308, 0
        %v494 = vsel %vm471, %v309, 0
        %496 = vmatprep.subr.bf16.mxu0 %v436
        %497 = vmatpush1.bf16.msra.mxu0 %v435
        %498 = vmatprep.subr.bf16.mxu0 %v445
        %499 = vmatpush1.bf16.msra.mxu0 %v444
        %500 = vmatprep.subr.bf16.mxu0 0
        %501 = vmatpush1.bf16.msra.mxu0 0
        %502 = vmatprep.subr.bf16.mxu0 0
        %503 = vmatpush1.bf16.msra.mxu0 0
        %504 = vmatprep.subr.bf16.mxu0 0
        %505 = vmatpush1.bf16.msra.mxu0 0
        %506 = vmatprep.subr.bf16.mxu0 0
        %507 = vmatpush1.bf16.msra.mxu0 0
        %508 = vmatprep.subr.bf16.mxu0 0
        %509 = vmatpush1.bf16.msra.mxu0 0
        %510 = vmatprep.subr.bf16.mxu0 0
        %511 = vmatpush1.bf16.msra.mxu0 0
        %512 = vmatprep.subr.bf16.mxu0 0
        %513 = vmatpush1.bf16.msra.mxu0 0
        %514 = vmatprep.subr.bf16.mxu0 0
        %515 = vmatpush1.bf16.msra.mxu0 0
        %516 = vmatprep.subr.bf16.mxu0 0
        %517 = vmatpush1.bf16.msra.mxu0 0
        %518 = vmatprep.subr.bf16.mxu0 0
        %519 = vmatpush1.bf16.msra.mxu0 0
        %520 = vmatprep.subr.bf16.mxu0 0
        %521 = vmatpush1.bf16.msra.mxu0 0
        %522 = vmatprep.subr.bf16.mxu0 0
        %523 = vmatpush1.bf16.msra.mxu0 0
        %524 = vmatprep.subr.bf16.mxu0 0
        %525 = vmatpush1.bf16.msra.mxu0 0
        %526 = vmatprep.subr.bf16.mxu0 0
        %527 = vmatpush1.bf16.msra.mxu0 0
        %528 = vmatprep.mubr.bf16.mxu0 0
        %529 = vmatmul.mubr.bf16.gmra.mrb[0].mxu0 %v473
        %v530 = vpop.f32.mrb[0].mxu0
        %v531 = vadd.f32 %v337, %v530
        %v532 = vpop.f32.mrb[0].mxu0
        %v533 = vadd.f32 %v341, %v532
        %v534 = vpop.f32.mrb[0].mxu0
        %v535 = vadd.f32 %v337, %v534
        %v536 = vpop.f32.mrb[0].mxu0
        %v537 = vadd.f32 %v341, %v536
        %538 = vmatprep.mubr.bf16.mxu0 0
        %539 = vmatmul.mubr.bf16.gmra.mrb[0].mxu0 %v476
        %v540 = vpop.f32.mrb[0].mxu0
        %v541 = vadd.f32 %v337, %v540
        %v542 = vpop.f32.mrb[0].mxu0
        %v543 = vadd.f32 %v341, %v542
        %v544 = vpop.f32.mrb[0].mxu0
        %v545 = vadd.f32 %v337, %v544
        %v546 = vpop.f32.mrb[0].mxu0
        %v547 = vadd.f32 %v341, %v546
        %548 = vmatprep.mubr.bf16.mxu0 0
        %549 = vmatmul.mubr.bf16.gmra.mrb[0].mxu0 %v479
        %v550 = vpop.f32.mrb[0].mxu0
        %v551 = vadd.f32 %v337, %v550
        %v552 = vpop.f32.mrb[0].mxu0
        %v553 = vadd.f32 %v341, %v552
        %v554 = vpop.f32.mrb[0].mxu0
        %v555 = vadd.f32 %v337, %v554
        %v556 = vpop.f32.mrb[0].mxu0
        %v557 = vadd.f32 %v341, %v556
        %558 = vmatprep.mubr.bf16.mxu0 0
        %559 = vmatmul.mubr.bf16.gmra.mrb[0].mxu0 %v482
        %v560 = vpop.f32.mrb[0].mxu0
        %v561 = vadd.f32 %v337, %v560
        %v562 = vpop.f32.mrb[0].mxu0
        %v563 = vadd.f32 %v341, %v562
        %v564 = vpop.f32.mrb[0].mxu0
        %v565 = vadd.f32 %v337, %v564
        %v566 = vpop.f32.mrb[0].mxu0
        %v567 = vadd.f32 %v341, %v566
        %568 = vmatprep.mubr.bf16.mxu0 0
        %569 = vmatmul.mubr.bf16.gmra.mrb[0].mxu0 %v485
        %v570 = vpop.f32.mrb[0].mxu0
        %v571 = vadd.f32 %v337, %v570
        %v572 = vpop.f32.mrb[0].mxu0
        %v573 = vadd.f32 %v341, %v572
        %v574 = vpop.f32.mrb[0].mxu0
        %v575 = vadd.f32 %v337, %v574
        %v576 = vpop.f32.mrb[0].mxu0
        %v577 = vadd.f32 %v341, %v576
        %578 = vmatprep.mubr.bf16.mxu0 0
        %579 = vmatmul.mubr.bf16.gmra.mrb[0].mxu0 %v488
        %v580 = vpop.f32.mrb[0].mxu0
        %v581 = vadd.f32 %v337, %v580
        %v582 = vpop.f32.mrb[0].mxu0
        %v583 = vadd.f32 %v341, %v582
        %v584 = vpop.f32.mrb[0].mxu0
        %v585 = vadd.f32 %v337, %v584
        %v586 = vpop.f32.mrb[0].mxu0
        %v587 = vadd.f32 %v341, %v586
        %588 = vmatprep.mubr.bf16.mxu0 0
        %589 = vmatmul.mubr.bf16.gmra.mrb[0].mxu0 %v491
        %v590 = vpop.f32.mrb[0].mxu0
        %v591 = vadd.f32 %v337, %v590
        %v592 = vpop.f32.mrb[0].mxu0
        %v593 = vadd.f32 %v341, %v592
        %v594 = vpop.f32.mrb[0].mxu0
        %v595 = vadd.f32 %v337, %v594
        %v596 = vpop.f32.mrb[0].mxu0
        %v597 = vadd.f32 %v341, %v596
        %598 = vmatprep.mubr.bf16.mxu0 0
        %599 = vmatmul.mubr.bf16.gmra.mrb[0].mxu0 %v494
        %v600 = vpop.f32.mrb[0].mxu0
        %v601 = vadd.f32 %v337, %v600
        %v602 = vpop.f32.mrb[0].mxu0
        %v603 = vadd.f32 %v341, %v602
        %v604 = vpop.f32.mrb[0].mxu0
        %v605 = vadd.f32 %v337, %v604
        %v606 = vpop.f32.mrb[0].mxu0
        %v607 = vadd.f32 %v341, %v606
        %608 = vdwg.mxu0
        %609 = vmatprep.subr.bf16.mxu0 %v438
        %610 = vmatpush1.bf16.msra.mxu0 %v437
        %611 = vmatprep.subr.bf16.mxu0 %v447
        %612 = vmatpush1.bf16.msra.mxu0 %v446
        %613 = vmatprep.subr.bf16.mxu0 0
        %614 = vmatpush1.bf16.msra.mxu0 0
        %615 = vmatprep.subr.bf16.mxu0 0
        %616 = vmatpush1.bf16.msra.mxu0 0
        %617 = vmatprep.subr.bf16.mxu0 0
        %618 = vmatpush1.bf16.msra.mxu0 0
        %619 = vmatprep.subr.bf16.mxu0 0
        %620 = vmatpush1.bf16.msra.mxu0 0
        %621 = vmatprep.subr.bf16.mxu0 0
        %622 = vmatpush1.bf16.msra.mxu0 0
        %623 = vmatprep.subr.bf16.mxu0 0
        %624 = vmatpush1.bf16.msra.mxu0 0
        %625 = vmatprep.subr.bf16.mxu0 0
        %626 = vmatpush1.bf16.msra.mxu0 0
        %627 = vmatprep.subr.bf16.mxu0 0
        %628 = vmatpush1.bf16.msra.mxu0 0
        %629 = vmatprep.subr.bf16.mxu0 0
        %630 = vmatpush1.bf16.msra.mxu0 0
        %631 = vmatprep.subr.bf16.mxu0 0
        %632 = vmatpush1.bf16.msra.mxu0 0
        %633 = vmatprep.subr.bf16.mxu0 0
        %634 = vmatpush1.bf16.msra.mxu0 0
        %635 = vmatprep.subr.bf16.mxu0 0
        %636 = vmatpush1.bf16.msra.mxu0 0
        %637 = vmatprep.subr.bf16.mxu0 0
        %638 = vmatpush1.bf16.msra.mxu0 0
        %639 = vmatprep.subr.bf16.mxu0 0
        %640 = vmatpush1.bf16.msra.mxu0 0
        %641 = vmatprep.mubr.bf16.mxu0 0
        %642 = vmatmul.mubr.bf16.gmra.mrb[0].mxu0 %v473
        %v643 = vpop.f32.mrb[0].mxu0
        %v644 = vadd.f32 %v345, %v643
        %v645 = vpop.f32.mrb[0].mxu0
        %v646 = vadd.f32 %v349, %v645
        %v647 = vpop.f32.mrb[0].mxu0
        %v648 = vadd.f32 %v345, %v647
        %v649 = vpop.f32.mrb[0].mxu0
        %v650 = vadd.f32 %v349, %v649
        %651 = vmatprep.mubr.bf16.mxu0 0
        %652 = vmatmul.mubr.bf16.gmra.mrb[0].mxu0 %v476
        %v653 = vpop.f32.mrb[0].mxu0
        %v654 = vadd.f32 %v345, %v653
        %v655 = vpop.f32.mrb[0].mxu0
        %v656 = vadd.f32 %v349, %v655
        %v657 = vpop.f32.mrb[0].mxu0
        %v658 = vadd.f32 %v345, %v657
        %v659 = vpop.f32.mrb[0].mxu0
        %v660 = vadd.f32 %v349, %v659
        %661 = vmatprep.mubr.bf16.mxu0 0
        %662 = vmatmul.mubr.bf16.gmra.mrb[0].mxu0 %v479
        %v663 = vpop.f32.mrb[0].mxu0
        %v664 = vadd.f32 %v345, %v663
        %v665 = vpop.f32.mrb[0].mxu0
        %v666 = vadd.f32 %v349, %v665
        %v667 = vpop.f32.mrb[0].mxu0
        %v668 = vadd.f32 %v345, %v667
        %v669 = vpop.f32.mrb[0].mxu0
        %v670 = vadd.f32 %v349, %v669
        %671 = vmatprep.mubr.bf16.mxu0 0
        %672 = vmatmul.mubr.bf16.gmra.mrb[0].mxu0 %v482
        %v673 = vpop.f32.mrb[0].mxu0
        %v674 = vadd.f32 %v345, %v673
        %v675 = vpop.f32.mrb[0].mxu0
        %v676 = vadd.f32 %v349, %v675
        %v677 = vpop.f32.mrb[0].mxu0
        %v678 = vadd.f32 %v345, %v677
        %v679 = vpop.f32.mrb[0].mxu0
        %v680 = vadd.f32 %v349, %v679
        %681 = vmatprep.mubr.bf16.mxu0 0
        %682 = vmatmul.mubr.bf16.gmra.mrb[0].mxu0 %v485
        %v683 = vpop.f32.mrb[0].mxu0
        %v684 = vadd.f32 %v345, %v683
        %v685 = vpop.f32.mrb[0].mxu0
        %v686 = vadd.f32 %v349, %v685
        %v687 = vpop.f32.mrb[0].mxu0
        %v688 = vadd.f32 %v345, %v687
        %v689 = vpop.f32.mrb[0].mxu0
        %v690 = vadd.f32 %v349, %v689
        %691 = vmatprep.mubr.bf16.mxu0 0
        %692 = vmatmul.mubr.bf16.gmra.mrb[0].mxu0 %v488
        %v693 = vpop.f32.mrb[0].mxu0
        %v694 = vadd.f32 %v345, %v693
        %v695 = vpop.f32.mrb[0].mxu0
        %v696 = vadd.f32 %v349, %v695
        %v697 = vpop.f32.mrb[0].mxu0
        %v698 = vadd.f32 %v345, %v697
        %v699 = vpop.f32.mrb[0].mxu0
        %v700 = vadd.f32 %v349, %v699
        %701 = vmatprep.mubr.bf16.mxu0 0
        %702 = vmatmul.mubr.bf16.gmra.mrb[0].mxu0 %v491
        %v703 = vpop.f32.mrb[0].mxu0
        %v704 = vadd.f32 %v345, %v703
        %v705 = vpop.f32.mrb[0].mxu0
        %v706 = vadd.f32 %v349, %v705
        %v707 = vpop.f32.mrb[0].mxu0
        %v708 = vadd.f32 %v345, %v707
        %v709 = vpop.f32.mrb[0].mxu0
        %v710 = vadd.f32 %v349, %v709
        %711 = vmatprep.mubr.bf16.mxu0 0
        %712 = vmatmul.mubr.bf16.gmra.mrb[0].mxu0 %v494
        %v713 = vpop.f32.mrb[0].mxu0
        %v714 = vadd.f32 %v345, %v713
        %v715 = vpop.f32.mrb[0].mxu0
        %v716 = vadd.f32 %v349, %v715
        %v717 = vpop.f32.mrb[0].mxu0
        %v718 = vadd.f32 %v345, %v717
        %v719 = vpop.f32.mrb[0].mxu0
        %v720 = vadd.f32 %v349, %v719
        %721 = vdwg.mxu0
        %722 = vmatprep.subr.bf16.mxu0 %v440
        %723 = vmatpush1.bf16.msra.mxu0 %v439
        %724 = vmatprep.subr.bf16.mxu0 %v449
        %725 = vmatpush1.bf16.msra.mxu0 %v448
        %726 = vmatprep.subr.bf16.mxu0 0
        %727 = vmatpush1.bf16.msra.mxu0 0
        %728 = vmatprep.subr.bf16.mxu0 0
        %729 = vmatpush1.bf16.msra.mxu0 0
        %730 = vmatprep.subr.bf16.mxu0 0
        %731 = vmatpush1.bf16.msra.mxu0 0
        %732 = vmatprep.subr.bf16.mxu0 0
        %733 = vmatpush1.bf16.msra.mxu0 0
        %734 = vmatprep.subr.bf16.mxu0 0
        %735 = vmatpush1.bf16.msra.mxu0 0
        %736 = vmatprep.subr.bf16.mxu0 0
        %737 = vmatpush1.bf16.msra.mxu0 0
        %738 = vmatprep.subr.bf16.mxu0 0
        %739 = vmatpush1.bf16.msra.mxu0 0
        %740 = vmatprep.subr.bf16.mxu0 0
        %741 = vmatpush1.bf16.msra.mxu0 0
        %742 = vmatprep.subr.bf16.mxu0 0
        %743 = vmatpush1.bf16.msra.mxu0 0
        %744 = vmatprep.subr.bf16.mxu0 0
        %745 = vmatpush1.bf16.msra.mxu0 0
        %746 = vmatprep.subr.bf16.mxu0 0
        %747 = vmatpush1.bf16.msra.mxu0 0
        %748 = vmatprep.subr.bf16.mxu0 0
        %749 = vmatpush1.bf16.msra.mxu0 0
        %750 = vmatprep.subr.bf16.mxu0 0
        %751 = vmatpush1.bf16.msra.mxu0 0
        %752 = vmatprep.subr.bf16.mxu0 0
        %753 = vmatpush1.bf16.msra.mxu0 0
        %754 = vmatprep.mubr.bf16.mxu0 0
        %755 = vmatmul.mubr.bf16.gmra.mrb[0].mxu0 %v473
        %v756 = vpop.f32.mrb[0].mxu0
        %v757 = vadd.f32 %v353, %v756
        %v758 = vpop.f32.mrb[0].mxu0
        %v759 = vadd.f32 %v357, %v758
        %v760 = vpop.f32.mrb[0].mxu0
        %v761 = vadd.f32 %v353, %v760
        %v762 = vpop.f32.mrb[0].mxu0
        %v763 = vadd.f32 %v357, %v762
        %764 = vmatprep.mubr.bf16.mxu0 0
        %765 = vmatmul.mubr.bf16.gmra.mrb[0].mxu0 %v476
        %v766 = vpop.f32.mrb[0].mxu0
        %v767 = vadd.f32 %v353, %v766
        %v768 = vpop.f32.mrb[0].mxu0
        %v769 = vadd.f32 %v357, %v768
        %v770 = vpop.f32.mrb[0].mxu0
        %v771 = vadd.f32 %v353, %v770
        %v772 = vpop.f32.mrb[0].mxu0
        %v773 = vadd.f32 %v357, %v772
        %774 = vmatprep.mubr.bf16.mxu0 0
        %775 = vmatmul.mubr.bf16.gmra.mrb[0].mxu0 %v479
        %v776 = vpop.f32.mrb[0].mxu0
        %v777 = vadd.f32 %v353, %v776
        %v778 = vpop.f32.mrb[0].mxu0
        %v779 = vadd.f32 %v357, %v778
        %v780 = vpop.f32.mrb[0].mxu0
        %v781 = vadd.f32 %v353, %v780
        %v782 = vpop.f32.mrb[0].mxu0
        %v783 = vadd.f32 %v357, %v782
        %784 = vmatprep.mubr.bf16.mxu0 0
        %785 = vmatmul.mubr.bf16.gmra.mrb[0].mxu0 %v482
        %v786 = vpop.f32.mrb[0].mxu0
        %v787 = vadd.f32 %v353, %v786
        %v788 = vpop.f32.mrb[0].mxu0
        %v789 = vadd.f32 %v357, %v788
        %v790 = vpop.f32.mrb[0].mxu0
        %v791 = vadd.f32 %v353, %v790
        %v792 = vpop.f32.mrb[0].mxu0
        %v793 = vadd.f32 %v357, %v792
        %794 = vmatprep.mubr.bf16.mxu0 0
        %795 = vmatmul.mubr.bf16.gmra.mrb[0].mxu0 %v485
        %v796 = vpop.f32.mrb[0].mxu0
        %v797 = vadd.f32 %v353, %v796
        %v798 = vpop.f32.mrb[0].mxu0
        %v799 = vadd.f32 %v357, %v798
        %v800 = vpop.f32.mrb[0].mxu0
        %v801 = vadd.f32 %v353, %v800
        %v802 = vpop.f32.mrb[0].mxu0
        %v803 = vadd.f32 %v357, %v802
        %804 = vmatprep.mubr.bf16.mxu0 0
        %805 = vmatmul.mubr.bf16.gmra.mrb[0].mxu0 %v488
        %v806 = vpop.f32.mrb[0].mxu0
        %v807 = vadd.f32 %v353, %v806
        %v808 = vpop.f32.mrb[0].mxu0
        %v809 = vadd.f32 %v357, %v808
        %v810 = vpop.f32.mrb[0].mxu0
        %v811 = vadd.f32 %v353, %v810
        %v812 = vpop.f32.mrb[0].mxu0
        %v813 = vadd.f32 %v357, %v812
        %814 = vmatprep.mubr.bf16.mxu0 0
        %815 = vmatmul.mubr.bf16.gmra.mrb[0].mxu0 %v491
        %v816 = vpop.f32.mrb[0].mxu0
        %v817 = vadd.f32 %v353, %v816
        %v818 = vpop.f32.mrb[0].mxu0
        %v819 = vadd.f32 %v357, %v818
        %v820 = vpop.f32.mrb[0].mxu0
        %v821 = vadd.f32 %v353, %v820
        %v822 = vpop.f32.mrb[0].mxu0
        %v823 = vadd.f32 %v357, %v822
        %824 = vmatprep.mubr.bf16.mxu0 0
        %825 = vmatmul.mubr.bf16.gmra.mrb[0].mxu0 %v494
        %v826 = vpop.f32.mrb[0].mxu0
        %v827 = vadd.f32 %v353, %v826
        %v828 = vpop.f32.mrb[0].mxu0
        %v829 = vadd.f32 %v357, %v828
        %v830 = vpop.f32.mrb[0].mxu0
        %v831 = vadd.f32 %v353, %v830
        %v832 = vpop.f32.mrb[0].mxu0
        %v833 = vadd.f32 %v357, %v832
        %834 = vdwg.mxu0
        %835 = vmatprep.subr.bf16.mxu0 %v442
        %836 = vmatpush1.bf16.msra.mxu0 %v441
        %837 = vmatprep.subr.bf16.mxu0 %v451
        %838 = vmatpush1.bf16.msra.mxu0 %v450
        %839 = vmatprep.subr.bf16.mxu0 0
        %840 = vmatpush1.bf16.msra.mxu0 0
        %841 = vmatprep.subr.bf16.mxu0 0
        %842 = vmatpush1.bf16.msra.mxu0 0
        %843 = vmatprep.subr.bf16.mxu0 0
        %844 = vmatpush1.bf16.msra.mxu0 0
        %845 = vmatprep.subr.bf16.mxu0 0
        %846 = vmatpush1.bf16.msra.mxu0 0
        %847 = vmatprep.subr.bf16.mxu0 0
        %848 = vmatpush1.bf16.msra.mxu0 0
        %849 = vmatprep.subr.bf16.mxu0 0
        %850 = vmatpush1.bf16.msra.mxu0 0
        %851 = vmatprep.subr.bf16.mxu0 0
        %852 = vmatpush1.bf16.msra.mxu0 0
        %853 = vmatprep.subr.bf16.mxu0 0
        %854 = vmatpush1.bf16.msra.mxu0 0
        %855 = vmatprep.subr.bf16.mxu0 0
        %856 = vmatpush1.bf16.msra.mxu0 0
        %857 = vmatprep.subr.bf16.mxu0 0
        %858 = vmatpush1.bf16.msra.mxu0 0
        %859 = vmatprep.subr.bf16.mxu0 0
        %860 = vmatpush1.bf16.msra.mxu0 0
        %861 = vmatprep.subr.bf16.mxu0 0
        %862 = vmatpush1.bf16.msra.mxu0 0
        %863 = vmatprep.subr.bf16.mxu0 0
        %864 = vmatpush1.bf16.msra.mxu0 0
        %865 = vmatprep.subr.bf16.mxu0 0
        %866 = vmatpush1.bf16.msra.mxu0 0
        %867 = vmatprep.mubr.bf16.mxu0 0
        %868 = vmatmul.mubr.bf16.gmra.mrb[0].mxu0 %v473
        %v869 = vpop.f32.mrb[0].mxu0
        %v870 = vadd.f32 %v361, %v869
        %v871 = vpop.f32.mrb[0].mxu0
        %v872 = vadd.f32 %v365, %v871
        %v873 = vpop.f32.mrb[0].mxu0
        %v874 = vadd.f32 %v361, %v873
        %v875 = vpop.f32.mrb[0].mxu0
        %v876 = vadd.f32 %v365, %v875
        %877 = vmatprep.mubr.bf16.mxu0 0
        %878 = vmatmul.mubr.bf16.gmra.mrb[0].mxu0 %v476
        %v879 = vpop.f32.mrb[0].mxu0
        %v880 = vadd.f32 %v361, %v879
        %v881 = vpop.f32.mrb[0].mxu0
        %v882 = vadd.f32 %v365, %v881
        %v883 = vpop.f32.mrb[0].mxu0
        %v884 = vadd.f32 %v361, %v883
        %v885 = vpop.f32.mrb[0].mxu0
        %v886 = vadd.f32 %v365, %v885
        %887 = vmatprep.mubr.bf16.mxu0 0
        %888 = vmatmul.mubr.bf16.gmra.mrb[0].mxu0 %v479
        %v889 = vpop.f32.mrb[0].mxu0
        %v890 = vadd.f32 %v361, %v889
        %v891 = vpop.f32.mrb[0].mxu0
        %v892 = vadd.f32 %v365, %v891
        %v893 = vpop.f32.mrb[0].mxu0
        %v894 = vadd.f32 %v361, %v893
        %v895 = vpop.f32.mrb[0].mxu0
        %v896 = vadd.f32 %v365, %v895
        %897 = vmatprep.mubr.bf16.mxu0 0
        %898 = vmatmul.mubr.bf16.gmra.mrb[0].mxu0 %v482
        %v899 = vpop.f32.mrb[0].mxu0
        %v900 = vadd.f32 %v361, %v899
        %v901 = vpop.f32.mrb[0].mxu0
        %v902 = vadd.f32 %v365, %v901
        %v903 = vpop.f32.mrb[0].mxu0
        %v904 = vadd.f32 %v361, %v903
        %v905 = vpop.f32.mrb[0].mxu0
        %v906 = vadd.f32 %v365, %v905
        %907 = vmatprep.mubr.bf16.mxu0 0
        %908 = vmatmul.mubr.bf16.gmra.mrb[0].mxu0 %v485
        %v909 = vpop.f32.mrb[0].mxu0
        %v910 = vadd.f32 %v361, %v909
        %v911 = vpop.f32.mrb[0].mxu0
        %v912 = vadd.f32 %v365, %v911
        %v913 = vpop.f32.mrb[0].mxu0
        %v914 = vadd.f32 %v361, %v913
        %v915 = vpop.f32.mrb[0].mxu0
        %v916 = vadd.f32 %v365, %v915
        %917 = vmatprep.mubr.bf16.mxu0 0
        %918 = vmatmul.mubr.bf16.gmra.mrb[0].mxu0 %v488
        %v919 = vpop.f32.mrb[0].mxu0
        %v920 = vadd.f32 %v361, %v919
        %v921 = vpop.f32.mrb[0].mxu0
        %v922 = vadd.f32 %v365, %v921
        %v923 = vpop.f32.mrb[0].mxu0
        %v924 = vadd.f32 %v361, %v923
        %v925 = vpop.f32.mrb[0].mxu0
        %v926 = vadd.f32 %v365, %v925
        %927 = vmatprep.mubr.bf16.mxu0 0
        %928 = vmatmul.mubr.bf16.gmra.mrb[0].mxu0 %v491
        %v929 = vpop.f32.mrb[0].mxu0
        %v930 = vadd.f32 %v361, %v929
        %v931 = vpop.f32.mrb[0].mxu0
        %v932 = vadd.f32 %v365, %v931
        %v933 = vpop.f32.mrb[0].mxu0
        %v934 = vadd.f32 %v361, %v933
        %v935 = vpop.f32.mrb[0].mxu0
        %v936 = vadd.f32 %v365, %v935
        %937 = vmatprep.mubr.bf16.mxu0 0
        %938 = vmatmul.mubr.bf16.gmra.mrb[0].mxu0 %v494
        %v939 = vpop.f32.mrb[0].mxu0
        %v940 = vadd.f32 %v361, %v939
        %v941 = vpop.f32.mrb[0].mxu0
        %v942 = vadd.f32 %v365, %v941
        %v943 = vpop.f32.mrb[0].mxu0
        %v944 = vadd.f32 %v361, %v943
        %v945 = vpop.f32.mrb[0].mxu0
        %v946 = vadd.f32 %v365, %v945
        %947 = vdwg.mxu0
        %948 = vmatprep.subr.bf16.mxu0 0
        %949 = vmatpush1.bf16.msra.mxu0 %v443
        %950 = vmatprep.subr.bf16.mxu0 0
        %951 = vmatpush1.bf16.msra.mxu0 %v452
        %952 = vmatprep.subr.bf16.mxu0 0
        %953 = vmatpush1.bf16.msra.mxu0 0
        %954 = vmatprep.subr.bf16.mxu0 0
        %955 = vmatpush1.bf16.msra.mxu0 0
        %956 = vmatprep.subr.bf16.mxu0 0
        %957 = vmatpush1.bf16.msra.mxu0 0
        %958 = vmatprep.subr.bf16.mxu0 0
        %959 = vmatpush1.bf16.msra.mxu0 0
        %960 = vmatprep.subr.bf16.mxu0 0
        %961 = vmatpush1.bf16.msra.mxu0 0
        %962 = vmatprep.subr.bf16.mxu0 0
        %963 = vmatpush1.bf16.msra.mxu0 0
        %964 = vmatprep.subr.bf16.mxu0 0
        %965 = vmatpush1.bf16.msra.mxu0 0
        %966 = vmatprep.subr.bf16.mxu0 0
        %967 = vmatpush1.bf16.msra.mxu0 0
        %968 = vmatprep.subr.bf16.mxu0 0
        %969 = vmatpush1.bf16.msra.mxu0 0
        %970 = vmatprep.subr.bf16.mxu0 0
        %971 = vmatpush1.bf16.msra.mxu0 0
        %972 = vmatprep.subr.bf16.mxu0 0
        %973 = vmatpush1.bf16.msra.mxu0 0
        %974 = vmatprep.subr.bf16.mxu0 0
        %975 = vmatpush1.bf16.msra.mxu0 0
        %976 = vmatprep.subr.bf16.mxu0 0
        %977 = vmatpush1.bf16.msra.mxu0 0
        %978 = vmatprep.subr.bf16.mxu0 0
        %979 = vmatpush1.bf16.msra.mxu0 0
        %980 = vmatprep.mubr.bf16.mxu0 0
        %981 = vmatmul.mubr.bf16.gmra.mrb[0].mxu0 %v473
        %v982 = vpop.f32.mrb[0].mxu0
        %v983 = vadd.f32 %v369, %v982
        %v984 = vpop.f32.mrb[0].mxu0
        %v985 = vpop.f32.mrb[0].mxu0
        %v986 = vadd.f32 %v369, %v985
        %v987 = vpop.f32.mrb[0].mxu0
        %988 = vmatprep.mubr.bf16.mxu0 0
        %989 = vmatmul.mubr.bf16.gmra.mrb[0].mxu0 %v476
        %v990 = vpop.f32.mrb[0].mxu0
        %v991 = vadd.f32 %v369, %v990
        %v992 = vpop.f32.mrb[0].mxu0
        %v993 = vpop.f32.mrb[0].mxu0
        %v994 = vadd.f32 %v369, %v993
        %v995 = vpop.f32.mrb[0].mxu0
        %996 = vmatprep.mubr.bf16.mxu0 0
        %997 = vmatmul.mubr.bf16.gmra.mrb[0].mxu0 %v479
        %v998 = vpop.f32.mrb[0].mxu0
        %v999 = vadd.f32 %v369, %v998
        %v1000 = vpop.f32.mrb[0].mxu0
        %v1001 = vpop.f32.mrb[0].mxu0
        %v1002 = vadd.f32 %v369, %v1001
        %v1003 = vpop.f32.mrb[0].mxu0
        %1004 = vmatprep.mubr.bf16.mxu0 0
        %1005 = vmatmul.mubr.bf16.gmra.mrb[0].mxu0 %v482
        %v1006 = vpop.f32.mrb[0].mxu0
        %v1007 = vadd.f32 %v369, %v1006
        %v1008 = vpop.f32.mrb[0].mxu0
        %v1009 = vpop.f32.mrb[0].mxu0
        %v1010 = vadd.f32 %v369, %v1009
        %v1011 = vpop.f32.mrb[0].mxu0
        %1012 = vmatprep.mubr.bf16.mxu0 0
        %1013 = vmatmul.mubr.bf16.gmra.mrb[0].mxu0 %v485
        %v1014 = vpop.f32.mrb[0].mxu0
        %v1015 = vadd.f32 %v369, %v1014
        %v1016 = vpop.f32.mrb[0].mxu0
        %v1017 = vpop.f32.mrb[0].mxu0
        %v1018 = vadd.f32 %v369, %v1017
        %v1019 = vpop.f32.mrb[0].mxu0
        %1020 = vmatprep.mubr.bf16.mxu0 0
        %1021 = vmatmul.mubr.bf16.gmra.mrb[0].mxu0 %v488
        %v1022 = vpop.f32.mrb[0].mxu0
        %v1023 = vadd.f32 %v369, %v1022
        %v1024 = vpop.f32.mrb[0].mxu0
        %v1025 = vpop.f32.mrb[0].mxu0
        %v1026 = vadd.f32 %v369, %v1025
        %v1027 = vpop.f32.mrb[0].mxu0
        %1028 = vmatprep.mubr.bf16.mxu0 0
        %1029 = vmatmul.mubr.bf16.gmra.mrb[0].mxu0 %v491
        %v1030 = vpop.f32.mrb[0].mxu0
        %v1031 = vadd.f32 %v369, %v1030
        %v1032 = vpop.f32.mrb[0].mxu0
        %v1033 = vpop.f32.mrb[0].mxu0
        %v1034 = vadd.f32 %v369, %v1033
        %v1035 = vpop.f32.mrb[0].mxu0
        %1036 = vmatprep.mubr.bf16.mxu0 0
        %1037 = vmatmul.mubr.bf16.gmra.mrb[0].mxu0 %v494
        %v1038 = vpop.f32.mrb[0].mxu0
        %v1039 = vadd.f32 %v369, %v1038
        %v1040 = vpop.f32.mrb[0].mxu0
        %v1041 = vpop.f32.mrb[0].mxu0
        %v1042 = vadd.f32 %v369, %v1041
        %v1043 = vpop.f32.mrb[0].mxu0
        %1044 = vdwg.mxu0
        %v1045 = vmax.f32 %v531, 0.0
        %v1046 = vmax.f32 %v533, 0.0
        %v1047 = vmax.f32 %v644, 0.0
        %v1048 = vmax.f32 %v646, 0.0
        %v1049 = vmax.f32 %v757, 0.0
        %v1050 = vmax.f32 %v759, 0.0
        %v1051 = vmax.f32 %v870, 0.0
        %v1052 = vmax.f32 %v872, 0.0
        %v1053 = vmax.f32 %v983, 0.0
        %v1054 = vmax.f32 %v535, 0.0
        %v1055 = vmax.f32 %v537, 0.0
        %v1056 = vmax.f32 %v648, 0.0
        %v1057 = vmax.f32 %v650, 0.0
        %v1058 = vmax.f32 %v761, 0.0
        %v1059 = vmax.f32 %v763, 0.0
        %v1060 = vmax.f32 %v874, 0.0
        %v1061 = vmax.f32 %v876, 0.0
        %v1062 = vmax.f32 %v986, 0.0
        %v1063 = vmax.f32 %v541, 0.0
        %v1064 = vmax.f32 %v543, 0.0
        %v1065 = vmax.f32 %v654, 0.0
        %v1066 = vmax.f32 %v656, 0.0
        %v1067 = vmax.f32 %v767, 0.0
        %v1068 = vmax.f32 %v769, 0.0
        %v1069 = vmax.f32 %v880, 0.0
        %v1070 = vmax.f32 %v882, 0.0
        %v1071 = vmax.f32 %v991, 0.0
        %v1072 = vmax.f32 %v545, 0.0
        %v1073 = vmax.f32 %v547, 0.0
        %v1074 = vmax.f32 %v658, 0.0
        %v1075 = vmax.f32 %v660, 0.0
        %v1076 = vmax.f32 %v771, 0.0
        %v1077 = vmax.f32 %v773, 0.0
        %v1078 = vmax.f32 %v884, 0.0
        %v1079 = vmax.f32 %v886, 0.0
        %v1080 = vmax.f32 %v994, 0.0
        %v1081 = vmax.f32 %v551, 0.0
        %v1082 = vmax.f32 %v553, 0.0
        %v1083 = vmax.f32 %v664, 0.0
        %v1084 = vmax.f32 %v666, 0.0
        %v1085 = vmax.f32 %v777, 0.0
        %v1086 = vmax.f32 %v779, 0.0
        %v1087 = vmax.f32 %v890, 0.0
        %v1088 = vmax.f32 %v892, 0.0
        %v1089 = vmax.f32 %v999, 0.0
        %v1090 = vmax.f32 %v555, 0.0
        %v1091 = vmax.f32 %v557, 0.0
        %v1092 = vmax.f32 %v668, 0.0
        %v1093 = vmax.f32 %v670, 0.0
        %v1094 = vmax.f32 %v781, 0.0
        %v1095 = vmax.f32 %v783, 0.0
        %v1096 = vmax.f32 %v894, 0.0
        %v1097 = vmax.f32 %v896, 0.0
        %v1098 = vmax.f32 %v1002, 0.0
        %v1099 = vmax.f32 %v561, 0.0
        %v1100 = vmax.f32 %v563, 0.0
        %v1101 = vmax.f32 %v674, 0.0
        %v1102 = vmax.f32 %v676, 0.0
        %v1103 = vmax.f32 %v787, 0.0
        %v1104 = vmax.f32 %v789, 0.0
        %v1105 = vmax.f32 %v900, 0.0
        %v1106 = vmax.f32 %v902, 0.0
        %v1107 = vmax.f32 %v1007, 0.0
        %v1108 = vmax.f32 %v565, 0.0
        %v1109 = vmax.f32 %v567, 0.0
        %v1110 = vmax.f32 %v678, 0.0
        %v1111 = vmax.f32 %v680, 0.0
        %v1112 = vmax.f32 %v791, 0.0
        %v1113 = vmax.f32 %v793, 0.0
        %v1114 = vmax.f32 %v904, 0.0
        %v1115 = vmax.f32 %v906, 0.0
        %v1116 = vmax.f32 %v1010, 0.0
        %v1117 = vmax.f32 %v571, 0.0
        %v1118 = vmax.f32 %v573, 0.0
        %v1119 = vmax.f32 %v684, 0.0
        %v1120 = vmax.f32 %v686, 0.0
        %v1121 = vmax.f32 %v797, 0.0
        %v1122 = vmax.f32 %v799, 0.0
        %v1123 = vmax.f32 %v910, 0.0
        %v1124 = vmax.f32 %v912, 0.0
        %v1125 = vmax.f32 %v1015, 0.0
        %v1126 = vmax.f32 %v575, 0.0
        %v1127 = vmax.f32 %v577, 0.0
        %v1128 = vmax.f32 %v688, 0.0
        %v1129 = vmax.f32 %v690, 0.0
        %v1130 = vmax.f32 %v801, 0.0
        %v1131 = vmax.f32 %v803, 0.0
        %v1132 = vmax.f32 %v914, 0.0
        %v1133 = vmax.f32 %v916, 0.0
        %v1134 = vmax.f32 %v1018, 0.0
        %v1135 = vmax.f32 %v581, 0.0
        %v1136 = vmax.f32 %v583, 0.0
        %v1137 = vmax.f32 %v694, 0.0
        %v1138 = vmax.f32 %v696, 0.0
        %v1139 = vmax.f32 %v807, 0.0
        %v1140 = vmax.f32 %v809, 0.0
        %v1141 = vmax.f32 %v920, 0.0
        %v1142 = vmax.f32 %v922, 0.0
        %v1143 = vmax.f32 %v1023, 0.0
        %v1144 = vmax.f32 %v585, 0.0
        %v1145 = vmax.f32 %v587, 0.0
        %v1146 = vmax.f32 %v698, 0.0
        %v1147 = vmax.f32 %v700, 0.0
        %v1148 = vmax.f32 %v811, 0.0
        %v1149 = vmax.f32 %v813, 0.0
        %v1150 = vmax.f32 %v924, 0.0
        %v1151 = vmax.f32 %v926, 0.0
        %v1152 = vmax.f32 %v1026, 0.0
        %v1153 = vmax.f32 %v591, 0.0
        %v1154 = vmax.f32 %v593, 0.0
        %v1155 = vmax.f32 %v704, 0.0
        %v1156 = vmax.f32 %v706, 0.0
        %v1157 = vmax.f32 %v817, 0.0
        %v1158 = vmax.f32 %v819, 0.0
        %v1159 = vmax.f32 %v930, 0.0
        %v1160 = vmax.f32 %v932, 0.0
        %v1161 = vmax.f32 %v1031, 0.0
        %v1162 = vmax.f32 %v595, 0.0
        %v1163 = vmax.f32 %v597, 0.0
        %v1164 = vmax.f32 %v708, 0.0
        %v1165 = vmax.f32 %v710, 0.0
        %v1166 = vmax.f32 %v821, 0.0
        %v1167 = vmax.f32 %v823, 0.0
        %v1168 = vmax.f32 %v934, 0.0
        %v1169 = vmax.f32 %v936, 0.0
        %v1170 = vmax.f32 %v1034, 0.0
        %v1171 = vmax.f32 %v601, 0.0
        %v1172 = vmax.f32 %v603, 0.0
        %v1173 = vmax.f32 %v714, 0.0
        %v1174 = vmax.f32 %v716, 0.0
        %v1175 = vmax.f32 %v827, 0.0
        %v1176 = vmax.f32 %v829, 0.0
        %v1177 = vmax.f32 %v940, 0.0
        %v1178 = vmax.f32 %v942, 0.0
        %v1179 = vmax.f32 %v1039, 0.0
        %v1180 = vmax.f32 %v605, 0.0
        %v1181 = vmax.f32 %v607, 0.0
        %v1182 = vmax.f32 %v718, 0.0
        %v1183 = vmax.f32 %v720, 0.0
        %v1184 = vmax.f32 %v831, 0.0
        %v1185 = vmax.f32 %v833, 0.0
        %v1186 = vmax.f32 %v944, 0.0
        %v1187 = vmax.f32 %v946, 0.0
        %v1188 = vmax.f32 %v1042, 0.0
        %v1189 = vpack.c.bf16 %v1054, %v1045
        %v1190 = vpack.c.bf16 %v1055, %v1046
        %v1191 = vpack.c.bf16 %v1056, %v1047
        %v1192 = vpack.c.bf16 %v1057, %v1048
        %v1193 = vpack.c.bf16 %v1058, %v1049
        %v1194 = vpack.c.bf16 %v1059, %v1050
        %v1195 = vpack.c.bf16 %v1060, %v1051
        %v1196 = vpack.c.bf16 %v1061, %v1052
        %v1197 = vpack.c.bf16 %v1062, %v1053
        %v1198 = vpack.c.bf16 %v1072, %v1063
        %v1199 = vpack.c.bf16 %v1073, %v1064
        %v1200 = vpack.c.bf16 %v1074, %v1065
        %v1201 = vpack.c.bf16 %v1075, %v1066
        %v1202 = vpack.c.bf16 %v1076, %v1067
        %v1203 = vpack.c.bf16 %v1077, %v1068
        %v1204 = vpack.c.bf16 %v1078, %v1069
        %v1205 = vpack.c.bf16 %v1079, %v1070
        %v1206 = vpack.c.bf16 %v1080, %v1071
        %v1207 = vpack.c.bf16 %v1090, %v1081
        %v1208 = vpack.c.bf16 %v1091, %v1082
        %v1209 = vpack.c.bf16 %v1092, %v1083
        %v1210 = vpack.c.bf16 %v1093, %v1084
        %v1211 = vpack.c.bf16 %v1094, %v1085
        %v1212 = vpack.c.bf16 %v1095, %v1086
        %v1213 = vpack.c.bf16 %v1096, %v1087
        %v1214 = vpack.c.bf16 %v1097, %v1088
        %v1215 = vpack.c.bf16 %v1098, %v1089
        %v1216 = vpack.c.bf16 %v1108, %v1099
        %v1217 = vpack.c.bf16 %v1109, %v1100
        %v1218 = vpack.c.bf16 %v1110, %v1101
        %v1219 = vpack.c.bf16 %v1111, %v1102
        %v1220 = vpack.c.bf16 %v1112, %v1103
        %v1221 = vpack.c.bf16 %v1113, %v1104
        %v1222 = vpack.c.bf16 %v1114, %v1105
        %v1223 = vpack.c.bf16 %v1115, %v1106
        %v1224 = vpack.c.bf16 %v1116, %v1107
        %v1225 = vpack.c.bf16 %v1126, %v1117
        %v1226 = vpack.c.bf16 %v1127, %v1118
        %v1227 = vpack.c.bf16 %v1128, %v1119
        %v1228 = vpack.c.bf16 %v1129, %v1120
        %v1229 = vpack.c.bf16 %v1130, %v1121
        %v1230 = vpack.c.bf16 %v1131, %v1122
        %v1231 = vpack.c.bf16 %v1132, %v1123
        %v1232 = vpack.c.bf16 %v1133, %v1124
        %v1233 = vpack.c.bf16 %v1134, %v1125
        %v1234 = vpack.c.bf16 %v1144, %v1135
        %v1235 = vpack.c.bf16 %v1145, %v1136
        %v1236 = vpack.c.bf16 %v1146, %v1137
        %v1237 = vpack.c.bf16 %v1147, %v1138
        %v1238 = vpack.c.bf16 %v1148, %v1139
        %v1239 = vpack.c.bf16 %v1149, %v1140
        %v1240 = vpack.c.bf16 %v1150, %v1141
        %v1241 = vpack.c.bf16 %v1151, %v1142
        %v1242 = vpack.c.bf16 %v1152, %v1143
        %v1243 = vpack.c.bf16 %v1162, %v1153
        %v1244 = vpack.c.bf16 %v1163, %v1154
        %v1245 = vpack.c.bf16 %v1164, %v1155
        %v1246 = vpack.c.bf16 %v1165, %v1156
        %v1247 = vpack.c.bf16 %v1166, %v1157
        %v1248 = vpack.c.bf16 %v1167, %v1158
        %v1249 = vpack.c.bf16 %v1168, %v1159
        %v1250 = vpack.c.bf16 %v1169, %v1160
        %v1251 = vpack.c.bf16 %v1170, %v1161
        %v1252 = vpack.c.bf16 %v1180, %v1171
        %v1253 = vpack.c.bf16 %v1181, %v1172
        %v1254 = vpack.c.bf16 %v1182, %v1173
        %v1255 = vpack.c.bf16 %v1183, %v1174
        %v1256 = vpack.c.bf16 %v1184, %v1175
        %v1257 = vpack.c.bf16 %v1185, %v1176
        %v1258 = vpack.c.bf16 %v1186, %v1177
        %v1259 = vpack.c.bf16 %v1187, %v1178
        %v1260 = vpack.c.bf16 %v1188, %v1179
        %v1261 = vld [vmem:[#allocation4] sm:$0xff]
        %v1262 = vld [vmem:[#allocation4 + $0x8] sm:$0xff]
        %v1263 = vld [vmem:[#allocation4 + $0x10] sm:$0xff]
        %v1264 = vld [vmem:[#allocation4 + $0x18] sm:$0xff]
        %v1265 = vld [vmem:[#allocation4 + $0x20] sm:$0xff]
        %v1266 = vld [vmem:[#allocation4 + $0x28] sm:$0xff]
        %v1267 = vld [vmem:[#allocation4 + $0x30] sm:$0xff]
        %v1268 = vld [vmem:[#allocation4 + $0x38] sm:$0xff]
        %v1269 = vld [vmem:[#allocation4 + $0x40] sm:$0xff]
        %v1270 = vld [vmem:[#allocation4 + $0x48] sm:$0xff]
        %v1271 = vld [vmem:[#allocation4 + $0x50] sm:$0xff]
        %v1272 = vld [vmem:[#allocation4 + $0x58] sm:$0xff]
        %v1273 = vld [vmem:[#allocation4 + $0x60] sm:$0xff]
        %v1274 = vld [vmem:[#allocation4 + $0x68] sm:$0xff]
        %v1275 = vld [vmem:[#allocation4 + $0x70] sm:$0xff]
        %v1276 = vld [vmem:[#allocation4 + $0x78] sm:$0xff]
        %v1277 = vld [vmem:[#allocation4 + $0x80] sm:$0xff]
        %v1278 = vld [vmem:[#allocation4 + $0x88] sm:$0xff]
        %v1279 = vld [vmem:[#allocation4 + $0x90] sm:$0xff]
        %v1280 = vld [vmem:[#allocation4 + $0x98] sm:$0xff]
        %v1281 = vld [vmem:[#allocation4 + $0xa0] sm:$0xff]
        %v1282 = vld [vmem:[#allocation4 + $0xa8] sm:$0xff]
        %v1283 = vld [vmem:[#allocation4 + $0xb0] sm:$0xff]
        %v1284 = vld [vmem:[#allocation4 + $0xb8] sm:$0xff]
        %v1285 = vld [vmem:[#allocation4 + $0xc0] sm:$0xff]
        %v1286 = vld [vmem:[#allocation4 + $0xc8] sm:$0xff]
        %v1287 = vld [vmem:[#allocation4 + $0xd0] sm:$0xff]
        %v1288 = vld [vmem:[#allocation4 + $0xd8] sm:$0xff]
        %v1289 = vld [vmem:[#allocation4 + $0xe0] sm:$0xff]
        %v1290 = vld [vmem:[#allocation4 + $0xe8] sm:$0xff]
        %v1291 = vld [vmem:[#allocation4 + $0xf0] sm:$0xff]
        %v1292 = vld [vmem:[#allocation4 + $0xf8] sm:$0xff]
        %v1293 = vld [vmem:[#allocation4 + $0x100] sm:$0xff]
        %v1294 = vld [vmem:[#allocation4 + $0x108] sm:$0xff]
        %v1295 = vld [vmem:[#allocation4 + $0x110] sm:$0xff]
        %v1296 = vld [vmem:[#allocation4 + $0x118] sm:$0xff]
        %v1297 = vld [vmem:[#allocation4 + $0x120] sm:$0xff]
        %v1298 = vld [vmem:[#allocation4 + $0x128] sm:$0xff]
        %v1299 = vld [vmem:[#allocation4 + $0x130] sm:$0xff]
        %v1300 = vld [vmem:[#allocation4 + $0x138] sm:$0xff]
        %v1301 = vld [vmem:[#allocation4 + $0x140] sm:$0xff]
        %v1302 = vld [vmem:[#allocation4 + $0x148] sm:$0xff]
        %v1303 = vld [vmem:[#allocation4 + $0x150] sm:$0xff]
        %v1304 = vld [vmem:[#allocation4 + $0x158] sm:$0xff]
        %v1305 = vld [vmem:[#allocation4 + $0x160] sm:$0xff]
        %v1306 = vld [vmem:[#allocation4 + $0x168] sm:$0xff]
        %v1307 = vld [vmem:[#allocation4 + $0x170] sm:$0xff]
        %v1308 = vld [vmem:[#allocation4 + $0x178] sm:$0xff]
        %v1309 = vld [vmem:[#allocation4 + $0x180] sm:$0xff]
        %v1310 = vld [vmem:[#allocation4 + $0x188] sm:$0xff]
        %v1311 = vld [vmem:[#allocation4 + $0x190] sm:$0xff]
        %v1312 = vld [vmem:[#allocation4 + $0x198] sm:$0xff]
        %v1313 = vld [vmem:[#allocation4 + $0x1a0] sm:$0xff]
        %v1314 = vld [vmem:[#allocation4 + $0x1a8] sm:$0xff]
        %v1315 = vld [vmem:[#allocation4 + $0x1b0] sm:$0xff]
        %v1316 = vld [vmem:[#allocation4 + $0x1b8] sm:$0xff]
        %v1317 = vld [vmem:[#allocation4 + $0x1c0] sm:$0xff]
        %v1318 = vld [vmem:[#allocation4 + $0x1c8] sm:$0xff]
        %v1319 = vld [vmem:[#allocation4 + $0x1d0] sm:$0xff]
        %v1320 = vld [vmem:[#allocation4 + $0x1d8] sm:$0xff]
        %v1321 = vld [vmem:[#allocation4 + $0x1e0] sm:$0xff]
        %v1322 = vld [vmem:[#allocation4 + $0x1e8] sm:$0xff]
        %v1323 = vld [vmem:[#allocation4 + $0x1f0] sm:$0xff]
        %v1324 = vld [vmem:[#allocation4 + $0x1f8] sm:$0xff]
        %v1325 = vld [vmem:[#allocation4 + $0x200] sm:$0xff]
        %v1326 = vld [vmem:[#allocation4 + $0x208] sm:$0xff]
        %v1327 = vld [vmem:[#allocation4 + $0x210] sm:$0xff]
        %v1328 = vld [vmem:[#allocation4 + $0x218] sm:$0xff]
        %v1329 = vld [vmem:[#allocation4 + $0x220] sm:$0xff]
        %v1330 = vld [vmem:[#allocation4 + $0x228] sm:$0xff]
        %v1331 = vld [vmem:[#allocation4 + $0x230] sm:$0xff]
        %v1332 = vld [vmem:[#allocation4 + $0x238] sm:$0xff]
        %v1333 = vld [vmem:[#allocation4 + $0x240] sm:$0xff]
        %v1334 = vld [vmem:[#allocation4 + $0x248] sm:$0xff]
        %v1335 = vld [vmem:[#allocation4 + $0x250] sm:$0xff]
        %v1336 = vld [vmem:[#allocation4 + $0x258] sm:$0xff]
        %v1337 = vld [vmem:[#allocation4 + $0x260] sm:$0xff]
        %v1338 = vld [vmem:[#allocation4 + $0x268] sm:$0xff]
        %v1339 = vld [vmem:[#allocation4 + $0x270] sm:$0xff]
        %v1340 = vld [vmem:[#allocation4 + $0x278] sm:$0xff]
        %v1341 = vld [vmem:[#allocation4 + $0x280] sm:$0xff]
        %v1342 = vld [vmem:[#allocation4 + $0x288] sm:$0xff]
        %v1343 = vld [vmem:[#allocation4 + $0x290] sm:$0xff]
        %v1344 = vld [vmem:[#allocation4 + $0x298] sm:$0xff]
        %v1345 = vld [vmem:[#allocation4 + $0x2a0] sm:$0xff]
        %v1346 = vld [vmem:[#allocation4 + $0x2a8] sm:$0xff]
        %v1347 = vld [vmem:[#allocation4 + $0x2b0] sm:$0xff]
        %v1348 = vld [vmem:[#allocation4 + $0x2b8] sm:$0xff]
        %v1349 = vld [vmem:[#allocation4 + $0x2c0] sm:$0xff]
        %v1350 = vld [vmem:[#allocation4 + $0x2c8] sm:$0xff]
        %v1351 = vld [vmem:[#allocation4 + $0x2d0] sm:$0xff]
        %v1352 = vld [vmem:[#allocation4 + $0x2d8] sm:$0xff]
        %v1353 = vld [vmem:[#allocation4 + $0x2e0] sm:$0xff]
        %v1354 = vld [vmem:[#allocation4 + $0x2e8] sm:$0xff]
        %v1355 = vld [vmem:[#allocation4 + $0x2f0] sm:$0xff]
        %v1356 = vld [vmem:[#allocation4 + $0x2f8] sm:$0xff]
        %v1357 = vld [vmem:[#allocation4 + $0x300] sm:$0xff]
        %v1358 = vld [vmem:[#allocation4 + $0x308] sm:$0xff]
        %v1359 = vld [vmem:[#allocation4 + $0x310] sm:$0xff]
        %v1360 = vld [vmem:[#allocation4 + $0x318] sm:$0xff]
        %v1361 = vld [vmem:[#allocation4 + $0x320] sm:$0xff]
        %v1362 = vld [vmem:[#allocation4 + $0x328] sm:$0xff]
        %v1363 = vld [vmem:[#allocation4 + $0x330] sm:$0xff]
        %v1364 = vld [vmem:[#allocation4 + $0x338] sm:$0xff]
        %v1365 = vld [vmem:[#allocation4 + $0x340] sm:$0xff]
        %v1366 = vld [vmem:[#allocation4 + $0x348] sm:$0xff]
        %v1367 = vld [vmem:[#allocation4 + $0x350] sm:$0xff]
        %v1368 = vld [vmem:[#allocation4 + $0x358] sm:$0xff]
        %v1369 = vld [vmem:[#allocation4 + $0x360] sm:$0xff]
        %v1370 = vld [vmem:[#allocation4 + $0x368] sm:$0xff]
        %v1371 = vld [vmem:[#allocation4 + $0x370] sm:$0xff]
        %v1372 = vld [vmem:[#allocation4 + $0x378] sm:$0xff]
        %v1373 = vld [vmem:[#allocation4 + $0x380] sm:$0xff]
        %v1374 = vld [vmem:[#allocation4 + $0x388] sm:$0xff]
        %v1375 = vld [vmem:[#allocation4 + $0x390] sm:$0xff]
        %v1376 = vld [vmem:[#allocation4 + $0x398] sm:$0xff]
        %v1377 = vld [vmem:[#allocation4 + $0x3a0] sm:$0xff]
        %v1378 = vld [vmem:[#allocation4 + $0x3a8] sm:$0xff]
        %v1379 = vld [vmem:[#allocation4 + $0x3b0] sm:$0xff]
        %v1380 = vld [vmem:[#allocation4 + $0x3b8] sm:$0xff]
        %v1381 = vld [vmem:[#allocation4 + $0x3c0] sm:$0xff]
        %v1382 = vld [vmem:[#allocation4 + $0x3c8] sm:$0xff]
        %v1383 = vld [vmem:[#allocation4 + $0x3d0] sm:$0xff]
        %v1384 = vld [vmem:[#allocation4 + $0x3d8] sm:$0xff]
        %v1385 = vld [vmem:[#allocation4 + $0x3e0] sm:$0xff]
        %v1386 = vld [vmem:[#allocation4 + $0x3e8] sm:$0xff]
        %v1387 = vld [vmem:[#allocation4 + $0x3f0] sm:$0xff]
        %v1388 = vld [vmem:[#allocation4 + $0x3f8] sm:$0xff]
        %v1389 = vld [vmem:[#allocation4 + $0x400] sm:$0xff]
        %v1390 = vld [vmem:[#allocation4 + $0x408] sm:$0xff]
        %v1391 = vld [vmem:[#allocation4 + $0x410] sm:$0xff]
        %v1392 = vld [vmem:[#allocation4 + $0x418] sm:$0xff]
        %v1393 = vld [vmem:[#allocation4 + $0x420] sm:$0xff]
        %v1394 = vld [vmem:[#allocation4 + $0x428] sm:$0xff]
        %v1395 = vld [vmem:[#allocation4 + $0x430] sm:$0xff]
        %v1396 = vld [vmem:[#allocation4 + $0x438] sm:$0xff]
        %v1397 = vld [vmem:[#allocation4 + $0x440] sm:$0xff]
        %v1398 = vld [vmem:[#allocation4 + $0x448] sm:$0xff]
        %v1399 = vld [vmem:[#allocation4 + $0x450] sm:$0xff]
        %v1400 = vld [vmem:[#allocation4 + $0x458] sm:$0xff]
        %v1401 = vld [vmem:[#allocation4 + $0x460] sm:$0xff]
        %v1402 = vld [vmem:[#allocation4 + $0x468] sm:$0xff]
        %v1403 = vld [vmem:[#allocation4 + $0x470] sm:$0xff]
        %v1404 = vld [vmem:[#allocation4 + $0x478] sm:$0xff]
        %v1405 = vld [vmem:[#allocation4 + $0x480] sm:$0xff]
        %v1406 = vld [vmem:[#allocation4 + $0x488] sm:$0xff]
        %v1407 = vld [vmem:[#allocation4 + $0x490] sm:$0xff]
        %v1408 = vld [vmem:[#allocation4 + $0x498] sm:$0xff]
        %v1409 = vld [vmem:[#allocation4 + $0x4a0] sm:$0xff]
        %v1410 = vld [vmem:[#allocation4 + $0x4a8] sm:$0xff]
        %v1411 = vld [vmem:[#allocation4 + $0x4b0] sm:$0xff]
        %v1412 = vld [vmem:[#allocation4 + $0x4b8] sm:$0xff]
        %v1413 = vld [vmem:[#allocation4 + $0x4c0] sm:$0xff]
        %v1414 = vld [vmem:[#allocation4 + $0x4c8] sm:$0xff]
        %v1415 = vld [vmem:[#allocation4 + $0x4d0] sm:$0xff]
        %v1416 = vld [vmem:[#allocation4 + $0x4d8] sm:$0xff]
        %v1417 = vld [vmem:[#allocation4 + $0x4e0] sm:$0xff]
        %v1418 = vld [vmem:[#allocation4 + $0x4e8] sm:$0xff]
        %v1419 = vld [vmem:[#allocation4 + $0x4f0] sm:$0xff]
        %v1420 = vld [vmem:[#allocation4 + $0x4f8] sm:$0xff]
        %v1421 = vld [vmem:[#allocation4 + $0x500] sm:$0xff]
        %v1422 = vld [vmem:[#allocation4 + $0x508] sm:$0xff]
        %v1423 = vld [vmem:[#allocation4 + $0x510] sm:$0xff]
        %v1424 = vld [vmem:[#allocation4 + $0x518] sm:$0xff]
        %v1425 = vld [vmem:[#allocation4 + $0x520] sm:$0xff]
        %v1426 = vld [vmem:[#allocation4 + $0x528] sm:$0xff]
        %v1427 = vld [vmem:[#allocation4 + $0x530] sm:$0xff]
        %v1428 = vld [vmem:[#allocation4 + $0x538] sm:$0xff]
        %v1429 = vld [vmem:[#allocation4 + $0x540] sm:$0xff]
        %v1430 = vld [vmem:[#allocation4 + $0x548] sm:$0xff]
        %v1431 = vld [vmem:[#allocation4 + $0x550] sm:$0xff]
        %v1432 = vld [vmem:[#allocation4 + $0x558] sm:$0xff]
        %v1433 = vld [vmem:[#allocation4 + $0x560] sm:$0xff]
        %v1434 = vld [vmem:[#allocation4 + $0x568] sm:$0xff]
        %v1435 = vld [vmem:[#allocation4 + $0x570] sm:$0xff]
        %v1436 = vld [vmem:[#allocation4 + $0x578] sm:$0xff]
        %v1437 = vld [vmem:[#allocation4 + $0x580] sm:$0xff]
        %v1438 = vld [vmem:[#allocation4 + $0x588] sm:$0xff]
        %v1439 = vld [vmem:[#allocation4 + $0x590] sm:$0xff]
        %v1440 = vld [vmem:[#allocation4 + $0x598] sm:$0xff]
        %v1441 = vld [vmem:[#allocation4 + $0x5a0] sm:$0xff]
        %v1442 = vld [vmem:[#allocation4 + $0x5a8] sm:$0xff]
        %v1443 = vld [vmem:[#allocation4 + $0x5b0] sm:$0xff]
        %v1444 = vld [vmem:[#allocation4 + $0x5b8] sm:$0xff]
        %v1445 = vld [vmem:[#allocation4 + $0x5c0] sm:$0xff]
        %v1446 = vld [vmem:[#allocation4 + $0x5c8] sm:$0xff]
        %v1447 = vld [vmem:[#allocation4 + $0x5d0] sm:$0xff]
        %v1448 = vld [vmem:[#allocation4 + $0x5d8] sm:$0xff]
        %v1449 = vld [vmem:[#allocation4 + $0x5e0] sm:$0xff]
        %v1450 = vld [vmem:[#allocation4 + $0x5e8] sm:$0xff]
        %v1451 = vld [vmem:[#allocation4 + $0x5f0] sm:$0xff]
        %v1452 = vld [vmem:[#allocation4 + $0x5f8] sm:$0xff]
        %v1453 = vld [vmem:[#allocation4 + $0x600] sm:$0xff]
        %v1454 = vld [vmem:[#allocation4 + $0x608] sm:$0xff]
        %v1455 = vld [vmem:[#allocation4 + $0x610] sm:$0xff]
        %v1456 = vld [vmem:[#allocation4 + $0x618] sm:$0xff]
        %v1457 = vld [vmem:[#allocation4 + $0x620] sm:$0xff]
        %v1458 = vld [vmem:[#allocation4 + $0x628] sm:$0xff]
        %v1459 = vld [vmem:[#allocation4 + $0x630] sm:$0xff]
        %v1460 = vld [vmem:[#allocation4 + $0x638] sm:$0xff]
        %v1461 = vld [vmem:[#allocation4 + $0x640] sm:$0xff]
        %v1462 = vld [vmem:[#allocation4 + $0x648] sm:$0xff]
        %v1463 = vld [vmem:[#allocation4 + $0x650] sm:$0xff]
        %v1464 = vld [vmem:[#allocation4 + $0x658] sm:$0xff]
        %v1465 = vld [vmem:[#allocation4 + $0x660] sm:$0xff]
        %v1466 = vld [vmem:[#allocation4 + $0x668] sm:$0xff]
        %v1467 = vld [vmem:[#allocation4 + $0x670] sm:$0xff]
        %v1468 = vld [vmem:[#allocation4 + $0x678] sm:$0xff]
        %v1469 = vld [vmem:[#allocation4 + $0x680] sm:$0xff]
        %v1470 = vld [vmem:[#allocation4 + $0x688] sm:$0xff]
        %v1471 = vld [vmem:[#allocation4 + $0x690] sm:$0xff]
        %v1472 = vld [vmem:[#allocation4 + $0x698] sm:$0xff]
        %v1473 = vld [vmem:[#allocation4 + $0x6a0] sm:$0xff]
        %v1474 = vld [vmem:[#allocation4 + $0x6a8] sm:$0xff]
        %v1475 = vld [vmem:[#allocation4 + $0x6b0] sm:$0xff]
        %v1476 = vld [vmem:[#allocation4 + $0x6b8] sm:$0xff]
        %v1477 = vld [vmem:[#allocation4 + $0x6c0] sm:$0xff]
        %v1478 = vld [vmem:[#allocation4 + $0x6c8] sm:$0xff]
        %v1479 = vld [vmem:[#allocation4 + $0x6d0] sm:$0xff]
        %v1480 = vld [vmem:[#allocation4 + $0x6d8] sm:$0xff]
        %v1481 = vld [vmem:[#allocation4 + $0x6e0] sm:$0xff]
        %v1482 = vld [vmem:[#allocation4 + $0x6e8] sm:$0xff]
        %v1483 = vld [vmem:[#allocation4 + $0x6f0] sm:$0xff]
        %v1484 = vld [vmem:[#allocation4 + $0x6f8] sm:$0xff]
        %v1485 = vld [vmem:[#allocation4 + $0x700] sm:$0xff]
        %v1486 = vld [vmem:[#allocation4 + $0x708] sm:$0xff]
        %v1487 = vld [vmem:[#allocation4 + $0x710] sm:$0xff]
        %v1488 = vld [vmem:[#allocation4 + $0x718] sm:$0xff]
        %v1489 = vld [vmem:[#allocation4 + $0x720] sm:$0xff]
        %v1490 = vld [vmem:[#allocation4 + $0x728] sm:$0xff]
        %v1491 = vld [vmem:[#allocation4 + $0x730] sm:$0xff]
        %v1492 = vld [vmem:[#allocation4 + $0x738] sm:$0xff]
        %v1493 = vld [vmem:[#allocation4 + $0x740] sm:$0xff]
        %v1494 = vld [vmem:[#allocation4 + $0x748] sm:$0xff]
        %v1495 = vld [vmem:[#allocation4 + $0x750] sm:$0xff]
        %v1496 = vld [vmem:[#allocation4 + $0x758] sm:$0xff]
        %v1497 = vld [vmem:[#allocation4 + $0x760] sm:$0xff]
        %v1498 = vld [vmem:[#allocation4 + $0x768] sm:$0xff]
        %v1499 = vld [vmem:[#allocation4 + $0x770] sm:$0xff]
        %v1500 = vld [vmem:[#allocation4 + $0x778] sm:$0xff]
        %v1501 = vld [vmem:[#allocation4 + $0x780] sm:$0xff]
        %v1502 = vld [vmem:[#allocation4 + $0x788] sm:$0xff]
        %v1503 = vld [vmem:[#allocation4 + $0x790] sm:$0xff]
        %v1504 = vld [vmem:[#allocation4 + $0x798] sm:$0xff]
        %v1505 = vld [vmem:[#allocation4 + $0x7a0] sm:$0xff]
        %v1506 = vld [vmem:[#allocation4 + $0x7a8] sm:$0xff]
        %v1507 = vld [vmem:[#allocation4 + $0x7b0] sm:$0xff]
        %v1508 = vld [vmem:[#allocation4 + $0x7b8] sm:$0xff]
        %v1509 = vld [vmem:[#allocation4 + $0x7c0] sm:$0xff]
        %v1510 = vld [vmem:[#allocation4 + $0x7c8] sm:$0xff]
        %v1511 = vld [vmem:[#allocation4 + $0x7d0] sm:$0xff]
        %v1512 = vld [vmem:[#allocation4 + $0x7d8] sm:$0xff]
        %v1513 = vld [vmem:[#allocation4 + $0x7e0] sm:$0xff]
        %v1514 = vld [vmem:[#allocation4 + $0x7e8] sm:$0xff]
        %v1515 = vld [vmem:[#allocation4 + $0x7f0] sm:$0xff]
        %v1516 = vld [vmem:[#allocation4 + $0x7f8] sm:$0xff]
        %v1517 = vld [vmem:[#allocation4 + $0x800] sm:$0xff]
        %v1518 = vld [vmem:[#allocation4 + $0x808] sm:$0xff]
        %v1519 = vld [vmem:[#allocation4 + $0x810] sm:$0xff]
        %v1520 = vld [vmem:[#allocation4 + $0x818] sm:$0xff]
        %v1521 = vld [vmem:[#allocation4 + $0x820] sm:$0xff]
        %v1522 = vld [vmem:[#allocation4 + $0x828] sm:$0xff]
        %v1523 = vld [vmem:[#allocation4 + $0x830] sm:$0xff]
        %v1524 = vld [vmem:[#allocation4 + $0x838] sm:$0xff]
        %v1525 = vld [vmem:[#allocation4 + $0x840] sm:$0xff]
        %v1526 = vld [vmem:[#allocation4 + $0x848] sm:$0xff]
        %v1527 = vld [vmem:[#allocation4 + $0x850] sm:$0xff]
        %v1528 = vld [vmem:[#allocation4 + $0x858] sm:$0xff]
        %v1529 = vld [vmem:[#allocation4 + $0x860] sm:$0xff]
        %v1530 = vld [vmem:[#allocation4 + $0x868] sm:$0xff]
        %v1531 = vld [vmem:[#allocation4 + $0x870] sm:$0xff]
        %v1532 = vld [vmem:[#allocation4 + $0x878] sm:$0xff]
        %v1533 = vld [vmem:[#allocation4 + $0x880] sm:$0xff]
        %v1534 = vld [vmem:[#allocation4 + $0x888] sm:$0xff]
        %v1535 = vld [vmem:[#allocation4 + $0x890] sm:$0xff]
        %v1536 = vld [vmem:[#allocation4 + $0x898] sm:$0xff]
        %v1537 = vld [vmem:[#allocation4 + $0x8a0] sm:$0xff]
        %v1538 = vld [vmem:[#allocation4 + $0x8a8] sm:$0xff]
        %v1539 = vld [vmem:[#allocation4 + $0x8b0] sm:$0xff]
        %v1540 = vld [vmem:[#allocation4 + $0x8b8] sm:$0xff]
        %v1541 = vld [vmem:[#allocation4 + $0x8c0] sm:$0xff]
        %v1542 = vld [vmem:[#allocation4 + $0x8c8] sm:$0xff]
        %v1543 = vld [vmem:[#allocation4 + $0x8d0] sm:$0xff]
        %v1544 = vld [vmem:[#allocation4 + $0x8d8] sm:$0xff]
        %v1545 = vld [vmem:[#allocation4 + $0x8e0] sm:$0xff]
        %v1546 = vld [vmem:[#allocation4 + $0x8e8] sm:$0xff]
        %v1547 = vld [vmem:[#allocation4 + $0x8f0] sm:$0xff]
        %v1548 = vld [vmem:[#allocation4 + $0x8f8] sm:$0xff]
        %v1549 = vld [vmem:[#allocation4 + $0x900] sm:$0xff]
        %v1550 = vld [vmem:[#allocation4 + $0x908] sm:$0xff]
        %v1551 = vld [vmem:[#allocation4 + $0x910] sm:$0xff]
        %v1552 = vld [vmem:[#allocation4 + $0x918] sm:$0xff]
        %v1553 = vld [vmem:[#allocation4 + $0x920] sm:$0xff]
        %v1554 = vld [vmem:[#allocation4 + $0x928] sm:$0xff]
        %v1555 = vld [vmem:[#allocation4 + $0x930] sm:$0xff]
        %v1556 = vld [vmem:[#allocation4 + $0x938] sm:$0xff]
        %v1557 = vld [vmem:[#allocation4 + $0x940] sm:$0xff]
        %v1558 = vld [vmem:[#allocation4 + $0x948] sm:$0xff]
        %v1559 = vld [vmem:[#allocation4 + $0x950] sm:$0xff]
        %v1560 = vld [vmem:[#allocation4 + $0x958] sm:$0xff]
        %v1561 = vld [vmem:[#allocation4 + $0x960] sm:$0xff]
        %v1562 = vld [vmem:[#allocation4 + $0x968] sm:$0xff]
        %v1563 = vld [vmem:[#allocation4 + $0x970] sm:$0xff]
        %v1564 = vld [vmem:[#allocation4 + $0x978] sm:$0xff]
        %v1565 = vld [vmem:[#allocation4 + $0x980] sm:$0xff]
        %v1566 = vld [vmem:[#allocation4 + $0x988] sm:$0xff]
        %v1567 = vld [vmem:[#allocation4 + $0x990] sm:$0xff]
        %v1568 = vld [vmem:[#allocation4 + $0x998] sm:$0xff]
        %v1569 = vld [vmem:[#allocation4 + $0x9a0] sm:$0xff]
        %v1570 = vld [vmem:[#allocation4 + $0x9a8] sm:$0xff]
        %v1571 = vld [vmem:[#allocation4 + $0x9b0] sm:$0xff]
        %v1572 = vld [vmem:[#allocation4 + $0x9b8] sm:$0xff]
        %v1573 = vld [vmem:[#allocation4 + $0x9c0] sm:$0xff]
        %v1574 = vld [vmem:[#allocation4 + $0x9c8] sm:$0xff]
        %v1575 = vld [vmem:[#allocation4 + $0x9d0] sm:$0xff]
        %v1576 = vld [vmem:[#allocation4 + $0x9d8] sm:$0xff]
        %v1577 = vld [vmem:[#allocation4 + $0x9e0] sm:$0xff]
        %v1578 = vld [vmem:[#allocation4 + $0x9e8] sm:$0xff]
        %v1579 = vld [vmem:[#allocation4 + $0x9f0] sm:$0xff]
        %v1580 = vld [vmem:[#allocation4 + $0x9f8] sm:$0xff]
        %v1581 = vld [vmem:[#allocation4 + $0xa00] sm:$0xff]
        %v1582 = vld [vmem:[#allocation4 + $0xa08] sm:$0xff]
        %v1583 = vld [vmem:[#allocation4 + $0xa10] sm:$0xff]
        %v1584 = vld [vmem:[#allocation4 + $0xa18] sm:$0xff]
        %v1585 = vld [vmem:[#allocation4 + $0xa20] sm:$0xff]
        %v1586 = vld [vmem:[#allocation4 + $0xa28] sm:$0xff]
        %v1587 = vld [vmem:[#allocation4 + $0xa30] sm:$0xff]
        %v1588 = vld [vmem:[#allocation4 + $0xa38] sm:$0xff]
        %v1589 = vld [vmem:[#allocation4 + $0xa40] sm:$0xff]
        %v1590 = vld [vmem:[#allocation4 + $0xa48] sm:$0xff]
        %v1591 = vld [vmem:[#allocation4 + $0xa50] sm:$0xff]
        %v1592 = vld [vmem:[#allocation4 + $0xa58] sm:$0xff]
        %v1593 = vld [vmem:[#allocation4 + $0xa60] sm:$0xff]
        %v1594 = vld [vmem:[#allocation4 + $0xa68] sm:$0xff]
        %v1595 = vld [vmem:[#allocation4 + $0xa70] sm:$0xff]
        %v1596 = vld [vmem:[#allocation4 + $0xa78] sm:$0xff]
        %v1597 = vld [vmem:[#allocation4 + $0xa80] sm:$0xff]
        %v1598 = vld [vmem:[#allocation4 + $0xa88] sm:$0xff]
        %v1599 = vld [vmem:[#allocation4 + $0xa90] sm:$0xff]
        %v1600 = vld [vmem:[#allocation4 + $0xa98] sm:$0xff]
        %v1601 = vld [vmem:[#allocation4 + $0xaa0] sm:$0xff]
        %v1602 = vld [vmem:[#allocation4 + $0xaa8] sm:$0xff]
        %v1603 = vld [vmem:[#allocation4 + $0xab0] sm:$0xff]
        %v1604 = vld [vmem:[#allocation4 + $0xab8] sm:$0xff]
        %v1605 = vld [vmem:[#allocation4 + $0xac0] sm:$0xff]
        %v1606 = vld [vmem:[#allocation4 + $0xac8] sm:$0xff]
        %v1607 = vld [vmem:[#allocation4 + $0xad0] sm:$0xff]
        %v1608 = vld [vmem:[#allocation4 + $0xad8] sm:$0xff]
        %v1609 = vld [vmem:[#allocation4 + $0xae0] sm:$0xff]
        %v1610 = vld [vmem:[#allocation4 + $0xae8] sm:$0xff]
        %v1611 = vld [vmem:[#allocation4 + $0xaf0] sm:$0xff]
        %v1612 = vld [vmem:[#allocation4 + $0xaf8] sm:$0xff]
        %v1613 = vld [vmem:[#allocation4 + $0xb00] sm:$0xff]
        %v1614 = vld [vmem:[#allocation4 + $0xb08] sm:$0xff]
        %v1615 = vld [vmem:[#allocation4 + $0xb10] sm:$0xff]
        %v1616 = vld [vmem:[#allocation4 + $0xb18] sm:$0xff]
        %v1617 = vld [vmem:[#allocation4 + $0xb20] sm:$0xff]
        %v1618 = vld [vmem:[#allocation4 + $0xb28] sm:$0xff]
        %v1619 = vld [vmem:[#allocation4 + $0xb30] sm:$0xff]
        %v1620 = vld [vmem:[#allocation4 + $0xb38] sm:$0xff]
        %v1621 = vld [vmem:[#allocation4 + $0xb40] sm:$0xff]
        %v1622 = vld [vmem:[#allocation4 + $0xb48] sm:$0xff]
        %v1623 = vld [vmem:[#allocation4 + $0xb50] sm:$0xff]
        %v1624 = vld [vmem:[#allocation4 + $0xb58] sm:$0xff]
        %v1625 = vld [vmem:[#allocation4 + $0xb60] sm:$0xff]
        %v1626 = vld [vmem:[#allocation4 + $0xb68] sm:$0xff]
        %v1627 = vld [vmem:[#allocation4 + $0xb70] sm:$0xff]
        %v1628 = vld [vmem:[#allocation4 + $0xb78] sm:$0xff]
        %v1629 = vld [vmem:[#allocation4 + $0xb80] sm:$0xff]
        %v1630 = vld [vmem:[#allocation4 + $0xb88] sm:$0xff]
        %v1631 = vld [vmem:[#allocation4 + $0xb90] sm:$0xff]
        %v1632 = vld [vmem:[#allocation4 + $0xb98] sm:$0xff]
        %v1633 = vld [vmem:[#allocation4 + $0xba0] sm:$0xff]
        %v1634 = vld [vmem:[#allocation4 + $0xba8] sm:$0xff]
        %v1635 = vld [vmem:[#allocation4 + $0xbb0] sm:$0xff]
        %v1636 = vld [vmem:[#allocation4 + $0xbb8] sm:$0xff]
        %v1637 = vld [vmem:[#allocation4 + $0xbc0] sm:$0xff]
        %v1638 = vld [vmem:[#allocation4 + $0xbc8] sm:$0xff]
        %v1639 = vld [vmem:[#allocation4 + $0xbd0] sm:$0xff]
        %v1640 = vld [vmem:[#allocation4 + $0xbd8] sm:$0xff]
        %v1641 = vld [vmem:[#allocation4 + $0xbe0] sm:$0xff]
        %v1642 = vld [vmem:[#allocation4 + $0xbe8] sm:$0xff]
        %v1643 = vld [vmem:[#allocation4 + $0xbf0] sm:$0xff]
        %v1644 = vld [vmem:[#allocation4 + $0xbf8] sm:$0xff]
        %v1645 = vld [vmem:[#allocation4 + $0xc00] sm:$0xff]
        %v1646 = vld [vmem:[#allocation4 + $0xc08] sm:$0xff]
        %v1647 = vld [vmem:[#allocation4 + $0xc10] sm:$0xff]
        %v1648 = vld [vmem:[#allocation4 + $0xc18] sm:$0xff]
        %v1649 = vld [vmem:[#allocation4 + $0xc20] sm:$0xff]
        %v1650 = vld [vmem:[#allocation4 + $0xc28] sm:$0xff]
        %v1651 = vld [vmem:[#allocation4 + $0xc30] sm:$0xff]
        %v1652 = vld [vmem:[#allocation4 + $0xc38] sm:$0xff]
        %v1653 = vld [vmem:[#allocation4 + $0xc40] sm:$0xff]
        %v1654 = vld [vmem:[#allocation4 + $0xc48] sm:$0xff]
        %v1655 = vld [vmem:[#allocation4 + $0xc50] sm:$0xff]
        %v1656 = vld [vmem:[#allocation4 + $0xc58] sm:$0xff]
        %v1657 = vld [vmem:[#allocation4 + $0xc60] sm:$0xff]
        %v1658 = vld [vmem:[#allocation4 + $0xc68] sm:$0xff]
        %v1659 = vld [vmem:[#allocation4 + $0xc70] sm:$0xff]
        %v1660 = vld [vmem:[#allocation4 + $0xc78] sm:$0xff]
        %v1661 = vld [vmem:[#allocation4 + $0xc80] sm:$0xff]
        %v1662 = vld [vmem:[#allocation4 + $0xc88] sm:$0xff]
        %v1663 = vld [vmem:[#allocation4 + $0xc90] sm:$0xff]
        %v1664 = vld [vmem:[#allocation4 + $0xc98] sm:$0xff]
        %v1665 = vld [vmem:[#allocation4 + $0xca0] sm:$0xff]
        %v1666 = vld [vmem:[#allocation4 + $0xca8] sm:$0xff]
        %v1667 = vld [vmem:[#allocation4 + $0xcb0] sm:$0xff]
        %v1668 = vld [vmem:[#allocation4 + $0xcb8] sm:$0xff]
        %v1669 = vld [vmem:[#allocation4 + $0xcc0] sm:$0xff]
        %v1670 = vld [vmem:[#allocation4 + $0xcc8] sm:$0xff]
        %v1671 = vld [vmem:[#allocation4 + $0xcd0] sm:$0xff]
        %v1672 = vld [vmem:[#allocation4 + $0xcd8] sm:$0xff]
        %v1673 = vld [vmem:[#allocation4 + $0xce0] sm:$0xff]
        %v1674 = vld [vmem:[#allocation4 + $0xce8] sm:$0xff]
        %v1675 = vld [vmem:[#allocation4 + $0xcf0] sm:$0xff]
        %v1676 = vld [vmem:[#allocation4 + $0xcf8] sm:$0xff]
        %v1677 = vld [vmem:[#allocation4 + $0xd00] sm:$0xff]
        %v1678 = vld [vmem:[#allocation4 + $0xd08] sm:$0xff]
        %v1679 = vld [vmem:[#allocation4 + $0xd10] sm:$0xff]
        %v1680 = vld [vmem:[#allocation4 + $0xd18] sm:$0xff]
        %v1681 = vld [vmem:[#allocation4 + $0xd20] sm:$0xff]
        %v1682 = vld [vmem:[#allocation4 + $0xd28] sm:$0xff]
        %v1683 = vld [vmem:[#allocation4 + $0xd30] sm:$0xff]
        %v1684 = vld [vmem:[#allocation4 + $0xd38] sm:$0xff]
        %v1685 = vld [vmem:[#allocation4 + $0xd40] sm:$0xff]
        %v1686 = vld [vmem:[#allocation4 + $0xd48] sm:$0xff]
        %v1687 = vld [vmem:[#allocation4 + $0xd50] sm:$0xff]
        %v1688 = vld [vmem:[#allocation4 + $0xd58] sm:$0xff]
        %v1689 = vld [vmem:[#allocation4 + $0xd60] sm:$0xff]
        %v1690 = vld [vmem:[#allocation4 + $0xd68] sm:$0xff]
        %v1691 = vld [vmem:[#allocation4 + $0xd70] sm:$0xff]
        %v1692 = vld [vmem:[#allocation4 + $0xd78] sm:$0xff]
        %v1693 = vld [vmem:[#allocation4 + $0xd80] sm:$0xff]
        %v1694 = vld [vmem:[#allocation4 + $0xd88] sm:$0xff]
        %v1695 = vld [vmem:[#allocation4 + $0xd90] sm:$0xff]
        %v1696 = vld [vmem:[#allocation4 + $0xd98] sm:$0xff]
        %v1697 = vld [vmem:[#allocation4 + $0xda0] sm:$0xff]
        %v1698 = vld [vmem:[#allocation4 + $0xda8] sm:$0xff]
        %v1699 = vld [vmem:[#allocation4 + $0xdb0] sm:$0xff]
        %v1700 = vld [vmem:[#allocation4 + $0xdb8] sm:$0xff]
        %v1701 = vld [vmem:[#allocation4 + $0xdc0] sm:$0xff]
        %v1702 = vld [vmem:[#allocation4 + $0xdc8] sm:$0xff]
        %v1703 = vld [vmem:[#allocation4 + $0xdd0] sm:$0xff]
        %v1704 = vld [vmem:[#allocation4 + $0xdd8] sm:$0xff]
        %v1705 = vld [vmem:[#allocation4 + $0xde0] sm:$0xff]
        %v1706 = vld [vmem:[#allocation4 + $0xde8] sm:$0xff]
        %v1707 = vld [vmem:[#allocation4 + $0xdf0] sm:$0xff]
        %v1708 = vld [vmem:[#allocation4 + $0xdf8] sm:$0xff]
        %v1709 = vld [vmem:[#allocation4 + $0xe00] sm:$0xff]
        %v1710 = vld [vmem:[#allocation4 + $0xe08] sm:$0xff]
        %v1711 = vld [vmem:[#allocation4 + $0xe10] sm:$0xff]
        %v1712 = vld [vmem:[#allocation4 + $0xe18] sm:$0xff]
        %v1713 = vld [vmem:[#allocation4 + $0xe20] sm:$0xff]
        %v1714 = vld [vmem:[#allocation4 + $0xe28] sm:$0xff]
        %v1715 = vld [vmem:[#allocation4 + $0xe30] sm:$0xff]
        %v1716 = vld [vmem:[#allocation4 + $0xe38] sm:$0xff]
        %v1717 = vld [vmem:[#allocation4 + $0xe40] sm:$0xff]
        %v1718 = vld [vmem:[#allocation4 + $0xe48] sm:$0xff]
        %v1719 = vld [vmem:[#allocation4 + $0xe50] sm:$0xff]
        %v1720 = vld [vmem:[#allocation4 + $0xe58] sm:$0xff]
        %v1721 = vld [vmem:[#allocation4 + $0xe60] sm:$0xff]
        %v1722 = vld [vmem:[#allocation4 + $0xe68] sm:$0xff]
        %v1723 = vld [vmem:[#allocation4 + $0xe70] sm:$0xff]
        %v1724 = vld [vmem:[#allocation4 + $0xe78] sm:$0xff]
        %v1725 = vld [vmem:[#allocation4 + $0xe80] sm:$0xff]
        %v1726 = vld [vmem:[#allocation4 + $0xe88] sm:$0xff]
        %v1727 = vld [vmem:[#allocation4 + $0xe90] sm:$0xff]
        %v1728 = vld [vmem:[#allocation4 + $0xe98] sm:$0xff]
        %v1729 = vld [vmem:[#allocation4 + $0xea0] sm:$0xff]
        %v1730 = vld [vmem:[#allocation4 + $0xea8] sm:$0xff]
        %v1731 = vld [vmem:[#allocation4 + $0xeb0] sm:$0xff]
        %v1732 = vld [vmem:[#allocation4 + $0xeb8] sm:$0xff]
        %v1733 = vld [vmem:[#allocation4 + $0xec0] sm:$0xff]
        %v1734 = vld [vmem:[#allocation4 + $0xec8] sm:$0xff]
        %v1735 = vld [vmem:[#allocation4 + $0xed0] sm:$0xff]
        %v1736 = vld [vmem:[#allocation4 + $0xed8] sm:$0xff]
        %v1737 = vld [vmem:[#allocation4 + $0xee0] sm:$0xff]
        %v1738 = vld [vmem:[#allocation4 + $0xee8] sm:$0xff]
        %v1739 = vld [vmem:[#allocation4 + $0xef0] sm:$0xff]
        %v1740 = vld [vmem:[#allocation4 + $0xef8] sm:$0xff]
        %v1741 = vld [vmem:[#allocation4 + $0xf00] sm:$0xff]
        %v1742 = vld [vmem:[#allocation4 + $0xf08] sm:$0xff]
        %v1743 = vld [vmem:[#allocation4 + $0xf10] sm:$0xff]
        %v1744 = vld [vmem:[#allocation4 + $0xf18] sm:$0xff]
        %v1745 = vld [vmem:[#allocation4 + $0xf20] sm:$0xff]
        %v1746 = vld [vmem:[#allocation4 + $0xf28] sm:$0xff]
        %v1747 = vld [vmem:[#allocation4 + $0xf30] sm:$0xff]
        %v1748 = vld [vmem:[#allocation4 + $0xf38] sm:$0xff]
        %v1749 = vld [vmem:[#allocation4 + $0xf40] sm:$0xff]
        %v1750 = vld [vmem:[#allocation4 + $0xf48] sm:$0xff]
        %v1751 = vld [vmem:[#allocation4 + $0xf50] sm:$0xff]
        %v1752 = vld [vmem:[#allocation4 + $0xf58] sm:$0xff]
        %v1753 = vld [vmem:[#allocation4 + $0xf60] sm:$0xff]
        %v1754 = vld [vmem:[#allocation4 + $0xf68] sm:$0xff]
        %v1755 = vld [vmem:[#allocation4 + $0xf70] sm:$0xff]
        %v1756 = vld [vmem:[#allocation4 + $0xf78] sm:$0xff]
        %v1757 = vld [vmem:[#allocation4 + $0xf80] sm:$0xff]
        %v1758 = vld [vmem:[#allocation4 + $0xf88] sm:$0xff]
        %v1759 = vld [vmem:[#allocation4 + $0xf90] sm:$0xff]
        %v1760 = vld [vmem:[#allocation4 + $0xf98] sm:$0xff]
        %v1761 = vld [vmem:[#allocation4 + $0xfa0] sm:$0xff]
        %v1762 = vld [vmem:[#allocation4 + $0xfa8] sm:$0xff]
        %v1763 = vld [vmem:[#allocation4 + $0xfb0] sm:$0xff]
        %v1764 = vld [vmem:[#allocation4 + $0xfb8] sm:$0xff]
        %v1765 = vld [vmem:[#allocation4 + $0xfc0] sm:$0xff]
        %v1766 = vld [vmem:[#allocation4 + $0xfc8] sm:$0xff]
        %v1767 = vld [vmem:[#allocation4 + $0xfd0] sm:$0xff]
        %v1768 = vld [vmem:[#allocation4 + $0xfd8] sm:$0xff]
        %v1769 = vld [vmem:[#allocation4 + $0xfe0] sm:$0xff]
        %v1770 = vld [vmem:[#allocation4 + $0xfe8] sm:$0xff]
        %v1771 = vld [vmem:[#allocation4 + $0xff0] sm:$0xff]
        %v1772 = vld [vmem:[#allocation4 + $0xff8] sm:$0xff]
        %v1773 = vld [vmem:[#allocation4 + $0x1000] sm:$0xff]
        %v1774 = vld [vmem:[#allocation4 + $0x1008] sm:$0xff]
        %v1775 = vld [vmem:[#allocation4 + $0x1010] sm:$0xff]
        %v1776 = vld [vmem:[#allocation4 + $0x1018] sm:$0xff]
        %v1777 = vld [vmem:[#allocation4 + $0x1020] sm:$0xff]
        %v1778 = vld [vmem:[#allocation4 + $0x1028] sm:$0xff]
        %v1779 = vld [vmem:[#allocation4 + $0x1030] sm:$0xff]
        %v1780 = vld [vmem:[#allocation4 + $0x1038] sm:$0xff]
        %v1781 = vld [vmem:[#allocation4 + $0x1040] sm:$0xff]
        %v1782 = vld [vmem:[#allocation4 + $0x1048] sm:$0xff]
        %v1783 = vld [vmem:[#allocation4 + $0x1050] sm:$0xff]
        %v1784 = vld [vmem:[#allocation4 + $0x1058] sm:$0xff]
        %v1785 = vld [vmem:[#allocation4 + $0x1060] sm:$0xff]
        %v1786 = vld [vmem:[#allocation4 + $0x1068] sm:$0xff]
        %v1787 = vld [vmem:[#allocation4 + $0x1070] sm:$0xff]
        %v1788 = vld [vmem:[#allocation4 + $0x1078] sm:$0xff]
        %v1789 = vld [vmem:[#allocation4 + $0x1080] sm:$0xff]
        %v1790 = vld [vmem:[#allocation4 + $0x1088] sm:$0xff]
        %v1791 = vld [vmem:[#allocation4 + $0x1090] sm:$0xff]
        %v1792 = vld [vmem:[#allocation4 + $0x1098] sm:$0xff]
        %v1793 = vld [vmem:[#allocation4 + $0x10a0] sm:$0xff]
        %v1794 = vld [vmem:[#allocation4 + $0x10a8] sm:$0xff]
        %v1795 = vld [vmem:[#allocation4 + $0x10b0] sm:$0xff]
        %v1796 = vld [vmem:[#allocation4 + $0x10b8] sm:$0xff]
        %v1797 = vld [vmem:[#allocation4 + $0x10c0] sm:$0xff]
        %v1798 = vld [vmem:[#allocation4 + $0x10c8] sm:$0xff]
        %v1799 = vld [vmem:[#allocation4 + $0x10d0] sm:$0xff]
        %v1800 = vld [vmem:[#allocation4 + $0x10d8] sm:$0xff]
        %v1801 = vld [vmem:[#allocation4 + $0x10e0] sm:$0xff]
        %v1802 = vld [vmem:[#allocation4 + $0x10e8] sm:$0xff]
        %v1803 = vld [vmem:[#allocation4 + $0x10f0] sm:$0xff]
        %v1804 = vld [vmem:[#allocation4 + $0x10f8] sm:$0xff]
        %v1805 = vld [vmem:[#allocation4 + $0x1100] sm:$0xff]
        %v1806 = vld [vmem:[#allocation4 + $0x1108] sm:$0xff]
        %v1807 = vld [vmem:[#allocation4 + $0x1110] sm:$0xff]
        %v1808 = vld [vmem:[#allocation4 + $0x1118] sm:$0xff]
        %v1809 = vld [vmem:[#allocation4 + $0x1120] sm:$0xff]
        %v1810 = vld [vmem:[#allocation4 + $0x1128] sm:$0xff]
        %v1811 = vld [vmem:[#allocation4 + $0x1130] sm:$0xff]
        %v1812 = vld [vmem:[#allocation4 + $0x1138] sm:$0xff]
        %v1813 = vld [vmem:[#allocation4 + $0x1140] sm:$0xff]
        %v1814 = vld [vmem:[#allocation4 + $0x1148] sm:$0xff]
        %v1815 = vld [vmem:[#allocation4 + $0x1150] sm:$0xff]
        %v1816 = vld [vmem:[#allocation4 + $0x1158] sm:$0xff]
        %v1817 = vld [vmem:[#allocation4 + $0x1160] sm:$0xff]
        %v1818 = vld [vmem:[#allocation4 + $0x1168] sm:$0xff]
        %v1819 = vld [vmem:[#allocation4 + $0x1170] sm:$0xff]
        %v1820 = vld [vmem:[#allocation4 + $0x1178] sm:$0xff]
        %v1821 = vld [vmem:[#allocation4 + $0x1180] sm:$0xff]
        %v1822 = vld [vmem:[#allocation4 + $0x1188] sm:$0xff]
        %v1823 = vld [vmem:[#allocation4 + $0x1190] sm:$0xff]
        %v1824 = vld [vmem:[#allocation4 + $0x1198] sm:$0xff]
        %v1825 = vld [vmem:[#allocation4 + $0x11a0] sm:$0xff]
        %v1826 = vld [vmem:[#allocation4 + $0x11a8] sm:$0xff]
        %v1827 = vld [vmem:[#allocation4 + $0x11b0] sm:$0xff]
        %v1828 = vld [vmem:[#allocation4 + $0x11b8] sm:$0xff]
        %v1829 = vld [vmem:[#allocation4 + $0x11c0] sm:$0xff]
        %v1830 = vld [vmem:[#allocation4 + $0x11c8] sm:$0xff]
        %v1831 = vld [vmem:[#allocation4 + $0x11d0] sm:$0xff]
        %v1832 = vld [vmem:[#allocation4 + $0x11d8] sm:$0xff]
        %v1833 = vld [vmem:[#allocation4 + $0x11e0] sm:$0xff]
        %v1834 = vld [vmem:[#allocation4 + $0x11e8] sm:$0xff]
        %v1835 = vld [vmem:[#allocation4 + $0x11f0] sm:$0xff]
        %v1836 = vld [vmem:[#allocation4 + $0x11f8] sm:$0xff]
        %v1837 = vld [vmem:[#allocation4 + $0x1200] sm:$0xff]
        %v1838 = vld [vmem:[#allocation4 + $0x1208] sm:$0xff]
        %v1839 = vld [vmem:[#allocation4 + $0x1210] sm:$0xff]
        %v1840 = vld [vmem:[#allocation4 + $0x1218] sm:$0xff]
        %v1841 = vld [vmem:[#allocation4 + $0x1220] sm:$0xff]
        %v1842 = vld [vmem:[#allocation4 + $0x1228] sm:$0xff]
        %v1843 = vld [vmem:[#allocation4 + $0x1230] sm:$0xff]
        %v1844 = vld [vmem:[#allocation4 + $0x1238] sm:$0xff]
        %v1845 = vld [vmem:[#allocation4 + $0x1240] sm:$0xff]
        %v1846 = vld [vmem:[#allocation4 + $0x1248] sm:$0xff]
        %v1847 = vld [vmem:[#allocation4 + $0x1250] sm:$0xff]
        %v1848 = vld [vmem:[#allocation4 + $0x1258] sm:$0xff]
        %v1849 = vld [vmem:[#allocation4 + $0x1260] sm:$0xff]
        %v1850 = vld [vmem:[#allocation4 + $0x1268] sm:$0xff]
        %v1851 = vld [vmem:[#allocation4 + $0x1270] sm:$0xff]
        %v1852 = vld [vmem:[#allocation4 + $0x1278] sm:$0xff]
        %v1853 = vld [vmem:[#allocation4 + $0x1280] sm:$0xff]
        %v1854 = vld [vmem:[#allocation4 + $0x1288] sm:$0xff]
        %v1855 = vld [vmem:[#allocation4 + $0x1290] sm:$0xff]
        %v1856 = vld [vmem:[#allocation4 + $0x1298] sm:$0xff]
        %v1857 = vld [vmem:[#allocation4 + $0x12a0] sm:$0xff]
        %v1858 = vld [vmem:[#allocation4 + $0x12a8] sm:$0xff]
        %v1859 = vld [vmem:[#allocation4 + $0x12b0] sm:$0xff]
        %v1860 = vld [vmem:[#allocation4 + $0x12b8] sm:$0xff]
        %v1861 = vld [vmem:[#allocation4 + $0x12c0] sm:$0xff]
        %v1862 = vld [vmem:[#allocation4 + $0x12c8] sm:$0xff]
        %v1863 = vld [vmem:[#allocation4 + $0x12d0] sm:$0xff]
        %v1864 = vld [vmem:[#allocation4 + $0x12d8] sm:$0xff]
        %v1865 = vld [vmem:[#allocation4 + $0x12e0] sm:$0xff]
        %v1866 = vld [vmem:[#allocation4 + $0x12e8] sm:$0xff]
        %v1867 = vld [vmem:[#allocation4 + $0x12f0] sm:$0xff]
        %v1868 = vld [vmem:[#allocation4 + $0x12f8] sm:$0xff]
        %v1869 = vld [vmem:[#allocation4 + $0x1300] sm:$0xff]
        %v1870 = vld [vmem:[#allocation4 + $0x1308] sm:$0xff]
        %v1871 = vld [vmem:[#allocation4 + $0x1310] sm:$0xff]
        %v1872 = vld [vmem:[#allocation4 + $0x1318] sm:$0xff]
        %v1873 = vld [vmem:[#allocation4 + $0x1320] sm:$0xff]
        %v1874 = vld [vmem:[#allocation4 + $0x1328] sm:$0xff]
        %v1875 = vld [vmem:[#allocation4 + $0x1330] sm:$0xff]
        %v1876 = vld [vmem:[#allocation4 + $0x1338] sm:$0xff]
        %v1877 = vld [vmem:[#allocation4 + $0x1340] sm:$0xff]
        %v1878 = vld [vmem:[#allocation4 + $0x1348] sm:$0xff]
        %v1879 = vld [vmem:[#allocation4 + $0x1350] sm:$0xff]
        %v1880 = vld [vmem:[#allocation4 + $0x1358] sm:$0xff]
        %v1881 = vld [vmem:[#allocation4 + $0x1360] sm:$0xff]
        %v1882 = vld [vmem:[#allocation4 + $0x1368] sm:$0xff]
        %v1883 = vld [vmem:[#allocation4 + $0x1370] sm:$0xff]
        %v1884 = vld [vmem:[#allocation4 + $0x1378] sm:$0xff]
        %v1885 = vld [vmem:[#allocation4 + $0x1380] sm:$0xff]
        %v1886 = vld [vmem:[#allocation4 + $0x1388] sm:$0xff]
        %v1887 = vld [vmem:[#allocation4 + $0x1390] sm:$0xff]
        %v1888 = vld [vmem:[#allocation4 + $0x1398] sm:$0xff]
        %v1889 = vld [vmem:[#allocation4 + $0x13a0] sm:$0xff]
        %v1890 = vld [vmem:[#allocation4 + $0x13a8] sm:$0xff]
        %v1891 = vld [vmem:[#allocation4 + $0x13b0] sm:$0xff]
        %v1892 = vld [vmem:[#allocation4 + $0x13b8] sm:$0xff]
        %v1893 = vld [vmem:[#allocation4 + $0x13c0] sm:$0xff]
        %v1894 = vld [vmem:[#allocation4 + $0x13c8] sm:$0xff]
        %v1895 = vld [vmem:[#allocation4 + $0x13d0] sm:$0xff]
        %v1896 = vld [vmem:[#allocation4 + $0x13d8] sm:$0xff]
        %v1897 = vld [vmem:[#allocation4 + $0x13e0] sm:$0xff]
        %v1898 = vld [vmem:[#allocation4 + $0x13e8] sm:$0xff]
        %v1899 = vld [vmem:[#allocation4 + $0x13f0] sm:$0xff]
        %v1900 = vld [vmem:[#allocation4 + $0x13f8] sm:$0xff]
        %v1901 = vld [vmem:[#allocation4 + $0x1400] sm:$0xff]
        %v1902 = vld [vmem:[#allocation4 + $0x1408] sm:$0xff]
        %v1903 = vld [vmem:[#allocation4 + $0x1410] sm:$0xff]
        %v1904 = vld [vmem:[#allocation4 + $0x1418] sm:$0xff]
        %v1905 = vld [vmem:[#allocation4 + $0x1420] sm:$0xff]
        %v1906 = vld [vmem:[#allocation4 + $0x1428] sm:$0xff]
        %v1907 = vld [vmem:[#allocation4 + $0x1430] sm:$0xff]
        %v1908 = vld [vmem:[#allocation4 + $0x1438] sm:$0xff]
        %v1909 = vld [vmem:[#allocation4 + $0x1440] sm:$0xff]
        %v1910 = vld [vmem:[#allocation4 + $0x1448] sm:$0xff]
        %v1911 = vld [vmem:[#allocation4 + $0x1450] sm:$0xff]
        %v1912 = vld [vmem:[#allocation4 + $0x1458] sm:$0xff]
        %v1913 = vld [vmem:[#allocation4 + $0x1460] sm:$0xff]
        %v1914 = vld [vmem:[#allocation4 + $0x1468] sm:$0xff]
        %v1915 = vld [vmem:[#allocation4 + $0x1470] sm:$0xff]
        %v1916 = vld [vmem:[#allocation4 + $0x1478] sm:$0xff]
        %v1917 = vld [vmem:[#allocation4 + $0x1480] sm:$0xff]
        %v1918 = vld [vmem:[#allocation4 + $0x1488] sm:$0xff]
        %v1919 = vld [vmem:[#allocation4 + $0x1490] sm:$0xff]
        %v1920 = vld [vmem:[#allocation4 + $0x1498] sm:$0xff]
        %v1921 = vld [vmem:[#allocation4 + $0x14a0] sm:$0xff]
        %v1922 = vld [vmem:[#allocation4 + $0x14a8] sm:$0xff]
        %v1923 = vld [vmem:[#allocation4 + $0x14b0] sm:$0xff]
        %v1924 = vld [vmem:[#allocation4 + $0x14b8] sm:$0xff]
        %v1925 = vld [vmem:[#allocation4 + $0x14c0] sm:$0xff]
        %v1926 = vld [vmem:[#allocation4 + $0x14c8] sm:$0xff]
        %v1927 = vld [vmem:[#allocation4 + $0x14d0] sm:$0xff]
        %v1928 = vld [vmem:[#allocation4 + $0x14d8] sm:$0xff]
        %v1929 = vld [vmem:[#allocation4 + $0x14e0] sm:$0xff]
        %v1930 = vld [vmem:[#allocation4 + $0x14e8] sm:$0xff]
        %v1931 = vld [vmem:[#allocation4 + $0x14f0] sm:$0xff]
        %v1932 = vld [vmem:[#allocation4 + $0x14f8] sm:$0xff]
        %v1933 = vld [vmem:[#allocation4 + $0x1500] sm:$0xff]
        %v1934 = vld [vmem:[#allocation4 + $0x1508] sm:$0xff]
        %v1935 = vld [vmem:[#allocation4 + $0x1510] sm:$0xff]
        %v1936 = vld [vmem:[#allocation4 + $0x1518] sm:$0xff]
        %v1937 = vld [vmem:[#allocation4 + $0x1520] sm:$0xff]
        %v1938 = vld [vmem:[#allocation4 + $0x1528] sm:$0xff]
        %v1939 = vld [vmem:[#allocation4 + $0x1530] sm:$0xff]
        %v1940 = vld [vmem:[#allocation4 + $0x1538] sm:$0xff]
        %v1941 = vld [vmem:[#allocation4 + $0x1540] sm:$0xff]
        %v1942 = vld [vmem:[#allocation4 + $0x1548] sm:$0xff]
        %v1943 = vld [vmem:[#allocation4 + $0x1550] sm:$0xff]
        %v1944 = vld [vmem:[#allocation4 + $0x1558] sm:$0xff]
        %v1945 = vld [vmem:[#allocation4 + $0x1560] sm:$0xff]
        %v1946 = vld [vmem:[#allocation4 + $0x1568] sm:$0xff]
        %v1947 = vld [vmem:[#allocation4 + $0x1570] sm:$0xff]
        %v1948 = vld [vmem:[#allocation4 + $0x1578] sm:$0xff]
        %v1949 = vld [vmem:[#allocation4 + $0x1580] sm:$0xff]
        %v1950 = vld [vmem:[#allocation4 + $0x1588] sm:$0xff]
        %v1951 = vld [vmem:[#allocation4 + $0x1590] sm:$0xff]
        %v1952 = vld [vmem:[#allocation4 + $0x1598] sm:$0xff]
        %v1953 = vld [vmem:[#allocation4 + $0x15a0] sm:$0xff]
        %v1954 = vld [vmem:[#allocation4 + $0x15a8] sm:$0xff]
        %v1955 = vld [vmem:[#allocation4 + $0x15b0] sm:$0xff]
        %v1956 = vld [vmem:[#allocation4 + $0x15b8] sm:$0xff]
        %v1957 = vld [vmem:[#allocation4 + $0x15c0] sm:$0xff]
        %v1958 = vld [vmem:[#allocation4 + $0x15c8] sm:$0xff]
        %v1959 = vld [vmem:[#allocation4 + $0x15d0] sm:$0xff]
        %v1960 = vld [vmem:[#allocation4 + $0x15d8] sm:$0xff]
        %v1961 = vld [vmem:[#allocation4 + $0x15e0] sm:$0xff]
        %v1962 = vld [vmem:[#allocation4 + $0x15e8] sm:$0xff]
        %v1963 = vld [vmem:[#allocation4 + $0x15f0] sm:$0xff]
        %v1964 = vld [vmem:[#allocation4 + $0x15f8] sm:$0xff]
        %v1965 = vld [vmem:[#allocation4 + $0x1600] sm:$0xff]
        %v1966 = vld [vmem:[#allocation4 + $0x1608] sm:$0xff]
        %v1967 = vld [vmem:[#allocation4 + $0x1610] sm:$0xff]
        %v1968 = vld [vmem:[#allocation4 + $0x1618] sm:$0xff]
        %v1969 = vld [vmem:[#allocation4 + $0x1620] sm:$0xff]
        %v1970 = vld [vmem:[#allocation4 + $0x1628] sm:$0xff]
        %v1971 = vld [vmem:[#allocation4 + $0x1630] sm:$0xff]
        %v1972 = vld [vmem:[#allocation4 + $0x1638] sm:$0xff]
        %v1973 = vld [vmem:[#allocation4 + $0x1640] sm:$0xff]
        %v1974 = vld [vmem:[#allocation4 + $0x1648] sm:$0xff]
        %v1975 = vld [vmem:[#allocation4 + $0x1650] sm:$0xff]
        %v1976 = vld [vmem:[#allocation4 + $0x1658] sm:$0xff]
        %v1977 = vld [vmem:[#allocation4 + $0x1660] sm:$0xff]
        %v1978 = vld [vmem:[#allocation4 + $0x1668] sm:$0xff]
        %v1979 = vld [vmem:[#allocation4 + $0x1670] sm:$0xff]
        %v1980 = vld [vmem:[#allocation4 + $0x1678] sm:$0xff]
        %v1981 = vld [vmem:[#allocation7 + $0x9] sm:$0xff]
        %v1982 = vld [vmem:[#allocation7 + $0x11] sm:$0x3]
        %v1985 = vlaneseq
        %v1986 = vshrl.u32 %v1985, 7
        %v1987 = vsub.s32 0, %v1986
        %v1988 = vrot.slane %v1981, %v1987
        %v1989 = vlaneseq
        %v1990 = vshrl.u32 %v1989, 7
        %v1991 = vsub.s32 1, %v1990
        %v1992 = vrot.slane %v1981, %v1991
        %v1993 = vlaneseq
        %v1994 = vshrl.u32 %v1993, 7
        %v1995 = vsub.s32 2, %v1994
        %v1996 = vrot.slane %v1981, %v1995
        %v1997 = vlaneseq
        %v1998 = vshrl.u32 %v1997, 7
        %v1999 = vsub.s32 3, %v1998
        %v2000 = vrot.slane %v1981, %v1999
        %v2001 = vlaneseq
        %v2002 = vshrl.u32 %v2001, 7
        %v2003 = vsub.s32 4, %v2002
        %v2004 = vrot.slane %v1981, %v2003
        %v2005 = vlaneseq
        %v2006 = vshrl.u32 %v2005, 7
        %v2007 = vsub.s32 5, %v2006
        %v2008 = vrot.slane %v1981, %v2007
        %v2009 = vlaneseq
        %v2010 = vshrl.u32 %v2009, 7
        %v2011 = vsub.s32 6, %v2010
        %v2012 = vrot.slane %v1981, %v2011
        %v2013 = vlaneseq
        %v2014 = vshrl.u32 %v2013, 7
        %v2015 = vsub.s32 7, %v2014
        %v2016 = vrot.slane %v1981, %v2015
        %v2017 = vlaneseq
        %v2018 = vshrl.u32 %v2017, 7
        %v2019 = vsub.s32 0, %v2018
        %v2020 = vrot.slane %v1982, %v2019
        %v2021 = vlaneseq
        %v2022 = vshrl.u32 %v2021, 7
        %v2023 = vsub.s32 1, %v2022
        %v2024 = vrot.slane %v1982, %v2023
        %v2755 = vunpack.c.l.b16 %v1261
        %v2756 = vunpack.c.h.b16 %v1261
        %v2757 = vunpack.c.l.b16 %v1262
        %v2758 = vunpack.c.h.b16 %v1262
        %v2759 = vunpack.c.l.b16 %v1263
        %v2760 = vunpack.c.h.b16 %v1263
        %v2761 = vunpack.c.l.b16 %v1264
        %v2762 = vunpack.c.h.b16 %v1264
        %v2763 = vunpack.c.l.b16 %v1265
        %v2764 = vunpack.c.h.b16 %v1265
        %v2765 = vunpack.c.l.b16 %v1266
        %v2766 = vunpack.c.h.b16 %v1266
        %v2767 = vunpack.c.l.b16 %v1267
        %v2768 = vunpack.c.h.b16 %v1267
        %v2769 = vunpack.c.l.b16 %v1268
        %v2770 = vunpack.c.h.b16 %v1268
        %v2771 = vunpack.c.l.b16 %v1269
        %v2772 = vunpack.c.h.b16 %v1269
        %v2773 = vunpack.c.l.b16 %v1270
        %v2774 = vunpack.c.h.b16 %v1270
        %v2775 = vunpack.c.l.b16 %v1271
        %v2776 = vunpack.c.h.b16 %v1271
        %v2777 = vunpack.c.l.b16 %v1272
        %v2778 = vunpack.c.h.b16 %v1272
        %v2779 = vunpack.c.l.b16 %v1273
        %v2780 = vunpack.c.h.b16 %v1273
        %v2781 = vunpack.c.l.b16 %v1274
        %v2782 = vunpack.c.h.b16 %v1274
        %v2783 = vunpack.c.l.b16 %v1275
        %v2784 = vunpack.c.h.b16 %v1275
        %v2785 = vunpack.c.l.b16 %v1276
        %v2786 = vunpack.c.h.b16 %v1276
        %v2787 = vunpack.c.l.b16 %v1277
        %v2788 = vunpack.c.h.b16 %v1277
        %v2789 = vunpack.c.l.b16 %v1278
        %v2790 = vunpack.c.h.b16 %v1278
        %v2791 = vunpack.c.l.b16 %v1279
        %v2792 = vunpack.c.h.b16 %v1279
        %v2793 = vunpack.c.l.b16 %v1280
        %v2794 = vunpack.c.h.b16 %v1280
        %v2795 = vunpack.c.l.b16 %v1281
        %v2796 = vunpack.c.h.b16 %v1281
        %v2797 = vunpack.c.l.b16 %v1282
        %v2798 = vunpack.c.h.b16 %v1282
        %v2799 = vunpack.c.l.b16 %v1283
        %v2800 = vunpack.c.h.b16 %v1283
        %v2801 = vunpack.c.l.b16 %v1284
        %v2802 = vunpack.c.h.b16 %v1284
        %v2803 = vunpack.c.l.b16 %v1285
        %v2804 = vunpack.c.h.b16 %v1285
        %v2805 = vunpack.c.l.b16 %v1286
        %v2806 = vunpack.c.h.b16 %v1286
        %v2807 = vunpack.c.l.b16 %v1287
        %v2808 = vunpack.c.h.b16 %v1287
        %v2809 = vunpack.c.l.b16 %v1288
        %v2810 = vunpack.c.h.b16 %v1288
        %v2811 = vunpack.c.l.b16 %v1289
        %v2812 = vunpack.c.h.b16 %v1289
        %v2813 = vunpack.c.l.b16 %v1290
        %v2814 = vunpack.c.h.b16 %v1290
        %v2815 = vunpack.c.l.b16 %v1291
        %v2816 = vunpack.c.h.b16 %v1291
        %v2817 = vunpack.c.l.b16 %v1292
        %v2818 = vunpack.c.h.b16 %v1292
        %v2819 = vunpack.c.l.b16 %v1293
        %v2820 = vunpack.c.h.b16 %v1293
        %v2821 = vunpack.c.l.b16 %v1294
        %v2822 = vunpack.c.h.b16 %v1294
        %v2823 = vunpack.c.l.b16 %v1295
        %v2824 = vunpack.c.h.b16 %v1295
        %v2825 = vunpack.c.l.b16 %v1296
        %v2826 = vunpack.c.h.b16 %v1296
        %v2827 = vunpack.c.l.b16 %v1297
        %v2828 = vunpack.c.h.b16 %v1297
        %v2829 = vunpack.c.l.b16 %v1298
        %v2830 = vunpack.c.h.b16 %v1298
        %v2831 = vunpack.c.l.b16 %v1299
        %v2832 = vunpack.c.h.b16 %v1299
        %v2833 = vunpack.c.l.b16 %v1300
        %v2834 = vunpack.c.h.b16 %v1300
        %v2835 = vunpack.c.l.b16 %v1301
        %v2836 = vunpack.c.h.b16 %v1301
        %v2837 = vunpack.c.l.b16 %v1302
        %v2838 = vunpack.c.h.b16 %v1302
        %v2839 = vunpack.c.l.b16 %v1303
        %v2840 = vunpack.c.h.b16 %v1303
        %v2841 = vunpack.c.l.b16 %v1304
        %v2842 = vunpack.c.h.b16 %v1304
        %v2843 = vunpack.c.l.b16 %v1305
        %v2844 = vunpack.c.h.b16 %v1305
        %v2845 = vunpack.c.l.b16 %v1306
        %v2846 = vunpack.c.h.b16 %v1306
        %v2847 = vunpack.c.l.b16 %v1307
        %v2848 = vunpack.c.h.b16 %v1307
        %v2849 = vunpack.c.l.b16 %v1308
        %v2850 = vunpack.c.h.b16 %v1308
        %v2851 = vunpack.c.l.b16 %v1309
        %v2852 = vunpack.c.h.b16 %v1309
        %v2853 = vunpack.c.l.b16 %v1310
        %v2854 = vunpack.c.h.b16 %v1310
        %v2855 = vunpack.c.l.b16 %v1311
        %v2856 = vunpack.c.h.b16 %v1311
        %v2857 = vunpack.c.l.b16 %v1312
        %v2858 = vunpack.c.h.b16 %v1312
        %v2859 = vunpack.c.l.b16 %v1313
        %v2860 = vunpack.c.h.b16 %v1313
        %v2861 = vunpack.c.l.b16 %v1314
        %v2862 = vunpack.c.h.b16 %v1314
        %v2863 = vunpack.c.l.b16 %v1315
        %v2864 = vunpack.c.h.b16 %v1315
        %v2865 = vunpack.c.l.b16 %v1316
        %v2866 = vunpack.c.h.b16 %v1316
        %v2867 = vunpack.c.l.b16 %v1317
        %v2868 = vunpack.c.h.b16 %v1317
        %v2869 = vunpack.c.l.b16 %v1318
        %v2870 = vunpack.c.h.b16 %v1318
        %v2871 = vunpack.c.l.b16 %v1319
        %v2872 = vunpack.c.h.b16 %v1319
        %v2873 = vunpack.c.l.b16 %v1320
        %v2874 = vunpack.c.h.b16 %v1320
        %v2875 = vunpack.c.l.b16 %v1321
        %v2876 = vunpack.c.h.b16 %v1321
        %v2877 = vunpack.c.l.b16 %v1322
        %v2878 = vunpack.c.h.b16 %v1322
        %v2879 = vunpack.c.l.b16 %v1323
        %v2880 = vunpack.c.h.b16 %v1323
        %v2881 = vunpack.c.l.b16 %v1324
        %v2882 = vunpack.c.h.b16 %v1324
        %v2883 = vunpack.c.l.b16 %v1325
        %v2884 = vunpack.c.h.b16 %v1325
        %v2885 = vunpack.c.l.b16 %v1326
        %v2886 = vunpack.c.h.b16 %v1326
        %v2887 = vunpack.c.l.b16 %v1327
        %v2888 = vunpack.c.h.b16 %v1327
        %v2889 = vunpack.c.l.b16 %v1328
        %v2890 = vunpack.c.h.b16 %v1328
        %v2891 = vunpack.c.l.b16 %v1329
        %v2892 = vunpack.c.h.b16 %v1329
        %v2893 = vunpack.c.l.b16 %v1330
        %v2894 = vunpack.c.h.b16 %v1330
        %v2895 = vunpack.c.l.b16 %v1331
        %v2896 = vunpack.c.h.b16 %v1331
        %v2897 = vunpack.c.l.b16 %v1332
        %v2898 = vunpack.c.h.b16 %v1332
        %v2899 = vunpack.c.l.b16 %v1333
        %v2900 = vunpack.c.h.b16 %v1333
        %v2901 = vunpack.c.l.b16 %v1334
        %v2902 = vunpack.c.h.b16 %v1334
        %v2903 = vunpack.c.l.b16 %v1335
        %v2904 = vunpack.c.h.b16 %v1335
        %v2905 = vunpack.c.l.b16 %v1336
        %v2906 = vunpack.c.h.b16 %v1336
        %v2907 = vunpack.c.l.b16 %v1337
        %v2908 = vunpack.c.h.b16 %v1337
        %v2909 = vunpack.c.l.b16 %v1338
        %v2910 = vunpack.c.h.b16 %v1338
        %v2911 = vunpack.c.l.b16 %v1339
        %v2912 = vunpack.c.h.b16 %v1339
        %v2913 = vunpack.c.l.b16 %v1340
        %v2914 = vunpack.c.h.b16 %v1340
        %v2915 = vunpack.c.l.b16 %v1341
        %v2916 = vunpack.c.h.b16 %v1341
        %v2917 = vunpack.c.l.b16 %v1342
        %v2918 = vunpack.c.h.b16 %v1342
        %v2919 = vunpack.c.l.b16 %v1343
        %v2920 = vunpack.c.h.b16 %v1343
        %v2921 = vunpack.c.l.b16 %v1344
        %v2922 = vunpack.c.h.b16 %v1344
        %v2923 = vunpack.c.l.b16 %v1345
        %v2924 = vunpack.c.h.b16 %v1345
        %v2925 = vunpack.c.l.b16 %v1346
        %v2926 = vunpack.c.h.b16 %v1346
        %v2927 = vunpack.c.l.b16 %v1347
        %v2928 = vunpack.c.h.b16 %v1347
        %v2929 = vunpack.c.l.b16 %v1348
        %v2930 = vunpack.c.h.b16 %v1348
        %v2931 = vunpack.c.l.b16 %v1349
        %v2932 = vunpack.c.h.b16 %v1349
        %v2933 = vunpack.c.l.b16 %v1350
        %v2934 = vunpack.c.h.b16 %v1350
        %v2935 = vunpack.c.l.b16 %v1351
        %v2936 = vunpack.c.h.b16 %v1351
        %v2937 = vunpack.c.l.b16 %v1352
        %v2938 = vunpack.c.h.b16 %v1352
        %v2939 = vunpack.c.l.b16 %v1353
        %v2940 = vunpack.c.h.b16 %v1353
        %v2941 = vunpack.c.l.b16 %v1354
        %v2942 = vunpack.c.h.b16 %v1354
        %v2943 = vunpack.c.l.b16 %v1355
        %v2944 = vunpack.c.h.b16 %v1355
        %v2945 = vunpack.c.l.b16 %v1356
        %v2946 = vunpack.c.h.b16 %v1356
        %v2947 = vunpack.c.l.b16 %v1357
        %v2948 = vunpack.c.h.b16 %v1357
        %v2949 = vunpack.c.l.b16 %v1358
        %v2950 = vunpack.c.h.b16 %v1358
        %v2951 = vunpack.c.l.b16 %v1359
        %v2952 = vunpack.c.h.b16 %v1359
        %v2953 = vunpack.c.l.b16 %v1360
        %v2954 = vunpack.c.h.b16 %v1360
        %v2955 = vunpack.c.l.b16 %v1361
        %v2956 = vunpack.c.h.b16 %v1361
        %v2957 = vunpack.c.l.b16 %v1362
        %v2958 = vunpack.c.h.b16 %v1362
        %v2959 = vunpack.c.l.b16 %v1363
        %v2960 = vunpack.c.h.b16 %v1363
        %v2961 = vunpack.c.l.b16 %v1364
        %v2962 = vunpack.c.h.b16 %v1364
        %v2963 = vunpack.c.l.b16 %v1365
        %v2964 = vunpack.c.h.b16 %v1365
        %v2965 = vunpack.c.l.b16 %v1366
        %v2966 = vunpack.c.h.b16 %v1366
        %v2967 = vunpack.c.l.b16 %v1367
        %v2968 = vunpack.c.h.b16 %v1367
        %v2969 = vunpack.c.l.b16 %v1368
        %v2970 = vunpack.c.h.b16 %v1368
        %v2971 = vunpack.c.l.b16 %v1369
        %v2972 = vunpack.c.h.b16 %v1369
        %v2973 = vunpack.c.l.b16 %v1370
        %v2974 = vunpack.c.h.b16 %v1370
        %v2975 = vunpack.c.l.b16 %v1371
        %v2976 = vunpack.c.h.b16 %v1371
        %v2977 = vunpack.c.l.b16 %v1372
        %v2978 = vunpack.c.h.b16 %v1372
        %v2979 = vunpack.c.l.b16 %v1373
        %v2980 = vunpack.c.h.b16 %v1373
        %v2981 = vunpack.c.l.b16 %v1374
        %v2982 = vunpack.c.h.b16 %v1374
        %v2983 = vunpack.c.l.b16 %v1375
        %v2984 = vunpack.c.h.b16 %v1375
        %v2985 = vunpack.c.l.b16 %v1376
        %v2986 = vunpack.c.h.b16 %v1376
        %v2987 = vunpack.c.l.b16 %v1377
        %v2988 = vunpack.c.h.b16 %v1377
        %v2989 = vunpack.c.l.b16 %v1378
        %v2990 = vunpack.c.h.b16 %v1378
        %v2991 = vunpack.c.l.b16 %v1379
        %v2992 = vunpack.c.h.b16 %v1379
        %v2993 = vunpack.c.l.b16 %v1380
        %v2994 = vunpack.c.h.b16 %v1380
        %v2995 = vunpack.c.l.b16 %v1381
        %v2996 = vunpack.c.h.b16 %v1381
        %v2997 = vunpack.c.l.b16 %v1382
        %v2998 = vunpack.c.h.b16 %v1382
        %v2999 = vunpack.c.l.b16 %v1383
        %v3000 = vunpack.c.h.b16 %v1383
        %v3001 = vunpack.c.l.b16 %v1384
        %v3002 = vunpack.c.h.b16 %v1384
        %v3003 = vunpack.c.l.b16 %v1385
        %v3004 = vunpack.c.h.b16 %v1385
        %v3005 = vunpack.c.l.b16 %v1386
        %v3006 = vunpack.c.h.b16 %v1386
        %v3007 = vunpack.c.l.b16 %v1387
        %v3008 = vunpack.c.h.b16 %v1387
        %v3009 = vunpack.c.l.b16 %v1388
        %v3010 = vunpack.c.h.b16 %v1388
        %v3011 = vunpack.c.l.b16 %v1389
        %v3012 = vunpack.c.h.b16 %v1389
        %v3013 = vunpack.c.l.b16 %v1390
        %v3014 = vunpack.c.h.b16 %v1390
        %v3015 = vunpack.c.l.b16 %v1391
        %v3016 = vunpack.c.h.b16 %v1391
        %v3017 = vunpack.c.l.b16 %v1392
        %v3018 = vunpack.c.h.b16 %v1392
        %v3019 = vunpack.c.l.b16 %v1393
        %v3020 = vunpack.c.h.b16 %v1393
        %v3021 = vunpack.c.l.b16 %v1394
        %v3022 = vunpack.c.h.b16 %v1394
        %v3023 = vunpack.c.l.b16 %v1395
        %v3024 = vunpack.c.h.b16 %v1395
        %v3025 = vunpack.c.l.b16 %v1396
        %v3026 = vunpack.c.h.b16 %v1396
        %v3027 = vunpack.c.l.b16 %v1397
        %v3028 = vunpack.c.h.b16 %v1397
        %v3029 = vunpack.c.l.b16 %v1398
        %v3030 = vunpack.c.h.b16 %v1398
        %v3031 = vunpack.c.l.b16 %v1399
        %v3032 = vunpack.c.h.b16 %v1399
        %v3033 = vunpack.c.l.b16 %v1400
        %v3034 = vunpack.c.h.b16 %v1400
        %v3035 = vunpack.c.l.b16 %v1401
        %v3036 = vunpack.c.h.b16 %v1401
        %v3037 = vunpack.c.l.b16 %v1402
        %v3038 = vunpack.c.h.b16 %v1402
        %v3039 = vunpack.c.l.b16 %v1403
        %v3040 = vunpack.c.h.b16 %v1403
        %v3041 = vunpack.c.l.b16 %v1404
        %v3042 = vunpack.c.h.b16 %v1404
        %v3043 = vunpack.c.l.b16 %v1405
        %v3044 = vunpack.c.h.b16 %v1405
        %v3045 = vunpack.c.l.b16 %v1406
        %v3046 = vunpack.c.h.b16 %v1406
        %v3047 = vunpack.c.l.b16 %v1407
        %v3048 = vunpack.c.h.b16 %v1407
        %v3049 = vunpack.c.l.b16 %v1408
        %v3050 = vunpack.c.h.b16 %v1408
        %v3051 = vunpack.c.l.b16 %v1409
        %v3052 = vunpack.c.h.b16 %v1409
        %v3053 = vunpack.c.l.b16 %v1410
        %v3054 = vunpack.c.h.b16 %v1410
        %v3055 = vunpack.c.l.b16 %v1411
        %v3056 = vunpack.c.h.b16 %v1411
        %v3057 = vunpack.c.l.b16 %v1412
        %v3058 = vunpack.c.h.b16 %v1412
        %v3059 = vunpack.c.l.b16 %v1413
        %v3060 = vunpack.c.h.b16 %v1413
        %v3061 = vunpack.c.l.b16 %v1414
        %v3062 = vunpack.c.h.b16 %v1414
        %v3063 = vunpack.c.l.b16 %v1415
        %v3064 = vunpack.c.h.b16 %v1415
        %v3065 = vunpack.c.l.b16 %v1416
        %v3066 = vunpack.c.h.b16 %v1416
        %v3067 = vunpack.c.l.b16 %v1417
        %v3068 = vunpack.c.h.b16 %v1417
        %v3069 = vunpack.c.l.b16 %v1418
        %v3070 = vunpack.c.h.b16 %v1418
        %v3071 = vunpack.c.l.b16 %v1419
        %v3072 = vunpack.c.h.b16 %v1419
        %v3073 = vunpack.c.l.b16 %v1420
        %v3074 = vunpack.c.h.b16 %v1420
        %v3075 = vunpack.c.l.b16 %v1421
        %v3076 = vunpack.c.h.b16 %v1421
        %v3077 = vunpack.c.l.b16 %v1422
        %v3078 = vunpack.c.h.b16 %v1422
        %v3079 = vunpack.c.l.b16 %v1423
        %v3080 = vunpack.c.h.b16 %v1423
        %v3081 = vunpack.c.l.b16 %v1424
        %v3082 = vunpack.c.h.b16 %v1424
        %v3083 = vunpack.c.l.b16 %v1425
        %v3084 = vunpack.c.h.b16 %v1425
        %v3085 = vunpack.c.l.b16 %v1426
        %v3086 = vunpack.c.h.b16 %v1426
        %v3087 = vunpack.c.l.b16 %v1427
        %v3088 = vunpack.c.h.b16 %v1427
        %v3089 = vunpack.c.l.b16 %v1428
        %v3090 = vunpack.c.h.b16 %v1428
        %v3091 = vunpack.c.l.b16 %v1429
        %v3092 = vunpack.c.h.b16 %v1429
        %v3093 = vunpack.c.l.b16 %v1430
        %v3094 = vunpack.c.h.b16 %v1430
        %v3095 = vunpack.c.l.b16 %v1431
        %v3096 = vunpack.c.h.b16 %v1431
        %v3097 = vunpack.c.l.b16 %v1432
        %v3098 = vunpack.c.h.b16 %v1432
        %v3099 = vunpack.c.l.b16 %v1433
        %v3100 = vunpack.c.h.b16 %v1433
        %v3101 = vunpack.c.l.b16 %v1434
        %v3102 = vunpack.c.h.b16 %v1434
        %v3103 = vunpack.c.l.b16 %v1435
        %v3104 = vunpack.c.h.b16 %v1435
        %v3105 = vunpack.c.l.b16 %v1436
        %v3106 = vunpack.c.h.b16 %v1436
        %v3107 = vunpack.c.l.b16 %v1437
        %v3108 = vunpack.c.h.b16 %v1437
        %v3109 = vunpack.c.l.b16 %v1438
        %v3110 = vunpack.c.h.b16 %v1438
        %v3111 = vunpack.c.l.b16 %v1439
        %v3112 = vunpack.c.h.b16 %v1439
        %v3113 = vunpack.c.l.b16 %v1440
        %v3114 = vunpack.c.h.b16 %v1440
        %v3115 = vunpack.c.l.b16 %v1441
        %v3116 = vunpack.c.h.b16 %v1441
        %v3117 = vunpack.c.l.b16 %v1442
        %v3118 = vunpack.c.h.b16 %v1442
        %v3119 = vunpack.c.l.b16 %v1443
        %v3120 = vunpack.c.h.b16 %v1443
        %v3121 = vunpack.c.l.b16 %v1444
        %v3122 = vunpack.c.h.b16 %v1444
        %v3123 = vunpack.c.l.b16 %v1445
        %v3124 = vunpack.c.h.b16 %v1445
        %v3125 = vunpack.c.l.b16 %v1446
        %v3126 = vunpack.c.h.b16 %v1446
        %v3127 = vunpack.c.l.b16 %v1447
        %v3128 = vunpack.c.h.b16 %v1447
        %v3129 = vunpack.c.l.b16 %v1448
        %v3130 = vunpack.c.h.b16 %v1448
        %v3131 = vunpack.c.l.b16 %v1449
        %v3132 = vunpack.c.h.b16 %v1449
        %v3133 = vunpack.c.l.b16 %v1450
        %v3134 = vunpack.c.h.b16 %v1450
        %v3135 = vunpack.c.l.b16 %v1451
        %v3136 = vunpack.c.h.b16 %v1451
        %v3137 = vunpack.c.l.b16 %v1452
        %v3138 = vunpack.c.h.b16 %v1452
        %v3139 = vunpack.c.l.b16 %v1453
        %v3140 = vunpack.c.h.b16 %v1453
        %v3141 = vunpack.c.l.b16 %v1454
        %v3142 = vunpack.c.h.b16 %v1454
        %v3143 = vunpack.c.l.b16 %v1455
        %v3144 = vunpack.c.h.b16 %v1455
        %v3145 = vunpack.c.l.b16 %v1456
        %v3146 = vunpack.c.h.b16 %v1456
        %v3147 = vunpack.c.l.b16 %v1457
        %v3148 = vunpack.c.h.b16 %v1457
        %v3149 = vunpack.c.l.b16 %v1458
        %v3150 = vunpack.c.h.b16 %v1458
        %v3151 = vunpack.c.l.b16 %v1459
        %v3152 = vunpack.c.h.b16 %v1459
        %v3153 = vunpack.c.l.b16 %v1460
        %v3154 = vunpack.c.h.b16 %v1460
        %v3155 = vunpack.c.l.b16 %v1461
        %v3156 = vunpack.c.h.b16 %v1461
        %v3157 = vunpack.c.l.b16 %v1462
        %v3158 = vunpack.c.h.b16 %v1462
        %v3159 = vunpack.c.l.b16 %v1463
        %v3160 = vunpack.c.h.b16 %v1463
        %v3161 = vunpack.c.l.b16 %v1464
        %v3162 = vunpack.c.h.b16 %v1464
        %v3163 = vunpack.c.l.b16 %v1465
        %v3164 = vunpack.c.h.b16 %v1465
        %v3165 = vunpack.c.l.b16 %v1466
        %v3166 = vunpack.c.h.b16 %v1466
        %v3167 = vunpack.c.l.b16 %v1467
        %v3168 = vunpack.c.h.b16 %v1467
        %v3169 = vunpack.c.l.b16 %v1468
        %v3170 = vunpack.c.h.b16 %v1468
        %v3171 = vunpack.c.l.b16 %v1469
        %v3172 = vunpack.c.h.b16 %v1469
        %v3173 = vunpack.c.l.b16 %v1470
        %v3174 = vunpack.c.h.b16 %v1470
        %v3175 = vunpack.c.l.b16 %v1471
        %v3176 = vunpack.c.h.b16 %v1471
        %v3177 = vunpack.c.l.b16 %v1472
        %v3178 = vunpack.c.h.b16 %v1472
        %v3179 = vunpack.c.l.b16 %v1473
        %v3180 = vunpack.c.h.b16 %v1473
        %v3181 = vunpack.c.l.b16 %v1474
        %v3182 = vunpack.c.h.b16 %v1474
        %v3183 = vunpack.c.l.b16 %v1475
        %v3184 = vunpack.c.h.b16 %v1475
        %v3185 = vunpack.c.l.b16 %v1476
        %v3186 = vunpack.c.h.b16 %v1476
        %v3187 = vunpack.c.l.b16 %v1477
        %v3188 = vunpack.c.h.b16 %v1477
        %v3189 = vunpack.c.l.b16 %v1478
        %v3190 = vunpack.c.h.b16 %v1478
        %v3191 = vunpack.c.l.b16 %v1479
        %v3192 = vunpack.c.h.b16 %v1479
        %v3193 = vunpack.c.l.b16 %v1480
        %v3194 = vunpack.c.h.b16 %v1480
        %v3195 = vunpack.c.l.b16 %v1481
        %v3196 = vunpack.c.h.b16 %v1481
        %v3197 = vunpack.c.l.b16 %v1482
        %v3198 = vunpack.c.h.b16 %v1482
        %v3199 = vunpack.c.l.b16 %v1483
        %v3200 = vunpack.c.h.b16 %v1483
        %v3201 = vunpack.c.l.b16 %v1484
        %v3202 = vunpack.c.h.b16 %v1484
        %v3203 = vunpack.c.l.b16 %v1485
        %v3204 = vunpack.c.h.b16 %v1485
        %v3205 = vunpack.c.l.b16 %v1486
        %v3206 = vunpack.c.h.b16 %v1486
        %v3207 = vunpack.c.l.b16 %v1487
        %v3208 = vunpack.c.h.b16 %v1487
        %v3209 = vunpack.c.l.b16 %v1488
        %v3210 = vunpack.c.h.b16 %v1488
        %v3211 = vunpack.c.l.b16 %v1489
        %v3212 = vunpack.c.h.b16 %v1489
        %v3213 = vunpack.c.l.b16 %v1490
        %v3214 = vunpack.c.h.b16 %v1490
        %v3215 = vunpack.c.l.b16 %v1491
        %v3216 = vunpack.c.h.b16 %v1491
        %v3217 = vunpack.c.l.b16 %v1492
        %v3218 = vunpack.c.h.b16 %v1492
        %v3219 = vunpack.c.l.b16 %v1493
        %v3220 = vunpack.c.h.b16 %v1493
        %v3221 = vunpack.c.l.b16 %v1494
        %v3222 = vunpack.c.h.b16 %v1494
        %v3223 = vunpack.c.l.b16 %v1495
        %v3224 = vunpack.c.h.b16 %v1495
        %v3225 = vunpack.c.l.b16 %v1496
        %v3226 = vunpack.c.h.b16 %v1496
        %v3227 = vunpack.c.l.b16 %v1497
        %v3228 = vunpack.c.h.b16 %v1497
        %v3229 = vunpack.c.l.b16 %v1498
        %v3230 = vunpack.c.h.b16 %v1498
        %v3231 = vunpack.c.l.b16 %v1499
        %v3232 = vunpack.c.h.b16 %v1499
        %v3233 = vunpack.c.l.b16 %v1500
        %v3234 = vunpack.c.h.b16 %v1500
        %v3235 = vunpack.c.l.b16 %v1501
        %v3236 = vunpack.c.h.b16 %v1501
        %v3237 = vunpack.c.l.b16 %v1502
        %v3238 = vunpack.c.h.b16 %v1502
        %v3239 = vunpack.c.l.b16 %v1503
        %v3240 = vunpack.c.h.b16 %v1503
        %v3241 = vunpack.c.l.b16 %v1504
        %v3242 = vunpack.c.h.b16 %v1504
        %v3243 = vunpack.c.l.b16 %v1505
        %v3244 = vunpack.c.h.b16 %v1505
        %v3245 = vunpack.c.l.b16 %v1506
        %v3246 = vunpack.c.h.b16 %v1506
        %v3247 = vunpack.c.l.b16 %v1507
        %v3248 = vunpack.c.h.b16 %v1507
        %v3249 = vunpack.c.l.b16 %v1508
        %v3250 = vunpack.c.h.b16 %v1508
        %v3251 = vunpack.c.l.b16 %v1509
        %v3252 = vunpack.c.h.b16 %v1509
        %v3253 = vunpack.c.l.b16 %v1510
        %v3254 = vunpack.c.h.b16 %v1510
        %v3255 = vunpack.c.l.b16 %v1511
        %v3256 = vunpack.c.h.b16 %v1511
        %v3257 = vunpack.c.l.b16 %v1512
        %v3258 = vunpack.c.h.b16 %v1512
        %v3259 = vunpack.c.l.b16 %v1513
        %v3260 = vunpack.c.h.b16 %v1513
        %v3261 = vunpack.c.l.b16 %v1514
        %v3262 = vunpack.c.h.b16 %v1514
        %v3263 = vunpack.c.l.b16 %v1515
        %v3264 = vunpack.c.h.b16 %v1515
        %v3265 = vunpack.c.l.b16 %v1516
        %v3266 = vunpack.c.h.b16 %v1516
        %v3267 = vunpack.c.l.b16 %v1517
        %v3268 = vunpack.c.h.b16 %v1517
        %v3269 = vunpack.c.l.b16 %v1518
        %v3270 = vunpack.c.h.b16 %v1518
        %v3271 = vunpack.c.l.b16 %v1519
        %v3272 = vunpack.c.h.b16 %v1519
        %v3273 = vunpack.c.l.b16 %v1520
        %v3274 = vunpack.c.h.b16 %v1520
        %v3275 = vunpack.c.l.b16 %v1521
        %v3276 = vunpack.c.h.b16 %v1521
        %v3277 = vunpack.c.l.b16 %v1522
        %v3278 = vunpack.c.h.b16 %v1522
        %v3279 = vunpack.c.l.b16 %v1523
        %v3280 = vunpack.c.h.b16 %v1523
        %v3281 = vunpack.c.l.b16 %v1524
        %v3282 = vunpack.c.h.b16 %v1524
        %v3283 = vunpack.c.l.b16 %v1525
        %v3284 = vunpack.c.h.b16 %v1525
        %v3285 = vunpack.c.l.b16 %v1526
        %v3286 = vunpack.c.h.b16 %v1526
        %v3287 = vunpack.c.l.b16 %v1527
        %v3288 = vunpack.c.h.b16 %v1527
        %v3289 = vunpack.c.l.b16 %v1528
        %v3290 = vunpack.c.h.b16 %v1528
        %v3291 = vunpack.c.l.b16 %v1529
        %v3292 = vunpack.c.h.b16 %v1529
        %v3293 = vunpack.c.l.b16 %v1530
        %v3294 = vunpack.c.h.b16 %v1530
        %v3295 = vunpack.c.l.b16 %v1531
        %v3296 = vunpack.c.h.b16 %v1531
        %v3297 = vunpack.c.l.b16 %v1532
        %v3298 = vunpack.c.h.b16 %v1532
        %v3299 = vunpack.c.l.b16 %v1533
        %v3300 = vunpack.c.h.b16 %v1533
        %v3301 = vunpack.c.l.b16 %v1534
        %v3302 = vunpack.c.h.b16 %v1534
        %v3303 = vunpack.c.l.b16 %v1535
        %v3304 = vunpack.c.h.b16 %v1535
        %v3305 = vunpack.c.l.b16 %v1536
        %v3306 = vunpack.c.h.b16 %v1536
        %v3307 = vunpack.c.l.b16 %v1537
        %v3308 = vunpack.c.h.b16 %v1537
        %v3309 = vunpack.c.l.b16 %v1538
        %v3310 = vunpack.c.h.b16 %v1538
        %v3311 = vunpack.c.l.b16 %v1539
        %v3312 = vunpack.c.h.b16 %v1539
        %v3313 = vunpack.c.l.b16 %v1540
        %v3314 = vunpack.c.h.b16 %v1540
        %v3315 = vunpack.c.l.b16 %v1541
        %v3316 = vunpack.c.h.b16 %v1541
        %v3317 = vunpack.c.l.b16 %v1542
        %v3318 = vunpack.c.h.b16 %v1542
        %v3319 = vunpack.c.l.b16 %v1543
        %v3320 = vunpack.c.h.b16 %v1543
        %v3321 = vunpack.c.l.b16 %v1544
        %v3322 = vunpack.c.h.b16 %v1544
        %v3323 = vunpack.c.l.b16 %v1545
        %v3324 = vunpack.c.h.b16 %v1545
        %v3325 = vunpack.c.l.b16 %v1546
        %v3326 = vunpack.c.h.b16 %v1546
        %v3327 = vunpack.c.l.b16 %v1547
        %v3328 = vunpack.c.h.b16 %v1547
        %v3329 = vunpack.c.l.b16 %v1548
        %v3330 = vunpack.c.h.b16 %v1548
        %v3331 = vunpack.c.l.b16 %v1549
        %v3332 = vunpack.c.h.b16 %v1549
        %v3333 = vunpack.c.l.b16 %v1550
        %v3334 = vunpack.c.h.b16 %v1550
        %v3335 = vunpack.c.l.b16 %v1551
        %v3336 = vunpack.c.h.b16 %v1551
        %v3337 = vunpack.c.l.b16 %v1552
        %v3338 = vunpack.c.h.b16 %v1552
        %v3339 = vunpack.c.l.b16 %v1553
        %v3340 = vunpack.c.h.b16 %v1553
        %v3341 = vunpack.c.l.b16 %v1554
        %v3342 = vunpack.c.h.b16 %v1554
        %v3343 = vunpack.c.l.b16 %v1555
        %v3344 = vunpack.c.h.b16 %v1555
        %v3345 = vunpack.c.l.b16 %v1556
        %v3346 = vunpack.c.h.b16 %v1556
        %v3347 = vunpack.c.l.b16 %v1557
        %v3348 = vunpack.c.h.b16 %v1557
        %v3349 = vunpack.c.l.b16 %v1558
        %v3350 = vunpack.c.h.b16 %v1558
        %v3351 = vunpack.c.l.b16 %v1559
        %v3352 = vunpack.c.h.b16 %v1559
        %v3353 = vunpack.c.l.b16 %v1560
        %v3354 = vunpack.c.h.b16 %v1560
        %v3355 = vunpack.c.l.b16 %v1561
        %v3356 = vunpack.c.h.b16 %v1561
        %v3357 = vunpack.c.l.b16 %v1562
        %v3358 = vunpack.c.h.b16 %v1562
        %v3359 = vunpack.c.l.b16 %v1563
        %v3360 = vunpack.c.h.b16 %v1563
        %v3361 = vunpack.c.l.b16 %v1564
        %v3362 = vunpack.c.h.b16 %v1564
        %v3363 = vunpack.c.l.b16 %v1565
        %v3364 = vunpack.c.h.b16 %v1565
        %v3365 = vunpack.c.l.b16 %v1566
        %v3366 = vunpack.c.h.b16 %v1566
        %v3367 = vunpack.c.l.b16 %v1567
        %v3368 = vunpack.c.h.b16 %v1567
        %v3369 = vunpack.c.l.b16 %v1568
        %v3370 = vunpack.c.h.b16 %v1568
        %v3371 = vunpack.c.l.b16 %v1569
        %v3372 = vunpack.c.h.b16 %v1569
        %v3373 = vunpack.c.l.b16 %v1570
        %v3374 = vunpack.c.h.b16 %v1570
        %v3375 = vunpack.c.l.b16 %v1571
        %v3376 = vunpack.c.h.b16 %v1571
        %v3377 = vunpack.c.l.b16 %v1572
        %v3378 = vunpack.c.h.b16 %v1572
        %v3379 = vunpack.c.l.b16 %v1573
        %v3380 = vunpack.c.h.b16 %v1573
        %v3381 = vunpack.c.l.b16 %v1574
        %v3382 = vunpack.c.h.b16 %v1574
        %v3383 = vunpack.c.l.b16 %v1575
        %v3384 = vunpack.c.h.b16 %v1575
        %v3385 = vunpack.c.l.b16 %v1576
        %v3386 = vunpack.c.h.b16 %v1576
        %v3387 = vunpack.c.l.b16 %v1577
        %v3388 = vunpack.c.h.b16 %v1577
        %v3389 = vunpack.c.l.b16 %v1578
        %v3390 = vunpack.c.h.b16 %v1578
        %v3391 = vunpack.c.l.b16 %v1579
        %v3392 = vunpack.c.h.b16 %v1579
        %v3393 = vunpack.c.l.b16 %v1580
        %v3394 = vunpack.c.h.b16 %v1580
        %v3395 = vunpack.c.l.b16 %v1581
        %v3396 = vunpack.c.h.b16 %v1581
        %v3397 = vunpack.c.l.b16 %v1582
        %v3398 = vunpack.c.h.b16 %v1582
        %v3399 = vunpack.c.l.b16 %v1583
        %v3400 = vunpack.c.h.b16 %v1583
        %v3401 = vunpack.c.l.b16 %v1584
        %v3402 = vunpack.c.h.b16 %v1584
        %v3403 = vunpack.c.l.b16 %v1585
        %v3404 = vunpack.c.h.b16 %v1585
        %v3405 = vunpack.c.l.b16 %v1586
        %v3406 = vunpack.c.h.b16 %v1586
        %v3407 = vunpack.c.l.b16 %v1587
        %v3408 = vunpack.c.h.b16 %v1587
        %v3409 = vunpack.c.l.b16 %v1588
        %v3410 = vunpack.c.h.b16 %v1588
        %v3411 = vunpack.c.l.b16 %v1589
        %v3412 = vunpack.c.h.b16 %v1589
        %v3413 = vunpack.c.l.b16 %v1590
        %v3414 = vunpack.c.h.b16 %v1590
        %v3415 = vunpack.c.l.b16 %v1591
        %v3416 = vunpack.c.h.b16 %v1591
        %v3417 = vunpack.c.l.b16 %v1592
        %v3418 = vunpack.c.h.b16 %v1592
        %v3419 = vunpack.c.l.b16 %v1593
        %v3420 = vunpack.c.h.b16 %v1593
        %v3421 = vunpack.c.l.b16 %v1594
        %v3422 = vunpack.c.h.b16 %v1594
        %v3423 = vunpack.c.l.b16 %v1595
        %v3424 = vunpack.c.h.b16 %v1595
        %v3425 = vunpack.c.l.b16 %v1596
        %v3426 = vunpack.c.h.b16 %v1596
        %v3427 = vunpack.c.l.b16 %v1597
        %v3428 = vunpack.c.h.b16 %v1597
        %v3429 = vunpack.c.l.b16 %v1598
        %v3430 = vunpack.c.h.b16 %v1598
        %v3431 = vunpack.c.l.b16 %v1599
        %v3432 = vunpack.c.h.b16 %v1599
        %v3433 = vunpack.c.l.b16 %v1600
        %v3434 = vunpack.c.h.b16 %v1600
        %v3435 = vunpack.c.l.b16 %v1601
        %v3436 = vunpack.c.h.b16 %v1601
        %v3437 = vunpack.c.l.b16 %v1602
        %v3438 = vunpack.c.h.b16 %v1602
        %v3439 = vunpack.c.l.b16 %v1603
        %v3440 = vunpack.c.h.b16 %v1603
        %v3441 = vunpack.c.l.b16 %v1604
        %v3442 = vunpack.c.h.b16 %v1604
        %v3443 = vunpack.c.l.b16 %v1605
        %v3444 = vunpack.c.h.b16 %v1605
        %v3445 = vunpack.c.l.b16 %v1606
        %v3446 = vunpack.c.h.b16 %v1606
        %v3447 = vunpack.c.l.b16 %v1607
        %v3448 = vunpack.c.h.b16 %v1607
        %v3449 = vunpack.c.l.b16 %v1608
        %v3450 = vunpack.c.h.b16 %v1608
        %v3451 = vunpack.c.l.b16 %v1609
        %v3452 = vunpack.c.h.b16 %v1609
        %v3453 = vunpack.c.l.b16 %v1610
        %v3454 = vunpack.c.h.b16 %v1610
        %v3455 = vunpack.c.l.b16 %v1611
        %v3456 = vunpack.c.h.b16 %v1611
        %v3457 = vunpack.c.l.b16 %v1612
        %v3458 = vunpack.c.h.b16 %v1612
        %v3459 = vunpack.c.l.b16 %v1613
        %v3460 = vunpack.c.h.b16 %v1613
        %v3461 = vunpack.c.l.b16 %v1614
        %v3462 = vunpack.c.h.b16 %v1614
        %v3463 = vunpack.c.l.b16 %v1615
        %v3464 = vunpack.c.h.b16 %v1615
        %v3465 = vunpack.c.l.b16 %v1616
        %v3466 = vunpack.c.h.b16 %v1616
        %v3467 = vunpack.c.l.b16 %v1617
        %v3468 = vunpack.c.h.b16 %v1617
        %v3469 = vunpack.c.l.b16 %v1618
        %v3470 = vunpack.c.h.b16 %v1618
        %v3471 = vunpack.c.l.b16 %v1619
        %v3472 = vunpack.c.h.b16 %v1619
        %v3473 = vunpack.c.l.b16 %v1620
        %v3474 = vunpack.c.h.b16 %v1620
        %v3475 = vunpack.c.l.b16 %v1621
        %v3476 = vunpack.c.h.b16 %v1621
        %v3477 = vunpack.c.l.b16 %v1622
        %v3478 = vunpack.c.h.b16 %v1622
        %v3479 = vunpack.c.l.b16 %v1623
        %v3480 = vunpack.c.h.b16 %v1623
        %v3481 = vunpack.c.l.b16 %v1624
        %v3482 = vunpack.c.h.b16 %v1624
        %v3483 = vunpack.c.l.b16 %v1625
        %v3484 = vunpack.c.h.b16 %v1625
        %v3485 = vunpack.c.l.b16 %v1626
        %v3486 = vunpack.c.h.b16 %v1626
        %v3487 = vunpack.c.l.b16 %v1627
        %v3488 = vunpack.c.h.b16 %v1627
        %v3489 = vunpack.c.l.b16 %v1628
        %v3490 = vunpack.c.h.b16 %v1628
        %v3491 = vunpack.c.l.b16 %v1629
        %v3492 = vunpack.c.h.b16 %v1629
        %v3493 = vunpack.c.l.b16 %v1630
        %v3494 = vunpack.c.h.b16 %v1630
        %v3495 = vunpack.c.l.b16 %v1631
        %v3496 = vunpack.c.h.b16 %v1631
        %v3497 = vunpack.c.l.b16 %v1632
        %v3498 = vunpack.c.h.b16 %v1632
        %v3499 = vunpack.c.l.b16 %v1633
        %v3500 = vunpack.c.h.b16 %v1633
        %v3501 = vunpack.c.l.b16 %v1634
        %v3502 = vunpack.c.h.b16 %v1634
        %v3503 = vunpack.c.l.b16 %v1635
        %v3504 = vunpack.c.h.b16 %v1635
        %v3505 = vunpack.c.l.b16 %v1636
        %v3506 = vunpack.c.h.b16 %v1636
        %v3507 = vunpack.c.l.b16 %v1637
        %v3508 = vunpack.c.h.b16 %v1637
        %v3509 = vunpack.c.l.b16 %v1638
        %v3510 = vunpack.c.h.b16 %v1638
        %v3511 = vunpack.c.l.b16 %v1639
        %v3512 = vunpack.c.h.b16 %v1639
        %v3513 = vunpack.c.l.b16 %v1640
        %v3514 = vunpack.c.h.b16 %v1640
        %v3515 = vunpack.c.l.b16 %v1641
        %v3516 = vunpack.c.h.b16 %v1641
        %v3517 = vunpack.c.l.b16 %v1642
        %v3518 = vunpack.c.h.b16 %v1642
        %v3519 = vunpack.c.l.b16 %v1643
        %v3520 = vunpack.c.h.b16 %v1643
        %v3521 = vunpack.c.l.b16 %v1644
        %v3522 = vunpack.c.h.b16 %v1644
        %v3523 = vunpack.c.l.b16 %v1645
        %v3524 = vunpack.c.h.b16 %v1645
        %v3525 = vunpack.c.l.b16 %v1646
        %v3526 = vunpack.c.h.b16 %v1646
        %v3527 = vunpack.c.l.b16 %v1647
        %v3528 = vunpack.c.h.b16 %v1647
        %v3529 = vunpack.c.l.b16 %v1648
        %v3530 = vunpack.c.h.b16 %v1648
        %v3531 = vunpack.c.l.b16 %v1649
        %v3532 = vunpack.c.h.b16 %v1649
        %v3533 = vunpack.c.l.b16 %v1650
        %v3534 = vunpack.c.h.b16 %v1650
        %v3535 = vunpack.c.l.b16 %v1651
        %v3536 = vunpack.c.h.b16 %v1651
        %v3537 = vunpack.c.l.b16 %v1652
        %v3538 = vunpack.c.h.b16 %v1652
        %v3539 = vunpack.c.l.b16 %v1653
        %v3540 = vunpack.c.h.b16 %v1653
        %v3541 = vunpack.c.l.b16 %v1654
        %v3542 = vunpack.c.h.b16 %v1654
        %v3543 = vunpack.c.l.b16 %v1655
        %v3544 = vunpack.c.h.b16 %v1655
        %v3545 = vunpack.c.l.b16 %v1656
        %v3546 = vunpack.c.h.b16 %v1656
        %v3547 = vunpack.c.l.b16 %v1657
        %v3548 = vunpack.c.h.b16 %v1657
        %v3549 = vunpack.c.l.b16 %v1658
        %v3550 = vunpack.c.h.b16 %v1658
        %v3551 = vunpack.c.l.b16 %v1659
        %v3552 = vunpack.c.h.b16 %v1659
        %v3553 = vunpack.c.l.b16 %v1660
        %v3554 = vunpack.c.h.b16 %v1660
        %v3555 = vunpack.c.l.b16 %v1661
        %v3556 = vunpack.c.h.b16 %v1661
        %v3557 = vunpack.c.l.b16 %v1662
        %v3558 = vunpack.c.h.b16 %v1662
        %v3559 = vunpack.c.l.b16 %v1663
        %v3560 = vunpack.c.h.b16 %v1663
        %v3561 = vunpack.c.l.b16 %v1664
        %v3562 = vunpack.c.h.b16 %v1664
        %v3563 = vunpack.c.l.b16 %v1665
        %v3564 = vunpack.c.h.b16 %v1665
        %v3565 = vunpack.c.l.b16 %v1666
        %v3566 = vunpack.c.h.b16 %v1666
        %v3567 = vunpack.c.l.b16 %v1667
        %v3568 = vunpack.c.h.b16 %v1667
        %v3569 = vunpack.c.l.b16 %v1668
        %v3570 = vunpack.c.h.b16 %v1668
        %v3571 = vunpack.c.l.b16 %v1669
        %v3572 = vunpack.c.h.b16 %v1669
        %v3573 = vunpack.c.l.b16 %v1670
        %v3574 = vunpack.c.h.b16 %v1670
        %v3575 = vunpack.c.l.b16 %v1671
        %v3576 = vunpack.c.h.b16 %v1671
        %v3577 = vunpack.c.l.b16 %v1672
        %v3578 = vunpack.c.h.b16 %v1672
        %v3579 = vunpack.c.l.b16 %v1673
        %v3580 = vunpack.c.h.b16 %v1673
        %v3581 = vunpack.c.l.b16 %v1674
        %v3582 = vunpack.c.h.b16 %v1674
        %v3583 = vunpack.c.l.b16 %v1675
        %v3584 = vunpack.c.h.b16 %v1675
        %v3585 = vunpack.c.l.b16 %v1676
        %v3586 = vunpack.c.h.b16 %v1676
        %v3587 = vunpack.c.l.b16 %v1677
        %v3588 = vunpack.c.h.b16 %v1677
        %v3589 = vunpack.c.l.b16 %v1678
        %v3590 = vunpack.c.h.b16 %v1678
        %v3591 = vunpack.c.l.b16 %v1679
        %v3592 = vunpack.c.h.b16 %v1679
        %v3593 = vunpack.c.l.b16 %v1680
        %v3594 = vunpack.c.h.b16 %v1680
        %v3595 = vunpack.c.l.b16 %v1681
        %v3596 = vunpack.c.h.b16 %v1681
        %v3597 = vunpack.c.l.b16 %v1682
        %v3598 = vunpack.c.h.b16 %v1682
        %v3599 = vunpack.c.l.b16 %v1683
        %v3600 = vunpack.c.h.b16 %v1683
        %v3601 = vunpack.c.l.b16 %v1684
        %v3602 = vunpack.c.h.b16 %v1684
        %v3603 = vunpack.c.l.b16 %v1685
        %v3604 = vunpack.c.h.b16 %v1685
        %v3605 = vunpack.c.l.b16 %v1686
        %v3606 = vunpack.c.h.b16 %v1686
        %v3607 = vunpack.c.l.b16 %v1687
        %v3608 = vunpack.c.h.b16 %v1687
        %v3609 = vunpack.c.l.b16 %v1688
        %v3610 = vunpack.c.h.b16 %v1688
        %v3611 = vunpack.c.l.b16 %v1689
        %v3612 = vunpack.c.h.b16 %v1689
        %v3613 = vunpack.c.l.b16 %v1690
        %v3614 = vunpack.c.h.b16 %v1690
        %v3615 = vunpack.c.l.b16 %v1691
        %v3616 = vunpack.c.h.b16 %v1691
        %v3617 = vunpack.c.l.b16 %v1692
        %v3618 = vunpack.c.h.b16 %v1692
        %v3619 = vunpack.c.l.b16 %v1693
        %v3620 = vunpack.c.h.b16 %v1693
        %v3621 = vunpack.c.l.b16 %v1694
        %v3622 = vunpack.c.h.b16 %v1694
        %v3623 = vunpack.c.l.b16 %v1695
        %v3624 = vunpack.c.h.b16 %v1695
        %v3625 = vunpack.c.l.b16 %v1696
        %v3626 = vunpack.c.h.b16 %v1696
        %v3627 = vunpack.c.l.b16 %v1697
        %v3628 = vunpack.c.h.b16 %v1697
        %v3629 = vunpack.c.l.b16 %v1698
        %v3630 = vunpack.c.h.b16 %v1698
        %v3631 = vunpack.c.l.b16 %v1699
        %v3632 = vunpack.c.h.b16 %v1699
        %v3633 = vunpack.c.l.b16 %v1700
        %v3634 = vunpack.c.h.b16 %v1700
        %v3635 = vunpack.c.l.b16 %v1701
        %v3636 = vunpack.c.h.b16 %v1701
        %v3637 = vunpack.c.l.b16 %v1702
        %v3638 = vunpack.c.h.b16 %v1702
        %v3639 = vunpack.c.l.b16 %v1703
        %v3640 = vunpack.c.h.b16 %v1703
        %v3641 = vunpack.c.l.b16 %v1704
        %v3642 = vunpack.c.h.b16 %v1704
        %v3643 = vunpack.c.l.b16 %v1705
        %v3644 = vunpack.c.h.b16 %v1705
        %v3645 = vunpack.c.l.b16 %v1706
        %v3646 = vunpack.c.h.b16 %v1706
        %v3647 = vunpack.c.l.b16 %v1707
        %v3648 = vunpack.c.h.b16 %v1707
        %v3649 = vunpack.c.l.b16 %v1708
        %v3650 = vunpack.c.h.b16 %v1708
        %v3651 = vunpack.c.l.b16 %v1709
        %v3652 = vunpack.c.h.b16 %v1709
        %v3653 = vunpack.c.l.b16 %v1710
        %v3654 = vunpack.c.h.b16 %v1710
        %v3655 = vunpack.c.l.b16 %v1711
        %v3656 = vunpack.c.h.b16 %v1711
        %v3657 = vunpack.c.l.b16 %v1712
        %v3658 = vunpack.c.h.b16 %v1712
        %v3659 = vunpack.c.l.b16 %v1713
        %v3660 = vunpack.c.h.b16 %v1713
        %v3661 = vunpack.c.l.b16 %v1714
        %v3662 = vunpack.c.h.b16 %v1714
        %v3663 = vunpack.c.l.b16 %v1715
        %v3664 = vunpack.c.h.b16 %v1715
        %v3665 = vunpack.c.l.b16 %v1716
        %v3666 = vunpack.c.h.b16 %v1716
        %v3667 = vunpack.c.l.b16 %v1717
        %v3668 = vunpack.c.h.b16 %v1717
        %v3669 = vunpack.c.l.b16 %v1718
        %v3670 = vunpack.c.h.b16 %v1718
        %v3671 = vunpack.c.l.b16 %v1719
        %v3672 = vunpack.c.h.b16 %v1719
        %v3673 = vunpack.c.l.b16 %v1720
        %v3674 = vunpack.c.h.b16 %v1720
        %v3675 = vunpack.c.l.b16 %v1721
        %v3676 = vunpack.c.h.b16 %v1721
        %v3677 = vunpack.c.l.b16 %v1722
        %v3678 = vunpack.c.h.b16 %v1722
        %v3679 = vunpack.c.l.b16 %v1723
        %v3680 = vunpack.c.h.b16 %v1723
        %v3681 = vunpack.c.l.b16 %v1724
        %v3682 = vunpack.c.h.b16 %v1724
        %v3683 = vunpack.c.l.b16 %v1725
        %v3684 = vunpack.c.h.b16 %v1725
        %v3685 = vunpack.c.l.b16 %v1726
        %v3686 = vunpack.c.h.b16 %v1726
        %v3687 = vunpack.c.l.b16 %v1727
        %v3688 = vunpack.c.h.b16 %v1727
        %v3689 = vunpack.c.l.b16 %v1728
        %v3690 = vunpack.c.h.b16 %v1728
        %v3691 = vunpack.c.l.b16 %v1729
        %v3692 = vunpack.c.h.b16 %v1729
        %v3693 = vunpack.c.l.b16 %v1730
        %v3694 = vunpack.c.h.b16 %v1730
        %v3695 = vunpack.c.l.b16 %v1731
        %v3696 = vunpack.c.h.b16 %v1731
        %v3697 = vunpack.c.l.b16 %v1732
        %v3698 = vunpack.c.h.b16 %v1732
        %v3699 = vunpack.c.l.b16 %v1733
        %v3700 = vunpack.c.h.b16 %v1733
        %v3701 = vunpack.c.l.b16 %v1734
        %v3702 = vunpack.c.h.b16 %v1734
        %v3703 = vunpack.c.l.b16 %v1735
        %v3704 = vunpack.c.h.b16 %v1735
        %v3705 = vunpack.c.l.b16 %v1736
        %v3706 = vunpack.c.h.b16 %v1736
        %v3707 = vunpack.c.l.b16 %v1737
        %v3708 = vunpack.c.h.b16 %v1737
        %v3709 = vunpack.c.l.b16 %v1738
        %v3710 = vunpack.c.h.b16 %v1738
        %v3711 = vunpack.c.l.b16 %v1739
        %v3712 = vunpack.c.h.b16 %v1739
        %v3713 = vunpack.c.l.b16 %v1740
        %v3714 = vunpack.c.h.b16 %v1740
        %v3715 = vunpack.c.l.b16 %v1741
        %v3716 = vunpack.c.h.b16 %v1741
        %v3717 = vunpack.c.l.b16 %v1742
        %v3718 = vunpack.c.h.b16 %v1742
        %v3719 = vunpack.c.l.b16 %v1743
        %v3720 = vunpack.c.h.b16 %v1743
        %v3721 = vunpack.c.l.b16 %v1744
        %v3722 = vunpack.c.h.b16 %v1744
        %v3723 = vunpack.c.l.b16 %v1745
        %v3724 = vunpack.c.h.b16 %v1745
        %v3725 = vunpack.c.l.b16 %v1746
        %v3726 = vunpack.c.h.b16 %v1746
        %v3727 = vunpack.c.l.b16 %v1747
        %v3728 = vunpack.c.h.b16 %v1747
        %v3729 = vunpack.c.l.b16 %v1748
        %v3730 = vunpack.c.h.b16 %v1748
        %v3731 = vunpack.c.l.b16 %v1749
        %v3732 = vunpack.c.h.b16 %v1749
        %v3733 = vunpack.c.l.b16 %v1750
        %v3734 = vunpack.c.h.b16 %v1750
        %v3735 = vunpack.c.l.b16 %v1751
        %v3736 = vunpack.c.h.b16 %v1751
        %v3737 = vunpack.c.l.b16 %v1752
        %v3738 = vunpack.c.h.b16 %v1752
        %v3739 = vunpack.c.l.b16 %v1753
        %v3740 = vunpack.c.h.b16 %v1753
        %v3741 = vunpack.c.l.b16 %v1754
        %v3742 = vunpack.c.h.b16 %v1754
        %v3743 = vunpack.c.l.b16 %v1755
        %v3744 = vunpack.c.h.b16 %v1755
        %v3745 = vunpack.c.l.b16 %v1756
        %v3746 = vunpack.c.h.b16 %v1756
        %v3747 = vunpack.c.l.b16 %v1757
        %v3748 = vunpack.c.h.b16 %v1757
        %v3749 = vunpack.c.l.b16 %v1758
        %v3750 = vunpack.c.h.b16 %v1758
        %v3751 = vunpack.c.l.b16 %v1759
        %v3752 = vunpack.c.h.b16 %v1759
        %v3753 = vunpack.c.l.b16 %v1760
        %v3754 = vunpack.c.h.b16 %v1760
        %v3755 = vunpack.c.l.b16 %v1761
        %v3756 = vunpack.c.h.b16 %v1761
        %v3757 = vunpack.c.l.b16 %v1762
        %v3758 = vunpack.c.h.b16 %v1762
        %v3759 = vunpack.c.l.b16 %v1763
        %v3760 = vunpack.c.h.b16 %v1763
        %v3761 = vunpack.c.l.b16 %v1764
        %v3762 = vunpack.c.h.b16 %v1764
        %v3763 = vunpack.c.l.b16 %v1765
        %v3764 = vunpack.c.h.b16 %v1765
        %v3765 = vunpack.c.l.b16 %v1766
        %v3766 = vunpack.c.h.b16 %v1766
        %v3767 = vunpack.c.l.b16 %v1767
        %v3768 = vunpack.c.h.b16 %v1767
        %v3769 = vunpack.c.l.b16 %v1768
        %v3770 = vunpack.c.h.b16 %v1768
        %v3771 = vunpack.c.l.b16 %v1769
        %v3772 = vunpack.c.h.b16 %v1769
        %v3773 = vunpack.c.l.b16 %v1770
        %v3774 = vunpack.c.h.b16 %v1770
        %v3775 = vunpack.c.l.b16 %v1771
        %v3776 = vunpack.c.h.b16 %v1771
        %v3777 = vunpack.c.l.b16 %v1772
        %v3778 = vunpack.c.h.b16 %v1772
        %v3779 = vunpack.c.l.b16 %v1773
        %v3780 = vunpack.c.h.b16 %v1773
        %v3781 = vunpack.c.l.b16 %v1774
        %v3782 = vunpack.c.h.b16 %v1774
        %v3783 = vunpack.c.l.b16 %v1775
        %v3784 = vunpack.c.h.b16 %v1775
        %v3785 = vunpack.c.l.b16 %v1776
        %v3786 = vunpack.c.h.b16 %v1776
        %v3787 = vunpack.c.l.b16 %v1777
        %v3788 = vunpack.c.h.b16 %v1777
        %v3789 = vunpack.c.l.b16 %v1778
        %v3790 = vunpack.c.h.b16 %v1778
        %v3791 = vunpack.c.l.b16 %v1779
        %v3792 = vunpack.c.h.b16 %v1779
        %v3793 = vunpack.c.l.b16 %v1780
        %v3794 = vunpack.c.h.b16 %v1780
        %v3795 = vunpack.c.l.b16 %v1781
        %v3796 = vunpack.c.h.b16 %v1781
        %v3797 = vunpack.c.l.b16 %v1782
        %v3798 = vunpack.c.h.b16 %v1782
        %v3799 = vunpack.c.l.b16 %v1783
        %v3800 = vunpack.c.h.b16 %v1783
        %v3801 = vunpack.c.l.b16 %v1784
        %v3802 = vunpack.c.h.b16 %v1784
        %v3803 = vunpack.c.l.b16 %v1785
        %v3804 = vunpack.c.h.b16 %v1785
        %v3805 = vunpack.c.l.b16 %v1786
        %v3806 = vunpack.c.h.b16 %v1786
        %v3807 = vunpack.c.l.b16 %v1787
        %v3808 = vunpack.c.h.b16 %v1787
        %v3809 = vunpack.c.l.b16 %v1788
        %v3810 = vunpack.c.h.b16 %v1788
        %v3811 = vunpack.c.l.b16 %v1789
        %v3812 = vunpack.c.h.b16 %v1789
        %v3813 = vunpack.c.l.b16 %v1790
        %v3814 = vunpack.c.h.b16 %v1790
        %v3815 = vunpack.c.l.b16 %v1791
        %v3816 = vunpack.c.h.b16 %v1791
        %v3817 = vunpack.c.l.b16 %v1792
        %v3818 = vunpack.c.h.b16 %v1792
        %v3819 = vunpack.c.l.b16 %v1793
        %v3820 = vunpack.c.h.b16 %v1793
        %v3821 = vunpack.c.l.b16 %v1794
        %v3822 = vunpack.c.h.b16 %v1794
        %v3823 = vunpack.c.l.b16 %v1795
        %v3824 = vunpack.c.h.b16 %v1795
        %v3825 = vunpack.c.l.b16 %v1796
        %v3826 = vunpack.c.h.b16 %v1796
        %v3827 = vunpack.c.l.b16 %v1797
        %v3828 = vunpack.c.h.b16 %v1797
        %v3829 = vunpack.c.l.b16 %v1798
        %v3830 = vunpack.c.h.b16 %v1798
        %v3831 = vunpack.c.l.b16 %v1799
        %v3832 = vunpack.c.h.b16 %v1799
        %v3833 = vunpack.c.l.b16 %v1800
        %v3834 = vunpack.c.h.b16 %v1800
        %v3835 = vunpack.c.l.b16 %v1801
        %v3836 = vunpack.c.h.b16 %v1801
        %v3837 = vunpack.c.l.b16 %v1802
        %v3838 = vunpack.c.h.b16 %v1802
        %v3839 = vunpack.c.l.b16 %v1803
        %v3840 = vunpack.c.h.b16 %v1803
        %v3841 = vunpack.c.l.b16 %v1804
        %v3842 = vunpack.c.h.b16 %v1804
        %v3843 = vunpack.c.l.b16 %v1805
        %v3844 = vunpack.c.h.b16 %v1805
        %v3845 = vunpack.c.l.b16 %v1806
        %v3846 = vunpack.c.h.b16 %v1806
        %v3847 = vunpack.c.l.b16 %v1807
        %v3848 = vunpack.c.h.b16 %v1807
        %v3849 = vunpack.c.l.b16 %v1808
        %v3850 = vunpack.c.h.b16 %v1808
        %v3851 = vunpack.c.l.b16 %v1809
        %v3852 = vunpack.c.h.b16 %v1809
        %v3853 = vunpack.c.l.b16 %v1810
        %v3854 = vunpack.c.h.b16 %v1810
        %v3855 = vunpack.c.l.b16 %v1811
        %v3856 = vunpack.c.h.b16 %v1811
        %v3857 = vunpack.c.l.b16 %v1812
        %v3858 = vunpack.c.h.b16 %v1812
        %v3859 = vunpack.c.l.b16 %v1813
        %v3860 = vunpack.c.h.b16 %v1813
        %v3861 = vunpack.c.l.b16 %v1814
        %v3862 = vunpack.c.h.b16 %v1814
        %v3863 = vunpack.c.l.b16 %v1815
        %v3864 = vunpack.c.h.b16 %v1815
        %v3865 = vunpack.c.l.b16 %v1816
        %v3866 = vunpack.c.h.b16 %v1816
        %v3867 = vunpack.c.l.b16 %v1817
        %v3868 = vunpack.c.h.b16 %v1817
        %v3869 = vunpack.c.l.b16 %v1818
        %v3870 = vunpack.c.h.b16 %v1818
        %v3871 = vunpack.c.l.b16 %v1819
        %v3872 = vunpack.c.h.b16 %v1819
        %v3873 = vunpack.c.l.b16 %v1820
        %v3874 = vunpack.c.h.b16 %v1820
        %v3875 = vunpack.c.l.b16 %v1821
        %v3876 = vunpack.c.h.b16 %v1821
        %v3877 = vunpack.c.l.b16 %v1822
        %v3878 = vunpack.c.h.b16 %v1822
        %v3879 = vunpack.c.l.b16 %v1823
        %v3880 = vunpack.c.h.b16 %v1823
        %v3881 = vunpack.c.l.b16 %v1824
        %v3882 = vunpack.c.h.b16 %v1824
        %v3883 = vunpack.c.l.b16 %v1825
        %v3884 = vunpack.c.h.b16 %v1825
        %v3885 = vunpack.c.l.b16 %v1826
        %v3886 = vunpack.c.h.b16 %v1826
        %v3887 = vunpack.c.l.b16 %v1827
        %v3888 = vunpack.c.h.b16 %v1827
        %v3889 = vunpack.c.l.b16 %v1828
        %v3890 = vunpack.c.h.b16 %v1828
        %v3891 = vunpack.c.l.b16 %v1829
        %v3892 = vunpack.c.h.b16 %v1829
        %v3893 = vunpack.c.l.b16 %v1830
        %v3894 = vunpack.c.h.b16 %v1830
        %v3895 = vunpack.c.l.b16 %v1831
        %v3896 = vunpack.c.h.b16 %v1831
        %v3897 = vunpack.c.l.b16 %v1832
        %v3898 = vunpack.c.h.b16 %v1832
        %v3899 = vunpack.c.l.b16 %v1833
        %v3900 = vunpack.c.h.b16 %v1833
        %v3901 = vunpack.c.l.b16 %v1834
        %v3902 = vunpack.c.h.b16 %v1834
        %v3903 = vunpack.c.l.b16 %v1835
        %v3904 = vunpack.c.h.b16 %v1835
        %v3905 = vunpack.c.l.b16 %v1836
        %v3906 = vunpack.c.h.b16 %v1836
        %v3907 = vunpack.c.l.b16 %v1837
        %v3908 = vunpack.c.h.b16 %v1837
        %v3909 = vunpack.c.l.b16 %v1838
        %v3910 = vunpack.c.h.b16 %v1838
        %v3911 = vunpack.c.l.b16 %v1839
        %v3912 = vunpack.c.h.b16 %v1839
        %v3913 = vunpack.c.l.b16 %v1840
        %v3914 = vunpack.c.h.b16 %v1840
        %v3915 = vunpack.c.l.b16 %v1841
        %v3916 = vunpack.c.h.b16 %v1841
        %v3917 = vunpack.c.l.b16 %v1842
        %v3918 = vunpack.c.h.b16 %v1842
        %v3919 = vunpack.c.l.b16 %v1843
        %v3920 = vunpack.c.h.b16 %v1843
        %v3921 = vunpack.c.l.b16 %v1844
        %v3922 = vunpack.c.h.b16 %v1844
        %v3923 = vunpack.c.l.b16 %v1845
        %v3924 = vunpack.c.h.b16 %v1845
        %v3925 = vunpack.c.l.b16 %v1846
        %v3926 = vunpack.c.h.b16 %v1846
        %v3927 = vunpack.c.l.b16 %v1847
        %v3928 = vunpack.c.h.b16 %v1847
        %v3929 = vunpack.c.l.b16 %v1848
        %v3930 = vunpack.c.h.b16 %v1848
        %v3931 = vunpack.c.l.b16 %v1849
        %v3932 = vunpack.c.h.b16 %v1849
        %v3933 = vunpack.c.l.b16 %v1850
        %v3934 = vunpack.c.h.b16 %v1850
        %v3935 = vunpack.c.l.b16 %v1851
        %v3936 = vunpack.c.h.b16 %v1851
        %v3937 = vunpack.c.l.b16 %v1852
        %v3938 = vunpack.c.h.b16 %v1852
        %v3939 = vunpack.c.l.b16 %v1853
        %v3940 = vunpack.c.h.b16 %v1853
        %v3941 = vunpack.c.l.b16 %v1854
        %v3942 = vunpack.c.h.b16 %v1854
        %v3943 = vunpack.c.l.b16 %v1855
        %v3944 = vunpack.c.h.b16 %v1855
        %v3945 = vunpack.c.l.b16 %v1856
        %v3946 = vunpack.c.h.b16 %v1856
        %v3947 = vunpack.c.l.b16 %v1857
        %v3948 = vunpack.c.h.b16 %v1857
        %v3949 = vunpack.c.l.b16 %v1858
        %v3950 = vunpack.c.h.b16 %v1858
        %v3951 = vunpack.c.l.b16 %v1859
        %v3952 = vunpack.c.h.b16 %v1859
        %v3953 = vunpack.c.l.b16 %v1860
        %v3954 = vunpack.c.h.b16 %v1860
        %v3955 = vunpack.c.l.b16 %v1861
        %v3956 = vunpack.c.h.b16 %v1861
        %v3957 = vunpack.c.l.b16 %v1862
        %v3958 = vunpack.c.h.b16 %v1862
        %v3959 = vunpack.c.l.b16 %v1863
        %v3960 = vunpack.c.h.b16 %v1863
        %v3961 = vunpack.c.l.b16 %v1864
        %v3962 = vunpack.c.h.b16 %v1864
        %v3963 = vunpack.c.l.b16 %v1865
        %v3964 = vunpack.c.h.b16 %v1865
        %v3965 = vunpack.c.l.b16 %v1866
        %v3966 = vunpack.c.h.b16 %v1866
        %v3967 = vunpack.c.l.b16 %v1867
        %v3968 = vunpack.c.h.b16 %v1867
        %v3969 = vunpack.c.l.b16 %v1868
        %v3970 = vunpack.c.h.b16 %v1868
        %v3971 = vunpack.c.l.b16 %v1869
        %v3972 = vunpack.c.h.b16 %v1869
        %v3973 = vunpack.c.l.b16 %v1870
        %v3974 = vunpack.c.h.b16 %v1870
        %v3975 = vunpack.c.l.b16 %v1871
        %v3976 = vunpack.c.h.b16 %v1871
        %v3977 = vunpack.c.l.b16 %v1872
        %v3978 = vunpack.c.h.b16 %v1872
        %v3979 = vunpack.c.l.b16 %v1873
        %v3980 = vunpack.c.h.b16 %v1873
        %v3981 = vunpack.c.l.b16 %v1874
        %v3982 = vunpack.c.h.b16 %v1874
        %v3983 = vunpack.c.l.b16 %v1875
        %v3984 = vunpack.c.h.b16 %v1875
        %v3985 = vunpack.c.l.b16 %v1876
        %v3986 = vunpack.c.h.b16 %v1876
        %v3987 = vunpack.c.l.b16 %v1877
        %v3988 = vunpack.c.h.b16 %v1877
        %v3989 = vunpack.c.l.b16 %v1878
        %v3990 = vunpack.c.h.b16 %v1878
        %v3991 = vunpack.c.l.b16 %v1879
        %v3992 = vunpack.c.h.b16 %v1879
        %v3993 = vunpack.c.l.b16 %v1880
        %v3994 = vunpack.c.h.b16 %v1880
        %v3995 = vunpack.c.l.b16 %v1881
        %v3996 = vunpack.c.h.b16 %v1881
        %v3997 = vunpack.c.l.b16 %v1882
        %v3998 = vunpack.c.h.b16 %v1882
        %v3999 = vunpack.c.l.b16 %v1883
        %v4000 = vunpack.c.h.b16 %v1883
        %v4001 = vunpack.c.l.b16 %v1884
        %v4002 = vunpack.c.h.b16 %v1884
        %v4003 = vunpack.c.l.b16 %v1885
        %v4004 = vunpack.c.h.b16 %v1885
        %v4005 = vunpack.c.l.b16 %v1886
        %v4006 = vunpack.c.h.b16 %v1886
        %v4007 = vunpack.c.l.b16 %v1887
        %v4008 = vunpack.c.h.b16 %v1887
        %v4009 = vunpack.c.l.b16 %v1888
        %v4010 = vunpack.c.h.b16 %v1888
        %v4011 = vunpack.c.l.b16 %v1889
        %v4012 = vunpack.c.h.b16 %v1889
        %v4013 = vunpack.c.l.b16 %v1890
        %v4014 = vunpack.c.h.b16 %v1890
        %v4015 = vunpack.c.l.b16 %v1891
        %v4016 = vunpack.c.h.b16 %v1891
        %v4017 = vunpack.c.l.b16 %v1892
        %v4018 = vunpack.c.h.b16 %v1892
        %v4019 = vunpack.c.l.b16 %v1893
        %v4020 = vunpack.c.h.b16 %v1893
        %v4021 = vunpack.c.l.b16 %v1894
        %v4022 = vunpack.c.h.b16 %v1894
        %v4023 = vunpack.c.l.b16 %v1895
        %v4024 = vunpack.c.h.b16 %v1895
        %v4025 = vunpack.c.l.b16 %v1896
        %v4026 = vunpack.c.h.b16 %v1896
        %v4027 = vunpack.c.l.b16 %v1897
        %v4028 = vunpack.c.h.b16 %v1897
        %v4029 = vunpack.c.l.b16 %v1898
        %v4030 = vunpack.c.h.b16 %v1898
        %v4031 = vunpack.c.l.b16 %v1899
        %v4032 = vunpack.c.h.b16 %v1899
        %v4033 = vunpack.c.l.b16 %v1900
        %v4034 = vunpack.c.h.b16 %v1900
        %v4035 = vunpack.c.l.b16 %v1901
        %v4036 = vunpack.c.h.b16 %v1901
        %v4037 = vunpack.c.l.b16 %v1902
        %v4038 = vunpack.c.h.b16 %v1902
        %v4039 = vunpack.c.l.b16 %v1903
        %v4040 = vunpack.c.h.b16 %v1903
        %v4041 = vunpack.c.l.b16 %v1904
        %v4042 = vunpack.c.h.b16 %v1904
        %v4043 = vunpack.c.l.b16 %v1905
        %v4044 = vunpack.c.h.b16 %v1905
        %v4045 = vunpack.c.l.b16 %v1906
        %v4046 = vunpack.c.h.b16 %v1906
        %v4047 = vunpack.c.l.b16 %v1907
        %v4048 = vunpack.c.h.b16 %v1907
        %v4049 = vunpack.c.l.b16 %v1908
        %v4050 = vunpack.c.h.b16 %v1908
        %v4051 = vunpack.c.l.b16 %v1909
        %v4052 = vunpack.c.h.b16 %v1909
        %v4053 = vunpack.c.l.b16 %v1910
        %v4054 = vunpack.c.h.b16 %v1910
        %v4055 = vunpack.c.l.b16 %v1911
        %v4056 = vunpack.c.h.b16 %v1911
        %v4057 = vunpack.c.l.b16 %v1912
        %v4058 = vunpack.c.h.b16 %v1912
        %v4059 = vunpack.c.l.b16 %v1913
        %v4060 = vunpack.c.h.b16 %v1913
        %v4061 = vunpack.c.l.b16 %v1914
        %v4062 = vunpack.c.h.b16 %v1914
        %v4063 = vunpack.c.l.b16 %v1915
        %v4064 = vunpack.c.h.b16 %v1915
        %v4065 = vunpack.c.l.b16 %v1916
        %v4066 = vunpack.c.h.b16 %v1916
        %v4067 = vunpack.c.l.b16 %v1917
        %v4068 = vunpack.c.h.b16 %v1917
        %v4069 = vunpack.c.l.b16 %v1918
        %v4070 = vunpack.c.h.b16 %v1918
        %v4071 = vunpack.c.l.b16 %v1919
        %v4072 = vunpack.c.h.b16 %v1919
        %v4073 = vunpack.c.l.b16 %v1920
        %v4074 = vunpack.c.h.b16 %v1920
        %v4075 = vunpack.c.l.b16 %v1921
        %v4076 = vunpack.c.h.b16 %v1921
        %v4077 = vunpack.c.l.b16 %v1922
        %v4078 = vunpack.c.h.b16 %v1922
        %v4079 = vunpack.c.l.b16 %v1923
        %v4080 = vunpack.c.h.b16 %v1923
        %v4081 = vunpack.c.l.b16 %v1924
        %v4082 = vunpack.c.h.b16 %v1924
        %v4083 = vunpack.c.l.b16 %v1925
        %v4084 = vunpack.c.h.b16 %v1925
        %v4085 = vunpack.c.l.b16 %v1926
        %v4086 = vunpack.c.h.b16 %v1926
        %v4087 = vunpack.c.l.b16 %v1927
        %v4088 = vunpack.c.h.b16 %v1927
        %v4089 = vunpack.c.l.b16 %v1928
        %v4090 = vunpack.c.h.b16 %v1928
        %v4091 = vunpack.c.l.b16 %v1929
        %v4092 = vunpack.c.h.b16 %v1929
        %v4093 = vunpack.c.l.b16 %v1930
        %v4094 = vunpack.c.h.b16 %v1930
        %v4095 = vunpack.c.l.b16 %v1931
        %v4096 = vunpack.c.h.b16 %v1931
        %v4097 = vunpack.c.l.b16 %v1932
        %v4098 = vunpack.c.h.b16 %v1932
        %v4099 = vunpack.c.l.b16 %v1933
        %v4100 = vunpack.c.h.b16 %v1933
        %v4101 = vunpack.c.l.b16 %v1934
        %v4102 = vunpack.c.h.b16 %v1934
        %v4103 = vunpack.c.l.b16 %v1935
        %v4104 = vunpack.c.h.b16 %v1935
        %v4105 = vunpack.c.l.b16 %v1936
        %v4106 = vunpack.c.h.b16 %v1936
        %v4107 = vunpack.c.l.b16 %v1937
        %v4108 = vunpack.c.h.b16 %v1937
        %v4109 = vunpack.c.l.b16 %v1938
        %v4110 = vunpack.c.h.b16 %v1938
        %v4111 = vunpack.c.l.b16 %v1939
        %v4112 = vunpack.c.h.b16 %v1939
        %v4113 = vunpack.c.l.b16 %v1940
        %v4114 = vunpack.c.h.b16 %v1940
        %v4115 = vunpack.c.l.b16 %v1941
        %v4116 = vunpack.c.h.b16 %v1941
        %v4117 = vunpack.c.l.b16 %v1942
        %v4118 = vunpack.c.h.b16 %v1942
        %v4119 = vunpack.c.l.b16 %v1943
        %v4120 = vunpack.c.h.b16 %v1943
        %v4121 = vunpack.c.l.b16 %v1944
        %v4122 = vunpack.c.h.b16 %v1944
        %v4123 = vunpack.c.l.b16 %v1945
        %v4124 = vunpack.c.h.b16 %v1945
        %v4125 = vunpack.c.l.b16 %v1946
        %v4126 = vunpack.c.h.b16 %v1946
        %v4127 = vunpack.c.l.b16 %v1947
        %v4128 = vunpack.c.h.b16 %v1947
        %v4129 = vunpack.c.l.b16 %v1948
        %v4130 = vunpack.c.h.b16 %v1948
        %v4131 = vunpack.c.l.b16 %v1949
        %v4132 = vunpack.c.h.b16 %v1949
        %v4133 = vunpack.c.l.b16 %v1950
        %v4134 = vunpack.c.h.b16 %v1950
        %v4135 = vunpack.c.l.b16 %v1951
        %v4136 = vunpack.c.h.b16 %v1951
        %v4137 = vunpack.c.l.b16 %v1952
        %v4138 = vunpack.c.h.b16 %v1952
        %v4139 = vunpack.c.l.b16 %v1953
        %v4140 = vunpack.c.h.b16 %v1953
        %v4141 = vunpack.c.l.b16 %v1954
        %v4142 = vunpack.c.h.b16 %v1954
        %v4143 = vunpack.c.l.b16 %v1955
        %v4144 = vunpack.c.h.b16 %v1955
        %v4145 = vunpack.c.l.b16 %v1956
        %v4146 = vunpack.c.h.b16 %v1956
        %v4147 = vunpack.c.l.b16 %v1957
        %v4148 = vunpack.c.h.b16 %v1957
        %v4149 = vunpack.c.l.b16 %v1958
        %v4150 = vunpack.c.h.b16 %v1958
        %v4151 = vunpack.c.l.b16 %v1959
        %v4152 = vunpack.c.h.b16 %v1959
        %v4153 = vunpack.c.l.b16 %v1960
        %v4154 = vunpack.c.h.b16 %v1960
        %v4155 = vunpack.c.l.b16 %v1961
        %v4156 = vunpack.c.h.b16 %v1961
        %v4157 = vunpack.c.l.b16 %v1962
        %v4158 = vunpack.c.h.b16 %v1962
        %v4159 = vunpack.c.l.b16 %v1963
        %v4160 = vunpack.c.h.b16 %v1963
        %v4161 = vunpack.c.l.b16 %v1964
        %v4162 = vunpack.c.h.b16 %v1964
        %v4163 = vunpack.c.l.b16 %v1965
        %v4164 = vunpack.c.h.b16 %v1965
        %v4165 = vunpack.c.l.b16 %v1966
        %v4166 = vunpack.c.h.b16 %v1966
        %v4167 = vunpack.c.l.b16 %v1967
        %v4168 = vunpack.c.h.b16 %v1967
        %v4169 = vunpack.c.l.b16 %v1968
        %v4170 = vunpack.c.h.b16 %v1968
        %v4171 = vunpack.c.l.b16 %v1969
        %v4172 = vunpack.c.h.b16 %v1969
        %v4173 = vunpack.c.l.b16 %v1970
        %v4174 = vunpack.c.h.b16 %v1970
        %v4175 = vunpack.c.l.b16 %v1971
        %v4176 = vunpack.c.h.b16 %v1971
        %v4177 = vunpack.c.l.b16 %v1972
        %v4178 = vunpack.c.h.b16 %v1972
        %v4179 = vunpack.c.l.b16 %v1973
        %v4180 = vunpack.c.h.b16 %v1973
        %v4181 = vunpack.c.l.b16 %v1974
        %v4182 = vunpack.c.h.b16 %v1974
        %v4183 = vunpack.c.l.b16 %v1975
        %v4184 = vunpack.c.h.b16 %v1975
        %v4185 = vunpack.c.l.b16 %v1976
        %v4186 = vunpack.c.h.b16 %v1976
        %v4187 = vunpack.c.l.b16 %v1977
        %v4188 = vunpack.c.h.b16 %v1977
        %v4189 = vunpack.c.l.b16 %v1978
        %v4190 = vunpack.c.h.b16 %v1978
        %v4191 = vunpack.c.l.b16 %v1979
        %v4192 = vunpack.c.h.b16 %v1979
        %v4193 = vunpack.c.l.b16 %v1980
        %v4194 = vunpack.c.h.b16 %v1980
        %v4195 = vpack.c.b16 %v2765, %v2755
        %v4196 = vpack.c.b16 %v2766, %v2756
        %v4197 = vpack.c.b16 %v2767, %v2757
        %v4198 = vpack.c.b16 %v2768, %v2758
        %v4199 = vpack.c.b16 %v2769, %v2759
        %v4200 = vpack.c.b16 %v2770, %v2760
        %v4201 = vpack.c.b16 %v2771, %v2761
        %v4202 = vpack.c.b16 %v2772, %v2762
        %v4203 = vpack.c.b16 %v2773, %v2763
        %v4204 = vpack.c.b16 %v2774, %v2764
        %v4205 = vpack.c.b16 %v2785, %v2775
        %v4206 = vpack.c.b16 %v2786, %v2776
        %v4207 = vpack.c.b16 %v2787, %v2777
        %v4208 = vpack.c.b16 %v2788, %v2778
        %v4209 = vpack.c.b16 %v2789, %v2779
        %v4210 = vpack.c.b16 %v2790, %v2780
        %v4211 = vpack.c.b16 %v2791, %v2781
        %v4212 = vpack.c.b16 %v2792, %v2782
        %v4213 = vpack.c.b16 %v2793, %v2783
        %v4214 = vpack.c.b16 %v2794, %v2784
        %v4215 = vpack.c.b16 %v2805, %v2795
        %v4216 = vpack.c.b16 %v2806, %v2796
        %v4217 = vpack.c.b16 %v2807, %v2797
        %v4218 = vpack.c.b16 %v2808, %v2798
        %v4219 = vpack.c.b16 %v2809, %v2799
        %v4220 = vpack.c.b16 %v2810, %v2800
        %v4221 = vpack.c.b16 %v2811, %v2801
        %v4222 = vpack.c.b16 %v2812, %v2802
        %v4223 = vpack.c.b16 %v2813, %v2803
        %v4224 = vpack.c.b16 %v2814, %v2804
        %v4225 = vpack.c.b16 %v2825, %v2815
        %v4226 = vpack.c.b16 %v2826, %v2816
        %v4227 = vpack.c.b16 %v2827, %v2817
        %v4228 = vpack.c.b16 %v2828, %v2818
        %v4229 = vpack.c.b16 %v2829, %v2819
        %v4230 = vpack.c.b16 %v2830, %v2820
        %v4231 = vpack.c.b16 %v2831, %v2821
        %v4232 = vpack.c.b16 %v2832, %v2822
        %v4233 = vpack.c.b16 %v2833, %v2823
        %v4234 = vpack.c.b16 %v2834, %v2824
        %v4235 = vpack.c.b16 %v2845, %v2835
        %v4236 = vpack.c.b16 %v2846, %v2836
        %v4237 = vpack.c.b16 %v2847, %v2837
        %v4238 = vpack.c.b16 %v2848, %v2838
        %v4239 = vpack.c.b16 %v2849, %v2839
        %v4240 = vpack.c.b16 %v2850, %v2840
        %v4241 = vpack.c.b16 %v2851, %v2841
        %v4242 = vpack.c.b16 %v2852, %v2842
        %v4243 = vpack.c.b16 %v2853, %v2843
        %v4244 = vpack.c.b16 %v2854, %v2844
        %v4245 = vpack.c.b16 %v2865, %v2855
        %v4246 = vpack.c.b16 %v2866, %v2856
        %v4247 = vpack.c.b16 %v2867, %v2857
        %v4248 = vpack.c.b16 %v2868, %v2858
        %v4249 = vpack.c.b16 %v2869, %v2859
        %v4250 = vpack.c.b16 %v2870, %v2860
        %v4251 = vpack.c.b16 %v2871, %v2861
        %v4252 = vpack.c.b16 %v2872, %v2862
        %v4253 = vpack.c.b16 %v2873, %v2863
        %v4254 = vpack.c.b16 %v2874, %v2864
        %v4255 = vpack.c.b16 %v2885, %v2875
        %v4256 = vpack.c.b16 %v2886, %v2876
        %v4257 = vpack.c.b16 %v2887, %v2877
        %v4258 = vpack.c.b16 %v2888, %v2878
        %v4259 = vpack.c.b16 %v2889, %v2879
        %v4260 = vpack.c.b16 %v2890, %v2880
        %v4261 = vpack.c.b16 %v2891, %v2881
        %v4262 = vpack.c.b16 %v2892, %v2882
        %v4263 = vpack.c.b16 %v2893, %v2883
        %v4264 = vpack.c.b16 %v2894, %v2884
        %v4265 = vpack.c.b16 %v2905, %v2895
        %v4266 = vpack.c.b16 %v2906, %v2896
        %v4267 = vpack.c.b16 %v2907, %v2897
        %v4268 = vpack.c.b16 %v2908, %v2898
        %v4269 = vpack.c.b16 %v2909, %v2899
        %v4270 = vpack.c.b16 %v2910, %v2900
        %v4271 = vpack.c.b16 %v2911, %v2901
        %v4272 = vpack.c.b16 %v2912, %v2902
        %v4273 = vpack.c.b16 %v2913, %v2903
        %v4274 = vpack.c.b16 %v2914, %v2904
        %v4275 = vpack.c.b16 %v2925, %v2915
        %v4276 = vpack.c.b16 %v2926, %v2916
        %v4277 = vpack.c.b16 %v2927, %v2917
        %v4278 = vpack.c.b16 %v2928, %v2918
        %v4279 = vpack.c.b16 %v2929, %v2919
        %v4280 = vpack.c.b16 %v2930, %v2920
        %v4281 = vpack.c.b16 %v2931, %v2921
        %v4282 = vpack.c.b16 %v2932, %v2922
        %v4283 = vpack.c.b16 %v2933, %v2923
        %v4284 = vpack.c.b16 %v2934, %v2924
        %v4285 = vpack.c.b16 %v2945, %v2935
        %v4286 = vpack.c.b16 %v2946, %v2936
        %v4287 = vpack.c.b16 %v2947, %v2937
        %v4288 = vpack.c.b16 %v2948, %v2938
        %v4289 = vpack.c.b16 %v2949, %v2939
        %v4290 = vpack.c.b16 %v2950, %v2940
        %v4291 = vpack.c.b16 %v2951, %v2941
        %v4292 = vpack.c.b16 %v2952, %v2942
        %v4293 = vpack.c.b16 %v2953, %v2943
        %v4294 = vpack.c.b16 %v2954, %v2944
        %v4295 = vpack.c.b16 %v2965, %v2955
        %v4296 = vpack.c.b16 %v2966, %v2956
        %v4297 = vpack.c.b16 %v2967, %v2957
        %v4298 = vpack.c.b16 %v2968, %v2958
        %v4299 = vpack.c.b16 %v2969, %v2959
        %v4300 = vpack.c.b16 %v2970, %v2960
        %v4301 = vpack.c.b16 %v2971, %v2961
        %v4302 = vpack.c.b16 %v2972, %v2962
        %v4303 = vpack.c.b16 %v2973, %v2963
        %v4304 = vpack.c.b16 %v2974, %v2964
        %v4305 = vpack.c.b16 %v2985, %v2975
        %v4306 = vpack.c.b16 %v2986, %v2976
        %v4307 = vpack.c.b16 %v2987, %v2977
        %v4308 = vpack.c.b16 %v2988, %v2978
        %v4309 = vpack.c.b16 %v2989, %v2979
        %v4310 = vpack.c.b16 %v2990, %v2980
        %v4311 = vpack.c.b16 %v2991, %v2981
        %v4312 = vpack.c.b16 %v2992, %v2982
        %v4313 = vpack.c.b16 %v2993, %v2983
        %v4314 = vpack.c.b16 %v2994, %v2984
        %v4315 = vpack.c.b16 %v3005, %v2995
        %v4316 = vpack.c.b16 %v3006, %v2996
        %v4317 = vpack.c.b16 %v3007, %v2997
        %v4318 = vpack.c.b16 %v3008, %v2998
        %v4319 = vpack.c.b16 %v3009, %v2999
        %v4320 = vpack.c.b16 %v3010, %v3000
        %v4321 = vpack.c.b16 %v3011, %v3001
        %v4322 = vpack.c.b16 %v3012, %v3002
        %v4323 = vpack.c.b16 %v3013, %v3003
        %v4324 = vpack.c.b16 %v3014, %v3004
        %v4325 = vpack.c.b16 %v3025, %v3015
        %v4326 = vpack.c.b16 %v3026, %v3016
        %v4327 = vpack.c.b16 %v3027, %v3017
        %v4328 = vpack.c.b16 %v3028, %v3018
        %v4329 = vpack.c.b16 %v3029, %v3019
        %v4330 = vpack.c.b16 %v3030, %v3020
        %v4331 = vpack.c.b16 %v3031, %v3021
        %v4332 = vpack.c.b16 %v3032, %v3022
        %v4333 = vpack.c.b16 %v3033, %v3023
        %v4334 = vpack.c.b16 %v3034, %v3024
        %v4335 = vpack.c.b16 %v3045, %v3035
        %v4336 = vpack.c.b16 %v3046, %v3036
        %v4337 = vpack.c.b16 %v3047, %v3037
        %v4338 = vpack.c.b16 %v3048, %v3038
        %v4339 = vpack.c.b16 %v3049, %v3039
        %v4340 = vpack.c.b16 %v3050, %v3040
        %v4341 = vpack.c.b16 %v3051, %v3041
        %v4342 = vpack.c.b16 %v3052, %v3042
        %v4343 = vpack.c.b16 %v3053, %v3043
        %v4344 = vpack.c.b16 %v3054, %v3044
        %v4345 = vpack.c.b16 %v3065, %v3055
        %v4346 = vpack.c.b16 %v3066, %v3056
        %v4347 = vpack.c.b16 %v3067, %v3057
        %v4348 = vpack.c.b16 %v3068, %v3058
        %v4349 = vpack.c.b16 %v3069, %v3059
        %v4350 = vpack.c.b16 %v3070, %v3060
        %v4351 = vpack.c.b16 %v3071, %v3061
        %v4352 = vpack.c.b16 %v3072, %v3062
        %v4353 = vpack.c.b16 %v3073, %v3063
        %v4354 = vpack.c.b16 %v3074, %v3064
        %v4355 = vpack.c.b16 %v3085, %v3075
        %v4356 = vpack.c.b16 %v3086, %v3076
        %v4357 = vpack.c.b16 %v3087, %v3077
        %v4358 = vpack.c.b16 %v3088, %v3078
        %v4359 = vpack.c.b16 %v3089, %v3079
        %v4360 = vpack.c.b16 %v3090, %v3080
        %v4361 = vpack.c.b16 %v3091, %v3081
        %v4362 = vpack.c.b16 %v3092, %v3082
        %v4363 = vpack.c.b16 %v3093, %v3083
        %v4364 = vpack.c.b16 %v3094, %v3084
        %v4365 = vpack.c.b16 %v3105, %v3095
        %v4366 = vpack.c.b16 %v3106, %v3096
        %v4367 = vpack.c.b16 %v3107, %v3097
        %v4368 = vpack.c.b16 %v3108, %v3098
        %v4369 = vpack.c.b16 %v3109, %v3099
        %v4370 = vpack.c.b16 %v3110, %v3100
        %v4371 = vpack.c.b16 %v3111, %v3101
        %v4372 = vpack.c.b16 %v3112, %v3102
        %v4373 = vpack.c.b16 %v3113, %v3103
        %v4374 = vpack.c.b16 %v3114, %v3104
        %v4375 = vpack.c.b16 %v3125, %v3115
        %v4376 = vpack.c.b16 %v3126, %v3116
        %v4377 = vpack.c.b16 %v3127, %v3117
        %v4378 = vpack.c.b16 %v3128, %v3118
        %v4379 = vpack.c.b16 %v3129, %v3119
        %v4380 = vpack.c.b16 %v3130, %v3120
        %v4381 = vpack.c.b16 %v3131, %v3121
        %v4382 = vpack.c.b16 %v3132, %v3122
        %v4383 = vpack.c.b16 %v3133, %v3123
        %v4384 = vpack.c.b16 %v3134, %v3124
        %v4385 = vpack.c.b16 %v3145, %v3135
        %v4386 = vpack.c.b16 %v3146, %v3136
        %v4387 = vpack.c.b16 %v3147, %v3137
        %v4388 = vpack.c.b16 %v3148, %v3138
        %v4389 = vpack.c.b16 %v3149, %v3139
        %v4390 = vpack.c.b16 %v3150, %v3140
        %v4391 = vpack.c.b16 %v3151, %v3141
        %v4392 = vpack.c.b16 %v3152, %v3142
        %v4393 = vpack.c.b16 %v3153, %v3143
        %v4394 = vpack.c.b16 %v3154, %v3144
        %v4395 = vpack.c.b16 %v3165, %v3155
        %v4396 = vpack.c.b16 %v3166, %v3156
        %v4397 = vpack.c.b16 %v3167, %v3157
        %v4398 = vpack.c.b16 %v3168, %v3158
        %v4399 = vpack.c.b16 %v3169, %v3159
        %v4400 = vpack.c.b16 %v3170, %v3160
        %v4401 = vpack.c.b16 %v3171, %v3161
        %v4402 = vpack.c.b16 %v3172, %v3162
        %v4403 = vpack.c.b16 %v3173, %v3163
        %v4404 = vpack.c.b16 %v3174, %v3164
        %v4405 = vpack.c.b16 %v3185, %v3175
        %v4406 = vpack.c.b16 %v3186, %v3176
        %v4407 = vpack.c.b16 %v3187, %v3177
        %v4408 = vpack.c.b16 %v3188, %v3178
        %v4409 = vpack.c.b16 %v3189, %v3179
        %v4410 = vpack.c.b16 %v3190, %v3180
        %v4411 = vpack.c.b16 %v3191, %v3181
        %v4412 = vpack.c.b16 %v3192, %v3182
        %v4413 = vpack.c.b16 %v3193, %v3183
        %v4414 = vpack.c.b16 %v3194, %v3184
        %v4415 = vpack.c.b16 %v3205, %v3195
        %v4416 = vpack.c.b16 %v3206, %v3196
        %v4417 = vpack.c.b16 %v3207, %v3197
        %v4418 = vpack.c.b16 %v3208, %v3198
        %v4419 = vpack.c.b16 %v3209, %v3199
        %v4420 = vpack.c.b16 %v3210, %v3200
        %v4421 = vpack.c.b16 %v3211, %v3201
        %v4422 = vpack.c.b16 %v3212, %v3202
        %v4423 = vpack.c.b16 %v3213, %v3203
        %v4424 = vpack.c.b16 %v3214, %v3204
        %v4425 = vpack.c.b16 %v3225, %v3215
        %v4426 = vpack.c.b16 %v3226, %v3216
        %v4427 = vpack.c.b16 %v3227, %v3217
        %v4428 = vpack.c.b16 %v3228, %v3218
        %v4429 = vpack.c.b16 %v3229, %v3219
        %v4430 = vpack.c.b16 %v3230, %v3220
        %v4431 = vpack.c.b16 %v3231, %v3221
        %v4432 = vpack.c.b16 %v3232, %v3222
        %v4433 = vpack.c.b16 %v3233, %v3223
        %v4434 = vpack.c.b16 %v3234, %v3224
        %v4435 = vpack.c.b16 %v3245, %v3235
        %v4436 = vpack.c.b16 %v3246, %v3236
        %v4437 = vpack.c.b16 %v3247, %v3237
        %v4438 = vpack.c.b16 %v3248, %v3238
        %v4439 = vpack.c.b16 %v3249, %v3239
        %v4440 = vpack.c.b16 %v3250, %v3240
        %v4441 = vpack.c.b16 %v3251, %v3241
        %v4442 = vpack.c.b16 %v3252, %v3242
        %v4443 = vpack.c.b16 %v3253, %v3243
        %v4444 = vpack.c.b16 %v3254, %v3244
        %v4445 = vpack.c.b16 %v3265, %v3255
        %v4446 = vpack.c.b16 %v3266, %v3256
        %v4447 = vpack.c.b16 %v3267, %v3257
        %v4448 = vpack.c.b16 %v3268, %v3258
        %v4449 = vpack.c.b16 %v3269, %v3259
        %v4450 = vpack.c.b16 %v3270, %v3260
        %v4451 = vpack.c.b16 %v3271, %v3261
        %v4452 = vpack.c.b16 %v3272, %v3262
        %v4453 = vpack.c.b16 %v3273, %v3263
        %v4454 = vpack.c.b16 %v3274, %v3264
        %v4455 = vpack.c.b16 %v3285, %v3275
        %v4456 = vpack.c.b16 %v3286, %v3276
        %v4457 = vpack.c.b16 %v3287, %v3277
        %v4458 = vpack.c.b16 %v3288, %v3278
        %v4459 = vpack.c.b16 %v3289, %v3279
        %v4460 = vpack.c.b16 %v3290, %v3280
        %v4461 = vpack.c.b16 %v3291, %v3281
        %v4462 = vpack.c.b16 %v3292, %v3282
        %v4463 = vpack.c.b16 %v3293, %v3283
        %v4464 = vpack.c.b16 %v3294, %v3284
        %v4465 = vpack.c.b16 %v3305, %v3295
        %v4466 = vpack.c.b16 %v3306, %v3296
        %v4467 = vpack.c.b16 %v3307, %v3297
        %v4468 = vpack.c.b16 %v3308, %v3298
        %v4469 = vpack.c.b16 %v3309, %v3299
        %v4470 = vpack.c.b16 %v3310, %v3300
        %v4471 = vpack.c.b16 %v3311, %v3301
        %v4472 = vpack.c.b16 %v3312, %v3302
        %v4473 = vpack.c.b16 %v3313, %v3303
        %v4474 = vpack.c.b16 %v3314, %v3304
        %v4475 = vpack.c.b16 %v3325, %v3315
        %v4476 = vpack.c.b16 %v3326, %v3316
        %v4477 = vpack.c.b16 %v3327, %v3317
        %v4478 = vpack.c.b16 %v3328, %v3318
        %v4479 = vpack.c.b16 %v3329, %v3319
        %v4480 = vpack.c.b16 %v3330, %v3320
        %v4481 = vpack.c.b16 %v3331, %v3321
        %v4482 = vpack.c.b16 %v3332, %v3322
        %v4483 = vpack.c.b16 %v3333, %v3323
        %v4484 = vpack.c.b16 %v3334, %v3324
        %v4485 = vpack.c.b16 %v3345, %v3335
        %v4486 = vpack.c.b16 %v3346, %v3336
        %v4487 = vpack.c.b16 %v3347, %v3337
        %v4488 = vpack.c.b16 %v3348, %v3338
        %v4489 = vpack.c.b16 %v3349, %v3339
        %v4490 = vpack.c.b16 %v3350, %v3340
        %v4491 = vpack.c.b16 %v3351, %v3341
        %v4492 = vpack.c.b16 %v3352, %v3342
        %v4493 = vpack.c.b16 %v3353, %v3343
        %v4494 = vpack.c.b16 %v3354, %v3344
        %v4495 = vpack.c.b16 %v3365, %v3355
        %v4496 = vpack.c.b16 %v3366, %v3356
        %v4497 = vpack.c.b16 %v3367, %v3357
        %v4498 = vpack.c.b16 %v3368, %v3358
        %v4499 = vpack.c.b16 %v3369, %v3359
        %v4500 = vpack.c.b16 %v3370, %v3360
        %v4501 = vpack.c.b16 %v3371, %v3361
        %v4502 = vpack.c.b16 %v3372, %v3362
        %v4503 = vpack.c.b16 %v3373, %v3363
        %v4504 = vpack.c.b16 %v3374, %v3364
        %v4505 = vpack.c.b16 %v3385, %v3375
        %v4506 = vpack.c.b16 %v3386, %v3376
        %v4507 = vpack.c.b16 %v3387, %v3377
        %v4508 = vpack.c.b16 %v3388, %v3378
        %v4509 = vpack.c.b16 %v3389, %v3379
        %v4510 = vpack.c.b16 %v3390, %v3380
        %v4511 = vpack.c.b16 %v3391, %v3381
        %v4512 = vpack.c.b16 %v3392, %v3382
        %v4513 = vpack.c.b16 %v3393, %v3383
        %v4514 = vpack.c.b16 %v3394, %v3384
        %v4515 = vpack.c.b16 %v3405, %v3395
        %v4516 = vpack.c.b16 %v3406, %v3396
        %v4517 = vpack.c.b16 %v3407, %v3397
        %v4518 = vpack.c.b16 %v3408, %v3398
        %v4519 = vpack.c.b16 %v3409, %v3399
        %v4520 = vpack.c.b16 %v3410, %v3400
        %v4521 = vpack.c.b16 %v3411, %v3401
        %v4522 = vpack.c.b16 %v3412, %v3402
        %v4523 = vpack.c.b16 %v3413, %v3403
        %v4524 = vpack.c.b16 %v3414, %v3404
        %v4525 = vpack.c.b16 %v3425, %v3415
        %v4526 = vpack.c.b16 %v3426, %v3416
        %v4527 = vpack.c.b16 %v3427, %v3417
        %v4528 = vpack.c.b16 %v3428, %v3418
        %v4529 = vpack.c.b16 %v3429, %v3419
        %v4530 = vpack.c.b16 %v3430, %v3420
        %v4531 = vpack.c.b16 %v3431, %v3421
        %v4532 = vpack.c.b16 %v3432, %v3422
        %v4533 = vpack.c.b16 %v3433, %v3423
        %v4534 = vpack.c.b16 %v3434, %v3424
        %v4535 = vpack.c.b16 %v3445, %v3435
        %v4536 = vpack.c.b16 %v3446, %v3436
        %v4537 = vpack.c.b16 %v3447, %v3437
        %v4538 = vpack.c.b16 %v3448, %v3438
        %v4539 = vpack.c.b16 %v3449, %v3439
        %v4540 = vpack.c.b16 %v3450, %v3440
        %v4541 = vpack.c.b16 %v3451, %v3441
        %v4542 = vpack.c.b16 %v3452, %v3442
        %v4543 = vpack.c.b16 %v3453, %v3443
        %v4544 = vpack.c.b16 %v3454, %v3444
        %v4545 = vpack.c.b16 %v3465, %v3455
        %v4546 = vpack.c.b16 %v3466, %v3456
        %v4547 = vpack.c.b16 %v3467, %v3457
        %v4548 = vpack.c.b16 %v3468, %v3458
        %v4549 = vpack.c.b16 %v3469, %v3459
        %v4550 = vpack.c.b16 %v3470, %v3460
        %v4551 = vpack.c.b16 %v3471, %v3461
        %v4552 = vpack.c.b16 %v3472, %v3462
        %v4553 = vpack.c.b16 %v3473, %v3463
        %v4554 = vpack.c.b16 %v3474, %v3464
        %v4555 = vpack.c.b16 %v3485, %v3475
        %v4556 = vpack.c.b16 %v3486, %v3476
        %v4557 = vpack.c.b16 %v3487, %v3477
        %v4558 = vpack.c.b16 %v3488, %v3478
        %v4559 = vpack.c.b16 %v3489, %v3479
        %v4560 = vpack.c.b16 %v3490, %v3480
        %v4561 = vpack.c.b16 %v3491, %v3481
        %v4562 = vpack.c.b16 %v3492, %v3482
        %v4563 = vpack.c.b16 %v3493, %v3483
        %v4564 = vpack.c.b16 %v3494, %v3484
        %v4565 = vpack.c.b16 %v3505, %v3495
        %v4566 = vpack.c.b16 %v3506, %v3496
        %v4567 = vpack.c.b16 %v3507, %v3497
        %v4568 = vpack.c.b16 %v3508, %v3498
        %v4569 = vpack.c.b16 %v3509, %v3499
        %v4570 = vpack.c.b16 %v3510, %v3500
        %v4571 = vpack.c.b16 %v3511, %v3501
        %v4572 = vpack.c.b16 %v3512, %v3502
        %v4573 = vpack.c.b16 %v3513, %v3503
        %v4574 = vpack.c.b16 %v3514, %v3504
        %v4575 = vpack.c.b16 %v3525, %v3515
        %v4576 = vpack.c.b16 %v3526, %v3516
        %v4577 = vpack.c.b16 %v3527, %v3517
        %v4578 = vpack.c.b16 %v3528, %v3518
        %v4579 = vpack.c.b16 %v3529, %v3519
        %v4580 = vpack.c.b16 %v3530, %v3520
        %v4581 = vpack.c.b16 %v3531, %v3521
        %v4582 = vpack.c.b16 %v3532, %v3522
        %v4583 = vpack.c.b16 %v3533, %v3523
        %v4584 = vpack.c.b16 %v3534, %v3524
        %v4585 = vpack.c.b16 %v3545, %v3535
        %v4586 = vpack.c.b16 %v3546, %v3536
        %v4587 = vpack.c.b16 %v3547, %v3537
        %v4588 = vpack.c.b16 %v3548, %v3538
        %v4589 = vpack.c.b16 %v3549, %v3539
        %v4590 = vpack.c.b16 %v3550, %v3540
        %v4591 = vpack.c.b16 %v3551, %v3541
        %v4592 = vpack.c.b16 %v3552, %v3542
        %v4593 = vpack.c.b16 %v3553, %v3543
        %v4594 = vpack.c.b16 %v3554, %v3544
        %v4595 = vpack.c.b16 %v3565, %v3555
        %v4596 = vpack.c.b16 %v3566, %v3556
        %v4597 = vpack.c.b16 %v3567, %v3557
        %v4598 = vpack.c.b16 %v3568, %v3558
        %v4599 = vpack.c.b16 %v3569, %v3559
        %v4600 = vpack.c.b16 %v3570, %v3560
        %v4601 = vpack.c.b16 %v3571, %v3561
        %v4602 = vpack.c.b16 %v3572, %v3562
        %v4603 = vpack.c.b16 %v3573, %v3563
        %v4604 = vpack.c.b16 %v3574, %v3564
        %v4605 = vpack.c.b16 %v3585, %v3575
        %v4606 = vpack.c.b16 %v3586, %v3576
        %v4607 = vpack.c.b16 %v3587, %v3577
        %v4608 = vpack.c.b16 %v3588, %v3578
        %v4609 = vpack.c.b16 %v3589, %v3579
        %v4610 = vpack.c.b16 %v3590, %v3580
        %v4611 = vpack.c.b16 %v3591, %v3581
        %v4612 = vpack.c.b16 %v3592, %v3582
        %v4613 = vpack.c.b16 %v3593, %v3583
        %v4614 = vpack.c.b16 %v3594, %v3584
        %v4615 = vpack.c.b16 %v3605, %v3595
        %v4616 = vpack.c.b16 %v3606, %v3596
        %v4617 = vpack.c.b16 %v3607, %v3597
        %v4618 = vpack.c.b16 %v3608, %v3598
        %v4619 = vpack.c.b16 %v3609, %v3599
        %v4620 = vpack.c.b16 %v3610, %v3600
        %v4621 = vpack.c.b16 %v3611, %v3601
        %v4622 = vpack.c.b16 %v3612, %v3602
        %v4623 = vpack.c.b16 %v3613, %v3603
        %v4624 = vpack.c.b16 %v3614, %v3604
        %v4625 = vpack.c.b16 %v3625, %v3615
        %v4626 = vpack.c.b16 %v3626, %v3616
        %v4627 = vpack.c.b16 %v3627, %v3617
        %v4628 = vpack.c.b16 %v3628, %v3618
        %v4629 = vpack.c.b16 %v3629, %v3619
        %v4630 = vpack.c.b16 %v3630, %v3620
        %v4631 = vpack.c.b16 %v3631, %v3621
        %v4632 = vpack.c.b16 %v3632, %v3622
        %v4633 = vpack.c.b16 %v3633, %v3623
        %v4634 = vpack.c.b16 %v3634, %v3624
        %v4635 = vpack.c.b16 %v3645, %v3635
        %v4636 = vpack.c.b16 %v3646, %v3636
        %v4637 = vpack.c.b16 %v3647, %v3637
        %v4638 = vpack.c.b16 %v3648, %v3638
        %v4639 = vpack.c.b16 %v3649, %v3639
        %v4640 = vpack.c.b16 %v3650, %v3640
        %v4641 = vpack.c.b16 %v3651, %v3641
        %v4642 = vpack.c.b16 %v3652, %v3642
        %v4643 = vpack.c.b16 %v3653, %v3643
        %v4644 = vpack.c.b16 %v3654, %v3644
        %v4645 = vpack.c.b16 %v3665, %v3655
        %v4646 = vpack.c.b16 %v3666, %v3656
        %v4647 = vpack.c.b16 %v3667, %v3657
        %v4648 = vpack.c.b16 %v3668, %v3658
        %v4649 = vpack.c.b16 %v3669, %v3659
        %v4650 = vpack.c.b16 %v3670, %v3660
        %v4651 = vpack.c.b16 %v3671, %v3661
        %v4652 = vpack.c.b16 %v3672, %v3662
        %v4653 = vpack.c.b16 %v3673, %v3663
        %v4654 = vpack.c.b16 %v3674, %v3664
        %v4655 = vpack.c.b16 %v3685, %v3675
        %v4656 = vpack.c.b16 %v3686, %v3676
        %v4657 = vpack.c.b16 %v3687, %v3677
        %v4658 = vpack.c.b16 %v3688, %v3678
        %v4659 = vpack.c.b16 %v3689, %v3679
        %v4660 = vpack.c.b16 %v3690, %v3680
        %v4661 = vpack.c.b16 %v3691, %v3681
        %v4662 = vpack.c.b16 %v3692, %v3682
        %v4663 = vpack.c.b16 %v3693, %v3683
        %v4664 = vpack.c.b16 %v3694, %v3684
        %v4665 = vpack.c.b16 %v3705, %v3695
        %v4666 = vpack.c.b16 %v3706, %v3696
        %v4667 = vpack.c.b16 %v3707, %v3697
        %v4668 = vpack.c.b16 %v3708, %v3698
        %v4669 = vpack.c.b16 %v3709, %v3699
        %v4670 = vpack.c.b16 %v3710, %v3700
        %v4671 = vpack.c.b16 %v3711, %v3701
        %v4672 = vpack.c.b16 %v3712, %v3702
        %v4673 = vpack.c.b16 %v3713, %v3703
        %v4674 = vpack.c.b16 %v3714, %v3704
        %v4675 = vpack.c.b16 %v3725, %v3715
        %v4676 = vpack.c.b16 %v3726, %v3716
        %v4677 = vpack.c.b16 %v3727, %v3717
        %v4678 = vpack.c.b16 %v3728, %v3718
        %v4679 = vpack.c.b16 %v3729, %v3719
        %v4680 = vpack.c.b16 %v3730, %v3720
        %v4681 = vpack.c.b16 %v3731, %v3721
        %v4682 = vpack.c.b16 %v3732, %v3722
        %v4683 = vpack.c.b16 %v3733, %v3723
        %v4684 = vpack.c.b16 %v3734, %v3724
        %v4685 = vpack.c.b16 %v3745, %v3735
        %v4686 = vpack.c.b16 %v3746, %v3736
        %v4687 = vpack.c.b16 %v3747, %v3737
        %v4688 = vpack.c.b16 %v3748, %v3738
        %v4689 = vpack.c.b16 %v3749, %v3739
        %v4690 = vpack.c.b16 %v3750, %v3740
        %v4691 = vpack.c.b16 %v3751, %v3741
        %v4692 = vpack.c.b16 %v3752, %v3742
        %v4693 = vpack.c.b16 %v3753, %v3743
        %v4694 = vpack.c.b16 %v3754, %v3744
        %v4695 = vpack.c.b16 %v3765, %v3755
        %v4696 = vpack.c.b16 %v3766, %v3756
        %v4697 = vpack.c.b16 %v3767, %v3757
        %v4698 = vpack.c.b16 %v3768, %v3758
        %v4699 = vpack.c.b16 %v3769, %v3759
        %v4700 = vpack.c.b16 %v3770, %v3760
        %v4701 = vpack.c.b16 %v3771, %v3761
        %v4702 = vpack.c.b16 %v3772, %v3762
        %v4703 = vpack.c.b16 %v3773, %v3763
        %v4704 = vpack.c.b16 %v3774, %v3764
        %v4705 = vpack.c.b16 %v3785, %v3775
        %v4706 = vpack.c.b16 %v3786, %v3776
        %v4707 = vpack.c.b16 %v3787, %v3777
        %v4708 = vpack.c.b16 %v3788, %v3778
        %v4709 = vpack.c.b16 %v3789, %v3779
        %v4710 = vpack.c.b16 %v3790, %v3780
        %v4711 = vpack.c.b16 %v3791, %v3781
        %v4712 = vpack.c.b16 %v3792, %v3782
        %v4713 = vpack.c.b16 %v3793, %v3783
        %v4714 = vpack.c.b16 %v3794, %v3784
        %v4715 = vpack.c.b16 %v3805, %v3795
        %v4716 = vpack.c.b16 %v3806, %v3796
        %v4717 = vpack.c.b16 %v3807, %v3797
        %v4718 = vpack.c.b16 %v3808, %v3798
        %v4719 = vpack.c.b16 %v3809, %v3799
        %v4720 = vpack.c.b16 %v3810, %v3800
        %v4721 = vpack.c.b16 %v3811, %v3801
        %v4722 = vpack.c.b16 %v3812, %v3802
        %v4723 = vpack.c.b16 %v3813, %v3803
        %v4724 = vpack.c.b16 %v3814, %v3804
        %v4725 = vpack.c.b16 %v3825, %v3815
        %v4726 = vpack.c.b16 %v3826, %v3816
        %v4727 = vpack.c.b16 %v3827, %v3817
        %v4728 = vpack.c.b16 %v3828, %v3818
        %v4729 = vpack.c.b16 %v3829, %v3819
        %v4730 = vpack.c.b16 %v3830, %v3820
        %v4731 = vpack.c.b16 %v3831, %v3821
        %v4732 = vpack.c.b16 %v3832, %v3822
        %v4733 = vpack.c.b16 %v3833, %v3823
        %v4734 = vpack.c.b16 %v3834, %v3824
        %v4735 = vpack.c.b16 %v3845, %v3835
        %v4736 = vpack.c.b16 %v3846, %v3836
        %v4737 = vpack.c.b16 %v3847, %v3837
        %v4738 = vpack.c.b16 %v3848, %v3838
        %v4739 = vpack.c.b16 %v3849, %v3839
        %v4740 = vpack.c.b16 %v3850, %v3840
        %v4741 = vpack.c.b16 %v3851, %v3841
        %v4742 = vpack.c.b16 %v3852, %v3842
        %v4743 = vpack.c.b16 %v3853, %v3843
        %v4744 = vpack.c.b16 %v3854, %v3844
        %v4745 = vpack.c.b16 %v3865, %v3855
        %v4746 = vpack.c.b16 %v3866, %v3856
        %v4747 = vpack.c.b16 %v3867, %v3857
        %v4748 = vpack.c.b16 %v3868, %v3858
        %v4749 = vpack.c.b16 %v3869, %v3859
        %v4750 = vpack.c.b16 %v3870, %v3860
        %v4751 = vpack.c.b16 %v3871, %v3861
        %v4752 = vpack.c.b16 %v3872, %v3862
        %v4753 = vpack.c.b16 %v3873, %v3863
        %v4754 = vpack.c.b16 %v3874, %v3864
        %v4755 = vpack.c.b16 %v3885, %v3875
        %v4756 = vpack.c.b16 %v3886, %v3876
        %v4757 = vpack.c.b16 %v3887, %v3877
        %v4758 = vpack.c.b16 %v3888, %v3878
        %v4759 = vpack.c.b16 %v3889, %v3879
        %v4760 = vpack.c.b16 %v3890, %v3880
        %v4761 = vpack.c.b16 %v3891, %v3881
        %v4762 = vpack.c.b16 %v3892, %v3882
        %v4763 = vpack.c.b16 %v3893, %v3883
        %v4764 = vpack.c.b16 %v3894, %v3884
        %v4765 = vpack.c.b16 %v3905, %v3895
        %v4766 = vpack.c.b16 %v3906, %v3896
        %v4767 = vpack.c.b16 %v3907, %v3897
        %v4768 = vpack.c.b16 %v3908, %v3898
        %v4769 = vpack.c.b16 %v3909, %v3899
        %v4770 = vpack.c.b16 %v3910, %v3900
        %v4771 = vpack.c.b16 %v3911, %v3901
        %v4772 = vpack.c.b16 %v3912, %v3902
        %v4773 = vpack.c.b16 %v3913, %v3903
        %v4774 = vpack.c.b16 %v3914, %v3904
        %v4775 = vpack.c.b16 %v3925, %v3915
        %v4776 = vpack.c.b16 %v3926, %v3916
        %v4777 = vpack.c.b16 %v3927, %v3917
        %v4778 = vpack.c.b16 %v3928, %v3918
        %v4779 = vpack.c.b16 %v3929, %v3919
        %v4780 = vpack.c.b16 %v3930, %v3920
        %v4781 = vpack.c.b16 %v3931, %v3921
        %v4782 = vpack.c.b16 %v3932, %v3922
        %v4783 = vpack.c.b16 %v3933, %v3923
        %v4784 = vpack.c.b16 %v3934, %v3924
        %v4785 = vpack.c.b16 %v3945, %v3935
        %v4786 = vpack.c.b16 %v3946, %v3936
        %v4787 = vpack.c.b16 %v3947, %v3937
        %v4788 = vpack.c.b16 %v3948, %v3938
        %v4789 = vpack.c.b16 %v3949, %v3939
        %v4790 = vpack.c.b16 %v3950, %v3940
        %v4791 = vpack.c.b16 %v3951, %v3941
        %v4792 = vpack.c.b16 %v3952, %v3942
        %v4793 = vpack.c.b16 %v3953, %v3943
        %v4794 = vpack.c.b16 %v3954, %v3944
        %v4795 = vpack.c.b16 %v3965, %v3955
        %v4796 = vpack.c.b16 %v3966, %v3956
        %v4797 = vpack.c.b16 %v3967, %v3957
        %v4798 = vpack.c.b16 %v3968, %v3958
        %v4799 = vpack.c.b16 %v3969, %v3959
        %v4800 = vpack.c.b16 %v3970, %v3960
        %v4801 = vpack.c.b16 %v3971, %v3961
        %v4802 = vpack.c.b16 %v3972, %v3962
        %v4803 = vpack.c.b16 %v3973, %v3963
        %v4804 = vpack.c.b16 %v3974, %v3964
        %v4805 = vpack.c.b16 %v3985, %v3975
        %v4806 = vpack.c.b16 %v3986, %v3976
        %v4807 = vpack.c.b16 %v3987, %v3977
        %v4808 = vpack.c.b16 %v3988, %v3978
        %v4809 = vpack.c.b16 %v3989, %v3979
        %v4810 = vpack.c.b16 %v3990, %v3980
        %v4811 = vpack.c.b16 %v3991, %v3981
        %v4812 = vpack.c.b16 %v3992, %v3982
        %v4813 = vpack.c.b16 %v3993, %v3983
        %v4814 = vpack.c.b16 %v3994, %v3984
        %v4815 = vpack.c.b16 %v4005, %v3995
        %v4816 = vpack.c.b16 %v4006, %v3996
        %v4817 = vpack.c.b16 %v4007, %v3997
        %v4818 = vpack.c.b16 %v4008, %v3998
        %v4819 = vpack.c.b16 %v4009, %v3999
        %v4820 = vpack.c.b16 %v4010, %v4000
        %v4821 = vpack.c.b16 %v4011, %v4001
        %v4822 = vpack.c.b16 %v4012, %v4002
        %v4823 = vpack.c.b16 %v4013, %v4003
        %v4824 = vpack.c.b16 %v4014, %v4004
        %v4825 = vpack.c.b16 %v4025, %v4015
        %v4826 = vpack.c.b16 %v4026, %v4016
        %v4827 = vpack.c.b16 %v4027, %v4017
        %v4828 = vpack.c.b16 %v4028, %v4018
        %v4829 = vpack.c.b16 %v4029, %v4019
        %v4830 = vpack.c.b16 %v4030, %v4020
        %v4831 = vpack.c.b16 %v4031, %v4021
        %v4832 = vpack.c.b16 %v4032, %v4022
        %v4833 = vpack.c.b16 %v4033, %v4023
        %v4834 = vpack.c.b16 %v4034, %v4024
        %v4835 = vpack.c.b16 %v4045, %v4035
        %v4836 = vpack.c.b16 %v4046, %v4036
        %v4837 = vpack.c.b16 %v4047, %v4037
        %v4838 = vpack.c.b16 %v4048, %v4038
        %v4839 = vpack.c.b16 %v4049, %v4039
        %v4840 = vpack.c.b16 %v4050, %v4040
        %v4841 = vpack.c.b16 %v4051, %v4041
        %v4842 = vpack.c.b16 %v4052, %v4042
        %v4843 = vpack.c.b16 %v4053, %v4043
        %v4844 = vpack.c.b16 %v4054, %v4044
        %v4845 = vpack.c.b16 %v4065, %v4055
        %v4846 = vpack.c.b16 %v4066, %v4056
        %v4847 = vpack.c.b16 %v4067, %v4057
        %v4848 = vpack.c.b16 %v4068, %v4058
        %v4849 = vpack.c.b16 %v4069, %v4059
        %v4850 = vpack.c.b16 %v4070, %v4060
        %v4851 = vpack.c.b16 %v4071, %v4061
        %v4852 = vpack.c.b16 %v4072, %v4062
        %v4853 = vpack.c.b16 %v4073, %v4063
        %v4854 = vpack.c.b16 %v4074, %v4064
        %v4855 = vpack.c.b16 %v4085, %v4075
        %v4856 = vpack.c.b16 %v4086, %v4076
        %v4857 = vpack.c.b16 %v4087, %v4077
        %v4858 = vpack.c.b16 %v4088, %v4078
        %v4859 = vpack.c.b16 %v4089, %v4079
        %v4860 = vpack.c.b16 %v4090, %v4080
        %v4861 = vpack.c.b16 %v4091, %v4081
        %v4862 = vpack.c.b16 %v4092, %v4082
        %v4863 = vpack.c.b16 %v4093, %v4083
        %v4864 = vpack.c.b16 %v4094, %v4084
        %v4865 = vpack.c.b16 %v4105, %v4095
        %v4866 = vpack.c.b16 %v4106, %v4096
        %v4867 = vpack.c.b16 %v4107, %v4097
        %v4868 = vpack.c.b16 %v4108, %v4098
        %v4869 = vpack.c.b16 %v4109, %v4099
        %v4870 = vpack.c.b16 %v4110, %v4100
        %v4871 = vpack.c.b16 %v4111, %v4101
        %v4872 = vpack.c.b16 %v4112, %v4102
        %v4873 = vpack.c.b16 %v4113, %v4103
        %v4874 = vpack.c.b16 %v4114, %v4104
        %v4875 = vpack.c.b16 %v4125, %v4115
        %v4876 = vpack.c.b16 %v4126, %v4116
        %v4877 = vpack.c.b16 %v4127, %v4117
        %v4878 = vpack.c.b16 %v4128, %v4118
        %v4879 = vpack.c.b16 %v4129, %v4119
        %v4880 = vpack.c.b16 %v4130, %v4120
        %v4881 = vpack.c.b16 %v4131, %v4121
        %v4882 = vpack.c.b16 %v4132, %v4122
        %v4883 = vpack.c.b16 %v4133, %v4123
        %v4884 = vpack.c.b16 %v4134, %v4124
        %v4885 = vpack.c.b16 %v4145, %v4135
        %v4886 = vpack.c.b16 %v4146, %v4136
        %v4887 = vpack.c.b16 %v4147, %v4137
        %v4888 = vpack.c.b16 %v4148, %v4138
        %v4889 = vpack.c.b16 %v4149, %v4139
        %v4890 = vpack.c.b16 %v4150, %v4140
        %v4891 = vpack.c.b16 %v4151, %v4141
        %v4892 = vpack.c.b16 %v4152, %v4142
        %v4893 = vpack.c.b16 %v4153, %v4143
        %v4894 = vpack.c.b16 %v4154, %v4144
        %v4895 = vpack.c.b16 %v4165, %v4155
        %v4896 = vpack.c.b16 %v4166, %v4156
        %v4897 = vpack.c.b16 %v4167, %v4157
        %v4898 = vpack.c.b16 %v4168, %v4158
        %v4899 = vpack.c.b16 %v4169, %v4159
        %v4900 = vpack.c.b16 %v4170, %v4160
        %v4901 = vpack.c.b16 %v4171, %v4161
        %v4902 = vpack.c.b16 %v4172, %v4162
        %v4903 = vpack.c.b16 %v4173, %v4163
        %v4904 = vpack.c.b16 %v4174, %v4164
        %v4905 = vpack.c.b16 %v4185, %v4175
        %v4906 = vpack.c.b16 %v4186, %v4176
        %v4907 = vpack.c.b16 %v4187, %v4177
        %v4908 = vpack.c.b16 %v4188, %v4178
        %v4909 = vpack.c.b16 %v4189, %v4179
        %v4910 = vpack.c.b16 %v4190, %v4180
        %v4911 = vpack.c.b16 %v4191, %v4181
        %v4912 = vpack.c.b16 %v4192, %v4182
        %v4913 = vpack.c.b16 %v4193, %v4183
        %v4914 = vpack.c.b16 %v4194, %v4184
        %5635 = vmatprep.subr.bf16.mxu0 %v4196
        %5636 = vmatpush1.bf16.msra.mxu0 %v4195
        %5637 = vmatprep.subr.bf16.mxu0 %v4206
        %5638 = vmatpush1.bf16.msra.mxu0 %v4205
        %5639 = vmatprep.subr.bf16.mxu0 %v4216
        %5640 = vmatpush1.bf16.msra.mxu0 %v4215
        %5641 = vmatprep.subr.bf16.mxu0 %v4226
        %5642 = vmatpush1.bf16.msra.mxu0 %v4225
        %5643 = vmatprep.subr.bf16.mxu0 %v4236
        %5644 = vmatpush1.bf16.msra.mxu0 %v4235
        %5645 = vmatprep.subr.bf16.mxu0 %v4246
        %5646 = vmatpush1.bf16.msra.mxu0 %v4245
        %5647 = vmatprep.subr.bf16.mxu0 %v4256
        %5648 = vmatpush1.bf16.msra.mxu0 %v4255
        %5649 = vmatprep.subr.bf16.mxu0 %v4266
        %5650 = vmatpush1.bf16.msra.mxu0 %v4265
        %5651 = vmatprep.subr.bf16.mxu0 %v4276
        %5652 = vmatpush1.bf16.msra.mxu0 %v4275
        %5653 = vmatprep.subr.bf16.mxu0 %v4286
        %5654 = vmatpush1.bf16.msra.mxu0 %v4285
        %5655 = vmatprep.subr.bf16.mxu0 %v4296
        %5656 = vmatpush1.bf16.msra.mxu0 %v4295
        %5657 = vmatprep.subr.bf16.mxu0 %v4306
        %5658 = vmatpush1.bf16.msra.mxu0 %v4305
        %5659 = vmatprep.subr.bf16.mxu0 %v4316
        %5660 = vmatpush1.bf16.msra.mxu0 %v4315
        %5661 = vmatprep.subr.bf16.mxu0 %v4326
        %5662 = vmatpush1.bf16.msra.mxu0 %v4325
        %5663 = vmatprep.subr.bf16.mxu0 %v4336
        %5664 = vmatpush1.bf16.msra.mxu0 %v4335
        %5665 = vmatprep.subr.bf16.mxu0 %v4346
        %5666 = vmatpush1.bf16.msra.mxu0 %v4345
        %5667 = vmatprep.mubr.bf16.mxu0 %v1190
        %5668 = vmatmul.mubr.bf16.gmra.mrb[0].mxu0 %v1189
        %v5669 = vpop.f32.mrb[0].mxu0
        %v5670 = vadd.f32 %v1988, %v5669
        %v5671 = vpop.f32.mrb[0].mxu0
        %v5672 = vadd.f32 %v1992, %v5671
        %v5673 = vpop.f32.mrb[0].mxu0
        %v5674 = vadd.f32 %v1988, %v5673
        %v5675 = vpop.f32.mrb[0].mxu0
        %v5676 = vadd.f32 %v1992, %v5675
        %5677 = vmatprep.mubr.bf16.mxu0 %v1199
        %5678 = vmatmul.mubr.bf16.gmra.mrb[0].mxu0 %v1198
        %v5679 = vpop.f32.mrb[0].mxu0
        %v5680 = vadd.f32 %v1988, %v5679
        %v5681 = vpop.f32.mrb[0].mxu0
        %v5682 = vadd.f32 %v1992, %v5681
        %v5683 = vpop.f32.mrb[0].mxu0
        %v5684 = vadd.f32 %v1988, %v5683
        %v5685 = vpop.f32.mrb[0].mxu0
        %v5686 = vadd.f32 %v1992, %v5685
        %5687 = vmatprep.mubr.bf16.mxu0 %v1208
        %5688 = vmatmul.mubr.bf16.gmra.mrb[0].mxu0 %v1207
        %v5689 = vpop.f32.mrb[0].mxu0
        %v5690 = vadd.f32 %v1988, %v5689
        %v5691 = vpop.f32.mrb[0].mxu0
        %v5692 = vadd.f32 %v1992, %v5691
        %v5693 = vpop.f32.mrb[0].mxu0
        %v5694 = vadd.f32 %v1988, %v5693
        %v5695 = vpop.f32.mrb[0].mxu0
        %v5696 = vadd.f32 %v1992, %v5695
        %5697 = vmatprep.mubr.bf16.mxu0 %v1217
        %5698 = vmatmul.mubr.bf16.gmra.mrb[0].mxu0 %v1216
        %v5699 = vpop.f32.mrb[0].mxu0
        %v5700 = vadd.f32 %v1988, %v5699
        %v5701 = vpop.f32.mrb[0].mxu0
        %v5702 = vadd.f32 %v1992, %v5701
        %v5703 = vpop.f32.mrb[0].mxu0
        %v5704 = vadd.f32 %v1988, %v5703
        %v5705 = vpop.f32.mrb[0].mxu0
        %v5706 = vadd.f32 %v1992, %v5705
        %5707 = vmatprep.mubr.bf16.mxu0 %v1226
        %5708 = vmatmul.mubr.bf16.gmra.mrb[0].mxu0 %v1225
        %v5709 = vpop.f32.mrb[0].mxu0
        %v5710 = vadd.f32 %v1988, %v5709
        %v5711 = vpop.f32.mrb[0].mxu0
        %v5712 = vadd.f32 %v1992, %v5711
        %v5713 = vpop.f32.mrb[0].mxu0
        %v5714 = vadd.f32 %v1988, %v5713
        %v5715 = vpop.f32.mrb[0].mxu0
        %v5716 = vadd.f32 %v1992, %v5715
        %5717 = vmatprep.mubr.bf16.mxu0 %v1235
        %5718 = vmatmul.mubr.bf16.gmra.mrb[0].mxu0 %v1234
        %v5719 = vpop.f32.mrb[0].mxu0
        %v5720 = vadd.f32 %v1988, %v5719
        %v5721 = vpop.f32.mrb[0].mxu0
        %v5722 = vadd.f32 %v1992, %v5721
        %v5723 = vpop.f32.mrb[0].mxu0
        %v5724 = vadd.f32 %v1988, %v5723
        %v5725 = vpop.f32.mrb[0].mxu0
        %v5726 = vadd.f32 %v1992, %v5725
        %5727 = vmatprep.mubr.bf16.mxu0 %v1244
        %5728 = vmatmul.mubr.bf16.gmra.mrb[0].mxu0 %v1243
        %v5729 = vpop.f32.mrb[0].mxu0
        %v5730 = vadd.f32 %v1988, %v5729
        %v5731 = vpop.f32.mrb[0].mxu0
        %v5732 = vadd.f32 %v1992, %v5731
        %v5733 = vpop.f32.mrb[0].mxu0
        %v5734 = vadd.f32 %v1988, %v5733
        %v5735 = vpop.f32.mrb[0].mxu0
        %v5736 = vadd.f32 %v1992, %v5735
        %5737 = vmatprep.mubr.bf16.mxu0 %v1253
        %5738 = vmatmul.mubr.bf16.gmra.mrb[0].mxu0 %v1252
        %v5739 = vpop.f32.mrb[0].mxu0
        %v5740 = vadd.f32 %v1988, %v5739
        %v5741 = vpop.f32.mrb[0].mxu0
        %v5742 = vadd.f32 %v1992, %v5741
        %v5743 = vpop.f32.mrb[0].mxu0
        %v5744 = vadd.f32 %v1988, %v5743
        %v5745 = vpop.f32.mrb[0].mxu0
        %v5746 = vadd.f32 %v1992, %v5745
        %5747 = vdwg.mxu0
        %5748 = vmatprep.subr.bf16.mxu0 %v4356
        %5749 = vmatpush1.bf16.msra.mxu0 %v4355
        %5750 = vmatprep.subr.bf16.mxu0 %v4366
        %5751 = vmatpush1.bf16.msra.mxu0 %v4365
        %5752 = vmatprep.subr.bf16.mxu0 %v4376
        %5753 = vmatpush1.bf16.msra.mxu0 %v4375
        %5754 = vmatprep.subr.bf16.mxu0 %v4386
        %5755 = vmatpush1.bf16.msra.mxu0 %v4385
        %5756 = vmatprep.subr.bf16.mxu0 %v4396
        %5757 = vmatpush1.bf16.msra.mxu0 %v4395
        %5758 = vmatprep.subr.bf16.mxu0 %v4406
        %5759 = vmatpush1.bf16.msra.mxu0 %v4405
        %5760 = vmatprep.subr.bf16.mxu0 %v4416
        %5761 = vmatpush1.bf16.msra.mxu0 %v4415
        %5762 = vmatprep.subr.bf16.mxu0 %v4426
        %5763 = vmatpush1.bf16.msra.mxu0 %v4425
        %5764 = vmatprep.subr.bf16.mxu0 %v4436
        %5765 = vmatpush1.bf16.msra.mxu0 %v4435
        %5766 = vmatprep.subr.bf16.mxu0 %v4446
        %5767 = vmatpush1.bf16.msra.mxu0 %v4445
        %5768 = vmatprep.subr.bf16.mxu0 %v4456
        %5769 = vmatpush1.bf16.msra.mxu0 %v4455
        %5770 = vmatprep.subr.bf16.mxu0 %v4466
        %5771 = vmatpush1.bf16.msra.mxu0 %v4465
        %5772 = vmatprep.subr.bf16.mxu0 %v4476
        %5773 = vmatpush1.bf16.msra.mxu0 %v4475
        %5774 = vmatprep.subr.bf16.mxu0 %v4486
        %5775 = vmatpush1.bf16.msra.mxu0 %v4485
        %5776 = vmatprep.subr.bf16.mxu0 %v4496
        %5777 = vmatpush1.bf16.msra.mxu0 %v4495
        %5778 = vmatprep.subr.bf16.mxu0 %v4506
        %5779 = vmatpush1.bf16.msra.mxu0 %v4505
        %5780 = vmatprep.mubr.bf16.mxu0 %v1192
        %5781 = vmatmul.mubr.bf16.gmra.mrb[0].mxu0 %v1191
        %v5782 = vpop.f32.mrb[0].mxu0
        %v5783 = vadd.f32 %v5670, %v5782
        %v5784 = vpop.f32.mrb[0].mxu0
        %v5785 = vadd.f32 %v5672, %v5784
        %v5786 = vpop.f32.mrb[0].mxu0
        %v5787 = vadd.f32 %v5674, %v5786
        %v5788 = vpop.f32.mrb[0].mxu0
        %v5789 = vadd.f32 %v5676, %v5788
        %5790 = vmatprep.mubr.bf16.mxu0 %v1201
        %5791 = vmatmul.mubr.bf16.gmra.mrb[0].mxu0 %v1200
        %v5792 = vpop.f32.mrb[0].mxu0
        %v5793 = vadd.f32 %v5680, %v5792
        %v5794 = vpop.f32.mrb[0].mxu0
        %v5795 = vadd.f32 %v5682, %v5794
        %v5796 = vpop.f32.mrb[0].mxu0
        %v5797 = vadd.f32 %v5684, %v5796
        %v5798 = vpop.f32.mrb[0].mxu0
        %v5799 = vadd.f32 %v5686, %v5798
        %5800 = vmatprep.mubr.bf16.mxu0 %v1210
        %5801 = vmatmul.mubr.bf16.gmra.mrb[0].mxu0 %v1209
        %v5802 = vpop.f32.mrb[0].mxu0
        %v5803 = vadd.f32 %v5690, %v5802
        %v5804 = vpop.f32.mrb[0].mxu0
        %v5805 = vadd.f32 %v5692, %v5804
        %v5806 = vpop.f32.mrb[0].mxu0
        %v5807 = vadd.f32 %v5694, %v5806
        %v5808 = vpop.f32.mrb[0].mxu0
        %v5809 = vadd.f32 %v5696, %v5808
        %5810 = vmatprep.mubr.bf16.mxu0 %v1219
        %5811 = vmatmul.mubr.bf16.gmra.mrb[0].mxu0 %v1218
        %v5812 = vpop.f32.mrb[0].mxu0
        %v5813 = vadd.f32 %v5700, %v5812
        %v5814 = vpop.f32.mrb[0].mxu0
        %v5815 = vadd.f32 %v5702, %v5814
        %v5816 = vpop.f32.mrb[0].mxu0
        %v5817 = vadd.f32 %v5704, %v5816
        %v5818 = vpop.f32.mrb[0].mxu0
        %v5819 = vadd.f32 %v5706, %v5818
        %5820 = vmatprep.mubr.bf16.mxu0 %v1228
        %5821 = vmatmul.mubr.bf16.gmra.mrb[0].mxu0 %v1227
        %v5822 = vpop.f32.mrb[0].mxu0
        %v5823 = vadd.f32 %v5710, %v5822
        %v5824 = vpop.f32.mrb[0].mxu0
        %v5825 = vadd.f32 %v5712, %v5824
        %v5826 = vpop.f32.mrb[0].mxu0
        %v5827 = vadd.f32 %v5714, %v5826
        %v5828 = vpop.f32.mrb[0].mxu0
        %v5829 = vadd.f32 %v5716, %v5828
        %5830 = vmatprep.mubr.bf16.mxu0 %v1237
        %5831 = vmatmul.mubr.bf16.gmra.mrb[0].mxu0 %v1236
        %v5832 = vpop.f32.mrb[0].mxu0
        %v5833 = vadd.f32 %v5720, %v5832
        %v5834 = vpop.f32.mrb[0].mxu0
        %v5835 = vadd.f32 %v5722, %v5834
        %v5836 = vpop.f32.mrb[0].mxu0
        %v5837 = vadd.f32 %v5724, %v5836
        %v5838 = vpop.f32.mrb[0].mxu0
        %v5839 = vadd.f32 %v5726, %v5838
        %5840 = vmatprep.mubr.bf16.mxu0 %v1246
        %5841 = vmatmul.mubr.bf16.gmra.mrb[0].mxu0 %v1245
        %v5842 = vpop.f32.mrb[0].mxu0
        %v5843 = vadd.f32 %v5730, %v5842
        %v5844 = vpop.f32.mrb[0].mxu0
        %v5845 = vadd.f32 %v5732, %v5844
        %v5846 = vpop.f32.mrb[0].mxu0
        %v5847 = vadd.f32 %v5734, %v5846
        %v5848 = vpop.f32.mrb[0].mxu0
        %v5849 = vadd.f32 %v5736, %v5848
        %5850 = vmatprep.mubr.bf16.mxu0 %v1255
        %5851 = vmatmul.mubr.bf16.gmra.mrb[0].mxu0 %v1254
        %v5852 = vpop.f32.mrb[0].mxu0
        %v5853 = vadd.f32 %v5740, %v5852
        %v5854 = vpop.f32.mrb[0].mxu0
        %v5855 = vadd.f32 %v5742, %v5854
        %v5856 = vpop.f32.mrb[0].mxu0
        %v5857 = vadd.f32 %v5744, %v5856
        %v5858 = vpop.f32.mrb[0].mxu0
        %v5859 = vadd.f32 %v5746, %v5858
        %5860 = vdwg.mxu0
        %5861 = vmatprep.subr.bf16.mxu0 %v4516
        %5862 = vmatpush1.bf16.msra.mxu0 %v4515
        %5863 = vmatprep.subr.bf16.mxu0 %v4526
        %5864 = vmatpush1.bf16.msra.mxu0 %v4525
        %5865 = vmatprep.subr.bf16.mxu0 %v4536
        %5866 = vmatpush1.bf16.msra.mxu0 %v4535
        %5867 = vmatprep.subr.bf16.mxu0 %v4546
        %5868 = vmatpush1.bf16.msra.mxu0 %v4545
        %5869 = vmatprep.subr.bf16.mxu0 %v4556
        %5870 = vmatpush1.bf16.msra.mxu0 %v4555
        %5871 = vmatprep.subr.bf16.mxu0 %v4566
        %5872 = vmatpush1.bf16.msra.mxu0 %v4565
        %5873 = vmatprep.subr.bf16.mxu0 %v4576
        %5874 = vmatpush1.bf16.msra.mxu0 %v4575
        %5875 = vmatprep.subr.bf16.mxu0 %v4586
        %5876 = vmatpush1.bf16.msra.mxu0 %v4585
        %5877 = vmatprep.subr.bf16.mxu0 %v4596
        %5878 = vmatpush1.bf16.msra.mxu0 %v4595
        %5879 = vmatprep.subr.bf16.mxu0 %v4606
        %5880 = vmatpush1.bf16.msra.mxu0 %v4605
        %5881 = vmatprep.subr.bf16.mxu0 %v4616
        %5882 = vmatpush1.bf16.msra.mxu0 %v4615
        %5883 = vmatprep.subr.bf16.mxu0 %v4626
        %5884 = vmatpush1.bf16.msra.mxu0 %v4625
        %5885 = vmatprep.subr.bf16.mxu0 %v4636
        %5886 = vmatpush1.bf16.msra.mxu0 %v4635
        %5887 = vmatprep.subr.bf16.mxu0 %v4646
        %5888 = vmatpush1.bf16.msra.mxu0 %v4645
        %5889 = vmatprep.subr.bf16.mxu0 %v4656
        %5890 = vmatpush1.bf16.msra.mxu0 %v4655
        %5891 = vmatprep.subr.bf16.mxu0 %v4666
        %5892 = vmatpush1.bf16.msra.mxu0 %v4665
        %5893 = vmatprep.mubr.bf16.mxu0 %v1194
        %5894 = vmatmul.mubr.bf16.gmra.mrb[0].mxu0 %v1193
        %v5895 = vpop.f32.mrb[0].mxu0
        %v5896 = vadd.f32 %v5783, %v5895
        %v5897 = vpop.f32.mrb[0].mxu0
        %v5898 = vadd.f32 %v5785, %v5897
        %v5899 = vpop.f32.mrb[0].mxu0
        %v5900 = vadd.f32 %v5787, %v5899
        %v5901 = vpop.f32.mrb[0].mxu0
        %v5902 = vadd.f32 %v5789, %v5901
        %5903 = vmatprep.mubr.bf16.mxu0 %v1203
        %5904 = vmatmul.mubr.bf16.gmra.mrb[0].mxu0 %v1202
        %v5905 = vpop.f32.mrb[0].mxu0
        %v5906 = vadd.f32 %v5793, %v5905
        %v5907 = vpop.f32.mrb[0].mxu0
        %v5908 = vadd.f32 %v5795, %v5907
        %v5909 = vpop.f32.mrb[0].mxu0
        %v5910 = vadd.f32 %v5797, %v5909
        %v5911 = vpop.f32.mrb[0].mxu0
        %v5912 = vadd.f32 %v5799, %v5911
        %5913 = vmatprep.mubr.bf16.mxu0 %v1212
        %5914 = vmatmul.mubr.bf16.gmra.mrb[0].mxu0 %v1211
        %v5915 = vpop.f32.mrb[0].mxu0
        %v5916 = vadd.f32 %v5803, %v5915
        %v5917 = vpop.f32.mrb[0].mxu0
        %v5918 = vadd.f32 %v5805, %v5917
        %v5919 = vpop.f32.mrb[0].mxu0
        %v5920 = vadd.f32 %v5807, %v5919
        %v5921 = vpop.f32.mrb[0].mxu0
        %v5922 = vadd.f32 %v5809, %v5921
        %5923 = vmatprep.mubr.bf16.mxu0 %v1221
        %5924 = vmatmul.mubr.bf16.gmra.mrb[0].mxu0 %v1220
        %v5925 = vpop.f32.mrb[0].mxu0
        %v5926 = vadd.f32 %v5813, %v5925
        %v5927 = vpop.f32.mrb[0].mxu0
        %v5928 = vadd.f32 %v5815, %v5927
        %v5929 = vpop.f32.mrb[0].mxu0
        %v5930 = vadd.f32 %v5817, %v5929
        %v5931 = vpop.f32.mrb[0].mxu0
        %v5932 = vadd.f32 %v5819, %v5931
        %5933 = vmatprep.mubr.bf16.mxu0 %v1230
        %5934 = vmatmul.mubr.bf16.gmra.mrb[0].mxu0 %v1229
        %v5935 = vpop.f32.mrb[0].mxu0
        %v5936 = vadd.f32 %v5823, %v5935
        %v5937 = vpop.f32.mrb[0].mxu0
        %v5938 = vadd.f32 %v5825, %v5937
        %v5939 = vpop.f32.mrb[0].mxu0
        %v5940 = vadd.f32 %v5827, %v5939
        %v5941 = vpop.f32.mrb[0].mxu0
        %v5942 = vadd.f32 %v5829, %v5941
        %5943 = vmatprep.mubr.bf16.mxu0 %v1239
        %5944 = vmatmul.mubr.bf16.gmra.mrb[0].mxu0 %v1238
        %v5945 = vpop.f32.mrb[0].mxu0
        %v5946 = vadd.f32 %v5833, %v5945
        %v5947 = vpop.f32.mrb[0].mxu0
        %v5948 = vadd.f32 %v5835, %v5947
        %v5949 = vpop.f32.mrb[0].mxu0
        %v5950 = vadd.f32 %v5837, %v5949
        %v5951 = vpop.f32.mrb[0].mxu0
        %v5952 = vadd.f32 %v5839, %v5951
        %5953 = vmatprep.mubr.bf16.mxu0 %v1248
        %5954 = vmatmul.mubr.bf16.gmra.mrb[0].mxu0 %v1247
        %v5955 = vpop.f32.mrb[0].mxu0
        %v5956 = vadd.f32 %v5843, %v5955
        %v5957 = vpop.f32.mrb[0].mxu0
        %v5958 = vadd.f32 %v5845, %v5957
        %v5959 = vpop.f32.mrb[0].mxu0
        %v5960 = vadd.f32 %v5847, %v5959
        %v5961 = vpop.f32.mrb[0].mxu0
        %v5962 = vadd.f32 %v5849, %v5961
        %5963 = vmatprep.mubr.bf16.mxu0 %v1257
        %5964 = vmatmul.mubr.bf16.gmra.mrb[0].mxu0 %v1256
        %v5965 = vpop.f32.mrb[0].mxu0
        %v5966 = vadd.f32 %v5853, %v5965
        %v5967 = vpop.f32.mrb[0].mxu0
        %v5968 = vadd.f32 %v5855, %v5967
        %v5969 = vpop.f32.mrb[0].mxu0
        %v5970 = vadd.f32 %v5857, %v5969
        %v5971 = vpop.f32.mrb[0].mxu0
        %v5972 = vadd.f32 %v5859, %v5971
        %5973 = vdwg.mxu0
        %5974 = vmatprep.subr.bf16.mxu0 %v4676
        %5975 = vmatpush1.bf16.msra.mxu0 %v4675
        %5976 = vmatprep.subr.bf16.mxu0 %v4686
        %5977 = vmatpush1.bf16.msra.mxu0 %v4685
        %5978 = vmatprep.subr.bf16.mxu0 %v4696
        %5979 = vmatpush1.bf16.msra.mxu0 %v4695
        %5980 = vmatprep.subr.bf16.mxu0 %v4706
        %5981 = vmatpush1.bf16.msra.mxu0 %v4705
        %5982 = vmatprep.subr.bf16.mxu0 %v4716
        %5983 = vmatpush1.bf16.msra.mxu0 %v4715
        %5984 = vmatprep.subr.bf16.mxu0 %v4726
        %5985 = vmatpush1.bf16.msra.mxu0 %v4725
        %5986 = vmatprep.subr.bf16.mxu0 %v4736
        %5987 = vmatpush1.bf16.msra.mxu0 %v4735
        %5988 = vmatprep.subr.bf16.mxu0 %v4746
        %5989 = vmatpush1.bf16.msra.mxu0 %v4745
        %5990 = vmatprep.subr.bf16.mxu0 %v4756
        %5991 = vmatpush1.bf16.msra.mxu0 %v4755
        %5992 = vmatprep.subr.bf16.mxu0 %v4766
        %5993 = vmatpush1.bf16.msra.mxu0 %v4765
        %5994 = vmatprep.subr.bf16.mxu0 %v4776
        %5995 = vmatpush1.bf16.msra.mxu0 %v4775
        %5996 = vmatprep.subr.bf16.mxu0 %v4786
        %5997 = vmatpush1.bf16.msra.mxu0 %v4785
        %5998 = vmatprep.subr.bf16.mxu0 %v4796
        %5999 = vmatpush1.bf16.msra.mxu0 %v4795
        %6000 = vmatprep.subr.bf16.mxu0 %v4806
        %6001 = vmatpush1.bf16.msra.mxu0 %v4805
        %6002 = vmatprep.subr.bf16.mxu0 %v4816
        %6003 = vmatpush1.bf16.msra.mxu0 %v4815
        %6004 = vmatprep.subr.bf16.mxu0 %v4826
        %6005 = vmatpush1.bf16.msra.mxu0 %v4825
        %6006 = vmatprep.mubr.bf16.mxu0 %v1196
        %6007 = vmatmul.mubr.bf16.gmra.mrb[0].mxu0 %v1195
        %v6008 = vpop.f32.mrb[0].mxu0
        %v6009 = vadd.f32 %v5896, %v6008
        %v6010 = vpop.f32.mrb[0].mxu0
        %v6011 = vadd.f32 %v5898, %v6010
        %v6012 = vpop.f32.mrb[0].mxu0
        %v6013 = vadd.f32 %v5900, %v6012
        %v6014 = vpop.f32.mrb[0].mxu0
        %v6015 = vadd.f32 %v5902, %v6014
        %6016 = vmatprep.mubr.bf16.mxu0 %v1205
        %6017 = vmatmul.mubr.bf16.gmra.mrb[0].mxu0 %v1204
        %v6018 = vpop.f32.mrb[0].mxu0
        %v6019 = vadd.f32 %v5906, %v6018
        %v6020 = vpop.f32.mrb[0].mxu0
        %v6021 = vadd.f32 %v5908, %v6020
        %v6022 = vpop.f32.mrb[0].mxu0
        %v6023 = vadd.f32 %v5910, %v6022
        %v6024 = vpop.f32.mrb[0].mxu0
        %v6025 = vadd.f32 %v5912, %v6024
        %6026 = vmatprep.mubr.bf16.mxu0 %v1214
        %6027 = vmatmul.mubr.bf16.gmra.mrb[0].mxu0 %v1213
        %v6028 = vpop.f32.mrb[0].mxu0
        %v6029 = vadd.f32 %v5916, %v6028
        %v6030 = vpop.f32.mrb[0].mxu0
        %v6031 = vadd.f32 %v5918, %v6030
        %v6032 = vpop.f32.mrb[0].mxu0
        %v6033 = vadd.f32 %v5920, %v6032
        %v6034 = vpop.f32.mrb[0].mxu0
        %v6035 = vadd.f32 %v5922, %v6034
        %6036 = vmatprep.mubr.bf16.mxu0 %v1223
        %6037 = vmatmul.mubr.bf16.gmra.mrb[0].mxu0 %v1222
        %v6038 = vpop.f32.mrb[0].mxu0
        %v6039 = vadd.f32 %v5926, %v6038
        %v6040 = vpop.f32.mrb[0].mxu0
        %v6041 = vadd.f32 %v5928, %v6040
        %v6042 = vpop.f32.mrb[0].mxu0
        %v6043 = vadd.f32 %v5930, %v6042
        %v6044 = vpop.f32.mrb[0].mxu0
        %v6045 = vadd.f32 %v5932, %v6044
        %6046 = vmatprep.mubr.bf16.mxu0 %v1232
        %6047 = vmatmul.mubr.bf16.gmra.mrb[0].mxu0 %v1231
        %v6048 = vpop.f32.mrb[0].mxu0
        %v6049 = vadd.f32 %v5936, %v6048
        %v6050 = vpop.f32.mrb[0].mxu0
        %v6051 = vadd.f32 %v5938, %v6050
        %v6052 = vpop.f32.mrb[0].mxu0
        %v6053 = vadd.f32 %v5940, %v6052
        %v6054 = vpop.f32.mrb[0].mxu0
        %v6055 = vadd.f32 %v5942, %v6054
        %6056 = vmatprep.mubr.bf16.mxu0 %v1241
        %6057 = vmatmul.mubr.bf16.gmra.mrb[0].mxu0 %v1240
        %v6058 = vpop.f32.mrb[0].mxu0
        %v6059 = vadd.f32 %v5946, %v6058
        %v6060 = vpop.f32.mrb[0].mxu0
        %v6061 = vadd.f32 %v5948, %v6060
        %v6062 = vpop.f32.mrb[0].mxu0
        %v6063 = vadd.f32 %v5950, %v6062
        %v6064 = vpop.f32.mrb[0].mxu0
        %v6065 = vadd.f32 %v5952, %v6064
        %6066 = vmatprep.mubr.bf16.mxu0 %v1250
        %6067 = vmatmul.mubr.bf16.gmra.mrb[0].mxu0 %v1249
        %v6068 = vpop.f32.mrb[0].mxu0
        %v6069 = vadd.f32 %v5956, %v6068
        %v6070 = vpop.f32.mrb[0].mxu0
        %v6071 = vadd.f32 %v5958, %v6070
        %v6072 = vpop.f32.mrb[0].mxu0
        %v6073 = vadd.f32 %v5960, %v6072
        %v6074 = vpop.f32.mrb[0].mxu0
        %v6075 = vadd.f32 %v5962, %v6074
        %6076 = vmatprep.mubr.bf16.mxu0 %v1259
        %6077 = vmatmul.mubr.bf16.gmra.mrb[0].mxu0 %v1258
        %v6078 = vpop.f32.mrb[0].mxu0
        %v6079 = vadd.f32 %v5966, %v6078
        %v6080 = vpop.f32.mrb[0].mxu0
        %v6081 = vadd.f32 %v5968, %v6080
        %v6082 = vpop.f32.mrb[0].mxu0
        %v6083 = vadd.f32 %v5970, %v6082
        %v6084 = vpop.f32.mrb[0].mxu0
        %v6085 = vadd.f32 %v5972, %v6084
        %6086 = vdwg.mxu0
        %6087 = vmatprep.subr.bf16.mxu0 %v4836
        %6088 = vmatpush1.bf16.msra.mxu0 %v4835
        %6089 = vmatprep.subr.bf16.mxu0 %v4846
        %6090 = vmatpush1.bf16.msra.mxu0 %v4845
        %6091 = vmatprep.subr.bf16.mxu0 %v4856
        %6092 = vmatpush1.bf16.msra.mxu0 %v4855
        %6093 = vmatprep.subr.bf16.mxu0 %v4866
        %6094 = vmatpush1.bf16.msra.mxu0 %v4865
        %6095 = vmatprep.subr.bf16.mxu0 %v4876
        %6096 = vmatpush1.bf16.msra.mxu0 %v4875
        %6097 = vmatprep.subr.bf16.mxu0 %v4886
        %6098 = vmatpush1.bf16.msra.mxu0 %v4885
        %6099 = vmatprep.subr.bf16.mxu0 %v4896
        %6100 = vmatpush1.bf16.msra.mxu0 %v4895
        %6101 = vmatprep.subr.bf16.mxu0 %v4906
        %6102 = vmatpush1.bf16.msra.mxu0 %v4905
        %6103 = vmatprep.subr.bf16.mxu0 0
        %6104 = vmatpush1.bf16.msra.mxu0 0
        %6105 = vmatprep.subr.bf16.mxu0 0
        %6106 = vmatpush1.bf16.msra.mxu0 0
        %6107 = vmatprep.subr.bf16.mxu0 0
        %6108 = vmatpush1.bf16.msra.mxu0 0
        %6109 = vmatprep.subr.bf16.mxu0 0
        %6110 = vmatpush1.bf16.msra.mxu0 0
        %6111 = vmatprep.subr.bf16.mxu0 0
        %6112 = vmatpush1.bf16.msra.mxu0 0
        %6113 = vmatprep.subr.bf16.mxu0 0
        %6114 = vmatpush1.bf16.msra.mxu0 0
        %6115 = vmatprep.subr.bf16.mxu0 0
        %6116 = vmatpush1.bf16.msra.mxu0 0
        %6117 = vmatprep.subr.bf16.mxu0 0
        %6118 = vmatpush1.bf16.msra.mxu0 0
        %6119 = vmatprep.mubr.bf16.mxu0 0
        %6120 = vmatmul.mubr.bf16.gmra.mrb[0].mxu0 %v1197
        %v6121 = vpop.f32.mrb[0].mxu0
        %v6122 = vadd.f32 %v6009, %v6121
        %v6123 = vpop.f32.mrb[0].mxu0
        %v6124 = vadd.f32 %v6011, %v6123
        %v6125 = vpop.f32.mrb[0].mxu0
        %v6126 = vadd.f32 %v6013, %v6125
        %v6127 = vpop.f32.mrb[0].mxu0
        %v6128 = vadd.f32 %v6015, %v6127
        %6129 = vmatprep.mubr.bf16.mxu0 0
        %6130 = vmatmul.mubr.bf16.gmra.mrb[0].mxu0 %v1206
        %v6131 = vpop.f32.mrb[0].mxu0
        %v6132 = vadd.f32 %v6019, %v6131
        %v6133 = vpop.f32.mrb[0].mxu0
        %v6134 = vadd.f32 %v6021, %v6133
        %v6135 = vpop.f32.mrb[0].mxu0
        %v6136 = vadd.f32 %v6023, %v6135
        %v6137 = vpop.f32.mrb[0].mxu0
        %v6138 = vadd.f32 %v6025, %v6137
        %6139 = vmatprep.mubr.bf16.mxu0 0
        %6140 = vmatmul.mubr.bf16.gmra.mrb[0].mxu0 %v1215
        %v6141 = vpop.f32.mrb[0].mxu0
        %v6142 = vadd.f32 %v6029, %v6141
        %v6143 = vpop.f32.mrb[0].mxu0
        %v6144 = vadd.f32 %v6031, %v6143
        %v6145 = vpop.f32.mrb[0].mxu0
        %v6146 = vadd.f32 %v6033, %v6145
        %v6147 = vpop.f32.mrb[0].mxu0
        %v6148 = vadd.f32 %v6035, %v6147
        %6149 = vmatprep.mubr.bf16.mxu0 0
        %6150 = vmatmul.mubr.bf16.gmra.mrb[0].mxu0 %v1224
        %v6151 = vpop.f32.mrb[0].mxu0
        %v6152 = vadd.f32 %v6039, %v6151
        %v6153 = vpop.f32.mrb[0].mxu0
        %v6154 = vadd.f32 %v6041, %v6153
        %v6155 = vpop.f32.mrb[0].mxu0
        %v6156 = vadd.f32 %v6043, %v6155
        %v6157 = vpop.f32.mrb[0].mxu0
        %v6158 = vadd.f32 %v6045, %v6157
        %6159 = vmatprep.mubr.bf16.mxu0 0
        %6160 = vmatmul.mubr.bf16.gmra.mrb[0].mxu0 %v1233
        %v6161 = vpop.f32.mrb[0].mxu0
        %v6162 = vadd.f32 %v6049, %v6161
        %v6163 = vpop.f32.mrb[0].mxu0
        %v6164 = vadd.f32 %v6051, %v6163
        %v6165 = vpop.f32.mrb[0].mxu0
        %v6166 = vadd.f32 %v6053, %v6165
        %v6167 = vpop.f32.mrb[0].mxu0
        %v6168 = vadd.f32 %v6055, %v6167
        %6169 = vmatprep.mubr.bf16.mxu0 0
        %6170 = vmatmul.mubr.bf16.gmra.mrb[0].mxu0 %v1242
        %v6171 = vpop.f32.mrb[0].mxu0
        %v6172 = vadd.f32 %v6059, %v6171
        %v6173 = vpop.f32.mrb[0].mxu0
        %v6174 = vadd.f32 %v6061, %v6173
        %v6175 = vpop.f32.mrb[0].mxu0
        %v6176 = vadd.f32 %v6063, %v6175
        %v6177 = vpop.f32.mrb[0].mxu0
        %v6178 = vadd.f32 %v6065, %v6177
        %6179 = vmatprep.mubr.bf16.mxu0 0
        %6180 = vmatmul.mubr.bf16.gmra.mrb[0].mxu0 %v1251
        %v6181 = vpop.f32.mrb[0].mxu0
        %v6182 = vadd.f32 %v6069, %v6181
        %v6183 = vpop.f32.mrb[0].mxu0
        %v6184 = vadd.f32 %v6071, %v6183
        %v6185 = vpop.f32.mrb[0].mxu0
        %v6186 = vadd.f32 %v6073, %v6185
        %v6187 = vpop.f32.mrb[0].mxu0
        %v6188 = vadd.f32 %v6075, %v6187
        %6189 = vmatprep.mubr.bf16.mxu0 0
        %6190 = vmatmul.mubr.bf16.gmra.mrb[0].mxu0 %v1260
        %v6191 = vpop.f32.mrb[0].mxu0
        %v6192 = vadd.f32 %v6079, %v6191
        %v6193 = vpop.f32.mrb[0].mxu0
        %v6194 = vadd.f32 %v6081, %v6193
        %v6195 = vpop.f32.mrb[0].mxu0
        %v6196 = vadd.f32 %v6083, %v6195
        %v6197 = vpop.f32.mrb[0].mxu0
        %v6198 = vadd.f32 %v6085, %v6197
        %6199 = vdwg.mxu0
        %6200 = vmatprep.subr.bf16.mxu0 %v4198
        %6201 = vmatpush1.bf16.msra.mxu0 %v4197
        %6202 = vmatprep.subr.bf16.mxu0 %v4208
        %6203 = vmatpush1.bf16.msra.mxu0 %v4207
        %6204 = vmatprep.subr.bf16.mxu0 %v4218
        %6205 = vmatpush1.bf16.msra.mxu0 %v4217
        %6206 = vmatprep.subr.bf16.mxu0 %v4228
        %6207 = vmatpush1.bf16.msra.mxu0 %v4227
        %6208 = vmatprep.subr.bf16.mxu0 %v4238
        %6209 = vmatpush1.bf16.msra.mxu0 %v4237
        %6210 = vmatprep.subr.bf16.mxu0 %v4248
        %6211 = vmatpush1.bf16.msra.mxu0 %v4247
        %6212 = vmatprep.subr.bf16.mxu0 %v4258
        %6213 = vmatpush1.bf16.msra.mxu0 %v4257
        %6214 = vmatprep.subr.bf16.mxu0 %v4268
        %6215 = vmatpush1.bf16.msra.mxu0 %v4267
        %6216 = vmatprep.subr.bf16.mxu0 %v4278
        %6217 = vmatpush1.bf16.msra.mxu0 %v4277
        %6218 = vmatprep.subr.bf16.mxu0 %v4288
        %6219 = vmatpush1.bf16.msra.mxu0 %v4287
        %6220 = vmatprep.subr.bf16.mxu0 %v4298
        %6221 = vmatpush1.bf16.msra.mxu0 %v4297
        %6222 = vmatprep.subr.bf16.mxu0 %v4308
        %6223 = vmatpush1.bf16.msra.mxu0 %v4307
        %6224 = vmatprep.subr.bf16.mxu0 %v4318
        %6225 = vmatpush1.bf16.msra.mxu0 %v4317
        %6226 = vmatprep.subr.bf16.mxu0 %v4328
        %6227 = vmatpush1.bf16.msra.mxu0 %v4327
        %6228 = vmatprep.subr.bf16.mxu0 %v4338
        %6229 = vmatpush1.bf16.msra.mxu0 %v4337
        %6230 = vmatprep.subr.bf16.mxu0 %v4348
        %6231 = vmatpush1.bf16.msra.mxu0 %v4347
        %6232 = vmatprep.mubr.bf16.mxu0 %v1190
        %6233 = vmatmul.mubr.bf16.gmra.mrb[0].mxu0 %v1189
        %v6234 = vpop.f32.mrb[0].mxu0
        %v6235 = vadd.f32 %v1996, %v6234
        %v6236 = vpop.f32.mrb[0].mxu0
        %v6237 = vadd.f32 %v2000, %v6236
        %v6238 = vpop.f32.mrb[0].mxu0
        %v6239 = vadd.f32 %v1996, %v6238
        %v6240 = vpop.f32.mrb[0].mxu0
        %v6241 = vadd.f32 %v2000, %v6240
        %6242 = vmatprep.mubr.bf16.mxu0 %v1199
        %6243 = vmatmul.mubr.bf16.gmra.mrb[0].mxu0 %v1198
        %v6244 = vpop.f32.mrb[0].mxu0
        %v6245 = vadd.f32 %v1996, %v6244
        %v6246 = vpop.f32.mrb[0].mxu0
        %v6247 = vadd.f32 %v2000, %v6246
        %v6248 = vpop.f32.mrb[0].mxu0
        %v6249 = vadd.f32 %v1996, %v6248
        %v6250 = vpop.f32.mrb[0].mxu0
        %v6251 = vadd.f32 %v2000, %v6250
        %6252 = vmatprep.mubr.bf16.mxu0 %v1208
        %6253 = vmatmul.mubr.bf16.gmra.mrb[0].mxu0 %v1207
        %v6254 = vpop.f32.mrb[0].mxu0
        %v6255 = vadd.f32 %v1996, %v6254
        %v6256 = vpop.f32.mrb[0].mxu0
        %v6257 = vadd.f32 %v2000, %v6256
        %v6258 = vpop.f32.mrb[0].mxu0
        %v6259 = vadd.f32 %v1996, %v6258
        %v6260 = vpop.f32.mrb[0].mxu0
        %v6261 = vadd.f32 %v2000, %v6260
        %6262 = vmatprep.mubr.bf16.mxu0 %v1217
        %6263 = vmatmul.mubr.bf16.gmra.mrb[0].mxu0 %v1216
        %v6264 = vpop.f32.mrb[0].mxu0
        %v6265 = vadd.f32 %v1996, %v6264
        %v6266 = vpop.f32.mrb[0].mxu0
        %v6267 = vadd.f32 %v2000, %v6266
        %v6268 = vpop.f32.mrb[0].mxu0
        %v6269 = vadd.f32 %v1996, %v6268
        %v6270 = vpop.f32.mrb[0].mxu0
        %v6271 = vadd.f32 %v2000, %v6270
        %6272 = vmatprep.mubr.bf16.mxu0 %v1226
        %6273 = vmatmul.mubr.bf16.gmra.mrb[0].mxu0 %v1225
        %v6274 = vpop.f32.mrb[0].mxu0
        %v6275 = vadd.f32 %v1996, %v6274
        %v6276 = vpop.f32.mrb[0].mxu0
        %v6277 = vadd.f32 %v2000, %v6276
        %v6278 = vpop.f32.mrb[0].mxu0
        %v6279 = vadd.f32 %v1996, %v6278
        %v6280 = vpop.f32.mrb[0].mxu0
        %v6281 = vadd.f32 %v2000, %v6280
        %6282 = vmatprep.mubr.bf16.mxu0 %v1235
        %6283 = vmatmul.mubr.bf16.gmra.mrb[0].mxu0 %v1234
        %v6284 = vpop.f32.mrb[0].mxu0
        %v6285 = vadd.f32 %v1996, %v6284
        %v6286 = vpop.f32.mrb[0].mxu0
        %v6287 = vadd.f32 %v2000, %v6286
        %v6288 = vpop.f32.mrb[0].mxu0
        %v6289 = vadd.f32 %v1996, %v6288
        %v6290 = vpop.f32.mrb[0].mxu0
        %v6291 = vadd.f32 %v2000, %v6290
        %6292 = vmatprep.mubr.bf16.mxu0 %v1244
        %6293 = vmatmul.mubr.bf16.gmra.mrb[0].mxu0 %v1243
        %v6294 = vpop.f32.mrb[0].mxu0
        %v6295 = vadd.f32 %v1996, %v6294
        %v6296 = vpop.f32.mrb[0].mxu0
        %v6297 = vadd.f32 %v2000, %v6296
        %v6298 = vpop.f32.mrb[0].mxu0
        %v6299 = vadd.f32 %v1996, %v6298
        %v6300 = vpop.f32.mrb[0].mxu0
        %v6301 = vadd.f32 %v2000, %v6300
        %6302 = vmatprep.mubr.bf16.mxu0 %v1253
        %6303 = vmatmul.mubr.bf16.gmra.mrb[0].mxu0 %v1252
        %v6304 = vpop.f32.mrb[0].mxu0
        %v6305 = vadd.f32 %v1996, %v6304
        %v6306 = vpop.f32.mrb[0].mxu0
        %v6307 = vadd.f32 %v2000, %v6306
        %v6308 = vpop.f32.mrb[0].mxu0
        %v6309 = vadd.f32 %v1996, %v6308
        %v6310 = vpop.f32.mrb[0].mxu0
        %v6311 = vadd.f32 %v2000, %v6310
        %6312 = vdwg.mxu0
        %6313 = vmatprep.subr.bf16.mxu0 %v4358
        %6314 = vmatpush1.bf16.msra.mxu0 %v4357
        %6315 = vmatprep.subr.bf16.mxu0 %v4368
        %6316 = vmatpush1.bf16.msra.mxu0 %v4367
        %6317 = vmatprep.subr.bf16.mxu0 %v4378
        %6318 = vmatpush1.bf16.msra.mxu0 %v4377
        %6319 = vmatprep.subr.bf16.mxu0 %v4388
        %6320 = vmatpush1.bf16.msra.mxu0 %v4387
        %6321 = vmatprep.subr.bf16.mxu0 %v4398
        %6322 = vmatpush1.bf16.msra.mxu0 %v4397
        %6323 = vmatprep.subr.bf16.mxu0 %v4408
        %6324 = vmatpush1.bf16.msra.mxu0 %v4407
        %6325 = vmatprep.subr.bf16.mxu0 %v4418
        %6326 = vmatpush1.bf16.msra.mxu0 %v4417
        %6327 = vmatprep.subr.bf16.mxu0 %v4428
        %6328 = vmatpush1.bf16.msra.mxu0 %v4427
        %6329 = vmatprep.subr.bf16.mxu0 %v4438
        %6330 = vmatpush1.bf16.msra.mxu0 %v4437
        %6331 = vmatprep.subr.bf16.mxu0 %v4448
        %6332 = vmatpush1.bf16.msra.mxu0 %v4447
        %6333 = vmatprep.subr.bf16.mxu0 %v4458
        %6334 = vmatpush1.bf16.msra.mxu0 %v4457
        %6335 = vmatprep.subr.bf16.mxu0 %v4468
        %6336 = vmatpush1.bf16.msra.mxu0 %v4467
        %6337 = vmatprep.subr.bf16.mxu0 %v4478
        %6338 = vmatpush1.bf16.msra.mxu0 %v4477
        %6339 = vmatprep.subr.bf16.mxu0 %v4488
        %6340 = vmatpush1.bf16.msra.mxu0 %v4487
        %6341 = vmatprep.subr.bf16.mxu0 %v4498
        %6342 = vmatpush1.bf16.msra.mxu0 %v4497
        %6343 = vmatprep.subr.bf16.mxu0 %v4508
        %6344 = vmatpush1.bf16.msra.mxu0 %v4507
        %6345 = vmatprep.mubr.bf16.mxu0 %v1192
        %6346 = vmatmul.mubr.bf16.gmra.mrb[0].mxu0 %v1191
        %v6347 = vpop.f32.mrb[0].mxu0
        %v6348 = vadd.f32 %v6235, %v6347
        %v6349 = vpop.f32.mrb[0].mxu0
        %v6350 = vadd.f32 %v6237, %v6349
        %v6351 = vpop.f32.mrb[0].mxu0
        %v6352 = vadd.f32 %v6239, %v6351
        %v6353 = vpop.f32.mrb[0].mxu0
        %v6354 = vadd.f32 %v6241, %v6353
        %6355 = vmatprep.mubr.bf16.mxu0 %v1201
        %6356 = vmatmul.mubr.bf16.gmra.mrb[0].mxu0 %v1200
        %v6357 = vpop.f32.mrb[0].mxu0
        %v6358 = vadd.f32 %v6245, %v6357
        %v6359 = vpop.f32.mrb[0].mxu0
        %v6360 = vadd.f32 %v6247, %v6359
        %v6361 = vpop.f32.mrb[0].mxu0
        %v6362 = vadd.f32 %v6249, %v6361
        %v6363 = vpop.f32.mrb[0].mxu0
        %v6364 = vadd.f32 %v6251, %v6363
        %6365 = vmatprep.mubr.bf16.mxu0 %v1210
        %6366 = vmatmul.mubr.bf16.gmra.mrb[0].mxu0 %v1209
        %v6367 = vpop.f32.mrb[0].mxu0
        %v6368 = vadd.f32 %v6255, %v6367
        %v6369 = vpop.f32.mrb[0].mxu0
        %v6370 = vadd.f32 %v6257, %v6369
        %v6371 = vpop.f32.mrb[0].mxu0
        %v6372 = vadd.f32 %v6259, %v6371
        %v6373 = vpop.f32.mrb[0].mxu0
        %v6374 = vadd.f32 %v6261, %v6373
        %6375 = vmatprep.mubr.bf16.mxu0 %v1219
        %6376 = vmatmul.mubr.bf16.gmra.mrb[0].mxu0 %v1218
        %v6377 = vpop.f32.mrb[0].mxu0
        %v6378 = vadd.f32 %v6265, %v6377
        %v6379 = vpop.f32.mrb[0].mxu0
        %v6380 = vadd.f32 %v6267, %v6379
        %v6381 = vpop.f32.mrb[0].mxu0
        %v6382 = vadd.f32 %v6269, %v6381
        %v6383 = vpop.f32.mrb[0].mxu0
        %v6384 = vadd.f32 %v6271, %v6383
        %6385 = vmatprep.mubr.bf16.mxu0 %v1228
        %6386 = vmatmul.mubr.bf16.gmra.mrb[0].mxu0 %v1227
        %v6387 = vpop.f32.mrb[0].mxu0
        %v6388 = vadd.f32 %v6275, %v6387
        %v6389 = vpop.f32.mrb[0].mxu0
        %v6390 = vadd.f32 %v6277, %v6389
        %v6391 = vpop.f32.mrb[0].mxu0
        %v6392 = vadd.f32 %v6279, %v6391
        %v6393 = vpop.f32.mrb[0].mxu0
        %v6394 = vadd.f32 %v6281, %v6393
        %6395 = vmatprep.mubr.bf16.mxu0 %v1237
        %6396 = vmatmul.mubr.bf16.gmra.mrb[0].mxu0 %v1236
        %v6397 = vpop.f32.mrb[0].mxu0
        %v6398 = vadd.f32 %v6285, %v6397
        %v6399 = vpop.f32.mrb[0].mxu0
        %v6400 = vadd.f32 %v6287, %v6399
        %v6401 = vpop.f32.mrb[0].mxu0
        %v6402 = vadd.f32 %v6289, %v6401
        %v6403 = vpop.f32.mrb[0].mxu0
        %v6404 = vadd.f32 %v6291, %v6403
        %6405 = vmatprep.mubr.bf16.mxu0 %v1246
        %6406 = vmatmul.mubr.bf16.gmra.mrb[0].mxu0 %v1245
        %v6407 = vpop.f32.mrb[0].mxu0
        %v6408 = vadd.f32 %v6295, %v6407
        %v6409 = vpop.f32.mrb[0].mxu0
        %v6410 = vadd.f32 %v6297, %v6409
        %v6411 = vpop.f32.mrb[0].mxu0
        %v6412 = vadd.f32 %v6299, %v6411
        %v6413 = vpop.f32.mrb[0].mxu0
        %v6414 = vadd.f32 %v6301, %v6413
        %6415 = vmatprep.mubr.bf16.mxu0 %v1255
        %6416 = vmatmul.mubr.bf16.gmra.mrb[0].mxu0 %v1254
        %v6417 = vpop.f32.mrb[0].mxu0
        %v6418 = vadd.f32 %v6305, %v6417
        %v6419 = vpop.f32.mrb[0].mxu0
        %v6420 = vadd.f32 %v6307, %v6419
        %v6421 = vpop.f32.mrb[0].mxu0
        %v6422 = vadd.f32 %v6309, %v6421
        %v6423 = vpop.f32.mrb[0].mxu0
        %v6424 = vadd.f32 %v6311, %v6423
        %6425 = vdwg.mxu0
        %6426 = vmatprep.subr.bf16.mxu0 %v4518
        %6427 = vmatpush1.bf16.msra.mxu0 %v4517
        %6428 = vmatprep.subr.bf16.mxu0 %v4528
        %6429 = vmatpush1.bf16.msra.mxu0 %v4527
        %6430 = vmatprep.subr.bf16.mxu0 %v4538
        %6431 = vmatpush1.bf16.msra.mxu0 %v4537
        %6432 = vmatprep.subr.bf16.mxu0 %v4548
        %6433 = vmatpush1.bf16.msra.mxu0 %v4547
        %6434 = vmatprep.subr.bf16.mxu0 %v4558
        %6435 = vmatpush1.bf16.msra.mxu0 %v4557
        %6436 = vmatprep.subr.bf16.mxu0 %v4568
        %6437 = vmatpush1.bf16.msra.mxu0 %v4567
        %6438 = vmatprep.subr.bf16.mxu0 %v4578
        %6439 = vmatpush1.bf16.msra.mxu0 %v4577
        %6440 = vmatprep.subr.bf16.mxu0 %v4588
        %6441 = vmatpush1.bf16.msra.mxu0 %v4587
        %6442 = vmatprep.subr.bf16.mxu0 %v4598
        %6443 = vmatpush1.bf16.msra.mxu0 %v4597
        %6444 = vmatprep.subr.bf16.mxu0 %v4608
        %6445 = vmatpush1.bf16.msra.mxu0 %v4607
        %6446 = vmatprep.subr.bf16.mxu0 %v4618
        %6447 = vmatpush1.bf16.msra.mxu0 %v4617
        %6448 = vmatprep.subr.bf16.mxu0 %v4628
        %6449 = vmatpush1.bf16.msra.mxu0 %v4627
        %6450 = vmatprep.subr.bf16.mxu0 %v4638
        %6451 = vmatpush1.bf16.msra.mxu0 %v4637
        %6452 = vmatprep.subr.bf16.mxu0 %v4648
        %6453 = vmatpush1.bf16.msra.mxu0 %v4647
        %6454 = vmatprep.subr.bf16.mxu0 %v4658
        %6455 = vmatpush1.bf16.msra.mxu0 %v4657
        %6456 = vmatprep.subr.bf16.mxu0 %v4668
        %6457 = vmatpush1.bf16.msra.mxu0 %v4667
        %6458 = vmatprep.mubr.bf16.mxu0 %v1194
        %6459 = vmatmul.mubr.bf16.gmra.mrb[0].mxu0 %v1193
        %v6460 = vpop.f32.mrb[0].mxu0
        %v6461 = vadd.f32 %v6348, %v6460
        %v6462 = vpop.f32.mrb[0].mxu0
        %v6463 = vadd.f32 %v6350, %v6462
        %v6464 = vpop.f32.mrb[0].mxu0
        %v6465 = vadd.f32 %v6352, %v6464
        %v6466 = vpop.f32.mrb[0].mxu0
        %v6467 = vadd.f32 %v6354, %v6466
        %6468 = vmatprep.mubr.bf16.mxu0 %v1203
        %6469 = vmatmul.mubr.bf16.gmra.mrb[0].mxu0 %v1202
        %v6470 = vpop.f32.mrb[0].mxu0
        %v6471 = vadd.f32 %v6358, %v6470
        %v6472 = vpop.f32.mrb[0].mxu0
        %v6473 = vadd.f32 %v6360, %v6472
        %v6474 = vpop.f32.mrb[0].mxu0
        %v6475 = vadd.f32 %v6362, %v6474
        %v6476 = vpop.f32.mrb[0].mxu0
        %v6477 = vadd.f32 %v6364, %v6476
        %6478 = vmatprep.mubr.bf16.mxu0 %v1212
        %6479 = vmatmul.mubr.bf16.gmra.mrb[0].mxu0 %v1211
        %v6480 = vpop.f32.mrb[0].mxu0
        %v6481 = vadd.f32 %v6368, %v6480
        %v6482 = vpop.f32.mrb[0].mxu0
        %v6483 = vadd.f32 %v6370, %v6482
        %v6484 = vpop.f32.mrb[0].mxu0
        %v6485 = vadd.f32 %v6372, %v6484
        %v6486 = vpop.f32.mrb[0].mxu0
        %v6487 = vadd.f32 %v6374, %v6486
        %6488 = vmatprep.mubr.bf16.mxu0 %v1221
        %6489 = vmatmul.mubr.bf16.gmra.mrb[0].mxu0 %v1220
        %v6490 = vpop.f32.mrb[0].mxu0
        %v6491 = vadd.f32 %v6378, %v6490
        %v6492 = vpop.f32.mrb[0].mxu0
        %v6493 = vadd.f32 %v6380, %v6492
        %v6494 = vpop.f32.mrb[0].mxu0
        %v6495 = vadd.f32 %v6382, %v6494
        %v6496 = vpop.f32.mrb[0].mxu0
        %v6497 = vadd.f32 %v6384, %v6496
        %6498 = vmatprep.mubr.bf16.mxu0 %v1230
        %6499 = vmatmul.mubr.bf16.gmra.mrb[0].mxu0 %v1229
        %v6500 = vpop.f32.mrb[0].mxu0
        %v6501 = vadd.f32 %v6388, %v6500
        %v6502 = vpop.f32.mrb[0].mxu0
        %v6503 = vadd.f32 %v6390, %v6502
        %v6504 = vpop.f32.mrb[0].mxu0
        %v6505 = vadd.f32 %v6392, %v6504
        %v6506 = vpop.f32.mrb[0].mxu0
        %v6507 = vadd.f32 %v6394, %v6506
        %6508 = vmatprep.mubr.bf16.mxu0 %v1239
        %6509 = vmatmul.mubr.bf16.gmra.mrb[0].mxu0 %v1238
        %v6510 = vpop.f32.mrb[0].mxu0
        %v6511 = vadd.f32 %v6398, %v6510
        %v6512 = vpop.f32.mrb[0].mxu0
        %v6513 = vadd.f32 %v6400, %v6512
        %v6514 = vpop.f32.mrb[0].mxu0
        %v6515 = vadd.f32 %v6402, %v6514
        %v6516 = vpop.f32.mrb[0].mxu0
        %v6517 = vadd.f32 %v6404, %v6516
        %6518 = vmatprep.mubr.bf16.mxu0 %v1248
        %6519 = vmatmul.mubr.bf16.gmra.mrb[0].mxu0 %v1247
        %v6520 = vpop.f32.mrb[0].mxu0
        %v6521 = vadd.f32 %v6408, %v6520
        %v6522 = vpop.f32.mrb[0].mxu0
        %v6523 = vadd.f32 %v6410, %v6522
        %v6524 = vpop.f32.mrb[0].mxu0
        %v6525 = vadd.f32 %v6412, %v6524
        %v6526 = vpop.f32.mrb[0].mxu0
        %v6527 = vadd.f32 %v6414, %v6526
        %6528 = vmatprep.mubr.bf16.mxu0 %v1257
        %6529 = vmatmul.mubr.bf16.gmra.mrb[0].mxu0 %v1256
        %v6530 = vpop.f32.mrb[0].mxu0
        %v6531 = vadd.f32 %v6418, %v6530
        %v6532 = vpop.f32.mrb[0].mxu0
        %v6533 = vadd.f32 %v6420, %v6532
        %v6534 = vpop.f32.mrb[0].mxu0
        %v6535 = vadd.f32 %v6422, %v6534
        %v6536 = vpop.f32.mrb[0].mxu0
        %v6537 = vadd.f32 %v6424, %v6536
        %6538 = vdwg.mxu0
        %6539 = vmatprep.subr.bf16.mxu0 %v4678
        %6540 = vmatpush1.bf16.msra.mxu0 %v4677
        %6541 = vmatprep.subr.bf16.mxu0 %v4688
        %6542 = vmatpush1.bf16.msra.mxu0 %v4687
        %6543 = vmatprep.subr.bf16.mxu0 %v4698
        %6544 = vmatpush1.bf16.msra.mxu0 %v4697
        %6545 = vmatprep.subr.bf16.mxu0 %v4708
        %6546 = vmatpush1.bf16.msra.mxu0 %v4707
        %6547 = vmatprep.subr.bf16.mxu0 %v4718
        %6548 = vmatpush1.bf16.msra.mxu0 %v4717
        %6549 = vmatprep.subr.bf16.mxu0 %v4728
        %6550 = vmatpush1.bf16.msra.mxu0 %v4727
        %6551 = vmatprep.subr.bf16.mxu0 %v4738
        %6552 = vmatpush1.bf16.msra.mxu0 %v4737
        %6553 = vmatprep.subr.bf16.mxu0 %v4748
        %6554 = vmatpush1.bf16.msra.mxu0 %v4747
        %6555 = vmatprep.subr.bf16.mxu0 %v4758
        %6556 = vmatpush1.bf16.msra.mxu0 %v4757
        %6557 = vmatprep.subr.bf16.mxu0 %v4768
        %6558 = vmatpush1.bf16.msra.mxu0 %v4767
        %6559 = vmatprep.subr.bf16.mxu0 %v4778
        %6560 = vmatpush1.bf16.msra.mxu0 %v4777
        %6561 = vmatprep.subr.bf16.mxu0 %v4788
        %6562 = vmatpush1.bf16.msra.mxu0 %v4787
        %6563 = vmatprep.subr.bf16.mxu0 %v4798
        %6564 = vmatpush1.bf16.msra.mxu0 %v4797
        %6565 = vmatprep.subr.bf16.mxu0 %v4808
        %6566 = vmatpush1.bf16.msra.mxu0 %v4807
        %6567 = vmatprep.subr.bf16.mxu0 %v4818
        %6568 = vmatpush1.bf16.msra.mxu0 %v4817
        %6569 = vmatprep.subr.bf16.mxu0 %v4828
        %6570 = vmatpush1.bf16.msra.mxu0 %v4827
        %6571 = vmatprep.mubr.bf16.mxu0 %v1196
        %6572 = vmatmul.mubr.bf16.gmra.mrb[0].mxu0 %v1195
        %v6573 = vpop.f32.mrb[0].mxu0
        %v6574 = vadd.f32 %v6461, %v6573
        %v6575 = vpop.f32.mrb[0].mxu0
        %v6576 = vadd.f32 %v6463, %v6575
        %v6577 = vpop.f32.mrb[0].mxu0
        %v6578 = vadd.f32 %v6465, %v6577
        %v6579 = vpop.f32.mrb[0].mxu0
        %v6580 = vadd.f32 %v6467, %v6579
        %6581 = vmatprep.mubr.bf16.mxu0 %v1205
        %6582 = vmatmul.mubr.bf16.gmra.mrb[0].mxu0 %v1204
        %v6583 = vpop.f32.mrb[0].mxu0
        %v6584 = vadd.f32 %v6471, %v6583
        %v6585 = vpop.f32.mrb[0].mxu0
        %v6586 = vadd.f32 %v6473, %v6585
        %v6587 = vpop.f32.mrb[0].mxu0
        %v6588 = vadd.f32 %v6475, %v6587
        %v6589 = vpop.f32.mrb[0].mxu0
        %v6590 = vadd.f32 %v6477, %v6589
        %6591 = vmatprep.mubr.bf16.mxu0 %v1214
        %6592 = vmatmul.mubr.bf16.gmra.mrb[0].mxu0 %v1213
        %v6593 = vpop.f32.mrb[0].mxu0
        %v6594 = vadd.f32 %v6481, %v6593
        %v6595 = vpop.f32.mrb[0].mxu0
        %v6596 = vadd.f32 %v6483, %v6595
        %v6597 = vpop.f32.mrb[0].mxu0
        %v6598 = vadd.f32 %v6485, %v6597
        %v6599 = vpop.f32.mrb[0].mxu0
        %v6600 = vadd.f32 %v6487, %v6599
        %6601 = vmatprep.mubr.bf16.mxu0 %v1223
        %6602 = vmatmul.mubr.bf16.gmra.mrb[0].mxu0 %v1222
        %v6603 = vpop.f32.mrb[0].mxu0
        %v6604 = vadd.f32 %v6491, %v6603
        %v6605 = vpop.f32.mrb[0].mxu0
        %v6606 = vadd.f32 %v6493, %v6605
        %v6607 = vpop.f32.mrb[0].mxu0
        %v6608 = vadd.f32 %v6495, %v6607
        %v6609 = vpop.f32.mrb[0].mxu0
        %v6610 = vadd.f32 %v6497, %v6609
        %6611 = vmatprep.mubr.bf16.mxu0 %v1232
        %6612 = vmatmul.mubr.bf16.gmra.mrb[0].mxu0 %v1231
        %v6613 = vpop.f32.mrb[0].mxu0
        %v6614 = vadd.f32 %v6501, %v6613
        %v6615 = vpop.f32.mrb[0].mxu0
        %v6616 = vadd.f32 %v6503, %v6615
        %v6617 = vpop.f32.mrb[0].mxu0
        %v6618 = vadd.f32 %v6505, %v6617
        %v6619 = vpop.f32.mrb[0].mxu0
        %v6620 = vadd.f32 %v6507, %v6619
        %6621 = vmatprep.mubr.bf16.mxu0 %v1241
        %6622 = vmatmul.mubr.bf16.gmra.mrb[0].mxu0 %v1240
        %v6623 = vpop.f32.mrb[0].mxu0
        %v6624 = vadd.f32 %v6511, %v6623
        %v6625 = vpop.f32.mrb[0].mxu0
        %v6626 = vadd.f32 %v6513, %v6625
        %v6627 = vpop.f32.mrb[0].mxu0
        %v6628 = vadd.f32 %v6515, %v6627
        %v6629 = vpop.f32.mrb[0].mxu0
        %v6630 = vadd.f32 %v6517, %v6629
        %6631 = vmatprep.mubr.bf16.mxu0 %v1250
        %6632 = vmatmul.mubr.bf16.gmra.mrb[0].mxu0 %v1249
        %v6633 = vpop.f32.mrb[0].mxu0
        %v6634 = vadd.f32 %v6521, %v6633
        %v6635 = vpop.f32.mrb[0].mxu0
        %v6636 = vadd.f32 %v6523, %v6635
        %v6637 = vpop.f32.mrb[0].mxu0
        %v6638 = vadd.f32 %v6525, %v6637
        %v6639 = vpop.f32.mrb[0].mxu0
        %v6640 = vadd.f32 %v6527, %v6639
        %6641 = vmatprep.mubr.bf16.mxu0 %v1259
        %6642 = vmatmul.mubr.bf16.gmra.mrb[0].mxu0 %v1258
        %v6643 = vpop.f32.mrb[0].mxu0
        %v6644 = vadd.f32 %v6531, %v6643
        %v6645 = vpop.f32.mrb[0].mxu0
        %v6646 = vadd.f32 %v6533, %v6645
        %v6647 = vpop.f32.mrb[0].mxu0
        %v6648 = vadd.f32 %v6535, %v6647
        %v6649 = vpop.f32.mrb[0].mxu0
        %v6650 = vadd.f32 %v6537, %v6649
        %6651 = vdwg.mxu0
        %6652 = vmatprep.subr.bf16.mxu0 %v4838
        %6653 = vmatpush1.bf16.msra.mxu0 %v4837
        %6654 = vmatprep.subr.bf16.mxu0 %v4848
        %6655 = vmatpush1.bf16.msra.mxu0 %v4847
        %6656 = vmatprep.subr.bf16.mxu0 %v4858
        %6657 = vmatpush1.bf16.msra.mxu0 %v4857
        %6658 = vmatprep.subr.bf16.mxu0 %v4868
        %6659 = vmatpush1.bf16.msra.mxu0 %v4867
        %6660 = vmatprep.subr.bf16.mxu0 %v4878
        %6661 = vmatpush1.bf16.msra.mxu0 %v4877
        %6662 = vmatprep.subr.bf16.mxu0 %v4888
        %6663 = vmatpush1.bf16.msra.mxu0 %v4887
        %6664 = vmatprep.subr.bf16.mxu0 %v4898
        %6665 = vmatpush1.bf16.msra.mxu0 %v4897
        %6666 = vmatprep.subr.bf16.mxu0 %v4908
        %6667 = vmatpush1.bf16.msra.mxu0 %v4907
        %6668 = vmatprep.subr.bf16.mxu0 0
        %6669 = vmatpush1.bf16.msra.mxu0 0
        %6670 = vmatprep.subr.bf16.mxu0 0
        %6671 = vmatpush1.bf16.msra.mxu0 0
        %6672 = vmatprep.subr.bf16.mxu0 0
        %6673 = vmatpush1.bf16.msra.mxu0 0
        %6674 = vmatprep.subr.bf16.mxu0 0
        %6675 = vmatpush1.bf16.msra.mxu0 0
        %6676 = vmatprep.subr.bf16.mxu0 0
        %6677 = vmatpush1.bf16.msra.mxu0 0
        %6678 = vmatprep.subr.bf16.mxu0 0
        %6679 = vmatpush1.bf16.msra.mxu0 0
        %6680 = vmatprep.subr.bf16.mxu0 0
        %6681 = vmatpush1.bf16.msra.mxu0 0
        %6682 = vmatprep.subr.bf16.mxu0 0
        %6683 = vmatpush1.bf16.msra.mxu0 0
        %6684 = vmatprep.mubr.bf16.mxu0 0
        %6685 = vmatmul.mubr.bf16.gmra.mrb[0].mxu0 %v1197
        %v6686 = vpop.f32.mrb[0].mxu0
        %v6687 = vadd.f32 %v6574, %v6686
        %v6688 = vpop.f32.mrb[0].mxu0
        %v6689 = vadd.f32 %v6576, %v6688
        %v6690 = vpop.f32.mrb[0].mxu0
        %v6691 = vadd.f32 %v6578, %v6690
        %v6692 = vpop.f32.mrb[0].mxu0
        %v6693 = vadd.f32 %v6580, %v6692
        %6694 = vmatprep.mubr.bf16.mxu0 0
        %6695 = vmatmul.mubr.bf16.gmra.mrb[0].mxu0 %v1206
        %v6696 = vpop.f32.mrb[0].mxu0
        %v6697 = vadd.f32 %v6584, %v6696
        %v6698 = vpop.f32.mrb[0].mxu0
        %v6699 = vadd.f32 %v6586, %v6698
        %v6700 = vpop.f32.mrb[0].mxu0
        %v6701 = vadd.f32 %v6588, %v6700
        %v6702 = vpop.f32.mrb[0].mxu0
        %v6703 = vadd.f32 %v6590, %v6702
        %6704 = vmatprep.mubr.bf16.mxu0 0
        %6705 = vmatmul.mubr.bf16.gmra.mrb[0].mxu0 %v1215
        %v6706 = vpop.f32.mrb[0].mxu0
        %v6707 = vadd.f32 %v6594, %v6706
        %v6708 = vpop.f32.mrb[0].mxu0
        %v6709 = vadd.f32 %v6596, %v6708
        %v6710 = vpop.f32.mrb[0].mxu0
        %v6711 = vadd.f32 %v6598, %v6710
        %v6712 = vpop.f32.mrb[0].mxu0
        %v6713 = vadd.f32 %v6600, %v6712
        %6714 = vmatprep.mubr.bf16.mxu0 0
        %6715 = vmatmul.mubr.bf16.gmra.mrb[0].mxu0 %v1224
        %v6716 = vpop.f32.mrb[0].mxu0
        %v6717 = vadd.f32 %v6604, %v6716
        %v6718 = vpop.f32.mrb[0].mxu0
        %v6719 = vadd.f32 %v6606, %v6718
        %v6720 = vpop.f32.mrb[0].mxu0
        %v6721 = vadd.f32 %v6608, %v6720
        %v6722 = vpop.f32.mrb[0].mxu0
        %v6723 = vadd.f32 %v6610, %v6722
        %6724 = vmatprep.mubr.bf16.mxu0 0
        %6725 = vmatmul.mubr.bf16.gmra.mrb[0].mxu0 %v1233
        %v6726 = vpop.f32.mrb[0].mxu0
        %v6727 = vadd.f32 %v6614, %v6726
        %v6728 = vpop.f32.mrb[0].mxu0
        %v6729 = vadd.f32 %v6616, %v6728
        %v6730 = vpop.f32.mrb[0].mxu0
        %v6731 = vadd.f32 %v6618, %v6730
        %v6732 = vpop.f32.mrb[0].mxu0
        %v6733 = vadd.f32 %v6620, %v6732
        %6734 = vmatprep.mubr.bf16.mxu0 0
        %6735 = vmatmul.mubr.bf16.gmra.mrb[0].mxu0 %v1242
        %v6736 = vpop.f32.mrb[0].mxu0
        %v6737 = vadd.f32 %v6624, %v6736
        %v6738 = vpop.f32.mrb[0].mxu0
        %v6739 = vadd.f32 %v6626, %v6738
        %v6740 = vpop.f32.mrb[0].mxu0
        %v6741 = vadd.f32 %v6628, %v6740
        %v6742 = vpop.f32.mrb[0].mxu0
        %v6743 = vadd.f32 %v6630, %v6742
        %6744 = vmatprep.mubr.bf16.mxu0 0
        %6745 = vmatmul.mubr.bf16.gmra.mrb[0].mxu0 %v1251
        %v6746 = vpop.f32.mrb[0].mxu0
        %v6747 = vadd.f32 %v6634, %v6746
        %v6748 = vpop.f32.mrb[0].mxu0
        %v6749 = vadd.f32 %v6636, %v6748
        %v6750 = vpop.f32.mrb[0].mxu0
        %v6751 = vadd.f32 %v6638, %v6750
        %v6752 = vpop.f32.mrb[0].mxu0
        %v6753 = vadd.f32 %v6640, %v6752
        %6754 = vmatprep.mubr.bf16.mxu0 0
        %6755 = vmatmul.mubr.bf16.gmra.mrb[0].mxu0 %v1260
        %v6756 = vpop.f32.mrb[0].mxu0
        %v6757 = vadd.f32 %v6644, %v6756
        %v6758 = vpop.f32.mrb[0].mxu0
        %v6759 = vadd.f32 %v6646, %v6758
        %v6760 = vpop.f32.mrb[0].mxu0
        %v6761 = vadd.f32 %v6648, %v6760
        %v6762 = vpop.f32.mrb[0].mxu0
        %v6763 = vadd.f32 %v6650, %v6762
        %6764 = vdwg.mxu0
        %6765 = vmatprep.subr.bf16.mxu0 %v4200
        %6766 = vmatpush1.bf16.msra.mxu0 %v4199
        %6767 = vmatprep.subr.bf16.mxu0 %v4210
        %6768 = vmatpush1.bf16.msra.mxu0 %v4209
        %6769 = vmatprep.subr.bf16.mxu0 %v4220
        %6770 = vmatpush1.bf16.msra.mxu0 %v4219
        %6771 = vmatprep.subr.bf16.mxu0 %v4230
        %6772 = vmatpush1.bf16.msra.mxu0 %v4229
        %6773 = vmatprep.subr.bf16.mxu0 %v4240
        %6774 = vmatpush1.bf16.msra.mxu0 %v4239
        %6775 = vmatprep.subr.bf16.mxu0 %v4250
        %6776 = vmatpush1.bf16.msra.mxu0 %v4249
        %6777 = vmatprep.subr.bf16.mxu0 %v4260
        %6778 = vmatpush1.bf16.msra.mxu0 %v4259
        %6779 = vmatprep.subr.bf16.mxu0 %v4270
        %6780 = vmatpush1.bf16.msra.mxu0 %v4269
        %6781 = vmatprep.subr.bf16.mxu0 %v4280
        %6782 = vmatpush1.bf16.msra.mxu0 %v4279
        %6783 = vmatprep.subr.bf16.mxu0 %v4290
        %6784 = vmatpush1.bf16.msra.mxu0 %v4289
        %6785 = vmatprep.subr.bf16.mxu0 %v4300
        %6786 = vmatpush1.bf16.msra.mxu0 %v4299
        %6787 = vmatprep.subr.bf16.mxu0 %v4310
        %6788 = vmatpush1.bf16.msra.mxu0 %v4309
        %6789 = vmatprep.subr.bf16.mxu0 %v4320
        %6790 = vmatpush1.bf16.msra.mxu0 %v4319
        %6791 = vmatprep.subr.bf16.mxu0 %v4330
        %6792 = vmatpush1.bf16.msra.mxu0 %v4329
        %6793 = vmatprep.subr.bf16.mxu0 %v4340
        %6794 = vmatpush1.bf16.msra.mxu0 %v4339
        %6795 = vmatprep.subr.bf16.mxu0 %v4350
        %6796 = vmatpush1.bf16.msra.mxu0 %v4349
        %6797 = vmatprep.mubr.bf16.mxu0 %v1190
        %6798 = vmatmul.mubr.bf16.gmra.mrb[0].mxu0 %v1189
        %v6799 = vpop.f32.mrb[0].mxu0
        %v6800 = vadd.f32 %v2004, %v6799
        %v6801 = vpop.f32.mrb[0].mxu0
        %v6802 = vadd.f32 %v2008, %v6801
        %v6803 = vpop.f32.mrb[0].mxu0
        %v6804 = vadd.f32 %v2004, %v6803
        %v6805 = vpop.f32.mrb[0].mxu0
        %v6806 = vadd.f32 %v2008, %v6805
        %6807 = vmatprep.mubr.bf16.mxu0 %v1199
        %6808 = vmatmul.mubr.bf16.gmra.mrb[0].mxu0 %v1198
        %v6809 = vpop.f32.mrb[0].mxu0
        %v6810 = vadd.f32 %v2004, %v6809
        %v6811 = vpop.f32.mrb[0].mxu0
        %v6812 = vadd.f32 %v2008, %v6811
        %v6813 = vpop.f32.mrb[0].mxu0
        %v6814 = vadd.f32 %v2004, %v6813
        %v6815 = vpop.f32.mrb[0].mxu0
        %v6816 = vadd.f32 %v2008, %v6815
        %6817 = vmatprep.mubr.bf16.mxu0 %v1208
        %6818 = vmatmul.mubr.bf16.gmra.mrb[0].mxu0 %v1207
        %v6819 = vpop.f32.mrb[0].mxu0
        %v6820 = vadd.f32 %v2004, %v6819
        %v6821 = vpop.f32.mrb[0].mxu0
        %v6822 = vadd.f32 %v2008, %v6821
        %v6823 = vpop.f32.mrb[0].mxu0
        %v6824 = vadd.f32 %v2004, %v6823
        %v6825 = vpop.f32.mrb[0].mxu0
        %v6826 = vadd.f32 %v2008, %v6825
        %6827 = vmatprep.mubr.bf16.mxu0 %v1217
        %6828 = vmatmul.mubr.bf16.gmra.mrb[0].mxu0 %v1216
        %v6829 = vpop.f32.mrb[0].mxu0
        %v6830 = vadd.f32 %v2004, %v6829
        %v6831 = vpop.f32.mrb[0].mxu0
        %v6832 = vadd.f32 %v2008, %v6831
        %v6833 = vpop.f32.mrb[0].mxu0
        %v6834 = vadd.f32 %v2004, %v6833
        %v6835 = vpop.f32.mrb[0].mxu0
        %v6836 = vadd.f32 %v2008, %v6835
        %6837 = vmatprep.mubr.bf16.mxu0 %v1226
        %6838 = vmatmul.mubr.bf16.gmra.mrb[0].mxu0 %v1225
        %v6839 = vpop.f32.mrb[0].mxu0
        %v6840 = vadd.f32 %v2004, %v6839
        %v6841 = vpop.f32.mrb[0].mxu0
        %v6842 = vadd.f32 %v2008, %v6841
        %v6843 = vpop.f32.mrb[0].mxu0
        %v6844 = vadd.f32 %v2004, %v6843
        %v6845 = vpop.f32.mrb[0].mxu0
        %v6846 = vadd.f32 %v2008, %v6845
        %6847 = vmatprep.mubr.bf16.mxu0 %v1235
        %6848 = vmatmul.mubr.bf16.gmra.mrb[0].mxu0 %v1234
        %v6849 = vpop.f32.mrb[0].mxu0
        %v6850 = vadd.f32 %v2004, %v6849
        %v6851 = vpop.f32.mrb[0].mxu0
        %v6852 = vadd.f32 %v2008, %v6851
        %v6853 = vpop.f32.mrb[0].mxu0
        %v6854 = vadd.f32 %v2004, %v6853
        %v6855 = vpop.f32.mrb[0].mxu0
        %v6856 = vadd.f32 %v2008, %v6855
        %6857 = vmatprep.mubr.bf16.mxu0 %v1244
        %6858 = vmatmul.mubr.bf16.gmra.mrb[0].mxu0 %v1243
        %v6859 = vpop.f32.mrb[0].mxu0
        %v6860 = vadd.f32 %v2004, %v6859
        %v6861 = vpop.f32.mrb[0].mxu0
        %v6862 = vadd.f32 %v2008, %v6861
        %v6863 = vpop.f32.mrb[0].mxu0
        %v6864 = vadd.f32 %v2004, %v6863
        %v6865 = vpop.f32.mrb[0].mxu0
        %v6866 = vadd.f32 %v2008, %v6865
        %6867 = vmatprep.mubr.bf16.mxu0 %v1253
        %6868 = vmatmul.mubr.bf16.gmra.mrb[0].mxu0 %v1252
        %v6869 = vpop.f32.mrb[0].mxu0
        %v6870 = vadd.f32 %v2004, %v6869
        %v6871 = vpop.f32.mrb[0].mxu0
        %v6872 = vadd.f32 %v2008, %v6871
        %v6873 = vpop.f32.mrb[0].mxu0
        %v6874 = vadd.f32 %v2004, %v6873
        %v6875 = vpop.f32.mrb[0].mxu0
        %v6876 = vadd.f32 %v2008, %v6875
        %6877 = vdwg.mxu0
        %6878 = vmatprep.subr.bf16.mxu0 %v4360
        %6879 = vmatpush1.bf16.msra.mxu0 %v4359
        %6880 = vmatprep.subr.bf16.mxu0 %v4370
        %6881 = vmatpush1.bf16.msra.mxu0 %v4369
        %6882 = vmatprep.subr.bf16.mxu0 %v4380
        %6883 = vmatpush1.bf16.msra.mxu0 %v4379
        %6884 = vmatprep.subr.bf16.mxu0 %v4390
        %6885 = vmatpush1.bf16.msra.mxu0 %v4389
        %6886 = vmatprep.subr.bf16.mxu0 %v4400
        %6887 = vmatpush1.bf16.msra.mxu0 %v4399
        %6888 = vmatprep.subr.bf16.mxu0 %v4410
        %6889 = vmatpush1.bf16.msra.mxu0 %v4409
        %6890 = vmatprep.subr.bf16.mxu0 %v4420
        %6891 = vmatpush1.bf16.msra.mxu0 %v4419
        %6892 = vmatprep.subr.bf16.mxu0 %v4430
        %6893 = vmatpush1.bf16.msra.mxu0 %v4429
        %6894 = vmatprep.subr.bf16.mxu0 %v4440
        %6895 = vmatpush1.bf16.msra.mxu0 %v4439
        %6896 = vmatprep.subr.bf16.mxu0 %v4450
        %6897 = vmatpush1.bf16.msra.mxu0 %v4449
        %6898 = vmatprep.subr.bf16.mxu0 %v4460
        %6899 = vmatpush1.bf16.msra.mxu0 %v4459
        %6900 = vmatprep.subr.bf16.mxu0 %v4470
        %6901 = vmatpush1.bf16.msra.mxu0 %v4469
        %6902 = vmatprep.subr.bf16.mxu0 %v4480
        %6903 = vmatpush1.bf16.msra.mxu0 %v4479
        %6904 = vmatprep.subr.bf16.mxu0 %v4490
        %6905 = vmatpush1.bf16.msra.mxu0 %v4489
        %6906 = vmatprep.subr.bf16.mxu0 %v4500
        %6907 = vmatpush1.bf16.msra.mxu0 %v4499
        %6908 = vmatprep.subr.bf16.mxu0 %v4510
        %6909 = vmatpush1.bf16.msra.mxu0 %v4509
        %6910 = vmatprep.mubr.bf16.mxu0 %v1192
        %6911 = vmatmul.mubr.bf16.gmra.mrb[0].mxu0 %v1191
        %v6912 = vpop.f32.mrb[0].mxu0
        %v6913 = vadd.f32 %v6800, %v6912
        %v6914 = vpop.f32.mrb[0].mxu0
        %v6915 = vadd.f32 %v6802, %v6914
        %v6916 = vpop.f32.mrb[0].mxu0
        %v6917 = vadd.f32 %v6804, %v6916
        %v6918 = vpop.f32.mrb[0].mxu0
        %v6919 = vadd.f32 %v6806, %v6918
        %6920 = vmatprep.mubr.bf16.mxu0 %v1201
        %6921 = vmatmul.mubr.bf16.gmra.mrb[0].mxu0 %v1200
        %v6922 = vpop.f32.mrb[0].mxu0
        %v6923 = vadd.f32 %v6810, %v6922
        %v6924 = vpop.f32.mrb[0].mxu0
        %v6925 = vadd.f32 %v6812, %v6924
        %v6926 = vpop.f32.mrb[0].mxu0
        %v6927 = vadd.f32 %v6814, %v6926
        %v6928 = vpop.f32.mrb[0].mxu0
        %v6929 = vadd.f32 %v6816, %v6928
        %6930 = vmatprep.mubr.bf16.mxu0 %v1210
        %6931 = vmatmul.mubr.bf16.gmra.mrb[0].mxu0 %v1209
        %v6932 = vpop.f32.mrb[0].mxu0
        %v6933 = vadd.f32 %v6820, %v6932
        %v6934 = vpop.f32.mrb[0].mxu0
        %v6935 = vadd.f32 %v6822, %v6934
        %v6936 = vpop.f32.mrb[0].mxu0
        %v6937 = vadd.f32 %v6824, %v6936
        %v6938 = vpop.f32.mrb[0].mxu0
        %v6939 = vadd.f32 %v6826, %v6938
        %6940 = vmatprep.mubr.bf16.mxu0 %v1219
        %6941 = vmatmul.mubr.bf16.gmra.mrb[0].mxu0 %v1218
        %v6942 = vpop.f32.mrb[0].mxu0
        %v6943 = vadd.f32 %v6830, %v6942
        %v6944 = vpop.f32.mrb[0].mxu0
        %v6945 = vadd.f32 %v6832, %v6944
        %v6946 = vpop.f32.mrb[0].mxu0
        %v6947 = vadd.f32 %v6834, %v6946
        %v6948 = vpop.f32.mrb[0].mxu0
        %v6949 = vadd.f32 %v6836, %v6948
        %6950 = vmatprep.mubr.bf16.mxu0 %v1228
        %6951 = vmatmul.mubr.bf16.gmra.mrb[0].mxu0 %v1227
        %v6952 = vpop.f32.mrb[0].mxu0
        %v6953 = vadd.f32 %v6840, %v6952
        %v6954 = vpop.f32.mrb[0].mxu0
        %v6955 = vadd.f32 %v6842, %v6954
        %v6956 = vpop.f32.mrb[0].mxu0
        %v6957 = vadd.f32 %v6844, %v6956
        %v6958 = vpop.f32.mrb[0].mxu0
        %v6959 = vadd.f32 %v6846, %v6958
        %6960 = vmatprep.mubr.bf16.mxu0 %v1237
        %6961 = vmatmul.mubr.bf16.gmra.mrb[0].mxu0 %v1236
        %v6962 = vpop.f32.mrb[0].mxu0
        %v6963 = vadd.f32 %v6850, %v6962
        %v6964 = vpop.f32.mrb[0].mxu0
        %v6965 = vadd.f32 %v6852, %v6964
        %v6966 = vpop.f32.mrb[0].mxu0
        %v6967 = vadd.f32 %v6854, %v6966
        %v6968 = vpop.f32.mrb[0].mxu0
        %v6969 = vadd.f32 %v6856, %v6968
        %6970 = vmatprep.mubr.bf16.mxu0 %v1246
        %6971 = vmatmul.mubr.bf16.gmra.mrb[0].mxu0 %v1245
        %v6972 = vpop.f32.mrb[0].mxu0
        %v6973 = vadd.f32 %v6860, %v6972
        %v6974 = vpop.f32.mrb[0].mxu0
        %v6975 = vadd.f32 %v6862, %v6974
        %v6976 = vpop.f32.mrb[0].mxu0
        %v6977 = vadd.f32 %v6864, %v6976
        %v6978 = vpop.f32.mrb[0].mxu0
        %v6979 = vadd.f32 %v6866, %v6978
        %6980 = vmatprep.mubr.bf16.mxu0 %v1255
        %6981 = vmatmul.mubr.bf16.gmra.mrb[0].mxu0 %v1254
        %v6982 = vpop.f32.mrb[0].mxu0
        %v6983 = vadd.f32 %v6870, %v6982
        %v6984 = vpop.f32.mrb[0].mxu0
        %v6985 = vadd.f32 %v6872, %v6984
        %v6986 = vpop.f32.mrb[0].mxu0
        %v6987 = vadd.f32 %v6874, %v6986
        %v6988 = vpop.f32.mrb[0].mxu0
        %v6989 = vadd.f32 %v6876, %v6988
        %6990 = vdwg.mxu0
        %6991 = vmatprep.subr.bf16.mxu0 %v4520
        %6992 = vmatpush1.bf16.msra.mxu0 %v4519
        %6993 = vmatprep.subr.bf16.mxu0 %v4530
        %6994 = vmatpush1.bf16.msra.mxu0 %v4529
        %6995 = vmatprep.subr.bf16.mxu0 %v4540
        %6996 = vmatpush1.bf16.msra.mxu0 %v4539
        %6997 = vmatprep.subr.bf16.mxu0 %v4550
        %6998 = vmatpush1.bf16.msra.mxu0 %v4549
        %6999 = vmatprep.subr.bf16.mxu0 %v4560
        %7000 = vmatpush1.bf16.msra.mxu0 %v4559
        %7001 = vmatprep.subr.bf16.mxu0 %v4570
        %7002 = vmatpush1.bf16.msra.mxu0 %v4569
        %7003 = vmatprep.subr.bf16.mxu0 %v4580
        %7004 = vmatpush1.bf16.msra.mxu0 %v4579
        %7005 = vmatprep.subr.bf16.mxu0 %v4590
        %7006 = vmatpush1.bf16.msra.mxu0 %v4589
        %7007 = vmatprep.subr.bf16.mxu0 %v4600
        %7008 = vmatpush1.bf16.msra.mxu0 %v4599
        %7009 = vmatprep.subr.bf16.mxu0 %v4610
        %7010 = vmatpush1.bf16.msra.mxu0 %v4609
        %7011 = vmatprep.subr.bf16.mxu0 %v4620
        %7012 = vmatpush1.bf16.msra.mxu0 %v4619
        %7013 = vmatprep.subr.bf16.mxu0 %v4630
        %7014 = vmatpush1.bf16.msra.mxu0 %v4629
        %7015 = vmatprep.subr.bf16.mxu0 %v4640
        %7016 = vmatpush1.bf16.msra.mxu0 %v4639
        %7017 = vmatprep.subr.bf16.mxu0 %v4650
        %7018 = vmatpush1.bf16.msra.mxu0 %v4649
        %7019 = vmatprep.subr.bf16.mxu0 %v4660
        %7020 = vmatpush1.bf16.msra.mxu0 %v4659
        %7021 = vmatprep.subr.bf16.mxu0 %v4670
        %7022 = vmatpush1.bf16.msra.mxu0 %v4669
        %7023 = vmatprep.mubr.bf16.mxu0 %v1194
        %7024 = vmatmul.mubr.bf16.gmra.mrb[0].mxu0 %v1193
        %v7025 = vpop.f32.mrb[0].mxu0
        %v7026 = vadd.f32 %v6913, %v7025
        %v7027 = vpop.f32.mrb[0].mxu0
        %v7028 = vadd.f32 %v6915, %v7027
        %v7029 = vpop.f32.mrb[0].mxu0
        %v7030 = vadd.f32 %v6917, %v7029
        %v7031 = vpop.f32.mrb[0].mxu0
        %v7032 = vadd.f32 %v6919, %v7031
        %7033 = vmatprep.mubr.bf16.mxu0 %v1203
        %7034 = vmatmul.mubr.bf16.gmra.mrb[0].mxu0 %v1202
        %v7035 = vpop.f32.mrb[0].mxu0
        %v7036 = vadd.f32 %v6923, %v7035
        %v7037 = vpop.f32.mrb[0].mxu0
        %v7038 = vadd.f32 %v6925, %v7037
        %v7039 = vpop.f32.mrb[0].mxu0
        %v7040 = vadd.f32 %v6927, %v7039
        %v7041 = vpop.f32.mrb[0].mxu0
        %v7042 = vadd.f32 %v6929, %v7041
        %7043 = vmatprep.mubr.bf16.mxu0 %v1212
        %7044 = vmatmul.mubr.bf16.gmra.mrb[0].mxu0 %v1211
        %v7045 = vpop.f32.mrb[0].mxu0
        %v7046 = vadd.f32 %v6933, %v7045
        %v7047 = vpop.f32.mrb[0].mxu0
        %v7048 = vadd.f32 %v6935, %v7047
        %v7049 = vpop.f32.mrb[0].mxu0
        %v7050 = vadd.f32 %v6937, %v7049
        %v7051 = vpop.f32.mrb[0].mxu0
        %v7052 = vadd.f32 %v6939, %v7051
        %7053 = vmatprep.mubr.bf16.mxu0 %v1221
        %7054 = vmatmul.mubr.bf16.gmra.mrb[0].mxu0 %v1220
        %v7055 = vpop.f32.mrb[0].mxu0
        %v7056 = vadd.f32 %v6943, %v7055
        %v7057 = vpop.f32.mrb[0].mxu0
        %v7058 = vadd.f32 %v6945, %v7057
        %v7059 = vpop.f32.mrb[0].mxu0
        %v7060 = vadd.f32 %v6947, %v7059
        %v7061 = vpop.f32.mrb[0].mxu0
        %v7062 = vadd.f32 %v6949, %v7061
        %7063 = vmatprep.mubr.bf16.mxu0 %v1230
        %7064 = vmatmul.mubr.bf16.gmra.mrb[0].mxu0 %v1229
        %v7065 = vpop.f32.mrb[0].mxu0
        %v7066 = vadd.f32 %v6953, %v7065
        %v7067 = vpop.f32.mrb[0].mxu0
        %v7068 = vadd.f32 %v6955, %v7067
        %v7069 = vpop.f32.mrb[0].mxu0
        %v7070 = vadd.f32 %v6957, %v7069
        %v7071 = vpop.f32.mrb[0].mxu0
        %v7072 = vadd.f32 %v6959, %v7071
        %7073 = vmatprep.mubr.bf16.mxu0 %v1239
        %7074 = vmatmul.mubr.bf16.gmra.mrb[0].mxu0 %v1238
        %v7075 = vpop.f32.mrb[0].mxu0
        %v7076 = vadd.f32 %v6963, %v7075
        %v7077 = vpop.f32.mrb[0].mxu0
        %v7078 = vadd.f32 %v6965, %v7077
        %v7079 = vpop.f32.mrb[0].mxu0
        %v7080 = vadd.f32 %v6967, %v7079
        %v7081 = vpop.f32.mrb[0].mxu0
        %v7082 = vadd.f32 %v6969, %v7081
        %7083 = vmatprep.mubr.bf16.mxu0 %v1248
        %7084 = vmatmul.mubr.bf16.gmra.mrb[0].mxu0 %v1247
        %v7085 = vpop.f32.mrb[0].mxu0
        %v7086 = vadd.f32 %v6973, %v7085
        %v7087 = vpop.f32.mrb[0].mxu0
        %v7088 = vadd.f32 %v6975, %v7087
        %v7089 = vpop.f32.mrb[0].mxu0
        %v7090 = vadd.f32 %v6977, %v7089
        %v7091 = vpop.f32.mrb[0].mxu0
        %v7092 = vadd.f32 %v6979, %v7091
        %7093 = vmatprep.mubr.bf16.mxu0 %v1257
        %7094 = vmatmul.mubr.bf16.gmra.mrb[0].mxu0 %v1256
        %v7095 = vpop.f32.mrb[0].mxu0
        %v7096 = vadd.f32 %v6983, %v7095
        %v7097 = vpop.f32.mrb[0].mxu0
        %v7098 = vadd.f32 %v6985, %v7097
        %v7099 = vpop.f32.mrb[0].mxu0
        %v7100 = vadd.f32 %v6987, %v7099
        %v7101 = vpop.f32.mrb[0].mxu0
        %v7102 = vadd.f32 %v6989, %v7101
        %7103 = vdwg.mxu0
        %7104 = vmatprep.subr.bf16.mxu0 %v4680
        %7105 = vmatpush1.bf16.msra.mxu0 %v4679
        %7106 = vmatprep.subr.bf16.mxu0 %v4690
        %7107 = vmatpush1.bf16.msra.mxu0 %v4689
        %7108 = vmatprep.subr.bf16.mxu0 %v4700
        %7109 = vmatpush1.bf16.msra.mxu0 %v4699
        %7110 = vmatprep.subr.bf16.mxu0 %v4710
        %7111 = vmatpush1.bf16.msra.mxu0 %v4709
        %7112 = vmatprep.subr.bf16.mxu0 %v4720
        %7113 = vmatpush1.bf16.msra.mxu0 %v4719
        %7114 = vmatprep.subr.bf16.mxu0 %v4730
        %7115 = vmatpush1.bf16.msra.mxu0 %v4729
        %7116 = vmatprep.subr.bf16.mxu0 %v4740
        %7117 = vmatpush1.bf16.msra.mxu0 %v4739
        %7118 = vmatprep.subr.bf16.mxu0 %v4750
        %7119 = vmatpush1.bf16.msra.mxu0 %v4749
        %7120 = vmatprep.subr.bf16.mxu0 %v4760
        %7121 = vmatpush1.bf16.msra.mxu0 %v4759
        %7122 = vmatprep.subr.bf16.mxu0 %v4770
        %7123 = vmatpush1.bf16.msra.mxu0 %v4769
        %7124 = vmatprep.subr.bf16.mxu0 %v4780
        %7125 = vmatpush1.bf16.msra.mxu0 %v4779
        %7126 = vmatprep.subr.bf16.mxu0 %v4790
        %7127 = vmatpush1.bf16.msra.mxu0 %v4789
        %7128 = vmatprep.subr.bf16.mxu0 %v4800
        %7129 = vmatpush1.bf16.msra.mxu0 %v4799
        %7130 = vmatprep.subr.bf16.mxu0 %v4810
        %7131 = vmatpush1.bf16.msra.mxu0 %v4809
        %7132 = vmatprep.subr.bf16.mxu0 %v4820
        %7133 = vmatpush1.bf16.msra.mxu0 %v4819
        %7134 = vmatprep.subr.bf16.mxu0 %v4830
        %7135 = vmatpush1.bf16.msra.mxu0 %v4829
        %7136 = vmatprep.mubr.bf16.mxu0 %v1196
        %7137 = vmatmul.mubr.bf16.gmra.mrb[0].mxu0 %v1195
        %v7138 = vpop.f32.mrb[0].mxu0
        %v7139 = vadd.f32 %v7026, %v7138
        %v7140 = vpop.f32.mrb[0].mxu0
        %v7141 = vadd.f32 %v7028, %v7140
        %v7142 = vpop.f32.mrb[0].mxu0
        %v7143 = vadd.f32 %v7030, %v7142
        %v7144 = vpop.f32.mrb[0].mxu0
        %v7145 = vadd.f32 %v7032, %v7144
        %7146 = vmatprep.mubr.bf16.mxu0 %v1205
        %7147 = vmatmul.mubr.bf16.gmra.mrb[0].mxu0 %v1204
        %v7148 = vpop.f32.mrb[0].mxu0
        %v7149 = vadd.f32 %v7036, %v7148
        %v7150 = vpop.f32.mrb[0].mxu0
        %v7151 = vadd.f32 %v7038, %v7150
        %v7152 = vpop.f32.mrb[0].mxu0
        %v7153 = vadd.f32 %v7040, %v7152
        %v7154 = vpop.f32.mrb[0].mxu0
        %v7155 = vadd.f32 %v7042, %v7154
        %7156 = vmatprep.mubr.bf16.mxu0 %v1214
        %7157 = vmatmul.mubr.bf16.gmra.mrb[0].mxu0 %v1213
        %v7158 = vpop.f32.mrb[0].mxu0
        %v7159 = vadd.f32 %v7046, %v7158
        %v7160 = vpop.f32.mrb[0].mxu0
        %v7161 = vadd.f32 %v7048, %v7160
        %v7162 = vpop.f32.mrb[0].mxu0
        %v7163 = vadd.f32 %v7050, %v7162
        %v7164 = vpop.f32.mrb[0].mxu0
        %v7165 = vadd.f32 %v7052, %v7164
        %7166 = vmatprep.mubr.bf16.mxu0 %v1223
        %7167 = vmatmul.mubr.bf16.gmra.mrb[0].mxu0 %v1222
        %v7168 = vpop.f32.mrb[0].mxu0
        %v7169 = vadd.f32 %v7056, %v7168
        %v7170 = vpop.f32.mrb[0].mxu0
        %v7171 = vadd.f32 %v7058, %v7170
        %v7172 = vpop.f32.mrb[0].mxu0
        %v7173 = vadd.f32 %v7060, %v7172
        %v7174 = vpop.f32.mrb[0].mxu0
        %v7175 = vadd.f32 %v7062, %v7174
        %7176 = vmatprep.mubr.bf16.mxu0 %v1232
        %7177 = vmatmul.mubr.bf16.gmra.mrb[0].mxu0 %v1231
        %v7178 = vpop.f32.mrb[0].mxu0
        %v7179 = vadd.f32 %v7066, %v7178
        %v7180 = vpop.f32.mrb[0].mxu0
        %v7181 = vadd.f32 %v7068, %v7180
        %v7182 = vpop.f32.mrb[0].mxu0
        %v7183 = vadd.f32 %v7070, %v7182
        %v7184 = vpop.f32.mrb[0].mxu0
        %v7185 = vadd.f32 %v7072, %v7184
        %7186 = vmatprep.mubr.bf16.mxu0 %v1241
        %7187 = vmatmul.mubr.bf16.gmra.mrb[0].mxu0 %v1240
        %v7188 = vpop.f32.mrb[0].mxu0
        %v7189 = vadd.f32 %v7076, %v7188
        %v7190 = vpop.f32.mrb[0].mxu0
        %v7191 = vadd.f32 %v7078, %v7190
        %v7192 = vpop.f32.mrb[0].mxu0
        %v7193 = vadd.f32 %v7080, %v7192
        %v7194 = vpop.f32.mrb[0].mxu0
        %v7195 = vadd.f32 %v7082, %v7194
        %7196 = vmatprep.mubr.bf16.mxu0 %v1250
        %7197 = vmatmul.mubr.bf16.gmra.mrb[0].mxu0 %v1249
        %v7198 = vpop.f32.mrb[0].mxu0
        %v7199 = vadd.f32 %v7086, %v7198
        %v7200 = vpop.f32.mrb[0].mxu0
        %v7201 = vadd.f32 %v7088, %v7200
        %v7202 = vpop.f32.mrb[0].mxu0
        %v7203 = vadd.f32 %v7090, %v7202
        %v7204 = vpop.f32.mrb[0].mxu0
        %v7205 = vadd.f32 %v7092, %v7204
        %7206 = vmatprep.mubr.bf16.mxu0 %v1259
        %7207 = vmatmul.mubr.bf16.gmra.mrb[0].mxu0 %v1258
        %v7208 = vpop.f32.mrb[0].mxu0
        %v7209 = vadd.f32 %v7096, %v7208
        %v7210 = vpop.f32.mrb[0].mxu0
        %v7211 = vadd.f32 %v7098, %v7210
        %v7212 = vpop.f32.mrb[0].mxu0
        %v7213 = vadd.f32 %v7100, %v7212
        %v7214 = vpop.f32.mrb[0].mxu0
        %v7215 = vadd.f32 %v7102, %v7214
        %7216 = vdwg.mxu0
        %7217 = vmatprep.subr.bf16.mxu0 %v4840
        %7218 = vmatpush1.bf16.msra.mxu0 %v4839
        %7219 = vmatprep.subr.bf16.mxu0 %v4850
        %7220 = vmatpush1.bf16.msra.mxu0 %v4849
        %7221 = vmatprep.subr.bf16.mxu0 %v4860
        %7222 = vmatpush1.bf16.msra.mxu0 %v4859
        %7223 = vmatprep.subr.bf16.mxu0 %v4870
        %7224 = vmatpush1.bf16.msra.mxu0 %v4869
        %7225 = vmatprep.subr.bf16.mxu0 %v4880
        %7226 = vmatpush1.bf16.msra.mxu0 %v4879
        %7227 = vmatprep.subr.bf16.mxu0 %v4890
        %7228 = vmatpush1.bf16.msra.mxu0 %v4889
        %7229 = vmatprep.subr.bf16.mxu0 %v4900
        %7230 = vmatpush1.bf16.msra.mxu0 %v4899
        %7231 = vmatprep.subr.bf16.mxu0 %v4910
        %7232 = vmatpush1.bf16.msra.mxu0 %v4909
        %7233 = vmatprep.subr.bf16.mxu0 0
        %7234 = vmatpush1.bf16.msra.mxu0 0
        %7235 = vmatprep.subr.bf16.mxu0 0
        %7236 = vmatpush1.bf16.msra.mxu0 0
        %7237 = vmatprep.subr.bf16.mxu0 0
        %7238 = vmatpush1.bf16.msra.mxu0 0
        %7239 = vmatprep.subr.bf16.mxu0 0
        %7240 = vmatpush1.bf16.msra.mxu0 0
        %7241 = vmatprep.subr.bf16.mxu0 0
        %7242 = vmatpush1.bf16.msra.mxu0 0
        %7243 = vmatprep.subr.bf16.mxu0 0
        %7244 = vmatpush1.bf16.msra.mxu0 0
        %7245 = vmatprep.subr.bf16.mxu0 0
        %7246 = vmatpush1.bf16.msra.mxu0 0
        %7247 = vmatprep.subr.bf16.mxu0 0
        %7248 = vmatpush1.bf16.msra.mxu0 0
        %7249 = vmatprep.mubr.bf16.mxu0 0
        %7250 = vmatmul.mubr.bf16.gmra.mrb[0].mxu0 %v1197
        %v7251 = vpop.f32.mrb[0].mxu0
        %v7252 = vadd.f32 %v7139, %v7251
        %v7253 = vpop.f32.mrb[0].mxu0
        %v7254 = vadd.f32 %v7141, %v7253
        %v7255 = vpop.f32.mrb[0].mxu0
        %v7256 = vadd.f32 %v7143, %v7255
        %v7257 = vpop.f32.mrb[0].mxu0
        %v7258 = vadd.f32 %v7145, %v7257
        %7259 = vmatprep.mubr.bf16.mxu0 0
        %7260 = vmatmul.mubr.bf16.gmra.mrb[0].mxu0 %v1206
        %v7261 = vpop.f32.mrb[0].mxu0
        %v7262 = vadd.f32 %v7149, %v7261
        %v7263 = vpop.f32.mrb[0].mxu0
        %v7264 = vadd.f32 %v7151, %v7263
        %v7265 = vpop.f32.mrb[0].mxu0
        %v7266 = vadd.f32 %v7153, %v7265
        %v7267 = vpop.f32.mrb[0].mxu0
        %v7268 = vadd.f32 %v7155, %v7267
        %7269 = vmatprep.mubr.bf16.mxu0 0
        %7270 = vmatmul.mubr.bf16.gmra.mrb[0].mxu0 %v1215
        %v7271 = vpop.f32.mrb[0].mxu0
        %v7272 = vadd.f32 %v7159, %v7271
        %v7273 = vpop.f32.mrb[0].mxu0
        %v7274 = vadd.f32 %v7161, %v7273
        %v7275 = vpop.f32.mrb[0].mxu0
        %v7276 = vadd.f32 %v7163, %v7275
        %v7277 = vpop.f32.mrb[0].mxu0
        %v7278 = vadd.f32 %v7165, %v7277
        %7279 = vmatprep.mubr.bf16.mxu0 0
        %7280 = vmatmul.mubr.bf16.gmra.mrb[0].mxu0 %v1224
        %v7281 = vpop.f32.mrb[0].mxu0
        %v7282 = vadd.f32 %v7169, %v7281
        %v7283 = vpop.f32.mrb[0].mxu0
        %v7284 = vadd.f32 %v7171, %v7283
        %v7285 = vpop.f32.mrb[0].mxu0
        %v7286 = vadd.f32 %v7173, %v7285
        %v7287 = vpop.f32.mrb[0].mxu0
        %v7288 = vadd.f32 %v7175, %v7287
        %7289 = vmatprep.mubr.bf16.mxu0 0
        %7290 = vmatmul.mubr.bf16.gmra.mrb[0].mxu0 %v1233
        %v7291 = vpop.f32.mrb[0].mxu0
        %v7292 = vadd.f32 %v7179, %v7291
        %v7293 = vpop.f32.mrb[0].mxu0
        %v7294 = vadd.f32 %v7181, %v7293
        %v7295 = vpop.f32.mrb[0].mxu0
        %v7296 = vadd.f32 %v7183, %v7295
        %v7297 = vpop.f32.mrb[0].mxu0
        %v7298 = vadd.f32 %v7185, %v7297
        %7299 = vmatprep.mubr.bf16.mxu0 0
        %7300 = vmatmul.mubr.bf16.gmra.mrb[0].mxu0 %v1242
        %v7301 = vpop.f32.mrb[0].mxu0
        %v7302 = vadd.f32 %v7189, %v7301
        %v7303 = vpop.f32.mrb[0].mxu0
        %v7304 = vadd.f32 %v7191, %v7303
        %v7305 = vpop.f32.mrb[0].mxu0
        %v7306 = vadd.f32 %v7193, %v7305
        %v7307 = vpop.f32.mrb[0].mxu0
        %v7308 = vadd.f32 %v7195, %v7307
        %7309 = vmatprep.mubr.bf16.mxu0 0
        %7310 = vmatmul.mubr.bf16.gmra.mrb[0].mxu0 %v1251
        %v7311 = vpop.f32.mrb[0].mxu0
        %v7312 = vadd.f32 %v7199, %v7311
        %v7313 = vpop.f32.mrb[0].mxu0
        %v7314 = vadd.f32 %v7201, %v7313
        %v7315 = vpop.f32.mrb[0].mxu0
        %v7316 = vadd.f32 %v7203, %v7315
        %v7317 = vpop.f32.mrb[0].mxu0
        %v7318 = vadd.f32 %v7205, %v7317
        %7319 = vmatprep.mubr.bf16.mxu0 0
        %7320 = vmatmul.mubr.bf16.gmra.mrb[0].mxu0 %v1260
        %v7321 = vpop.f32.mrb[0].mxu0
        %v7322 = vadd.f32 %v7209, %v7321
        %v7323 = vpop.f32.mrb[0].mxu0
        %v7324 = vadd.f32 %v7211, %v7323
        %v7325 = vpop.f32.mrb[0].mxu0
        %v7326 = vadd.f32 %v7213, %v7325
        %v7327 = vpop.f32.mrb[0].mxu0
        %v7328 = vadd.f32 %v7215, %v7327
        %7329 = vdwg.mxu0
        %7330 = vmatprep.subr.bf16.mxu0 %v4202
        %7331 = vmatpush1.bf16.msra.mxu0 %v4201
        %7332 = vmatprep.subr.bf16.mxu0 %v4212
        %7333 = vmatpush1.bf16.msra.mxu0 %v4211
        %7334 = vmatprep.subr.bf16.mxu0 %v4222
        %7335 = vmatpush1.bf16.msra.mxu0 %v4221
        %7336 = vmatprep.subr.bf16.mxu0 %v4232
        %7337 = vmatpush1.bf16.msra.mxu0 %v4231
        %7338 = vmatprep.subr.bf16.mxu0 %v4242
        %7339 = vmatpush1.bf16.msra.mxu0 %v4241
        %7340 = vmatprep.subr.bf16.mxu0 %v4252
        %7341 = vmatpush1.bf16.msra.mxu0 %v4251
        %7342 = vmatprep.subr.bf16.mxu0 %v4262
        %7343 = vmatpush1.bf16.msra.mxu0 %v4261
        %7344 = vmatprep.subr.bf16.mxu0 %v4272
        %7345 = vmatpush1.bf16.msra.mxu0 %v4271
        %7346 = vmatprep.subr.bf16.mxu0 %v4282
        %7347 = vmatpush1.bf16.msra.mxu0 %v4281
        %7348 = vmatprep.subr.bf16.mxu0 %v4292
        %7349 = vmatpush1.bf16.msra.mxu0 %v4291
        %7350 = vmatprep.subr.bf16.mxu0 %v4302
        %7351 = vmatpush1.bf16.msra.mxu0 %v4301
        %7352 = vmatprep.subr.bf16.mxu0 %v4312
        %7353 = vmatpush1.bf16.msra.mxu0 %v4311
        %7354 = vmatprep.subr.bf16.mxu0 %v4322
        %7355 = vmatpush1.bf16.msra.mxu0 %v4321
        %7356 = vmatprep.subr.bf16.mxu0 %v4332
        %7357 = vmatpush1.bf16.msra.mxu0 %v4331
        %7358 = vmatprep.subr.bf16.mxu0 %v4342
        %7359 = vmatpush1.bf16.msra.mxu0 %v4341
        %7360 = vmatprep.subr.bf16.mxu0 %v4352
        %7361 = vmatpush1.bf16.msra.mxu0 %v4351
        %7362 = vmatprep.mubr.bf16.mxu0 %v1190
        %7363 = vmatmul.mubr.bf16.gmra.mrb[0].mxu0 %v1189
        %v7364 = vpop.f32.mrb[0].mxu0
        %v7365 = vadd.f32 %v2012, %v7364
        %v7366 = vpop.f32.mrb[0].mxu0
        %v7367 = vadd.f32 %v2016, %v7366
        %v7368 = vpop.f32.mrb[0].mxu0
        %v7369 = vadd.f32 %v2012, %v7368
        %v7370 = vpop.f32.mrb[0].mxu0
        %v7371 = vadd.f32 %v2016, %v7370
        %7372 = vmatprep.mubr.bf16.mxu0 %v1199
        %7373 = vmatmul.mubr.bf16.gmra.mrb[0].mxu0 %v1198
        %v7374 = vpop.f32.mrb[0].mxu0
        %v7375 = vadd.f32 %v2012, %v7374
        %v7376 = vpop.f32.mrb[0].mxu0
        %v7377 = vadd.f32 %v2016, %v7376
        %v7378 = vpop.f32.mrb[0].mxu0
        %v7379 = vadd.f32 %v2012, %v7378
        %v7380 = vpop.f32.mrb[0].mxu0
        %v7381 = vadd.f32 %v2016, %v7380
        %7382 = vmatprep.mubr.bf16.mxu0 %v1208
        %7383 = vmatmul.mubr.bf16.gmra.mrb[0].mxu0 %v1207
        %v7384 = vpop.f32.mrb[0].mxu0
        %v7385 = vadd.f32 %v2012, %v7384
        %v7386 = vpop.f32.mrb[0].mxu0
        %v7387 = vadd.f32 %v2016, %v7386
        %v7388 = vpop.f32.mrb[0].mxu0
        %v7389 = vadd.f32 %v2012, %v7388
        %v7390 = vpop.f32.mrb[0].mxu0
        %v7391 = vadd.f32 %v2016, %v7390
        %7392 = vmatprep.mubr.bf16.mxu0 %v1217
        %7393 = vmatmul.mubr.bf16.gmra.mrb[0].mxu0 %v1216
        %v7394 = vpop.f32.mrb[0].mxu0
        %v7395 = vadd.f32 %v2012, %v7394
        %v7396 = vpop.f32.mrb[0].mxu0
        %v7397 = vadd.f32 %v2016, %v7396
        %v7398 = vpop.f32.mrb[0].mxu0
        %v7399 = vadd.f32 %v2012, %v7398
        %v7400 = vpop.f32.mrb[0].mxu0
        %v7401 = vadd.f32 %v2016, %v7400
        %7402 = vmatprep.mubr.bf16.mxu0 %v1226
        %7403 = vmatmul.mubr.bf16.gmra.mrb[0].mxu0 %v1225
        %v7404 = vpop.f32.mrb[0].mxu0
        %v7405 = vadd.f32 %v2012, %v7404
        %v7406 = vpop.f32.mrb[0].mxu0
        %v7407 = vadd.f32 %v2016, %v7406
        %v7408 = vpop.f32.mrb[0].mxu0
        %v7409 = vadd.f32 %v2012, %v7408
        %v7410 = vpop.f32.mrb[0].mxu0
        %v7411 = vadd.f32 %v2016, %v7410
        %7412 = vmatprep.mubr.bf16.mxu0 %v1235
        %7413 = vmatmul.mubr.bf16.gmra.mrb[0].mxu0 %v1234
        %v7414 = vpop.f32.mrb[0].mxu0
        %v7415 = vadd.f32 %v2012, %v7414
        %v7416 = vpop.f32.mrb[0].mxu0
        %v7417 = vadd.f32 %v2016, %v7416
        %v7418 = vpop.f32.mrb[0].mxu0
        %v7419 = vadd.f32 %v2012, %v7418
        %v7420 = vpop.f32.mrb[0].mxu0
        %v7421 = vadd.f32 %v2016, %v7420
        %7422 = vmatprep.mubr.bf16.mxu0 %v1244
        %7423 = vmatmul.mubr.bf16.gmra.mrb[0].mxu0 %v1243
        %v7424 = vpop.f32.mrb[0].mxu0
        %v7425 = vadd.f32 %v2012, %v7424
        %v7426 = vpop.f32.mrb[0].mxu0
        %v7427 = vadd.f32 %v2016, %v7426
        %v7428 = vpop.f32.mrb[0].mxu0
        %v7429 = vadd.f32 %v2012, %v7428
        %v7430 = vpop.f32.mrb[0].mxu0
        %v7431 = vadd.f32 %v2016, %v7430
        %7432 = vmatprep.mubr.bf16.mxu0 %v1253
        %7433 = vmatmul.mubr.bf16.gmra.mrb[0].mxu0 %v1252
        %v7434 = vpop.f32.mrb[0].mxu0
        %v7435 = vadd.f32 %v2012, %v7434
        %v7436 = vpop.f32.mrb[0].mxu0
        %v7437 = vadd.f32 %v2016, %v7436
        %v7438 = vpop.f32.mrb[0].mxu0
        %v7439 = vadd.f32 %v2012, %v7438
        %v7440 = vpop.f32.mrb[0].mxu0
        %v7441 = vadd.f32 %v2016, %v7440
        %7442 = vdwg.mxu0
        %7443 = vmatprep.subr.bf16.mxu0 %v4362
        %7444 = vmatpush1.bf16.msra.mxu0 %v4361
        %7445 = vmatprep.subr.bf16.mxu0 %v4372
        %7446 = vmatpush1.bf16.msra.mxu0 %v4371
        %7447 = vmatprep.subr.bf16.mxu0 %v4382
        %7448 = vmatpush1.bf16.msra.mxu0 %v4381
        %7449 = vmatprep.subr.bf16.mxu0 %v4392
        %7450 = vmatpush1.bf16.msra.mxu0 %v4391
        %7451 = vmatprep.subr.bf16.mxu0 %v4402
        %7452 = vmatpush1.bf16.msra.mxu0 %v4401
        %7453 = vmatprep.subr.bf16.mxu0 %v4412
        %7454 = vmatpush1.bf16.msra.mxu0 %v4411
        %7455 = vmatprep.subr.bf16.mxu0 %v4422
        %7456 = vmatpush1.bf16.msra.mxu0 %v4421
        %7457 = vmatprep.subr.bf16.mxu0 %v4432
        %7458 = vmatpush1.bf16.msra.mxu0 %v4431
        %7459 = vmatprep.subr.bf16.mxu0 %v4442
        %7460 = vmatpush1.bf16.msra.mxu0 %v4441
        %7461 = vmatprep.subr.bf16.mxu0 %v4452
        %7462 = vmatpush1.bf16.msra.mxu0 %v4451
        %7463 = vmatprep.subr.bf16.mxu0 %v4462
        %7464 = vmatpush1.bf16.msra.mxu0 %v4461
        %7465 = vmatprep.subr.bf16.mxu0 %v4472
        %7466 = vmatpush1.bf16.msra.mxu0 %v4471
        %7467 = vmatprep.subr.bf16.mxu0 %v4482
        %7468 = vmatpush1.bf16.msra.mxu0 %v4481
        %7469 = vmatprep.subr.bf16.mxu0 %v4492
        %7470 = vmatpush1.bf16.msra.mxu0 %v4491
        %7471 = vmatprep.subr.bf16.mxu0 %v4502
        %7472 = vmatpush1.bf16.msra.mxu0 %v4501
        %7473 = vmatprep.subr.bf16.mxu0 %v4512
        %7474 = vmatpush1.bf16.msra.mxu0 %v4511
        %7475 = vmatprep.mubr.bf16.mxu0 %v1192
        %7476 = vmatmul.mubr.bf16.gmra.mrb[0].mxu0 %v1191
        %v7477 = vpop.f32.mrb[0].mxu0
        %v7478 = vadd.f32 %v7365, %v7477
        %v7479 = vpop.f32.mrb[0].mxu0
        %v7480 = vadd.f32 %v7367, %v7479
        %v7481 = vpop.f32.mrb[0].mxu0
        %v7482 = vadd.f32 %v7369, %v7481
        %v7483 = vpop.f32.mrb[0].mxu0
        %v7484 = vadd.f32 %v7371, %v7483
        %7485 = vmatprep.mubr.bf16.mxu0 %v1201
        %7486 = vmatmul.mubr.bf16.gmra.mrb[0].mxu0 %v1200
        %v7487 = vpop.f32.mrb[0].mxu0
        %v7488 = vadd.f32 %v7375, %v7487
        %v7489 = vpop.f32.mrb[0].mxu0
        %v7490 = vadd.f32 %v7377, %v7489
        %v7491 = vpop.f32.mrb[0].mxu0
        %v7492 = vadd.f32 %v7379, %v7491
        %v7493 = vpop.f32.mrb[0].mxu0
        %v7494 = vadd.f32 %v7381, %v7493
        %7495 = vmatprep.mubr.bf16.mxu0 %v1210
        %7496 = vmatmul.mubr.bf16.gmra.mrb[0].mxu0 %v1209
        %v7497 = vpop.f32.mrb[0].mxu0
        %v7498 = vadd.f32 %v7385, %v7497
        %v7499 = vpop.f32.mrb[0].mxu0
        %v7500 = vadd.f32 %v7387, %v7499
        %v7501 = vpop.f32.mrb[0].mxu0
        %v7502 = vadd.f32 %v7389, %v7501
        %v7503 = vpop.f32.mrb[0].mxu0
        %v7504 = vadd.f32 %v7391, %v7503
        %7505 = vmatprep.mubr.bf16.mxu0 %v1219
        %7506 = vmatmul.mubr.bf16.gmra.mrb[0].mxu0 %v1218
        %v7507 = vpop.f32.mrb[0].mxu0
        %v7508 = vadd.f32 %v7395, %v7507
        %v7509 = vpop.f32.mrb[0].mxu0
        %v7510 = vadd.f32 %v7397, %v7509
        %v7511 = vpop.f32.mrb[0].mxu0
        %v7512 = vadd.f32 %v7399, %v7511
        %v7513 = vpop.f32.mrb[0].mxu0
        %v7514 = vadd.f32 %v7401, %v7513
        %7515 = vmatprep.mubr.bf16.mxu0 %v1228
        %7516 = vmatmul.mubr.bf16.gmra.mrb[0].mxu0 %v1227
        %v7517 = vpop.f32.mrb[0].mxu0
        %v7518 = vadd.f32 %v7405, %v7517
        %v7519 = vpop.f32.mrb[0].mxu0
        %v7520 = vadd.f32 %v7407, %v7519
        %v7521 = vpop.f32.mrb[0].mxu0
        %v7522 = vadd.f32 %v7409, %v7521
        %v7523 = vpop.f32.mrb[0].mxu0
        %v7524 = vadd.f32 %v7411, %v7523
        %7525 = vmatprep.mubr.bf16.mxu0 %v1237
        %7526 = vmatmul.mubr.bf16.gmra.mrb[0].mxu0 %v1236
        %v7527 = vpop.f32.mrb[0].mxu0
        %v7528 = vadd.f32 %v7415, %v7527
        %v7529 = vpop.f32.mrb[0].mxu0
        %v7530 = vadd.f32 %v7417, %v7529
        %v7531 = vpop.f32.mrb[0].mxu0
        %v7532 = vadd.f32 %v7419, %v7531
        %v7533 = vpop.f32.mrb[0].mxu0
        %v7534 = vadd.f32 %v7421, %v7533
        %7535 = vmatprep.mubr.bf16.mxu0 %v1246
        %7536 = vmatmul.mubr.bf16.gmra.mrb[0].mxu0 %v1245
        %v7537 = vpop.f32.mrb[0].mxu0
        %v7538 = vadd.f32 %v7425, %v7537
        %v7539 = vpop.f32.mrb[0].mxu0
        %v7540 = vadd.f32 %v7427, %v7539
        %v7541 = vpop.f32.mrb[0].mxu0
        %v7542 = vadd.f32 %v7429, %v7541
        %v7543 = vpop.f32.mrb[0].mxu0
        %v7544 = vadd.f32 %v7431, %v7543
        %7545 = vmatprep.mubr.bf16.mxu0 %v1255
        %7546 = vmatmul.mubr.bf16.gmra.mrb[0].mxu0 %v1254
        %v7547 = vpop.f32.mrb[0].mxu0
        %v7548 = vadd.f32 %v7435, %v7547
        %v7549 = vpop.f32.mrb[0].mxu0
        %v7550 = vadd.f32 %v7437, %v7549
        %v7551 = vpop.f32.mrb[0].mxu0
        %v7552 = vadd.f32 %v7439, %v7551
        %v7553 = vpop.f32.mrb[0].mxu0
        %v7554 = vadd.f32 %v7441, %v7553
        %7555 = vdwg.mxu0
        %7556 = vmatprep.subr.bf16.mxu0 %v4522
        %7557 = vmatpush1.bf16.msra.mxu0 %v4521
        %7558 = vmatprep.subr.bf16.mxu0 %v4532
        %7559 = vmatpush1.bf16.msra.mxu0 %v4531
        %7560 = vmatprep.subr.bf16.mxu0 %v4542
        %7561 = vmatpush1.bf16.msra.mxu0 %v4541
        %7562 = vmatprep.subr.bf16.mxu0 %v4552
        %7563 = vmatpush1.bf16.msra.mxu0 %v4551
        %7564 = vmatprep.subr.bf16.mxu0 %v4562
        %7565 = vmatpush1.bf16.msra.mxu0 %v4561
        %7566 = vmatprep.subr.bf16.mxu0 %v4572
        %7567 = vmatpush1.bf16.msra.mxu0 %v4571
        %7568 = vmatprep.subr.bf16.mxu0 %v4582
        %7569 = vmatpush1.bf16.msra.mxu0 %v4581
        %7570 = vmatprep.subr.bf16.mxu0 %v4592
        %7571 = vmatpush1.bf16.msra.mxu0 %v4591
        %7572 = vmatprep.subr.bf16.mxu0 %v4602
        %7573 = vmatpush1.bf16.msra.mxu0 %v4601
        %7574 = vmatprep.subr.bf16.mxu0 %v4612
        %7575 = vmatpush1.bf16.msra.mxu0 %v4611
        %7576 = vmatprep.subr.bf16.mxu0 %v4622
        %7577 = vmatpush1.bf16.msra.mxu0 %v4621
        %7578 = vmatprep.subr.bf16.mxu0 %v4632
        %7579 = vmatpush1.bf16.msra.mxu0 %v4631
        %7580 = vmatprep.subr.bf16.mxu0 %v4642
        %7581 = vmatpush1.bf16.msra.mxu0 %v4641
        %7582 = vmatprep.subr.bf16.mxu0 %v4652
        %7583 = vmatpush1.bf16.msra.mxu0 %v4651
        %7584 = vmatprep.subr.bf16.mxu0 %v4662
        %7585 = vmatpush1.bf16.msra.mxu0 %v4661
        %7586 = vmatprep.subr.bf16.mxu0 %v4672
        %7587 = vmatpush1.bf16.msra.mxu0 %v4671
        %7588 = vmatprep.mubr.bf16.mxu0 %v1194
        %7589 = vmatmul.mubr.bf16.gmra.mrb[0].mxu0 %v1193
        %v7590 = vpop.f32.mrb[0].mxu0
        %v7591 = vadd.f32 %v7478, %v7590
        %v7592 = vpop.f32.mrb[0].mxu0
        %v7593 = vadd.f32 %v7480, %v7592
        %v7594 = vpop.f32.mrb[0].mxu0
        %v7595 = vadd.f32 %v7482, %v7594
        %v7596 = vpop.f32.mrb[0].mxu0
        %v7597 = vadd.f32 %v7484, %v7596
        %7598 = vmatprep.mubr.bf16.mxu0 %v1203
        %7599 = vmatmul.mubr.bf16.gmra.mrb[0].mxu0 %v1202
        %v7600 = vpop.f32.mrb[0].mxu0
        %v7601 = vadd.f32 %v7488, %v7600
        %v7602 = vpop.f32.mrb[0].mxu0
        %v7603 = vadd.f32 %v7490, %v7602
        %v7604 = vpop.f32.mrb[0].mxu0
        %v7605 = vadd.f32 %v7492, %v7604
        %v7606 = vpop.f32.mrb[0].mxu0
        %v7607 = vadd.f32 %v7494, %v7606
        %7608 = vmatprep.mubr.bf16.mxu0 %v1212
        %7609 = vmatmul.mubr.bf16.gmra.mrb[0].mxu0 %v1211
        %v7610 = vpop.f32.mrb[0].mxu0
        %v7611 = vadd.f32 %v7498, %v7610
        %v7612 = vpop.f32.mrb[0].mxu0
        %v7613 = vadd.f32 %v7500, %v7612
        %v7614 = vpop.f32.mrb[0].mxu0
        %v7615 = vadd.f32 %v7502, %v7614
        %v7616 = vpop.f32.mrb[0].mxu0
        %v7617 = vadd.f32 %v7504, %v7616
        %7618 = vmatprep.mubr.bf16.mxu0 %v1221
        %7619 = vmatmul.mubr.bf16.gmra.mrb[0].mxu0 %v1220
        %v7620 = vpop.f32.mrb[0].mxu0
        %v7621 = vadd.f32 %v7508, %v7620
        %v7622 = vpop.f32.mrb[0].mxu0
        %v7623 = vadd.f32 %v7510, %v7622
        %v7624 = vpop.f32.mrb[0].mxu0
        %v7625 = vadd.f32 %v7512, %v7624
        %v7626 = vpop.f32.mrb[0].mxu0
        %v7627 = vadd.f32 %v7514, %v7626
        %7628 = vmatprep.mubr.bf16.mxu0 %v1230
        %7629 = vmatmul.mubr.bf16.gmra.mrb[0].mxu0 %v1229
        %v7630 = vpop.f32.mrb[0].mxu0
        %v7631 = vadd.f32 %v7518, %v7630
        %v7632 = vpop.f32.mrb[0].mxu0
        %v7633 = vadd.f32 %v7520, %v7632
        %v7634 = vpop.f32.mrb[0].mxu0
        %v7635 = vadd.f32 %v7522, %v7634
        %v7636 = vpop.f32.mrb[0].mxu0
        %v7637 = vadd.f32 %v7524, %v7636
        %7638 = vmatprep.mubr.bf16.mxu0 %v1239
        %7639 = vmatmul.mubr.bf16.gmra.mrb[0].mxu0 %v1238
        %v7640 = vpop.f32.mrb[0].mxu0
        %v7641 = vadd.f32 %v7528, %v7640
        %v7642 = vpop.f32.mrb[0].mxu0
        %v7643 = vadd.f32 %v7530, %v7642
        %v7644 = vpop.f32.mrb[0].mxu0
        %v7645 = vadd.f32 %v7532, %v7644
        %v7646 = vpop.f32.mrb[0].mxu0
        %v7647 = vadd.f32 %v7534, %v7646
        %7648 = vmatprep.mubr.bf16.mxu0 %v1248
        %7649 = vmatmul.mubr.bf16.gmra.mrb[0].mxu0 %v1247
        %v7650 = vpop.f32.mrb[0].mxu0
        %v7651 = vadd.f32 %v7538, %v7650
        %v7652 = vpop.f32.mrb[0].mxu0
        %v7653 = vadd.f32 %v7540, %v7652
        %v7654 = vpop.f32.mrb[0].mxu0
        %v7655 = vadd.f32 %v7542, %v7654
        %v7656 = vpop.f32.mrb[0].mxu0
        %v7657 = vadd.f32 %v7544, %v7656
        %7658 = vmatprep.mubr.bf16.mxu0 %v1257
        %7659 = vmatmul.mubr.bf16.gmra.mrb[0].mxu0 %v1256
        %v7660 = vpop.f32.mrb[0].mxu0
        %v7661 = vadd.f32 %v7548, %v7660
        %v7662 = vpop.f32.mrb[0].mxu0
        %v7663 = vadd.f32 %v7550, %v7662
        %v7664 = vpop.f32.mrb[0].mxu0
        %v7665 = vadd.f32 %v7552, %v7664
        %v7666 = vpop.f32.mrb[0].mxu0
        %v7667 = vadd.f32 %v7554, %v7666
        %7668 = vdwg.mxu0
        %7669 = vmatprep.subr.bf16.mxu0 %v4682
        %7670 = vmatpush1.bf16.msra.mxu0 %v4681
        %7671 = vmatprep.subr.bf16.mxu0 %v4692
        %7672 = vmatpush1.bf16.msra.mxu0 %v4691
        %7673 = vmatprep.subr.bf16.mxu0 %v4702
        %7674 = vmatpush1.bf16.msra.mxu0 %v4701
        %7675 = vmatprep.subr.bf16.mxu0 %v4712
        %7676 = vmatpush1.bf16.msra.mxu0 %v4711
        %7677 = vmatprep.subr.bf16.mxu0 %v4722
        %7678 = vmatpush1.bf16.msra.mxu0 %v4721
        %7679 = vmatprep.subr.bf16.mxu0 %v4732
        %7680 = vmatpush1.bf16.msra.mxu0 %v4731
        %7681 = vmatprep.subr.bf16.mxu0 %v4742
        %7682 = vmatpush1.bf16.msra.mxu0 %v4741
        %7683 = vmatprep.subr.bf16.mxu0 %v4752
        %7684 = vmatpush1.bf16.msra.mxu0 %v4751
        %7685 = vmatprep.subr.bf16.mxu0 %v4762
        %7686 = vmatpush1.bf16.msra.mxu0 %v4761
        %7687 = vmatprep.subr.bf16.mxu0 %v4772
        %7688 = vmatpush1.bf16.msra.mxu0 %v4771
        %7689 = vmatprep.subr.bf16.mxu0 %v4782
        %7690 = vmatpush1.bf16.msra.mxu0 %v4781
        %7691 = vmatprep.subr.bf16.mxu0 %v4792
        %7692 = vmatpush1.bf16.msra.mxu0 %v4791
        %7693 = vmatprep.subr.bf16.mxu0 %v4802
        %7694 = vmatpush1.bf16.msra.mxu0 %v4801
        %7695 = vmatprep.subr.bf16.mxu0 %v4812
        %7696 = vmatpush1.bf16.msra.mxu0 %v4811
        %7697 = vmatprep.subr.bf16.mxu0 %v4822
        %7698 = vmatpush1.bf16.msra.mxu0 %v4821
        %7699 = vmatprep.subr.bf16.mxu0 %v4832
        %7700 = vmatpush1.bf16.msra.mxu0 %v4831
        %7701 = vmatprep.mubr.bf16.mxu0 %v1196
        %7702 = vmatmul.mubr.bf16.gmra.mrb[0].mxu0 %v1195
        %v7703 = vpop.f32.mrb[0].mxu0
        %v7704 = vadd.f32 %v7591, %v7703
        %v7705 = vpop.f32.mrb[0].mxu0
        %v7706 = vadd.f32 %v7593, %v7705
        %v7707 = vpop.f32.mrb[0].mxu0
        %v7708 = vadd.f32 %v7595, %v7707
        %v7709 = vpop.f32.mrb[0].mxu0
        %v7710 = vadd.f32 %v7597, %v7709
        %7711 = vmatprep.mubr.bf16.mxu0 %v1205
        %7712 = vmatmul.mubr.bf16.gmra.mrb[0].mxu0 %v1204
        %v7713 = vpop.f32.mrb[0].mxu0
        %v7714 = vadd.f32 %v7601, %v7713
        %v7715 = vpop.f32.mrb[0].mxu0
        %v7716 = vadd.f32 %v7603, %v7715
        %v7717 = vpop.f32.mrb[0].mxu0
        %v7718 = vadd.f32 %v7605, %v7717
        %v7719 = vpop.f32.mrb[0].mxu0
        %v7720 = vadd.f32 %v7607, %v7719
        %7721 = vmatprep.mubr.bf16.mxu0 %v1214
        %7722 = vmatmul.mubr.bf16.gmra.mrb[0].mxu0 %v1213
        %v7723 = vpop.f32.mrb[0].mxu0
        %v7724 = vadd.f32 %v7611, %v7723
        %v7725 = vpop.f32.mrb[0].mxu0
        %v7726 = vadd.f32 %v7613, %v7725
        %v7727 = vpop.f32.mrb[0].mxu0
        %v7728 = vadd.f32 %v7615, %v7727
        %v7729 = vpop.f32.mrb[0].mxu0
        %v7730 = vadd.f32 %v7617, %v7729
        %7731 = vmatprep.mubr.bf16.mxu0 %v1223
        %7732 = vmatmul.mubr.bf16.gmra.mrb[0].mxu0 %v1222
        %v7733 = vpop.f32.mrb[0].mxu0
        %v7734 = vadd.f32 %v7621, %v7733
        %v7735 = vpop.f32.mrb[0].mxu0
        %v7736 = vadd.f32 %v7623, %v7735
        %v7737 = vpop.f32.mrb[0].mxu0
        %v7738 = vadd.f32 %v7625, %v7737
        %v7739 = vpop.f32.mrb[0].mxu0
        %v7740 = vadd.f32 %v7627, %v7739
        %7741 = vmatprep.mubr.bf16.mxu0 %v1232
        %7742 = vmatmul.mubr.bf16.gmra.mrb[0].mxu0 %v1231
        %v7743 = vpop.f32.mrb[0].mxu0
        %v7744 = vadd.f32 %v7631, %v7743
        %v7745 = vpop.f32.mrb[0].mxu0
        %v7746 = vadd.f32 %v7633, %v7745
        %v7747 = vpop.f32.mrb[0].mxu0
        %v7748 = vadd.f32 %v7635, %v7747
        %v7749 = vpop.f32.mrb[0].mxu0
        %v7750 = vadd.f32 %v7637, %v7749
        %7751 = vmatprep.mubr.bf16.mxu0 %v1241
        %7752 = vmatmul.mubr.bf16.gmra.mrb[0].mxu0 %v1240
        %v7753 = vpop.f32.mrb[0].mxu0
        %v7754 = vadd.f32 %v7641, %v7753
        %v7755 = vpop.f32.mrb[0].mxu0
        %v7756 = vadd.f32 %v7643, %v7755
        %v7757 = vpop.f32.mrb[0].mxu0
        %v7758 = vadd.f32 %v7645, %v7757
        %v7759 = vpop.f32.mrb[0].mxu0
        %v7760 = vadd.f32 %v7647, %v7759
        %7761 = vmatprep.mubr.bf16.mxu0 %v1250
        %7762 = vmatmul.mubr.bf16.gmra.mrb[0].mxu0 %v1249
        %v7763 = vpop.f32.mrb[0].mxu0
        %v7764 = vadd.f32 %v7651, %v7763
        %v7765 = vpop.f32.mrb[0].mxu0
        %v7766 = vadd.f32 %v7653, %v7765
        %v7767 = vpop.f32.mrb[0].mxu0
        %v7768 = vadd.f32 %v7655, %v7767
        %v7769 = vpop.f32.mrb[0].mxu0
        %v7770 = vadd.f32 %v7657, %v7769
        %7771 = vmatprep.mubr.bf16.mxu0 %v1259
        %7772 = vmatmul.mubr.bf16.gmra.mrb[0].mxu0 %v1258
        %v7773 = vpop.f32.mrb[0].mxu0
        %v7774 = vadd.f32 %v7661, %v7773
        %v7775 = vpop.f32.mrb[0].mxu0
        %v7776 = vadd.f32 %v7663, %v7775
        %v7777 = vpop.f32.mrb[0].mxu0
        %v7778 = vadd.f32 %v7665, %v7777
        %v7779 = vpop.f32.mrb[0].mxu0
        %v7780 = vadd.f32 %v7667, %v7779
        %7781 = vdwg.mxu0
        %7782 = vmatprep.subr.bf16.mxu0 %v4842
        %7783 = vmatpush1.bf16.msra.mxu0 %v4841
        %7784 = vmatprep.subr.bf16.mxu0 %v4852
        %7785 = vmatpush1.bf16.msra.mxu0 %v4851
        %7786 = vmatprep.subr.bf16.mxu0 %v4862
        %7787 = vmatpush1.bf16.msra.mxu0 %v4861
        %7788 = vmatprep.subr.bf16.mxu0 %v4872
        %7789 = vmatpush1.bf16.msra.mxu0 %v4871
        %7790 = vmatprep.subr.bf16.mxu0 %v4882
        %7791 = vmatpush1.bf16.msra.mxu0 %v4881
        %7792 = vmatprep.subr.bf16.mxu0 %v4892
        %7793 = vmatpush1.bf16.msra.mxu0 %v4891
        %7794 = vmatprep.subr.bf16.mxu0 %v4902
        %7795 = vmatpush1.bf16.msra.mxu0 %v4901
        %7796 = vmatprep.subr.bf16.mxu0 %v4912
        %7797 = vmatpush1.bf16.msra.mxu0 %v4911
        %7798 = vmatprep.subr.bf16.mxu0 0
        %7799 = vmatpush1.bf16.msra.mxu0 0
        %7800 = vmatprep.subr.bf16.mxu0 0
        %7801 = vmatpush1.bf16.msra.mxu0 0
        %7802 = vmatprep.subr.bf16.mxu0 0
        %7803 = vmatpush1.bf16.msra.mxu0 0
        %7804 = vmatprep.subr.bf16.mxu0 0
        %7805 = vmatpush1.bf16.msra.mxu0 0
        %7806 = vmatprep.subr.bf16.mxu0 0
        %7807 = vmatpush1.bf16.msra.mxu0 0
        %7808 = vmatprep.subr.bf16.mxu0 0
        %7809 = vmatpush1.bf16.msra.mxu0 0
        %7810 = vmatprep.subr.bf16.mxu0 0
        %7811 = vmatpush1.bf16.msra.mxu0 0
        %7812 = vmatprep.subr.bf16.mxu0 0
        %7813 = vmatpush1.bf16.msra.mxu0 0
        %7814 = vmatprep.mubr.bf16.mxu0 0
        %7815 = vmatmul.mubr.bf16.gmra.mrb[0].mxu0 %v1197
        %v7816 = vpop.f32.mrb[0].mxu0
        %v7817 = vadd.f32 %v7704, %v7816
        %v7818 = vpop.f32.mrb[0].mxu0
        %v7819 = vadd.f32 %v7706, %v7818
        %v7820 = vpop.f32.mrb[0].mxu0
        %v7821 = vadd.f32 %v7708, %v7820
        %v7822 = vpop.f32.mrb[0].mxu0
        %v7823 = vadd.f32 %v7710, %v7822
        %7824 = vmatprep.mubr.bf16.mxu0 0
        %7825 = vmatmul.mubr.bf16.gmra.mrb[0].mxu0 %v1206
        %v7826 = vpop.f32.mrb[0].mxu0
        %v7827 = vadd.f32 %v7714, %v7826
        %v7828 = vpop.f32.mrb[0].mxu0
        %v7829 = vadd.f32 %v7716, %v7828
        %v7830 = vpop.f32.mrb[0].mxu0
        %v7831 = vadd.f32 %v7718, %v7830
        %v7832 = vpop.f32.mrb[0].mxu0
        %v7833 = vadd.f32 %v7720, %v7832
        %7834 = vmatprep.mubr.bf16.mxu0 0
        %7835 = vmatmul.mubr.bf16.gmra.mrb[0].mxu0 %v1215
        %v7836 = vpop.f32.mrb[0].mxu0
        %v7837 = vadd.f32 %v7724, %v7836
        %v7838 = vpop.f32.mrb[0].mxu0
        %v7839 = vadd.f32 %v7726, %v7838
        %v7840 = vpop.f32.mrb[0].mxu0
        %v7841 = vadd.f32 %v7728, %v7840
        %v7842 = vpop.f32.mrb[0].mxu0
        %v7843 = vadd.f32 %v7730, %v7842
        %7844 = vmatprep.mubr.bf16.mxu0 0
        %7845 = vmatmul.mubr.bf16.gmra.mrb[0].mxu0 %v1224
        %v7846 = vpop.f32.mrb[0].mxu0
        %v7847 = vadd.f32 %v7734, %v7846
        %v7848 = vpop.f32.mrb[0].mxu0
        %v7849 = vadd.f32 %v7736, %v7848
        %v7850 = vpop.f32.mrb[0].mxu0
        %v7851 = vadd.f32 %v7738, %v7850
        %v7852 = vpop.f32.mrb[0].mxu0
        %v7853 = vadd.f32 %v7740, %v7852
        %7854 = vmatprep.mubr.bf16.mxu0 0
        %7855 = vmatmul.mubr.bf16.gmra.mrb[0].mxu0 %v1233
        %v7856 = vpop.f32.mrb[0].mxu0
        %v7857 = vadd.f32 %v7744, %v7856
        %v7858 = vpop.f32.mrb[0].mxu0
        %v7859 = vadd.f32 %v7746, %v7858
        %v7860 = vpop.f32.mrb[0].mxu0
        %v7861 = vadd.f32 %v7748, %v7860
        %v7862 = vpop.f32.mrb[0].mxu0
        %v7863 = vadd.f32 %v7750, %v7862
        %7864 = vmatprep.mubr.bf16.mxu0 0
        %7865 = vmatmul.mubr.bf16.gmra.mrb[0].mxu0 %v1242
        %v7866 = vpop.f32.mrb[0].mxu0
        %v7867 = vadd.f32 %v7754, %v7866
        %v7868 = vpop.f32.mrb[0].mxu0
        %v7869 = vadd.f32 %v7756, %v7868
        %v7870 = vpop.f32.mrb[0].mxu0
        %v7871 = vadd.f32 %v7758, %v7870
        %v7872 = vpop.f32.mrb[0].mxu0
        %v7873 = vadd.f32 %v7760, %v7872
        %7874 = vmatprep.mubr.bf16.mxu0 0
        %7875 = vmatmul.mubr.bf16.gmra.mrb[0].mxu0 %v1251
        %v7876 = vpop.f32.mrb[0].mxu0
        %v7877 = vadd.f32 %v7764, %v7876
        %v7878 = vpop.f32.mrb[0].mxu0
        %v7879 = vadd.f32 %v7766, %v7878
        %v7880 = vpop.f32.mrb[0].mxu0
        %v7881 = vadd.f32 %v7768, %v7880
        %v7882 = vpop.f32.mrb[0].mxu0
        %v7883 = vadd.f32 %v7770, %v7882
        %7884 = vmatprep.mubr.bf16.mxu0 0
        %7885 = vmatmul.mubr.bf16.gmra.mrb[0].mxu0 %v1260
        %v7886 = vpop.f32.mrb[0].mxu0
        %v7887 = vadd.f32 %v7774, %v7886
        %v7888 = vpop.f32.mrb[0].mxu0
        %v7889 = vadd.f32 %v7776, %v7888
        %v7890 = vpop.f32.mrb[0].mxu0
        %v7891 = vadd.f32 %v7778, %v7890
        %v7892 = vpop.f32.mrb[0].mxu0
        %v7893 = vadd.f32 %v7780, %v7892
        %7894 = vdwg.mxu0
        %7895 = vmatprep.subr.bf16.mxu0 %v4204
        %7896 = vmatpush1.bf16.msra.mxu0 %v4203
        %7897 = vmatprep.subr.bf16.mxu0 %v4214
        %7898 = vmatpush1.bf16.msra.mxu0 %v4213
        %7899 = vmatprep.subr.bf16.mxu0 %v4224
        %7900 = vmatpush1.bf16.msra.mxu0 %v4223
        %7901 = vmatprep.subr.bf16.mxu0 %v4234
        %7902 = vmatpush1.bf16.msra.mxu0 %v4233
        %7903 = vmatprep.subr.bf16.mxu0 %v4244
        %7904 = vmatpush1.bf16.msra.mxu0 %v4243
        %7905 = vmatprep.subr.bf16.mxu0 %v4254
        %7906 = vmatpush1.bf16.msra.mxu0 %v4253
        %7907 = vmatprep.subr.bf16.mxu0 %v4264
        %7908 = vmatpush1.bf16.msra.mxu0 %v4263
        %7909 = vmatprep.subr.bf16.mxu0 %v4274
        %7910 = vmatpush1.bf16.msra.mxu0 %v4273
        %7911 = vmatprep.subr.bf16.mxu0 %v4284
        %7912 = vmatpush1.bf16.msra.mxu0 %v4283
        %7913 = vmatprep.subr.bf16.mxu0 %v4294
        %7914 = vmatpush1.bf16.msra.mxu0 %v4293
        %7915 = vmatprep.subr.bf16.mxu0 %v4304
        %7916 = vmatpush1.bf16.msra.mxu0 %v4303
        %7917 = vmatprep.subr.bf16.mxu0 %v4314
        %7918 = vmatpush1.bf16.msra.mxu0 %v4313
        %7919 = vmatprep.subr.bf16.mxu0 %v4324
        %7920 = vmatpush1.bf16.msra.mxu0 %v4323
        %7921 = vmatprep.subr.bf16.mxu0 %v4334
        %7922 = vmatpush1.bf16.msra.mxu0 %v4333
        %7923 = vmatprep.subr.bf16.mxu0 %v4344
        %7924 = vmatpush1.bf16.msra.mxu0 %v4343
        %7925 = vmatprep.subr.bf16.mxu0 %v4354
        %7926 = vmatpush1.bf16.msra.mxu0 %v4353
        %7927 = vmatprep.mubr.bf16.mxu0 %v1190
        %7928 = vmatmul.mubr.bf16.gmra.mrb[0].mxu0 %v1189
        %v7929 = vpop.f32.mrb[0].mxu0
        %v7930 = vadd.f32 %v2020, %v7929
        %v7931 = vpop.f32.mrb[0].mxu0
        %v7932 = vadd.f32 %v2024, %v7931
        %v7933 = vpop.f32.mrb[0].mxu0
        %v7934 = vadd.f32 %v2020, %v7933
        %v7935 = vpop.f32.mrb[0].mxu0
        %v7936 = vadd.f32 %v2024, %v7935
        %7937 = vmatprep.mubr.bf16.mxu0 %v1199
        %7938 = vmatmul.mubr.bf16.gmra.mrb[0].mxu0 %v1198
        %v7939 = vpop.f32.mrb[0].mxu0
        %v7940 = vadd.f32 %v2020, %v7939
        %v7941 = vpop.f32.mrb[0].mxu0
        %v7942 = vadd.f32 %v2024, %v7941
        %v7943 = vpop.f32.mrb[0].mxu0
        %v7944 = vadd.f32 %v2020, %v7943
        %v7945 = vpop.f32.mrb[0].mxu0
        %v7946 = vadd.f32 %v2024, %v7945
        %7947 = vmatprep.mubr.bf16.mxu0 %v1208
        %7948 = vmatmul.mubr.bf16.gmra.mrb[0].mxu0 %v1207
        %v7949 = vpop.f32.mrb[0].mxu0
        %v7950 = vadd.f32 %v2020, %v7949
        %v7951 = vpop.f32.mrb[0].mxu0
        %v7952 = vadd.f32 %v2024, %v7951
        %v7953 = vpop.f32.mrb[0].mxu0
        %v7954 = vadd.f32 %v2020, %v7953
        %v7955 = vpop.f32.mrb[0].mxu0
        %v7956 = vadd.f32 %v2024, %v7955
        %7957 = vmatprep.mubr.bf16.mxu0 %v1217
        %7958 = vmatmul.mubr.bf16.gmra.mrb[0].mxu0 %v1216
        %v7959 = vpop.f32.mrb[0].mxu0
        %v7960 = vadd.f32 %v2020, %v7959
        %v7961 = vpop.f32.mrb[0].mxu0
        %v7962 = vadd.f32 %v2024, %v7961
        %v7963 = vpop.f32.mrb[0].mxu0
        %v7964 = vadd.f32 %v2020, %v7963
        %v7965 = vpop.f32.mrb[0].mxu0
        %v7966 = vadd.f32 %v2024, %v7965
        %7967 = vmatprep.mubr.bf16.mxu0 %v1226
        %7968 = vmatmul.mubr.bf16.gmra.mrb[0].mxu0 %v1225
        %v7969 = vpop.f32.mrb[0].mxu0
        %v7970 = vadd.f32 %v2020, %v7969
        %v7971 = vpop.f32.mrb[0].mxu0
        %v7972 = vadd.f32 %v2024, %v7971
        %v7973 = vpop.f32.mrb[0].mxu0
        %v7974 = vadd.f32 %v2020, %v7973
        %v7975 = vpop.f32.mrb[0].mxu0
        %v7976 = vadd.f32 %v2024, %v7975
        %7977 = vmatprep.mubr.bf16.mxu0 %v1235
        %7978 = vmatmul.mubr.bf16.gmra.mrb[0].mxu0 %v1234
        %v7979 = vpop.f32.mrb[0].mxu0
        %v7980 = vadd.f32 %v2020, %v7979
        %v7981 = vpop.f32.mrb[0].mxu0
        %v7982 = vadd.f32 %v2024, %v7981
        %v7983 = vpop.f32.mrb[0].mxu0
        %v7984 = vadd.f32 %v2020, %v7983
        %v7985 = vpop.f32.mrb[0].mxu0
        %v7986 = vadd.f32 %v2024, %v7985
        %7987 = vmatprep.mubr.bf16.mxu0 %v1244
        %7988 = vmatmul.mubr.bf16.gmra.mrb[0].mxu0 %v1243
        %v7989 = vpop.f32.mrb[0].mxu0
        %v7990 = vadd.f32 %v2020, %v7989
        %v7991 = vpop.f32.mrb[0].mxu0
        %v7992 = vadd.f32 %v2024, %v7991
        %v7993 = vpop.f32.mrb[0].mxu0
        %v7994 = vadd.f32 %v2020, %v7993
        %v7995 = vpop.f32.mrb[0].mxu0
        %v7996 = vadd.f32 %v2024, %v7995
        %7997 = vmatprep.mubr.bf16.mxu0 %v1253
        %7998 = vmatmul.mubr.bf16.gmra.mrb[0].mxu0 %v1252
        %v7999 = vpop.f32.mrb[0].mxu0
        %v8000 = vadd.f32 %v2020, %v7999
        %v8001 = vpop.f32.mrb[0].mxu0
        %v8002 = vadd.f32 %v2024, %v8001
        %v8003 = vpop.f32.mrb[0].mxu0
        %v8004 = vadd.f32 %v2020, %v8003
        %v8005 = vpop.f32.mrb[0].mxu0
        %v8006 = vadd.f32 %v2024, %v8005
        %8007 = vdwg.mxu0
        %8008 = vmatprep.subr.bf16.mxu0 %v4364
        %8009 = vmatpush1.bf16.msra.mxu0 %v4363
        %8010 = vmatprep.subr.bf16.mxu0 %v4374
        %8011 = vmatpush1.bf16.msra.mxu0 %v4373
        %8012 = vmatprep.subr.bf16.mxu0 %v4384
        %8013 = vmatpush1.bf16.msra.mxu0 %v4383
        %8014 = vmatprep.subr.bf16.mxu0 %v4394
        %8015 = vmatpush1.bf16.msra.mxu0 %v4393
        %8016 = vmatprep.subr.bf16.mxu0 %v4404
        %8017 = vmatpush1.bf16.msra.mxu0 %v4403
        %8018 = vmatprep.subr.bf16.mxu0 %v4414
        %8019 = vmatpush1.bf16.msra.mxu0 %v4413
        %8020 = vmatprep.subr.bf16.mxu0 %v4424
        %8021 = vmatpush1.bf16.msra.mxu0 %v4423
        %8022 = vmatprep.subr.bf16.mxu0 %v4434
        %8023 = vmatpush1.bf16.msra.mxu0 %v4433
        %8024 = vmatprep.subr.bf16.mxu0 %v4444
        %8025 = vmatpush1.bf16.msra.mxu0 %v4443
        %8026 = vmatprep.subr.bf16.mxu0 %v4454
        %8027 = vmatpush1.bf16.msra.mxu0 %v4453
        %8028 = vmatprep.subr.bf16.mxu0 %v4464
        %8029 = vmatpush1.bf16.msra.mxu0 %v4463
        %8030 = vmatprep.subr.bf16.mxu0 %v4474
        %8031 = vmatpush1.bf16.msra.mxu0 %v4473
        %8032 = vmatprep.subr.bf16.mxu0 %v4484
        %8033 = vmatpush1.bf16.msra.mxu0 %v4483
        %8034 = vmatprep.subr.bf16.mxu0 %v4494
        %8035 = vmatpush1.bf16.msra.mxu0 %v4493
        %8036 = vmatprep.subr.bf16.mxu0 %v4504
        %8037 = vmatpush1.bf16.msra.mxu0 %v4503
        %8038 = vmatprep.subr.bf16.mxu0 %v4514
        %8039 = vmatpush1.bf16.msra.mxu0 %v4513
        %8040 = vmatprep.mubr.bf16.mxu0 %v1192
        %8041 = vmatmul.mubr.bf16.gmra.mrb[0].mxu0 %v1191
        %v8042 = vpop.f32.mrb[0].mxu0
        %v8043 = vadd.f32 %v7930, %v8042
        %v8044 = vpop.f32.mrb[0].mxu0
        %v8045 = vadd.f32 %v7932, %v8044
        %v8046 = vpop.f32.mrb[0].mxu0
        %v8047 = vadd.f32 %v7934, %v8046
        %v8048 = vpop.f32.mrb[0].mxu0
        %v8049 = vadd.f32 %v7936, %v8048
        %8050 = vmatprep.mubr.bf16.mxu0 %v1201
        %8051 = vmatmul.mubr.bf16.gmra.mrb[0].mxu0 %v1200
        %v8052 = vpop.f32.mrb[0].mxu0
        %v8053 = vadd.f32 %v7940, %v8052
        %v8054 = vpop.f32.mrb[0].mxu0
        %v8055 = vadd.f32 %v7942, %v8054
        %v8056 = vpop.f32.mrb[0].mxu0
        %v8057 = vadd.f32 %v7944, %v8056
        %v8058 = vpop.f32.mrb[0].mxu0
        %v8059 = vadd.f32 %v7946, %v8058
        %8060 = vmatprep.mubr.bf16.mxu0 %v1210
        %8061 = vmatmul.mubr.bf16.gmra.mrb[0].mxu0 %v1209
        %v8062 = vpop.f32.mrb[0].mxu0
        %v8063 = vadd.f32 %v7950, %v8062
        %v8064 = vpop.f32.mrb[0].mxu0
        %v8065 = vadd.f32 %v7952, %v8064
        %v8066 = vpop.f32.mrb[0].mxu0
        %v8067 = vadd.f32 %v7954, %v8066
        %v8068 = vpop.f32.mrb[0].mxu0
        %v8069 = vadd.f32 %v7956, %v8068
        %8070 = vmatprep.mubr.bf16.mxu0 %v1219
        %8071 = vmatmul.mubr.bf16.gmra.mrb[0].mxu0 %v1218
        %v8072 = vpop.f32.mrb[0].mxu0
        %v8073 = vadd.f32 %v7960, %v8072
        %v8074 = vpop.f32.mrb[0].mxu0
        %v8075 = vadd.f32 %v7962, %v8074
        %v8076 = vpop.f32.mrb[0].mxu0
        %v8077 = vadd.f32 %v7964, %v8076
        %v8078 = vpop.f32.mrb[0].mxu0
        %v8079 = vadd.f32 %v7966, %v8078
        %8080 = vmatprep.mubr.bf16.mxu0 %v1228
        %8081 = vmatmul.mubr.bf16.gmra.mrb[0].mxu0 %v1227
        %v8082 = vpop.f32.mrb[0].mxu0
        %v8083 = vadd.f32 %v7970, %v8082
        %v8084 = vpop.f32.mrb[0].mxu0
        %v8085 = vadd.f32 %v7972, %v8084
        %v8086 = vpop.f32.mrb[0].mxu0
        %v8087 = vadd.f32 %v7974, %v8086
        %v8088 = vpop.f32.mrb[0].mxu0
        %v8089 = vadd.f32 %v7976, %v8088
        %8090 = vmatprep.mubr.bf16.mxu0 %v1237
        %8091 = vmatmul.mubr.bf16.gmra.mrb[0].mxu0 %v1236
        %v8092 = vpop.f32.mrb[0].mxu0
        %v8093 = vadd.f32 %v7980, %v8092
        %v8094 = vpop.f32.mrb[0].mxu0
        %v8095 = vadd.f32 %v7982, %v8094
        %v8096 = vpop.f32.mrb[0].mxu0
        %v8097 = vadd.f32 %v7984, %v8096
        %v8098 = vpop.f32.mrb[0].mxu0
        %v8099 = vadd.f32 %v7986, %v8098
        %8100 = vmatprep.mubr.bf16.mxu0 %v1246
        %8101 = vmatmul.mubr.bf16.gmra.mrb[0].mxu0 %v1245
        %v8102 = vpop.f32.mrb[0].mxu0
        %v8103 = vadd.f32 %v7990, %v8102
        %v8104 = vpop.f32.mrb[0].mxu0
        %v8105 = vadd.f32 %v7992, %v8104
        %v8106 = vpop.f32.mrb[0].mxu0
        %v8107 = vadd.f32 %v7994, %v8106
        %v8108 = vpop.f32.mrb[0].mxu0
        %v8109 = vadd.f32 %v7996, %v8108
        %8110 = vmatprep.mubr.bf16.mxu0 %v1255
        %8111 = vmatmul.mubr.bf16.gmra.mrb[0].mxu0 %v1254
        %v8112 = vpop.f32.mrb[0].mxu0
        %v8113 = vadd.f32 %v8000, %v8112
        %v8114 = vpop.f32.mrb[0].mxu0
        %v8115 = vadd.f32 %v8002, %v8114
        %v8116 = vpop.f32.mrb[0].mxu0
        %v8117 = vadd.f32 %v8004, %v8116
        %v8118 = vpop.f32.mrb[0].mxu0
        %v8119 = vadd.f32 %v8006, %v8118
        %8120 = vdwg.mxu0
        %8121 = vmatprep.subr.bf16.mxu0 %v4524
        %8122 = vmatpush1.bf16.msra.mxu0 %v4523
        %8123 = vmatprep.subr.bf16.mxu0 %v4534
        %8124 = vmatpush1.bf16.msra.mxu0 %v4533
        %8125 = vmatprep.subr.bf16.mxu0 %v4544
        %8126 = vmatpush1.bf16.msra.mxu0 %v4543
        %8127 = vmatprep.subr.bf16.mxu0 %v4554
        %8128 = vmatpush1.bf16.msra.mxu0 %v4553
        %8129 = vmatprep.subr.bf16.mxu0 %v4564
        %8130 = vmatpush1.bf16.msra.mxu0 %v4563
        %8131 = vmatprep.subr.bf16.mxu0 %v4574
        %8132 = vmatpush1.bf16.msra.mxu0 %v4573
        %8133 = vmatprep.subr.bf16.mxu0 %v4584
        %8134 = vmatpush1.bf16.msra.mxu0 %v4583
        %8135 = vmatprep.subr.bf16.mxu0 %v4594
        %8136 = vmatpush1.bf16.msra.mxu0 %v4593
        %8137 = vmatprep.subr.bf16.mxu0 %v4604
        %8138 = vmatpush1.bf16.msra.mxu0 %v4603
        %8139 = vmatprep.subr.bf16.mxu0 %v4614
        %8140 = vmatpush1.bf16.msra.mxu0 %v4613
        %8141 = vmatprep.subr.bf16.mxu0 %v4624
        %8142 = vmatpush1.bf16.msra.mxu0 %v4623
        %8143 = vmatprep.subr.bf16.mxu0 %v4634
        %8144 = vmatpush1.bf16.msra.mxu0 %v4633
        %8145 = vmatprep.subr.bf16.mxu0 %v4644
        %8146 = vmatpush1.bf16.msra.mxu0 %v4643
        %8147 = vmatprep.subr.bf16.mxu0 %v4654
        %8148 = vmatpush1.bf16.msra.mxu0 %v4653
        %8149 = vmatprep.subr.bf16.mxu0 %v4664
        %8150 = vmatpush1.bf16.msra.mxu0 %v4663
        %8151 = vmatprep.subr.bf16.mxu0 %v4674
        %8152 = vmatpush1.bf16.msra.mxu0 %v4673
        %8153 = vmatprep.mubr.bf16.mxu0 %v1194
        %8154 = vmatmul.mubr.bf16.gmra.mrb[0].mxu0 %v1193
        %v8155 = vpop.f32.mrb[0].mxu0
        %v8156 = vadd.f32 %v8043, %v8155
        %v8157 = vpop.f32.mrb[0].mxu0
        %v8158 = vadd.f32 %v8045, %v8157
        %v8159 = vpop.f32.mrb[0].mxu0
        %v8160 = vadd.f32 %v8047, %v8159
        %v8161 = vpop.f32.mrb[0].mxu0
        %v8162 = vadd.f32 %v8049, %v8161
        %8163 = vmatprep.mubr.bf16.mxu0 %v1203
        %8164 = vmatmul.mubr.bf16.gmra.mrb[0].mxu0 %v1202
        %v8165 = vpop.f32.mrb[0].mxu0
        %v8166 = vadd.f32 %v8053, %v8165
        %v8167 = vpop.f32.mrb[0].mxu0
        %v8168 = vadd.f32 %v8055, %v8167
        %v8169 = vpop.f32.mrb[0].mxu0
        %v8170 = vadd.f32 %v8057, %v8169
        %v8171 = vpop.f32.mrb[0].mxu0
        %v8172 = vadd.f32 %v8059, %v8171
        %8173 = vmatprep.mubr.bf16.mxu0 %v1212
        %8174 = vmatmul.mubr.bf16.gmra.mrb[0].mxu0 %v1211
        %v8175 = vpop.f32.mrb[0].mxu0
        %v8176 = vadd.f32 %v8063, %v8175
        %v8177 = vpop.f32.mrb[0].mxu0
        %v8178 = vadd.f32 %v8065, %v8177
        %v8179 = vpop.f32.mrb[0].mxu0
        %v8180 = vadd.f32 %v8067, %v8179
        %v8181 = vpop.f32.mrb[0].mxu0
        %v8182 = vadd.f32 %v8069, %v8181
        %8183 = vmatprep.mubr.bf16.mxu0 %v1221
        %8184 = vmatmul.mubr.bf16.gmra.mrb[0].mxu0 %v1220
        %v8185 = vpop.f32.mrb[0].mxu0
        %v8186 = vadd.f32 %v8073, %v8185
        %v8187 = vpop.f32.mrb[0].mxu0
        %v8188 = vadd.f32 %v8075, %v8187
        %v8189 = vpop.f32.mrb[0].mxu0
        %v8190 = vadd.f32 %v8077, %v8189
        %v8191 = vpop.f32.mrb[0].mxu0
        %v8192 = vadd.f32 %v8079, %v8191
        %8193 = vmatprep.mubr.bf16.mxu0 %v1230
        %8194 = vmatmul.mubr.bf16.gmra.mrb[0].mxu0 %v1229
        %v8195 = vpop.f32.mrb[0].mxu0
        %v8196 = vadd.f32 %v8083, %v8195
        %v8197 = vpop.f32.mrb[0].mxu0
        %v8198 = vadd.f32 %v8085, %v8197
        %v8199 = vpop.f32.mrb[0].mxu0
        %v8200 = vadd.f32 %v8087, %v8199
        %v8201 = vpop.f32.mrb[0].mxu0
        %v8202 = vadd.f32 %v8089, %v8201
        %8203 = vmatprep.mubr.bf16.mxu0 %v1239
        %8204 = vmatmul.mubr.bf16.gmra.mrb[0].mxu0 %v1238
        %v8205 = vpop.f32.mrb[0].mxu0
        %v8206 = vadd.f32 %v8093, %v8205
        %v8207 = vpop.f32.mrb[0].mxu0
        %v8208 = vadd.f32 %v8095, %v8207
        %v8209 = vpop.f32.mrb[0].mxu0
        %v8210 = vadd.f32 %v8097, %v8209
        %v8211 = vpop.f32.mrb[0].mxu0
        %v8212 = vadd.f32 %v8099, %v8211
        %8213 = vmatprep.mubr.bf16.mxu0 %v1248
        %8214 = vmatmul.mubr.bf16.gmra.mrb[0].mxu0 %v1247
        %v8215 = vpop.f32.mrb[0].mxu0
        %v8216 = vadd.f32 %v8103, %v8215
        %v8217 = vpop.f32.mrb[0].mxu0
        %v8218 = vadd.f32 %v8105, %v8217
        %v8219 = vpop.f32.mrb[0].mxu0
        %v8220 = vadd.f32 %v8107, %v8219
        %v8221 = vpop.f32.mrb[0].mxu0
        %v8222 = vadd.f32 %v8109, %v8221
        %8223 = vmatprep.mubr.bf16.mxu0 %v1257
        %8224 = vmatmul.mubr.bf16.gmra.mrb[0].mxu0 %v1256
        %v8225 = vpop.f32.mrb[0].mxu0
        %v8226 = vadd.f32 %v8113, %v8225
        %v8227 = vpop.f32.mrb[0].mxu0
        %v8228 = vadd.f32 %v8115, %v8227
        %v8229 = vpop.f32.mrb[0].mxu0
        %v8230 = vadd.f32 %v8117, %v8229
        %v8231 = vpop.f32.mrb[0].mxu0
        %v8232 = vadd.f32 %v8119, %v8231
        %8233 = vdwg.mxu0
        %8234 = vmatprep.subr.bf16.mxu0 %v4684
        %8235 = vmatpush1.bf16.msra.mxu0 %v4683
        %8236 = vmatprep.subr.bf16.mxu0 %v4694
        %8237 = vmatpush1.bf16.msra.mxu0 %v4693
        %8238 = vmatprep.subr.bf16.mxu0 %v4704
        %8239 = vmatpush1.bf16.msra.mxu0 %v4703
        %8240 = vmatprep.subr.bf16.mxu0 %v4714
        %8241 = vmatpush1.bf16.msra.mxu0 %v4713
        %8242 = vmatprep.subr.bf16.mxu0 %v4724
        %8243 = vmatpush1.bf16.msra.mxu0 %v4723
        %8244 = vmatprep.subr.bf16.mxu0 %v4734
        %8245 = vmatpush1.bf16.msra.mxu0 %v4733
        %8246 = vmatprep.subr.bf16.mxu0 %v4744
        %8247 = vmatpush1.bf16.msra.mxu0 %v4743
        %8248 = vmatprep.subr.bf16.mxu0 %v4754
        %8249 = vmatpush1.bf16.msra.mxu0 %v4753
        %8250 = vmatprep.subr.bf16.mxu0 %v4764
        %8251 = vmatpush1.bf16.msra.mxu0 %v4763
        %8252 = vmatprep.subr.bf16.mxu0 %v4774
        %8253 = vmatpush1.bf16.msra.mxu0 %v4773
        %8254 = vmatprep.subr.bf16.mxu0 %v4784
        %8255 = vmatpush1.bf16.msra.mxu0 %v4783
        %8256 = vmatprep.subr.bf16.mxu0 %v4794
        %8257 = vmatpush1.bf16.msra.mxu0 %v4793
        %8258 = vmatprep.subr.bf16.mxu0 %v4804
        %8259 = vmatpush1.bf16.msra.mxu0 %v4803
        %8260 = vmatprep.subr.bf16.mxu0 %v4814
        %8261 = vmatpush1.bf16.msra.mxu0 %v4813
        %8262 = vmatprep.subr.bf16.mxu0 %v4824
        %8263 = vmatpush1.bf16.msra.mxu0 %v4823
        %8264 = vmatprep.subr.bf16.mxu0 %v4834
        %8265 = vmatpush1.bf16.msra.mxu0 %v4833
        %8266 = vmatprep.mubr.bf16.mxu0 %v1196
        %8267 = vmatmul.mubr.bf16.gmra.mrb[0].mxu0 %v1195
        %v8268 = vpop.f32.mrb[0].mxu0
        %v8269 = vadd.f32 %v8156, %v8268
        %v8270 = vpop.f32.mrb[0].mxu0
        %v8271 = vadd.f32 %v8158, %v8270
        %v8272 = vpop.f32.mrb[0].mxu0
        %v8273 = vadd.f32 %v8160, %v8272
        %v8274 = vpop.f32.mrb[0].mxu0
        %v8275 = vadd.f32 %v8162, %v8274
        %8276 = vmatprep.mubr.bf16.mxu0 %v1205
        %8277 = vmatmul.mubr.bf16.gmra.mrb[0].mxu0 %v1204
        %v8278 = vpop.f32.mrb[0].mxu0
        %v8279 = vadd.f32 %v8166, %v8278
        %v8280 = vpop.f32.mrb[0].mxu0
        %v8281 = vadd.f32 %v8168, %v8280
        %v8282 = vpop.f32.mrb[0].mxu0
        %v8283 = vadd.f32 %v8170, %v8282
        %v8284 = vpop.f32.mrb[0].mxu0
        %v8285 = vadd.f32 %v8172, %v8284
        %8286 = vmatprep.mubr.bf16.mxu0 %v1214
        %8287 = vmatmul.mubr.bf16.gmra.mrb[0].mxu0 %v1213
        %v8288 = vpop.f32.mrb[0].mxu0
        %v8289 = vadd.f32 %v8176, %v8288
        %v8290 = vpop.f32.mrb[0].mxu0
        %v8291 = vadd.f32 %v8178, %v8290
        %v8292 = vpop.f32.mrb[0].mxu0
        %v8293 = vadd.f32 %v8180, %v8292
        %v8294 = vpop.f32.mrb[0].mxu0
        %v8295 = vadd.f32 %v8182, %v8294
        %8296 = vmatprep.mubr.bf16.mxu0 %v1223
        %8297 = vmatmul.mubr.bf16.gmra.mrb[0].mxu0 %v1222
        %v8298 = vpop.f32.mrb[0].mxu0
        %v8299 = vadd.f32 %v8186, %v8298
        %v8300 = vpop.f32.mrb[0].mxu0
        %v8301 = vadd.f32 %v8188, %v8300
        %v8302 = vpop.f32.mrb[0].mxu0
        %v8303 = vadd.f32 %v8190, %v8302
        %v8304 = vpop.f32.mrb[0].mxu0
        %v8305 = vadd.f32 %v8192, %v8304
        %8306 = vmatprep.mubr.bf16.mxu0 %v1232
        %8307 = vmatmul.mubr.bf16.gmra.mrb[0].mxu0 %v1231
        %v8308 = vpop.f32.mrb[0].mxu0
        %v8309 = vadd.f32 %v8196, %v8308
        %v8310 = vpop.f32.mrb[0].mxu0
        %v8311 = vadd.f32 %v8198, %v8310
        %v8312 = vpop.f32.mrb[0].mxu0
        %v8313 = vadd.f32 %v8200, %v8312
        %v8314 = vpop.f32.mrb[0].mxu0
        %v8315 = vadd.f32 %v8202, %v8314
        %8316 = vmatprep.mubr.bf16.mxu0 %v1241
        %8317 = vmatmul.mubr.bf16.gmra.mrb[0].mxu0 %v1240
        %v8318 = vpop.f32.mrb[0].mxu0
        %v8319 = vadd.f32 %v8206, %v8318
        %v8320 = vpop.f32.mrb[0].mxu0
        %v8321 = vadd.f32 %v8208, %v8320
        %v8322 = vpop.f32.mrb[0].mxu0
        %v8323 = vadd.f32 %v8210, %v8322
        %v8324 = vpop.f32.mrb[0].mxu0
        %v8325 = vadd.f32 %v8212, %v8324
        %8326 = vmatprep.mubr.bf16.mxu0 %v1250
        %8327 = vmatmul.mubr.bf16.gmra.mrb[0].mxu0 %v1249
        %v8328 = vpop.f32.mrb[0].mxu0
        %v8329 = vadd.f32 %v8216, %v8328
        %v8330 = vpop.f32.mrb[0].mxu0
        %v8331 = vadd.f32 %v8218, %v8330
        %v8332 = vpop.f32.mrb[0].mxu0
        %v8333 = vadd.f32 %v8220, %v8332
        %v8334 = vpop.f32.mrb[0].mxu0
        %v8335 = vadd.f32 %v8222, %v8334
        %8336 = vmatprep.mubr.bf16.mxu0 %v1259
        %8337 = vmatmul.mubr.bf16.gmra.mrb[0].mxu0 %v1258
        %v8338 = vpop.f32.mrb[0].mxu0
        %v8339 = vadd.f32 %v8226, %v8338
        %v8340 = vpop.f32.mrb[0].mxu0
        %v8341 = vadd.f32 %v8228, %v8340
        %v8342 = vpop.f32.mrb[0].mxu0
        %v8343 = vadd.f32 %v8230, %v8342
        %v8344 = vpop.f32.mrb[0].mxu0
        %v8345 = vadd.f32 %v8232, %v8344
        %8346 = vdwg.mxu0
        %8347 = vmatprep.subr.bf16.mxu0 %v4844
        %8348 = vmatpush1.bf16.msra.mxu0 %v4843
        %8349 = vmatprep.subr.bf16.mxu0 %v4854
        %8350 = vmatpush1.bf16.msra.mxu0 %v4853
        %8351 = vmatprep.subr.bf16.mxu0 %v4864
        %8352 = vmatpush1.bf16.msra.mxu0 %v4863
        %8353 = vmatprep.subr.bf16.mxu0 %v4874
        %8354 = vmatpush1.bf16.msra.mxu0 %v4873
        %8355 = vmatprep.subr.bf16.mxu0 %v4884
        %8356 = vmatpush1.bf16.msra.mxu0 %v4883
        %8357 = vmatprep.subr.bf16.mxu0 %v4894
        %8358 = vmatpush1.bf16.msra.mxu0 %v4893
        %8359 = vmatprep.subr.bf16.mxu0 %v4904
        %8360 = vmatpush1.bf16.msra.mxu0 %v4903
        %8361 = vmatprep.subr.bf16.mxu0 %v4914
        %8362 = vmatpush1.bf16.msra.mxu0 %v4913
        %8363 = vmatprep.subr.bf16.mxu0 0
        %8364 = vmatpush1.bf16.msra.mxu0 0
        %8365 = vmatprep.subr.bf16.mxu0 0
        %8366 = vmatpush1.bf16.msra.mxu0 0
        %8367 = vmatprep.subr.bf16.mxu0 0
        %8368 = vmatpush1.bf16.msra.mxu0 0
        %8369 = vmatprep.subr.bf16.mxu0 0
        %8370 = vmatpush1.bf16.msra.mxu0 0
        %8371 = vmatprep.subr.bf16.mxu0 0
        %8372 = vmatpush1.bf16.msra.mxu0 0
        %8373 = vmatprep.subr.bf16.mxu0 0
        %8374 = vmatpush1.bf16.msra.mxu0 0
        %8375 = vmatprep.subr.bf16.mxu0 0
        %8376 = vmatpush1.bf16.msra.mxu0 0
        %8377 = vmatprep.subr.bf16.mxu0 0
        %8378 = vmatpush1.bf16.msra.mxu0 0
        %8379 = vmatprep.mubr.bf16.mxu0 0
        %8380 = vmatmul.mubr.bf16.gmra.mrb[0].mxu0 %v1197
        %v8381 = vpop.f32.mrb[0].mxu0
        %v8382 = vadd.f32 %v8269, %v8381
        %v8383 = vpop.f32.mrb[0].mxu0
        %v8384 = vadd.f32 %v8271, %v8383
        %v8385 = vpop.f32.mrb[0].mxu0
        %v8386 = vadd.f32 %v8273, %v8385
        %v8387 = vpop.f32.mrb[0].mxu0
        %v8388 = vadd.f32 %v8275, %v8387
        %8389 = vmatprep.mubr.bf16.mxu0 0
        %8390 = vmatmul.mubr.bf16.gmra.mrb[0].mxu0 %v1206
        %v8391 = vpop.f32.mrb[0].mxu0
        %v8392 = vadd.f32 %v8279, %v8391
        %v8393 = vpop.f32.mrb[0].mxu0
        %v8394 = vadd.f32 %v8281, %v8393
        %v8395 = vpop.f32.mrb[0].mxu0
        %v8396 = vadd.f32 %v8283, %v8395
        %v8397 = vpop.f32.mrb[0].mxu0
        %v8398 = vadd.f32 %v8285, %v8397
        %8399 = vmatprep.mubr.bf16.mxu0 0
        %8400 = vmatmul.mubr.bf16.gmra.mrb[0].mxu0 %v1215
        %v8401 = vpop.f32.mrb[0].mxu0
        %v8402 = vadd.f32 %v8289, %v8401
        %v8403 = vpop.f32.mrb[0].mxu0
        %v8404 = vadd.f32 %v8291, %v8403
        %v8405 = vpop.f32.mrb[0].mxu0
        %v8406 = vadd.f32 %v8293, %v8405
        %v8407 = vpop.f32.mrb[0].mxu0
        %v8408 = vadd.f32 %v8295, %v8407
        %8409 = vmatprep.mubr.bf16.mxu0 0
        %8410 = vmatmul.mubr.bf16.gmra.mrb[0].mxu0 %v1224
        %v8411 = vpop.f32.mrb[0].mxu0
        %v8412 = vadd.f32 %v8299, %v8411
        %v8413 = vpop.f32.mrb[0].mxu0
        %v8414 = vadd.f32 %v8301, %v8413
        %v8415 = vpop.f32.mrb[0].mxu0
        %v8416 = vadd.f32 %v8303, %v8415
        %v8417 = vpop.f32.mrb[0].mxu0
        %v8418 = vadd.f32 %v8305, %v8417
        %8419 = vmatprep.mubr.bf16.mxu0 0
        %8420 = vmatmul.mubr.bf16.gmra.mrb[0].mxu0 %v1233
        %v8421 = vpop.f32.mrb[0].mxu0
        %v8422 = vadd.f32 %v8309, %v8421
        %v8423 = vpop.f32.mrb[0].mxu0
        %v8424 = vadd.f32 %v8311, %v8423
        %v8425 = vpop.f32.mrb[0].mxu0
        %v8426 = vadd.f32 %v8313, %v8425
        %v8427 = vpop.f32.mrb[0].mxu0
        %v8428 = vadd.f32 %v8315, %v8427
        %8429 = vmatprep.mubr.bf16.mxu0 0
        %8430 = vmatmul.mubr.bf16.gmra.mrb[0].mxu0 %v1242
        %v8431 = vpop.f32.mrb[0].mxu0
        %v8432 = vadd.f32 %v8319, %v8431
        %v8433 = vpop.f32.mrb[0].mxu0
        %v8434 = vadd.f32 %v8321, %v8433
        %v8435 = vpop.f32.mrb[0].mxu0
        %v8436 = vadd.f32 %v8323, %v8435
        %v8437 = vpop.f32.mrb[0].mxu0
        %v8438 = vadd.f32 %v8325, %v8437
        %8439 = vmatprep.mubr.bf16.mxu0 0
        %8440 = vmatmul.mubr.bf16.gmra.mrb[0].mxu0 %v1251
        %v8441 = vpop.f32.mrb[0].mxu0
        %v8442 = vadd.f32 %v8329, %v8441
        %v8443 = vpop.f32.mrb[0].mxu0
        %v8444 = vadd.f32 %v8331, %v8443
        %v8445 = vpop.f32.mrb[0].mxu0
        %v8446 = vadd.f32 %v8333, %v8445
        %v8447 = vpop.f32.mrb[0].mxu0
        %v8448 = vadd.f32 %v8335, %v8447
        %8449 = vmatprep.mubr.bf16.mxu0 0
        %8450 = vmatmul.mubr.bf16.gmra.mrb[0].mxu0 %v1260
        %v8451 = vpop.f32.mrb[0].mxu0
        %v8452 = vadd.f32 %v8339, %v8451
        %v8453 = vpop.f32.mrb[0].mxu0
        %v8454 = vadd.f32 %v8341, %v8453
        %v8455 = vpop.f32.mrb[0].mxu0
        %v8456 = vadd.f32 %v8343, %v8455
        %v8457 = vpop.f32.mrb[0].mxu0
        %v8458 = vadd.f32 %v8345, %v8457
        %8459 = vdwg.mxu0
        %v8460 = vmax.f32 %v6122, 0.0
        %v8461 = vmax.f32 %v6124, 0.0
        %v8462 = vmax.f32 %v6687, 0.0
        %v8463 = vmax.f32 %v6689, 0.0
        %v8464 = vmax.f32 %v7252, 0.0
        %v8465 = vmax.f32 %v7254, 0.0
        %v8466 = vmax.f32 %v7817, 0.0
        %v8467 = vmax.f32 %v7819, 0.0
        %v8468 = vmax.f32 %v8382, 0.0
        %v8469 = vmax.f32 %v8384, 0.0
        %v8470 = vmax.f32 %v6126, 0.0
        %v8471 = vmax.f32 %v6128, 0.0
        %v8472 = vmax.f32 %v6691, 0.0
        %v8473 = vmax.f32 %v6693, 0.0
        %v8474 = vmax.f32 %v7256, 0.0
        %v8475 = vmax.f32 %v7258, 0.0
        %v8476 = vmax.f32 %v7821, 0.0
        %v8477 = vmax.f32 %v7823, 0.0
        %v8478 = vmax.f32 %v8386, 0.0
        %v8479 = vmax.f32 %v8388, 0.0
        %v8480 = vmax.f32 %v6132, 0.0
        %v8481 = vmax.f32 %v6134, 0.0
        %v8482 = vmax.f32 %v6697, 0.0
        %v8483 = vmax.f32 %v6699, 0.0
        %v8484 = vmax.f32 %v7262, 0.0
        %v8485 = vmax.f32 %v7264, 0.0
        %v8486 = vmax.f32 %v7827, 0.0
        %v8487 = vmax.f32 %v7829, 0.0
        %v8488 = vmax.f32 %v8392, 0.0
        %v8489 = vmax.f32 %v8394, 0.0
        %v8490 = vmax.f32 %v6136, 0.0
        %v8491 = vmax.f32 %v6138, 0.0
        %v8492 = vmax.f32 %v6701, 0.0
        %v8493 = vmax.f32 %v6703, 0.0
        %v8494 = vmax.f32 %v7266, 0.0
        %v8495 = vmax.f32 %v7268, 0.0
        %v8496 = vmax.f32 %v7831, 0.0
        %v8497 = vmax.f32 %v7833, 0.0
        %v8498 = vmax.f32 %v8396, 0.0
        %v8499 = vmax.f32 %v8398, 0.0
        %v8500 = vmax.f32 %v6142, 0.0
        %v8501 = vmax.f32 %v6144, 0.0
        %v8502 = vmax.f32 %v6707, 0.0
        %v8503 = vmax.f32 %v6709, 0.0
        %v8504 = vmax.f32 %v7272, 0.0
        %v8505 = vmax.f32 %v7274, 0.0
        %v8506 = vmax.f32 %v7837, 0.0
        %v8507 = vmax.f32 %v7839, 0.0
        %v8508 = vmax.f32 %v8402, 0.0
        %v8509 = vmax.f32 %v8404, 0.0
        %v8510 = vmax.f32 %v6146, 0.0
        %v8511 = vmax.f32 %v6148, 0.0
        %v8512 = vmax.f32 %v6711, 0.0
        %v8513 = vmax.f32 %v6713, 0.0
        %v8514 = vmax.f32 %v7276, 0.0
        %v8515 = vmax.f32 %v7278, 0.0
        %v8516 = vmax.f32 %v7841, 0.0
        %v8517 = vmax.f32 %v7843, 0.0
        %v8518 = vmax.f32 %v8406, 0.0
        %v8519 = vmax.f32 %v8408, 0.0
        %v8520 = vmax.f32 %v6152, 0.0
        %v8521 = vmax.f32 %v6154, 0.0
        %v8522 = vmax.f32 %v6717, 0.0
        %v8523 = vmax.f32 %v6719, 0.0
        %v8524 = vmax.f32 %v7282, 0.0
        %v8525 = vmax.f32 %v7284, 0.0
        %v8526 = vmax.f32 %v7847, 0.0
        %v8527 = vmax.f32 %v7849, 0.0
        %v8528 = vmax.f32 %v8412, 0.0
        %v8529 = vmax.f32 %v8414, 0.0
        %v8530 = vmax.f32 %v6156, 0.0
        %v8531 = vmax.f32 %v6158, 0.0
        %v8532 = vmax.f32 %v6721, 0.0
        %v8533 = vmax.f32 %v6723, 0.0
        %v8534 = vmax.f32 %v7286, 0.0
        %v8535 = vmax.f32 %v7288, 0.0
        %v8536 = vmax.f32 %v7851, 0.0
        %v8537 = vmax.f32 %v7853, 0.0
        %v8538 = vmax.f32 %v8416, 0.0
        %v8539 = vmax.f32 %v8418, 0.0
        %v8540 = vmax.f32 %v6162, 0.0
        %v8541 = vmax.f32 %v6164, 0.0
        %v8542 = vmax.f32 %v6727, 0.0
        %v8543 = vmax.f32 %v6729, 0.0
        %v8544 = vmax.f32 %v7292, 0.0
        %v8545 = vmax.f32 %v7294, 0.0
        %v8546 = vmax.f32 %v7857, 0.0
        %v8547 = vmax.f32 %v7859, 0.0
        %v8548 = vmax.f32 %v8422, 0.0
        %v8549 = vmax.f32 %v8424, 0.0
        %v8550 = vmax.f32 %v6166, 0.0
        %v8551 = vmax.f32 %v6168, 0.0
        %v8552 = vmax.f32 %v6731, 0.0
        %v8553 = vmax.f32 %v6733, 0.0
        %v8554 = vmax.f32 %v7296, 0.0
        %v8555 = vmax.f32 %v7298, 0.0
        %v8556 = vmax.f32 %v7861, 0.0
        %v8557 = vmax.f32 %v7863, 0.0
        %v8558 = vmax.f32 %v8426, 0.0
        %v8559 = vmax.f32 %v8428, 0.0
        %v8560 = vmax.f32 %v6172, 0.0
        %v8561 = vmax.f32 %v6174, 0.0
        %v8562 = vmax.f32 %v6737, 0.0
        %v8563 = vmax.f32 %v6739, 0.0
        %v8564 = vmax.f32 %v7302, 0.0
        %v8565 = vmax.f32 %v7304, 0.0
        %v8566 = vmax.f32 %v7867, 0.0
        %v8567 = vmax.f32 %v7869, 0.0
        %v8568 = vmax.f32 %v8432, 0.0
        %v8569 = vmax.f32 %v8434, 0.0
        %v8570 = vmax.f32 %v6176, 0.0
        %v8571 = vmax.f32 %v6178, 0.0
        %v8572 = vmax.f32 %v6741, 0.0
        %v8573 = vmax.f32 %v6743, 0.0
        %v8574 = vmax.f32 %v7306, 0.0
        %v8575 = vmax.f32 %v7308, 0.0
        %v8576 = vmax.f32 %v7871, 0.0
        %v8577 = vmax.f32 %v7873, 0.0
        %v8578 = vmax.f32 %v8436, 0.0
        %v8579 = vmax.f32 %v8438, 0.0
        %v8580 = vmax.f32 %v6182, 0.0
        %v8581 = vmax.f32 %v6184, 0.0
        %v8582 = vmax.f32 %v6747, 0.0
        %v8583 = vmax.f32 %v6749, 0.0
        %v8584 = vmax.f32 %v7312, 0.0
        %v8585 = vmax.f32 %v7314, 0.0
        %v8586 = vmax.f32 %v7877, 0.0
        %v8587 = vmax.f32 %v7879, 0.0
        %v8588 = vmax.f32 %v8442, 0.0
        %v8589 = vmax.f32 %v8444, 0.0
        %v8590 = vmax.f32 %v6186, 0.0
        %v8591 = vmax.f32 %v6188, 0.0
        %v8592 = vmax.f32 %v6751, 0.0
        %v8593 = vmax.f32 %v6753, 0.0
        %v8594 = vmax.f32 %v7316, 0.0
        %v8595 = vmax.f32 %v7318, 0.0
        %v8596 = vmax.f32 %v7881, 0.0
        %v8597 = vmax.f32 %v7883, 0.0
        %v8598 = vmax.f32 %v8446, 0.0
        %v8599 = vmax.f32 %v8448, 0.0
        %v8600 = vmax.f32 %v6192, 0.0
        %v8601 = vmax.f32 %v6194, 0.0
        %v8602 = vmax.f32 %v6757, 0.0
        %v8603 = vmax.f32 %v6759, 0.0
        %v8604 = vmax.f32 %v7322, 0.0
        %v8605 = vmax.f32 %v7324, 0.0
        %v8606 = vmax.f32 %v7887, 0.0
        %v8607 = vmax.f32 %v7889, 0.0
        %v8608 = vmax.f32 %v8452, 0.0
        %v8609 = vmax.f32 %v8454, 0.0
        %v8610 = vmax.f32 %v6196, 0.0
        %v8611 = vmax.f32 %v6198, 0.0
        %v8612 = vmax.f32 %v6761, 0.0
        %v8613 = vmax.f32 %v6763, 0.0
        %v8614 = vmax.f32 %v7326, 0.0
        %v8615 = vmax.f32 %v7328, 0.0
        %v8616 = vmax.f32 %v7891, 0.0
        %v8617 = vmax.f32 %v7893, 0.0
        %v8618 = vmax.f32 %v8456, 0.0
        %v8619 = vmax.f32 %v8458, 0.0
        %v8620 = vpack.c.bf16 %v8470, %v8460
        %v8621 = vpack.c.bf16 %v8471, %v8461
        %v8622 = vpack.c.bf16 %v8472, %v8462
        %v8623 = vpack.c.bf16 %v8473, %v8463
        %v8624 = vpack.c.bf16 %v8474, %v8464
        %v8625 = vpack.c.bf16 %v8475, %v8465
        %v8626 = vpack.c.bf16 %v8476, %v8466
        %v8627 = vpack.c.bf16 %v8477, %v8467
        %v8628 = vpack.c.bf16 %v8478, %v8468
        %v8629 = vpack.c.bf16 %v8479, %v8469
        %v8630 = vpack.c.bf16 %v8490, %v8480
        %v8631 = vpack.c.bf16 %v8491, %v8481
        %v8632 = vpack.c.bf16 %v8492, %v8482
        %v8633 = vpack.c.bf16 %v8493, %v8483
        %v8634 = vpack.c.bf16 %v8494, %v8484
        %v8635 = vpack.c.bf16 %v8495, %v8485
        %v8636 = vpack.c.bf16 %v8496, %v8486
        %v8637 = vpack.c.bf16 %v8497, %v8487
        %v8638 = vpack.c.bf16 %v8498, %v8488
        %v8639 = vpack.c.bf16 %v8499, %v8489
        %v8640 = vpack.c.bf16 %v8510, %v8500
        %v8641 = vpack.c.bf16 %v8511, %v8501
        %v8642 = vpack.c.bf16 %v8512, %v8502
        %v8643 = vpack.c.bf16 %v8513, %v8503
        %v8644 = vpack.c.bf16 %v8514, %v8504
        %v8645 = vpack.c.bf16 %v8515, %v8505
        %v8646 = vpack.c.bf16 %v8516, %v8506
        %v8647 = vpack.c.bf16 %v8517, %v8507
        %v8648 = vpack.c.bf16 %v8518, %v8508
        %v8649 = vpack.c.bf16 %v8519, %v8509
        %v8650 = vpack.c.bf16 %v8530, %v8520
        %v8651 = vpack.c.bf16 %v8531, %v8521
        %v8652 = vpack.c.bf16 %v8532, %v8522
        %v8653 = vpack.c.bf16 %v8533, %v8523
        %v8654 = vpack.c.bf16 %v8534, %v8524
        %v8655 = vpack.c.bf16 %v8535, %v8525
        %v8656 = vpack.c.bf16 %v8536, %v8526
        %v8657 = vpack.c.bf16 %v8537, %v8527
        %v8658 = vpack.c.bf16 %v8538, %v8528
        %v8659 = vpack.c.bf16 %v8539, %v8529
        %v8660 = vpack.c.bf16 %v8550, %v8540
        %v8661 = vpack.c.bf16 %v8551, %v8541
        %v8662 = vpack.c.bf16 %v8552, %v8542
        %v8663 = vpack.c.bf16 %v8553, %v8543
        %v8664 = vpack.c.bf16 %v8554, %v8544
        %v8665 = vpack.c.bf16 %v8555, %v8545
        %v8666 = vpack.c.bf16 %v8556, %v8546
        %v8667 = vpack.c.bf16 %v8557, %v8547
        %v8668 = vpack.c.bf16 %v8558, %v8548
        %v8669 = vpack.c.bf16 %v8559, %v8549
        %v8670 = vpack.c.bf16 %v8570, %v8560
        %v8671 = vpack.c.bf16 %v8571, %v8561
        %v8672 = vpack.c.bf16 %v8572, %v8562
        %v8673 = vpack.c.bf16 %v8573, %v8563
        %v8674 = vpack.c.bf16 %v8574, %v8564
        %v8675 = vpack.c.bf16 %v8575, %v8565
        %v8676 = vpack.c.bf16 %v8576, %v8566
        %v8677 = vpack.c.bf16 %v8577, %v8567
        %v8678 = vpack.c.bf16 %v8578, %v8568
        %v8679 = vpack.c.bf16 %v8579, %v8569
        %v8680 = vpack.c.bf16 %v8590, %v8580
        %v8681 = vpack.c.bf16 %v8591, %v8581
        %v8682 = vpack.c.bf16 %v8592, %v8582
        %v8683 = vpack.c.bf16 %v8593, %v8583
        %v8684 = vpack.c.bf16 %v8594, %v8584
        %v8685 = vpack.c.bf16 %v8595, %v8585
        %v8686 = vpack.c.bf16 %v8596, %v8586
        %v8687 = vpack.c.bf16 %v8597, %v8587
        %v8688 = vpack.c.bf16 %v8598, %v8588
        %v8689 = vpack.c.bf16 %v8599, %v8589
        %v8690 = vpack.c.bf16 %v8610, %v8600
        %v8691 = vpack.c.bf16 %v8611, %v8601
        %v8692 = vpack.c.bf16 %v8612, %v8602
        %v8693 = vpack.c.bf16 %v8613, %v8603
        %v8694 = vpack.c.bf16 %v8614, %v8604
        %v8695 = vpack.c.bf16 %v8615, %v8605
        %v8696 = vpack.c.bf16 %v8616, %v8606
        %v8697 = vpack.c.bf16 %v8617, %v8607
        %v8698 = vpack.c.bf16 %v8618, %v8608
        %v8699 = vpack.c.bf16 %v8619, %v8609
        %v8700 = vld [vmem:[#allocation6] sm:$0xf]
        %v8701 = vld [vmem:[#allocation6 + $0x4] sm:$0xf]
        %v8702 = vld [vmem:[#allocation6 + $0x8] sm:$0xf]
        %v8703 = vld [vmem:[#allocation6 + $0xc] sm:$0xf]
        %v8704 = vld [vmem:[#allocation6 + $0x10] sm:$0xf]
        %v8705 = vld [vmem:[#allocation6 + $0x14] sm:$0xf]
        %v8706 = vld [vmem:[#allocation6 + $0x18] sm:$0xf]
        %v8707 = vld [vmem:[#allocation6 + $0x1c] sm:$0xf]
        %v8708 = vld [vmem:[#allocation6 + $0x20] sm:$0xf]
        %v8709 = vld [vmem:[#allocation6 + $0x24] sm:$0xf]
        %v8710 = vld [vmem:[#allocation6 + $0x28] sm:$0xf]
        %v8711 = vld [vmem:[#allocation6 + $0x2c] sm:$0xf]
        %v8712 = vld [vmem:[#allocation6 + $0x30] sm:$0xf]
        %v8713 = vld [vmem:[#allocation6 + $0x34] sm:$0xf]
        %v8714 = vld [vmem:[#allocation6 + $0x38] sm:$0xf]
        %v8715 = vld [vmem:[#allocation6 + $0x3c] sm:$0xf]
        %v8716 = vld [vmem:[#allocation6 + $0x40] sm:$0xf]
        %v8717 = vld [vmem:[#allocation6 + $0x44] sm:$0xf]
        %v8718 = vld [vmem:[#allocation6 + $0x48] sm:$0xf]
        %v8719 = vld [vmem:[#allocation6 + $0x4c] sm:$0xf]
        %v8720 = vld [vmem:[#allocation6 + $0x50] sm:$0xf]
        %v8721 = vld [vmem:[#allocation6 + $0x54] sm:$0xf]
        %v8722 = vld [vmem:[#allocation6 + $0x58] sm:$0xf]
        %v8723 = vld [vmem:[#allocation6 + $0x5c] sm:$0xf]
        %v8724 = vld [vmem:[#allocation6 + $0x60] sm:$0xf]
        %v8725 = vld [vmem:[#allocation6 + $0x64] sm:$0xf]
        %v8726 = vld [vmem:[#allocation6 + $0x68] sm:$0xf]
        %v8727 = vld [vmem:[#allocation6 + $0x6c] sm:$0xf]
        %v8728 = vld [vmem:[#allocation6 + $0x70] sm:$0xf]
        %v8729 = vld [vmem:[#allocation6 + $0x74] sm:$0xf]
        %v8730 = vld [vmem:[#allocation6 + $0x78] sm:$0xf]
        %v8731 = vld [vmem:[#allocation6 + $0x7c] sm:$0xf]
        %v8732 = vld [vmem:[#allocation6 + $0x80] sm:$0xf]
        %v8733 = vld [vmem:[#allocation6 + $0x84] sm:$0xf]
        %v8734 = vld [vmem:[#allocation6 + $0x88] sm:$0xf]
        %v8735 = vld [vmem:[#allocation6 + $0x8c] sm:$0xf]
        %v8736 = vld [vmem:[#allocation6 + $0x90] sm:$0xf]
        %v8737 = vld [vmem:[#allocation6 + $0x94] sm:$0xf]
        %v8738 = vld [vmem:[#allocation6 + $0x98] sm:$0xf]
        %v8739 = vld [vmem:[#allocation6 + $0x9c] sm:$0xf]
        %v8740 = vld [vmem:[#allocation6 + $0xa0] sm:$0xf]
        %v8741 = vld [vmem:[#allocation6 + $0xa4] sm:$0xf]
        %v8742 = vld [vmem:[#allocation6 + $0xa8] sm:$0xf]
        %v8743 = vld [vmem:[#allocation6 + $0xac] sm:$0xf]
        %v8744 = vld [vmem:[#allocation6 + $0xb0] sm:$0xf]
        %v8745 = vld [vmem:[#allocation6 + $0xb4] sm:$0xf]
        %v8746 = vld [vmem:[#allocation6 + $0xb8] sm:$0xf]
        %v8747 = vld [vmem:[#allocation6 + $0xbc] sm:$0xf]
        %v8748 = vld [vmem:[#allocation6 + $0xc0] sm:$0xf]
        %v8749 = vld [vmem:[#allocation6 + $0xc4] sm:$0xf]
        %v8750 = vld [vmem:[#allocation6 + $0xc8] sm:$0xf]
        %v8751 = vld [vmem:[#allocation6 + $0xcc] sm:$0xf]
        %v8752 = vld [vmem:[#allocation6 + $0xd0] sm:$0xf]
        %v8753 = vld [vmem:[#allocation6 + $0xd4] sm:$0xf]
        %v8754 = vld [vmem:[#allocation6 + $0xd8] sm:$0xf]
        %v8755 = vld [vmem:[#allocation6 + $0xdc] sm:$0xf]
        %v8756 = vld [vmem:[#allocation6 + $0xe0] sm:$0xf]
        %v8757 = vld [vmem:[#allocation6 + $0xe4] sm:$0xf]
        %v8758 = vld [vmem:[#allocation6 + $0xe8] sm:$0xf]
        %v8759 = vld [vmem:[#allocation6 + $0xec] sm:$0xf]
        %v8760 = vld [vmem:[#allocation6 + $0xf0] sm:$0xf]
        %v8761 = vld [vmem:[#allocation6 + $0xf4] sm:$0xf]
        %v8762 = vld [vmem:[#allocation6 + $0xf8] sm:$0xf]
        %v8763 = vld [vmem:[#allocation6 + $0xfc] sm:$0xf]
        %v8764 = vld [vmem:[#allocation6 + $0x100] sm:$0xf]
        %v8765 = vld [vmem:[#allocation6 + $0x104] sm:$0xf]
        %v8766 = vld [vmem:[#allocation6 + $0x108] sm:$0xf]
        %v8767 = vld [vmem:[#allocation6 + $0x10c] sm:$0xf]
        %v8768 = vld [vmem:[#allocation6 + $0x110] sm:$0xf]
        %v8769 = vld [vmem:[#allocation6 + $0x114] sm:$0xf]
        %v8770 = vld [vmem:[#allocation6 + $0x118] sm:$0xf]
        %v8771 = vld [vmem:[#allocation6 + $0x11c] sm:$0xf]
        %v8772 = vld [vmem:[#allocation6 + $0x120] sm:$0xf]
        %v8773 = vld [vmem:[#allocation6 + $0x124] sm:$0xf]
        %v8774 = vld [vmem:[#allocation6 + $0x128] sm:$0xf]
        %v8775 = vld [vmem:[#allocation6 + $0x12c] sm:$0xf]
        %v8776 = vld [vmem:[#allocation6 + $0x130] sm:$0xf]
        %v8777 = vld [vmem:[#allocation6 + $0x134] sm:$0xf]
        %v8778 = vld [vmem:[#allocation6 + $0x138] sm:$0xf]
        %v8779 = vld [vmem:[#allocation6 + $0x13c] sm:$0xf]
        %v8780 = vld [vmem:[#allocation6 + $0x140] sm:$0xf]
        %v8781 = vld [vmem:[#allocation6 + $0x144] sm:$0xf]
        %v8782 = vld [vmem:[#allocation6 + $0x148] sm:$0xf]
        %v8783 = vld [vmem:[#allocation6 + $0x14c] sm:$0xf]
        %v8784 = vld [vmem:[#allocation6 + $0x150] sm:$0xf]
        %v8785 = vld [vmem:[#allocation6 + $0x154] sm:$0xf]
        %v8786 = vld [vmem:[#allocation6 + $0x158] sm:$0xf]
        %v8787 = vld [vmem:[#allocation6 + $0x15c] sm:$0xf]
        %v8788 = vld [vmem:[#allocation6 + $0x160] sm:$0xf]
        %v8789 = vld [vmem:[#allocation6 + $0x164] sm:$0xf]
        %v8790 = vld [vmem:[#allocation6 + $0x168] sm:$0xf]
        %v8791 = vld [vmem:[#allocation6 + $0x16c] sm:$0xf]
        %v8792 = vld [vmem:[#allocation6 + $0x170] sm:$0xf]
        %v8793 = vld [vmem:[#allocation6 + $0x174] sm:$0xf]
        %v8794 = vld [vmem:[#allocation6 + $0x178] sm:$0xf]
        %v8795 = vld [vmem:[#allocation6 + $0x17c] sm:$0xf]
        %v8796 = vld [vmem:[#allocation6 + $0x180] sm:$0xf]
        %v8797 = vld [vmem:[#allocation6 + $0x184] sm:$0xf]
        %v8798 = vld [vmem:[#allocation6 + $0x188] sm:$0xf]
        %v8799 = vld [vmem:[#allocation6 + $0x18c] sm:$0xf]
        %v8800 = vld [vmem:[#allocation6 + $0x190] sm:$0xf]
        %v8801 = vld [vmem:[#allocation6 + $0x194] sm:$0xf]
        %v8802 = vld [vmem:[#allocation6 + $0x198] sm:$0xf]
        %v8803 = vld [vmem:[#allocation6 + $0x19c] sm:$0xf]
        %v8804 = vld [vmem:[#allocation6 + $0x1a0] sm:$0xf]
        %v8805 = vld [vmem:[#allocation6 + $0x1a4] sm:$0xf]
        %v8806 = vld [vmem:[#allocation6 + $0x1a8] sm:$0xf]
        %v8807 = vld [vmem:[#allocation6 + $0x1ac] sm:$0xf]
        %v8808 = vld [vmem:[#allocation6 + $0x1b0] sm:$0xf]
        %v8809 = vld [vmem:[#allocation6 + $0x1b4] sm:$0xf]
        %v8810 = vld [vmem:[#allocation6 + $0x1b8] sm:$0xf]
        %v8811 = vld [vmem:[#allocation6 + $0x1bc] sm:$0xf]
        %v8812 = vld [vmem:[#allocation6 + $0x1c0] sm:$0xf]
        %v8813 = vld [vmem:[#allocation6 + $0x1c4] sm:$0xf]
        %v8814 = vld [vmem:[#allocation6 + $0x1c8] sm:$0xf]
        %v8815 = vld [vmem:[#allocation6 + $0x1cc] sm:$0xf]
        %v8816 = vld [vmem:[#allocation6 + $0x1d0] sm:$0xf]
        %v8817 = vld [vmem:[#allocation6 + $0x1d4] sm:$0xf]
        %v8818 = vld [vmem:[#allocation6 + $0x1d8] sm:$0xf]
        %v8819 = vld [vmem:[#allocation6 + $0x1dc] sm:$0xf]
        %v8820 = vld [vmem:[#allocation6 + $0x1e0] sm:$0xf]
        %v8821 = vld [vmem:[#allocation6 + $0x1e4] sm:$0xf]
        %v8822 = vld [vmem:[#allocation6 + $0x1e8] sm:$0xf]
        %v8823 = vld [vmem:[#allocation6 + $0x1ec] sm:$0xf]
        %v8824 = vld [vmem:[#allocation6 + $0x1f0] sm:$0xf]
        %v8825 = vld [vmem:[#allocation6 + $0x1f4] sm:$0xf]
        %v8826 = vld [vmem:[#allocation6 + $0x1f8] sm:$0xf]
        %v8827 = vld [vmem:[#allocation6 + $0x1fc] sm:$0xf]
        %v8828 = vld [vmem:[#allocation6 + $0x200] sm:$0xf]
        %v8829 = vld [vmem:[#allocation6 + $0x204] sm:$0xf]
        %v8830 = vld [vmem:[#allocation6 + $0x208] sm:$0xf]
        %v8831 = vld [vmem:[#allocation6 + $0x20c] sm:$0xf]
        %v8832 = vld [vmem:[#allocation6 + $0x210] sm:$0xf]
        %v8833 = vld [vmem:[#allocation6 + $0x214] sm:$0xf]
        %v8834 = vld [vmem:[#allocation6 + $0x218] sm:$0xf]
        %v8835 = vld [vmem:[#allocation6 + $0x21c] sm:$0xf]
        %v8836 = vld [vmem:[#allocation6 + $0x220] sm:$0xf]
        %v8837 = vld [vmem:[#allocation6 + $0x224] sm:$0xf]
        %v8838 = vld [vmem:[#allocation6 + $0x228] sm:$0xf]
        %v8839 = vld [vmem:[#allocation6 + $0x22c] sm:$0xf]
        %v8840 = vld [vmem:[#allocation6 + $0x230] sm:$0xf]
        %v8841 = vld [vmem:[#allocation6 + $0x234] sm:$0xf]
        %v8842 = vld [vmem:[#allocation6 + $0x238] sm:$0xf]
        %v8843 = vld [vmem:[#allocation6 + $0x23c] sm:$0xf]
        %v8844 = vld [vmem:[#allocation6 + $0x240] sm:$0xf]
        %v8845 = vld [vmem:[#allocation6 + $0x244] sm:$0xf]
        %v8846 = vld [vmem:[#allocation6 + $0x248] sm:$0xf]
        %v8847 = vld [vmem:[#allocation6 + $0x24c] sm:$0xf]
        %v8848 = vld [vmem:[#allocation6 + $0x250] sm:$0xf]
        %v8849 = vld [vmem:[#allocation6 + $0x254] sm:$0xf]
        %v8850 = vld [vmem:[#allocation6 + $0x258] sm:$0xf]
        %v8851 = vld [vmem:[#allocation6 + $0x25c] sm:$0xf]
        %v8852 = vld [vmem:[#allocation6 + $0x260] sm:$0xf]
        %v8853 = vld [vmem:[#allocation6 + $0x264] sm:$0xf]
        %v8854 = vld [vmem:[#allocation6 + $0x268] sm:$0xf]
        %v8855 = vld [vmem:[#allocation6 + $0x26c] sm:$0xf]
        %v8856 = vld [vmem:[#allocation6 + $0x270] sm:$0xf]
        %v8857 = vld [vmem:[#allocation6 + $0x274] sm:$0xf]
        %v8858 = vld [vmem:[#allocation6 + $0x278] sm:$0xf]
        %v8859 = vld [vmem:[#allocation6 + $0x27c] sm:$0xf]
        %v8860 = vld [vmem:[#allocation7 + $0x13] sm:$0x1]
        %v8862 = vlaneseq
        %v8863 = vshrl.u32 %v8862, 7
        %v8864 = vsub.s32 0, %v8863
        %v8865 = vrot.slane %v8860, %v8864
        %v9027 = vunpack.c.l.b16 %v8700
        %v9028 = vunpack.c.l.b16 %v8701
        %v9029 = vunpack.c.l.b16 %v8702
        %v9030 = vunpack.c.l.b16 %v8703
        %v9031 = vunpack.c.l.b16 %v8704
        %v9032 = vunpack.c.l.b16 %v8705
        %v9033 = vunpack.c.l.b16 %v8706
        %v9034 = vunpack.c.l.b16 %v8707
        %v9035 = vunpack.c.l.b16 %v8708
        %v9036 = vunpack.c.l.b16 %v8709
        %v9037 = vunpack.c.l.b16 %v8710
        %v9038 = vunpack.c.l.b16 %v8711
        %v9039 = vunpack.c.l.b16 %v8712
        %v9040 = vunpack.c.l.b16 %v8713
        %v9041 = vunpack.c.l.b16 %v8714
        %v9042 = vunpack.c.l.b16 %v8715
        %v9043 = vunpack.c.l.b16 %v8716
        %v9044 = vunpack.c.l.b16 %v8717
        %v9045 = vunpack.c.l.b16 %v8718
        %v9046 = vunpack.c.l.b16 %v8719
        %v9047 = vunpack.c.l.b16 %v8720
        %v9048 = vunpack.c.l.b16 %v8721
        %v9049 = vunpack.c.l.b16 %v8722
        %v9050 = vunpack.c.l.b16 %v8723
        %v9051 = vunpack.c.l.b16 %v8724
        %v9052 = vunpack.c.l.b16 %v8725
        %v9053 = vunpack.c.l.b16 %v8726
        %v9054 = vunpack.c.l.b16 %v8727
        %v9055 = vunpack.c.l.b16 %v8728
        %v9056 = vunpack.c.l.b16 %v8729
        %v9057 = vunpack.c.l.b16 %v8730
        %v9058 = vunpack.c.l.b16 %v8731
        %v9059 = vunpack.c.l.b16 %v8732
        %v9060 = vunpack.c.l.b16 %v8733
        %v9061 = vunpack.c.l.b16 %v8734
        %v9062 = vunpack.c.l.b16 %v8735
        %v9063 = vunpack.c.l.b16 %v8736
        %v9064 = vunpack.c.l.b16 %v8737
        %v9065 = vunpack.c.l.b16 %v8738
        %v9066 = vunpack.c.l.b16 %v8739
        %v9067 = vunpack.c.l.b16 %v8740
        %v9068 = vunpack.c.l.b16 %v8741
        %v9069 = vunpack.c.l.b16 %v8742
        %v9070 = vunpack.c.l.b16 %v8743
        %v9071 = vunpack.c.l.b16 %v8744
        %v9072 = vunpack.c.l.b16 %v8745
        %v9073 = vunpack.c.l.b16 %v8746
        %v9074 = vunpack.c.l.b16 %v8747
        %v9075 = vunpack.c.l.b16 %v8748
        %v9076 = vunpack.c.l.b16 %v8749
        %v9077 = vunpack.c.l.b16 %v8750
        %v9078 = vunpack.c.l.b16 %v8751
        %v9079 = vunpack.c.l.b16 %v8752
        %v9080 = vunpack.c.l.b16 %v8753
        %v9081 = vunpack.c.l.b16 %v8754
        %v9082 = vunpack.c.l.b16 %v8755
        %v9083 = vunpack.c.l.b16 %v8756
        %v9084 = vunpack.c.l.b16 %v8757
        %v9085 = vunpack.c.l.b16 %v8758
        %v9086 = vunpack.c.l.b16 %v8759
        %v9087 = vunpack.c.l.b16 %v8760
        %v9088 = vunpack.c.l.b16 %v8761
        %v9089 = vunpack.c.l.b16 %v8762
        %v9090 = vunpack.c.l.b16 %v8763
        %v9091 = vunpack.c.l.b16 %v8764
        %v9092 = vunpack.c.l.b16 %v8765
        %v9093 = vunpack.c.l.b16 %v8766
        %v9094 = vunpack.c.l.b16 %v8767
        %v9095 = vunpack.c.l.b16 %v8768
        %v9096 = vunpack.c.l.b16 %v8769
        %v9097 = vunpack.c.l.b16 %v8770
        %v9098 = vunpack.c.l.b16 %v8771
        %v9099 = vunpack.c.l.b16 %v8772
        %v9100 = vunpack.c.l.b16 %v8773
        %v9101 = vunpack.c.l.b16 %v8774
        %v9102 = vunpack.c.l.b16 %v8775
        %v9103 = vunpack.c.l.b16 %v8776
        %v9104 = vunpack.c.l.b16 %v8777
        %v9105 = vunpack.c.l.b16 %v8778
        %v9106 = vunpack.c.l.b16 %v8779
        %v9107 = vunpack.c.l.b16 %v8780
        %v9108 = vunpack.c.l.b16 %v8781
        %v9109 = vunpack.c.l.b16 %v8782
        %v9110 = vunpack.c.l.b16 %v8783
        %v9111 = vunpack.c.l.b16 %v8784
        %v9112 = vunpack.c.l.b16 %v8785
        %v9113 = vunpack.c.l.b16 %v8786
        %v9114 = vunpack.c.l.b16 %v8787
        %v9115 = vunpack.c.l.b16 %v8788
        %v9116 = vunpack.c.l.b16 %v8789
        %v9117 = vunpack.c.l.b16 %v8790
        %v9118 = vunpack.c.l.b16 %v8791
        %v9119 = vunpack.c.l.b16 %v8792
        %v9120 = vunpack.c.l.b16 %v8793
        %v9121 = vunpack.c.l.b16 %v8794
        %v9122 = vunpack.c.l.b16 %v8795
        %v9123 = vunpack.c.l.b16 %v8796
        %v9124 = vunpack.c.l.b16 %v8797
        %v9125 = vunpack.c.l.b16 %v8798
        %v9126 = vunpack.c.l.b16 %v8799
        %v9127 = vunpack.c.l.b16 %v8800
        %v9128 = vunpack.c.l.b16 %v8801
        %v9129 = vunpack.c.l.b16 %v8802
        %v9130 = vunpack.c.l.b16 %v8803
        %v9131 = vunpack.c.l.b16 %v8804
        %v9132 = vunpack.c.l.b16 %v8805
        %v9133 = vunpack.c.l.b16 %v8806
        %v9134 = vunpack.c.l.b16 %v8807
        %v9135 = vunpack.c.l.b16 %v8808
        %v9136 = vunpack.c.l.b16 %v8809
        %v9137 = vunpack.c.l.b16 %v8810
        %v9138 = vunpack.c.l.b16 %v8811
        %v9139 = vunpack.c.l.b16 %v8812
        %v9140 = vunpack.c.l.b16 %v8813
        %v9141 = vunpack.c.l.b16 %v8814
        %v9142 = vunpack.c.l.b16 %v8815
        %v9143 = vunpack.c.l.b16 %v8816
        %v9144 = vunpack.c.l.b16 %v8817
        %v9145 = vunpack.c.l.b16 %v8818
        %v9146 = vunpack.c.l.b16 %v8819
        %v9147 = vunpack.c.l.b16 %v8820
        %v9148 = vunpack.c.l.b16 %v8821
        %v9149 = vunpack.c.l.b16 %v8822
        %v9150 = vunpack.c.l.b16 %v8823
        %v9151 = vunpack.c.l.b16 %v8824
        %v9152 = vunpack.c.l.b16 %v8825
        %v9153 = vunpack.c.l.b16 %v8826
        %v9154 = vunpack.c.l.b16 %v8827
        %v9155 = vunpack.c.l.b16 %v8828
        %v9156 = vunpack.c.l.b16 %v8829
        %v9157 = vunpack.c.l.b16 %v8830
        %v9158 = vunpack.c.l.b16 %v8831
        %v9159 = vunpack.c.l.b16 %v8832
        %v9160 = vunpack.c.l.b16 %v8833
        %v9161 = vunpack.c.l.b16 %v8834
        %v9162 = vunpack.c.l.b16 %v8835
        %v9163 = vunpack.c.l.b16 %v8836
        %v9164 = vunpack.c.l.b16 %v8837
        %v9165 = vunpack.c.l.b16 %v8838
        %v9166 = vunpack.c.l.b16 %v8839
        %v9167 = vunpack.c.l.b16 %v8840
        %v9168 = vunpack.c.l.b16 %v8841
        %v9169 = vunpack.c.l.b16 %v8842
        %v9170 = vunpack.c.l.b16 %v8843
        %v9171 = vunpack.c.l.b16 %v8844
        %v9172 = vunpack.c.l.b16 %v8845
        %v9173 = vunpack.c.l.b16 %v8846
        %v9174 = vunpack.c.l.b16 %v8847
        %v9175 = vunpack.c.l.b16 %v8848
        %v9176 = vunpack.c.l.b16 %v8849
        %v9177 = vunpack.c.l.b16 %v8850
        %v9178 = vunpack.c.l.b16 %v8851
        %v9179 = vunpack.c.l.b16 %v8852
        %v9180 = vunpack.c.l.b16 %v8853
        %v9181 = vunpack.c.l.b16 %v8854
        %v9182 = vunpack.c.l.b16 %v8855
        %v9183 = vunpack.c.l.b16 %v8856
        %v9184 = vunpack.c.l.b16 %v8857
        %v9185 = vunpack.c.l.b16 %v8858
        %v9186 = vunpack.c.l.b16 %v8859
        %v9187 = vpack.c.b16 %v9028, %v9027
        %v9188 = vpack.c.b16 %v9030, %v9029
        %v9189 = vpack.c.b16 %v9032, %v9031
        %v9190 = vpack.c.b16 %v9034, %v9033
        %v9191 = vpack.c.b16 %v9036, %v9035
        %v9192 = vpack.c.b16 %v9038, %v9037
        %v9193 = vpack.c.b16 %v9040, %v9039
        %v9194 = vpack.c.b16 %v9042, %v9041
        %v9195 = vpack.c.b16 %v9044, %v9043
        %v9196 = vpack.c.b16 %v9046, %v9045
        %v9197 = vpack.c.b16 %v9048, %v9047
        %v9198 = vpack.c.b16 %v9050, %v9049
        %v9199 = vpack.c.b16 %v9052, %v9051
        %v9200 = vpack.c.b16 %v9054, %v9053
        %v9201 = vpack.c.b16 %v9056, %v9055
        %v9202 = vpack.c.b16 %v9058, %v9057
        %v9203 = vpack.c.b16 %v9060, %v9059
        %v9204 = vpack.c.b16 %v9062, %v9061
        %v9205 = vpack.c.b16 %v9064, %v9063
        %v9206 = vpack.c.b16 %v9066, %v9065
        %v9207 = vpack.c.b16 %v9068, %v9067
        %v9208 = vpack.c.b16 %v9070, %v9069
        %v9209 = vpack.c.b16 %v9072, %v9071
        %v9210 = vpack.c.b16 %v9074, %v9073
        %v9211 = vpack.c.b16 %v9076, %v9075
        %v9212 = vpack.c.b16 %v9078, %v9077
        %v9213 = vpack.c.b16 %v9080, %v9079
        %v9214 = vpack.c.b16 %v9082, %v9081
        %v9215 = vpack.c.b16 %v9084, %v9083
        %v9216 = vpack.c.b16 %v9086, %v9085
        %v9217 = vpack.c.b16 %v9088, %v9087
        %v9218 = vpack.c.b16 %v9090, %v9089
        %v9219 = vpack.c.b16 %v9092, %v9091
        %v9220 = vpack.c.b16 %v9094, %v9093
        %v9221 = vpack.c.b16 %v9096, %v9095
        %v9222 = vpack.c.b16 %v9098, %v9097
        %v9223 = vpack.c.b16 %v9100, %v9099
        %v9224 = vpack.c.b16 %v9102, %v9101
        %v9225 = vpack.c.b16 %v9104, %v9103
        %v9226 = vpack.c.b16 %v9106, %v9105
        %v9227 = vpack.c.b16 %v9108, %v9107
        %v9228 = vpack.c.b16 %v9110, %v9109
        %v9229 = vpack.c.b16 %v9112, %v9111
        %v9230 = vpack.c.b16 %v9114, %v9113
        %v9231 = vpack.c.b16 %v9116, %v9115
        %v9232 = vpack.c.b16 %v9118, %v9117
        %v9233 = vpack.c.b16 %v9120, %v9119
        %v9234 = vpack.c.b16 %v9122, %v9121
        %v9235 = vpack.c.b16 %v9124, %v9123
        %v9236 = vpack.c.b16 %v9126, %v9125
        %v9237 = vpack.c.b16 %v9128, %v9127
        %v9238 = vpack.c.b16 %v9130, %v9129
        %v9239 = vpack.c.b16 %v9132, %v9131
        %v9240 = vpack.c.b16 %v9134, %v9133
        %v9241 = vpack.c.b16 %v9136, %v9135
        %v9242 = vpack.c.b16 %v9138, %v9137
        %v9243 = vpack.c.b16 %v9140, %v9139
        %v9244 = vpack.c.b16 %v9142, %v9141
        %v9245 = vpack.c.b16 %v9144, %v9143
        %v9246 = vpack.c.b16 %v9146, %v9145
        %v9247 = vpack.c.b16 %v9148, %v9147
        %v9248 = vpack.c.b16 %v9150, %v9149
        %v9249 = vpack.c.b16 %v9152, %v9151
        %v9250 = vpack.c.b16 %v9154, %v9153
        %v9251 = vpack.c.b16 %v9156, %v9155
        %v9252 = vpack.c.b16 %v9158, %v9157
        %v9253 = vpack.c.b16 %v9160, %v9159
        %v9254 = vpack.c.b16 %v9162, %v9161
        %v9255 = vpack.c.b16 %v9164, %v9163
        %v9256 = vpack.c.b16 %v9166, %v9165
        %v9257 = vpack.c.b16 %v9168, %v9167
        %v9258 = vpack.c.b16 %v9170, %v9169
        %v9259 = vpack.c.b16 %v9172, %v9171
        %v9260 = vpack.c.b16 %v9174, %v9173
        %v9261 = vpack.c.b16 %v9176, %v9175
        %v9262 = vpack.c.b16 %v9178, %v9177
        %v9263 = vpack.c.b16 %v9180, %v9179
        %v9264 = vpack.c.b16 %v9182, %v9181
        %v9265 = vpack.c.b16 %v9184, %v9183
        %v9266 = vpack.c.b16 %v9186, %v9185
        %9347 = vmatprep.subr.bf16.mxu0 0
        %9348 = vmatpush1.bf16.msra.mxu0 %v9187
        %9349 = vmatprep.subr.bf16.mxu0 0
        %9350 = vmatpush1.bf16.msra.mxu0 %v9188
        %9351 = vmatprep.subr.bf16.mxu0 0
        %9352 = vmatpush1.bf16.msra.mxu0 %v9189
        %9353 = vmatprep.subr.bf16.mxu0 0
        %9354 = vmatpush1.bf16.msra.mxu0 %v9190
        %9355 = vmatprep.subr.bf16.mxu0 0
        %9356 = vmatpush1.bf16.msra.mxu0 %v9191
        %9357 = vmatprep.subr.bf16.mxu0 0
        %9358 = vmatpush1.bf16.msra.mxu0 %v9192
        %9359 = vmatprep.subr.bf16.mxu0 0
        %9360 = vmatpush1.bf16.msra.mxu0 %v9193
        %9361 = vmatprep.subr.bf16.mxu0 0
        %9362 = vmatpush1.bf16.msra.mxu0 %v9194
        %9363 = vmatprep.subr.bf16.mxu0 0
        %9364 = vmatpush1.bf16.msra.mxu0 %v9195
        %9365 = vmatprep.subr.bf16.mxu0 0
        %9366 = vmatpush1.bf16.msra.mxu0 %v9196
        %9367 = vmatprep.subr.bf16.mxu0 0
        %9368 = vmatpush1.bf16.msra.mxu0 %v9197
        %9369 = vmatprep.subr.bf16.mxu0 0
        %9370 = vmatpush1.bf16.msra.mxu0 %v9198
        %9371 = vmatprep.subr.bf16.mxu0 0
        %9372 = vmatpush1.bf16.msra.mxu0 %v9199
        %9373 = vmatprep.subr.bf16.mxu0 0
        %9374 = vmatpush1.bf16.msra.mxu0 %v9200
        %9375 = vmatprep.subr.bf16.mxu0 0
        %9376 = vmatpush1.bf16.msra.mxu0 %v9201
        %9377 = vmatprep.subr.bf16.mxu0 0
        %9378 = vmatpush1.bf16.msra.mxu0 %v9202
        %9379 = vmatprep.mubr.bf16.mxu0 %v8621
        %9380 = vmatmul.mubr.bf16.gmra.mrb[0].mxu0 %v8620
        %v9381 = vpop.f32.mrb[0].mxu0
        %v9382 = vadd.f32 %v8865, %v9381
        %v9383 = vpop.f32.mrb[0].mxu0
        %v9384 = vpop.f32.mrb[0].mxu0
        %v9385 = vadd.f32 %v8865, %v9384
        %v9386 = vpop.f32.mrb[0].mxu0
        %9387 = vmatprep.mubr.bf16.mxu0 %v8631
        %9388 = vmatmul.mubr.bf16.gmra.mrb[0].mxu0 %v8630
        %v9389 = vpop.f32.mrb[0].mxu0
        %v9390 = vadd.f32 %v8865, %v9389
        %v9391 = vpop.f32.mrb[0].mxu0
        %v9392 = vpop.f32.mrb[0].mxu0
        %v9393 = vadd.f32 %v8865, %v9392
        %v9394 = vpop.f32.mrb[0].mxu0
        %9395 = vmatprep.mubr.bf16.mxu0 %v8641
        %9396 = vmatmul.mubr.bf16.gmra.mrb[0].mxu0 %v8640
        %v9397 = vpop.f32.mrb[0].mxu0
        %v9398 = vadd.f32 %v8865, %v9397
        %v9399 = vpop.f32.mrb[0].mxu0
        %v9400 = vpop.f32.mrb[0].mxu0
        %v9401 = vadd.f32 %v8865, %v9400
        %v9402 = vpop.f32.mrb[0].mxu0
        %9403 = vmatprep.mubr.bf16.mxu0 %v8651
        %9404 = vmatmul.mubr.bf16.gmra.mrb[0].mxu0 %v8650
        %v9405 = vpop.f32.mrb[0].mxu0
        %v9406 = vadd.f32 %v8865, %v9405
        %v9407 = vpop.f32.mrb[0].mxu0
        %v9408 = vpop.f32.mrb[0].mxu0
        %v9409 = vadd.f32 %v8865, %v9408
        %v9410 = vpop.f32.mrb[0].mxu0
        %9411 = vmatprep.mubr.bf16.mxu0 %v8661
        %9412 = vmatmul.mubr.bf16.gmra.mrb[0].mxu0 %v8660
        %v9413 = vpop.f32.mrb[0].mxu0
        %v9414 = vadd.f32 %v8865, %v9413
        %v9415 = vpop.f32.mrb[0].mxu0
        %v9416 = vpop.f32.mrb[0].mxu0
        %v9417 = vadd.f32 %v8865, %v9416
        %v9418 = vpop.f32.mrb[0].mxu0
        %9419 = vmatprep.mubr.bf16.mxu0 %v8671
        %9420 = vmatmul.mubr.bf16.gmra.mrb[0].mxu0 %v8670
        %v9421 = vpop.f32.mrb[0].mxu0
        %v9422 = vadd.f32 %v8865, %v9421
        %v9423 = vpop.f32.mrb[0].mxu0
        %v9424 = vpop.f32.mrb[0].mxu0
        %v9425 = vadd.f32 %v8865, %v9424
        %v9426 = vpop.f32.mrb[0].mxu0
        %9427 = vmatprep.mubr.bf16.mxu0 %v8681
        %9428 = vmatmul.mubr.bf16.gmra.mrb[0].mxu0 %v8680
        %v9429 = vpop.f32.mrb[0].mxu0
        %v9430 = vadd.f32 %v8865, %v9429
        %v9431 = vpop.f32.mrb[0].mxu0
        %v9432 = vpop.f32.mrb[0].mxu0
        %v9433 = vadd.f32 %v8865, %v9432
        %v9434 = vpop.f32.mrb[0].mxu0
        %9435 = vmatprep.mubr.bf16.mxu0 %v8691
        %9436 = vmatmul.mubr.bf16.gmra.mrb[0].mxu0 %v8690
        %v9437 = vpop.f32.mrb[0].mxu0
        %v9438 = vadd.f32 %v8865, %v9437
        %v9439 = vpop.f32.mrb[0].mxu0
        %v9440 = vpop.f32.mrb[0].mxu0
        %v9441 = vadd.f32 %v8865, %v9440
        %v9442 = vpop.f32.mrb[0].mxu0
        %9443 = vdwg.mxu0
        %9444 = vmatprep.subr.bf16.mxu0 0
        %9445 = vmatpush1.bf16.msra.mxu0 %v9203
        %9446 = vmatprep.subr.bf16.mxu0 0
        %9447 = vmatpush1.bf16.msra.mxu0 %v9204
        %9448 = vmatprep.subr.bf16.mxu0 0
        %9449 = vmatpush1.bf16.msra.mxu0 %v9205
        %9450 = vmatprep.subr.bf16.mxu0 0
        %9451 = vmatpush1.bf16.msra.mxu0 %v9206
        %9452 = vmatprep.subr.bf16.mxu0 0
        %9453 = vmatpush1.bf16.msra.mxu0 %v9207
        %9454 = vmatprep.subr.bf16.mxu0 0
        %9455 = vmatpush1.bf16.msra.mxu0 %v9208
        %9456 = vmatprep.subr.bf16.mxu0 0
        %9457 = vmatpush1.bf16.msra.mxu0 %v9209
        %9458 = vmatprep.subr.bf16.mxu0 0
        %9459 = vmatpush1.bf16.msra.mxu0 %v9210
        %9460 = vmatprep.subr.bf16.mxu0 0
        %9461 = vmatpush1.bf16.msra.mxu0 %v9211
        %9462 = vmatprep.subr.bf16.mxu0 0
        %9463 = vmatpush1.bf16.msra.mxu0 %v9212
        %9464 = vmatprep.subr.bf16.mxu0 0
        %9465 = vmatpush1.bf16.msra.mxu0 %v9213
        %9466 = vmatprep.subr.bf16.mxu0 0
        %9467 = vmatpush1.bf16.msra.mxu0 %v9214
        %9468 = vmatprep.subr.bf16.mxu0 0
        %9469 = vmatpush1.bf16.msra.mxu0 %v9215
        %9470 = vmatprep.subr.bf16.mxu0 0
        %9471 = vmatpush1.bf16.msra.mxu0 %v9216
        %9472 = vmatprep.subr.bf16.mxu0 0
        %9473 = vmatpush1.bf16.msra.mxu0 %v9217
        %9474 = vmatprep.subr.bf16.mxu0 0
        %9475 = vmatpush1.bf16.msra.mxu0 %v9218
        %9476 = vmatprep.mubr.bf16.mxu0 %v8623
        %9477 = vmatmul.mubr.bf16.gmra.mrb[0].mxu0 %v8622
        %v9478 = vpop.f32.mrb[0].mxu0
        %v9479 = vadd.f32 %v9382, %v9478
        %v9480 = vpop.f32.mrb[0].mxu0
        %v9481 = vpop.f32.mrb[0].mxu0
        %v9482 = vadd.f32 %v9385, %v9481
        %v9483 = vpop.f32.mrb[0].mxu0
        %9484 = vmatprep.mubr.bf16.mxu0 %v8633
        %9485 = vmatmul.mubr.bf16.gmra.mrb[0].mxu0 %v8632
        %v9486 = vpop.f32.mrb[0].mxu0
        %v9487 = vadd.f32 %v9390, %v9486
        %v9488 = vpop.f32.mrb[0].mxu0
        %v9489 = vpop.f32.mrb[0].mxu0
        %v9490 = vadd.f32 %v9393, %v9489
        %v9491 = vpop.f32.mrb[0].mxu0
        %9492 = vmatprep.mubr.bf16.mxu0 %v8643
        %9493 = vmatmul.mubr.bf16.gmra.mrb[0].mxu0 %v8642
        %v9494 = vpop.f32.mrb[0].mxu0
        %v9495 = vadd.f32 %v9398, %v9494
        %v9496 = vpop.f32.mrb[0].mxu0
        %v9497 = vpop.f32.mrb[0].mxu0
        %v9498 = vadd.f32 %v9401, %v9497
        %v9499 = vpop.f32.mrb[0].mxu0
        %9500 = vmatprep.mubr.bf16.mxu0 %v8653
        %9501 = vmatmul.mubr.bf16.gmra.mrb[0].mxu0 %v8652
        %v9502 = vpop.f32.mrb[0].mxu0
        %v9503 = vadd.f32 %v9406, %v9502
        %v9504 = vpop.f32.mrb[0].mxu0
        %v9505 = vpop.f32.mrb[0].mxu0
        %v9506 = vadd.f32 %v9409, %v9505
        %v9507 = vpop.f32.mrb[0].mxu0
        %9508 = vmatprep.mubr.bf16.mxu0 %v8663
        %9509 = vmatmul.mubr.bf16.gmra.mrb[0].mxu0 %v8662
        %v9510 = vpop.f32.mrb[0].mxu0
        %v9511 = vadd.f32 %v9414, %v9510
        %v9512 = vpop.f32.mrb[0].mxu0
        %v9513 = vpop.f32.mrb[0].mxu0
        %v9514 = vadd.f32 %v9417, %v9513
        %v9515 = vpop.f32.mrb[0].mxu0
        %9516 = vmatprep.mubr.bf16.mxu0 %v8673
        %9517 = vmatmul.mubr.bf16.gmra.mrb[0].mxu0 %v8672
        %v9518 = vpop.f32.mrb[0].mxu0
        %v9519 = vadd.f32 %v9422, %v9518
        %v9520 = vpop.f32.mrb[0].mxu0
        %v9521 = vpop.f32.mrb[0].mxu0
        %v9522 = vadd.f32 %v9425, %v9521
        %v9523 = vpop.f32.mrb[0].mxu0
        %9524 = vmatprep.mubr.bf16.mxu0 %v8683
        %9525 = vmatmul.mubr.bf16.gmra.mrb[0].mxu0 %v8682
        %v9526 = vpop.f32.mrb[0].mxu0
        %v9527 = vadd.f32 %v9430, %v9526
        %v9528 = vpop.f32.mrb[0].mxu0
        %v9529 = vpop.f32.mrb[0].mxu0
        %v9530 = vadd.f32 %v9433, %v9529
        %v9531 = vpop.f32.mrb[0].mxu0
        %9532 = vmatprep.mubr.bf16.mxu0 %v8693
        %9533 = vmatmul.mubr.bf16.gmra.mrb[0].mxu0 %v8692
        %v9534 = vpop.f32.mrb[0].mxu0
        %v9535 = vadd.f32 %v9438, %v9534
        %v9536 = vpop.f32.mrb[0].mxu0
        %v9537 = vpop.f32.mrb[0].mxu0
        %v9538 = vadd.f32 %v9441, %v9537
        %v9539 = vpop.f32.mrb[0].mxu0
        %9540 = vdwg.mxu0
        %9541 = vmatprep.subr.bf16.mxu0 0
        %9542 = vmatpush1.bf16.msra.mxu0 %v9219
        %9543 = vmatprep.subr.bf16.mxu0 0
        %9544 = vmatpush1.bf16.msra.mxu0 %v9220
        %9545 = vmatprep.subr.bf16.mxu0 0
        %9546 = vmatpush1.bf16.msra.mxu0 %v9221
        %9547 = vmatprep.subr.bf16.mxu0 0
        %9548 = vmatpush1.bf16.msra.mxu0 %v9222
        %9549 = vmatprep.subr.bf16.mxu0 0
        %9550 = vmatpush1.bf16.msra.mxu0 %v9223
        %9551 = vmatprep.subr.bf16.mxu0 0
        %9552 = vmatpush1.bf16.msra.mxu0 %v9224
        %9553 = vmatprep.subr.bf16.mxu0 0
        %9554 = vmatpush1.bf16.msra.mxu0 %v9225
        %9555 = vmatprep.subr.bf16.mxu0 0
        %9556 = vmatpush1.bf16.msra.mxu0 %v9226
        %9557 = vmatprep.subr.bf16.mxu0 0
        %9558 = vmatpush1.bf16.msra.mxu0 %v9227
        %9559 = vmatprep.subr.bf16.mxu0 0
        %9560 = vmatpush1.bf16.msra.mxu0 %v9228
        %9561 = vmatprep.subr.bf16.mxu0 0
        %9562 = vmatpush1.bf16.msra.mxu0 %v9229
        %9563 = vmatprep.subr.bf16.mxu0 0
        %9564 = vmatpush1.bf16.msra.mxu0 %v9230
        %9565 = vmatprep.subr.bf16.mxu0 0
        %9566 = vmatpush1.bf16.msra.mxu0 %v9231
        %9567 = vmatprep.subr.bf16.mxu0 0
        %9568 = vmatpush1.bf16.msra.mxu0 %v9232
        %9569 = vmatprep.subr.bf16.mxu0 0
        %9570 = vmatpush1.bf16.msra.mxu0 %v9233
        %9571 = vmatprep.subr.bf16.mxu0 0
        %9572 = vmatpush1.bf16.msra.mxu0 %v9234
        %9573 = vmatprep.mubr.bf16.mxu0 %v8625
        %9574 = vmatmul.mubr.bf16.gmra.mrb[0].mxu0 %v8624
        %v9575 = vpop.f32.mrb[0].mxu0
        %v9576 = vadd.f32 %v9479, %v9575
        %v9577 = vpop.f32.mrb[0].mxu0
        %v9578 = vpop.f32.mrb[0].mxu0
        %v9579 = vadd.f32 %v9482, %v9578
        %v9580 = vpop.f32.mrb[0].mxu0
        %9581 = vmatprep.mubr.bf16.mxu0 %v8635
        %9582 = vmatmul.mubr.bf16.gmra.mrb[0].mxu0 %v8634
        %v9583 = vpop.f32.mrb[0].mxu0
        %v9584 = vadd.f32 %v9487, %v9583
        %v9585 = vpop.f32.mrb[0].mxu0
        %v9586 = vpop.f32.mrb[0].mxu0
        %v9587 = vadd.f32 %v9490, %v9586
        %v9588 = vpop.f32.mrb[0].mxu0
        %9589 = vmatprep.mubr.bf16.mxu0 %v8645
        %9590 = vmatmul.mubr.bf16.gmra.mrb[0].mxu0 %v8644
        %v9591 = vpop.f32.mrb[0].mxu0
        %v9592 = vadd.f32 %v9495, %v9591
        %v9593 = vpop.f32.mrb[0].mxu0
        %v9594 = vpop.f32.mrb[0].mxu0
        %v9595 = vadd.f32 %v9498, %v9594
        %v9596 = vpop.f32.mrb[0].mxu0
        %9597 = vmatprep.mubr.bf16.mxu0 %v8655
        %9598 = vmatmul.mubr.bf16.gmra.mrb[0].mxu0 %v8654
        %v9599 = vpop.f32.mrb[0].mxu0
        %v9600 = vadd.f32 %v9503, %v9599
        %v9601 = vpop.f32.mrb[0].mxu0
        %v9602 = vpop.f32.mrb[0].mxu0
        %v9603 = vadd.f32 %v9506, %v9602
        %v9604 = vpop.f32.mrb[0].mxu0
        %9605 = vmatprep.mubr.bf16.mxu0 %v8665
        %9606 = vmatmul.mubr.bf16.gmra.mrb[0].mxu0 %v8664
        %v9607 = vpop.f32.mrb[0].mxu0
        %v9608 = vadd.f32 %v9511, %v9607
        %v9609 = vpop.f32.mrb[0].mxu0
        %v9610 = vpop.f32.mrb[0].mxu0
        %v9611 = vadd.f32 %v9514, %v9610
        %v9612 = vpop.f32.mrb[0].mxu0
        %9613 = vmatprep.mubr.bf16.mxu0 %v8675
        %9614 = vmatmul.mubr.bf16.gmra.mrb[0].mxu0 %v8674
        %v9615 = vpop.f32.mrb[0].mxu0
        %v9616 = vadd.f32 %v9519, %v9615
        %v9617 = vpop.f32.mrb[0].mxu0
        %v9618 = vpop.f32.mrb[0].mxu0
        %v9619 = vadd.f32 %v9522, %v9618
        %v9620 = vpop.f32.mrb[0].mxu0
        %9621 = vmatprep.mubr.bf16.mxu0 %v8685
        %9622 = vmatmul.mubr.bf16.gmra.mrb[0].mxu0 %v8684
        %v9623 = vpop.f32.mrb[0].mxu0
        %v9624 = vadd.f32 %v9527, %v9623
        %v9625 = vpop.f32.mrb[0].mxu0
        %v9626 = vpop.f32.mrb[0].mxu0
        %v9627 = vadd.f32 %v9530, %v9626
        %v9628 = vpop.f32.mrb[0].mxu0
        %9629 = vmatprep.mubr.bf16.mxu0 %v8695
        %9630 = vmatmul.mubr.bf16.gmra.mrb[0].mxu0 %v8694
        %v9631 = vpop.f32.mrb[0].mxu0
        %v9632 = vadd.f32 %v9535, %v9631
        %v9633 = vpop.f32.mrb[0].mxu0
        %v9634 = vpop.f32.mrb[0].mxu0
        %v9635 = vadd.f32 %v9538, %v9634
        %v9636 = vpop.f32.mrb[0].mxu0
        %9637 = vdwg.mxu0
        %9638 = vmatprep.subr.bf16.mxu0 0
        %9639 = vmatpush1.bf16.msra.mxu0 %v9235
        %9640 = vmatprep.subr.bf16.mxu0 0
        %9641 = vmatpush1.bf16.msra.mxu0 %v9236
        %9642 = vmatprep.subr.bf16.mxu0 0
        %9643 = vmatpush1.bf16.msra.mxu0 %v9237
        %9644 = vmatprep.subr.bf16.mxu0 0
        %9645 = vmatpush1.bf16.msra.mxu0 %v9238
        %9646 = vmatprep.subr.bf16.mxu0 0
        %9647 = vmatpush1.bf16.msra.mxu0 %v9239
        %9648 = vmatprep.subr.bf16.mxu0 0
        %9649 = vmatpush1.bf16.msra.mxu0 %v9240
        %9650 = vmatprep.subr.bf16.mxu0 0
        %9651 = vmatpush1.bf16.msra.mxu0 %v9241
        %9652 = vmatprep.subr.bf16.mxu0 0
        %9653 = vmatpush1.bf16.msra.mxu0 %v9242
        %9654 = vmatprep.subr.bf16.mxu0 0
        %9655 = vmatpush1.bf16.msra.mxu0 %v9243
        %9656 = vmatprep.subr.bf16.mxu0 0
        %9657 = vmatpush1.bf16.msra.mxu0 %v9244
        %9658 = vmatprep.subr.bf16.mxu0 0
        %9659 = vmatpush1.bf16.msra.mxu0 %v9245
        %9660 = vmatprep.subr.bf16.mxu0 0
        %9661 = vmatpush1.bf16.msra.mxu0 %v9246
        %9662 = vmatprep.subr.bf16.mxu0 0
        %9663 = vmatpush1.bf16.msra.mxu0 %v9247
        %9664 = vmatprep.subr.bf16.mxu0 0
        %9665 = vmatpush1.bf16.msra.mxu0 %v9248
        %9666 = vmatprep.subr.bf16.mxu0 0
        %9667 = vmatpush1.bf16.msra.mxu0 %v9249
        %9668 = vmatprep.subr.bf16.mxu0 0
        %9669 = vmatpush1.bf16.msra.mxu0 %v9250
        %9670 = vmatprep.mubr.bf16.mxu0 %v8627
        %9671 = vmatmul.mubr.bf16.gmra.mrb[0].mxu0 %v8626
        %v9672 = vpop.f32.mrb[0].mxu0
        %v9673 = vadd.f32 %v9576, %v9672
        %v9674 = vpop.f32.mrb[0].mxu0
        %v9675 = vpop.f32.mrb[0].mxu0
        %v9676 = vadd.f32 %v9579, %v9675
        %v9677 = vpop.f32.mrb[0].mxu0
        %9678 = vmatprep.mubr.bf16.mxu0 %v8637
        %9679 = vmatmul.mubr.bf16.gmra.mrb[0].mxu0 %v8636
        %v9680 = vpop.f32.mrb[0].mxu0
        %v9681 = vadd.f32 %v9584, %v9680
        %v9682 = vpop.f32.mrb[0].mxu0
        %v9683 = vpop.f32.mrb[0].mxu0
        %v9684 = vadd.f32 %v9587, %v9683
        %v9685 = vpop.f32.mrb[0].mxu0
        %9686 = vmatprep.mubr.bf16.mxu0 %v8647
        %9687 = vmatmul.mubr.bf16.gmra.mrb[0].mxu0 %v8646
        %v9688 = vpop.f32.mrb[0].mxu0
        %v9689 = vadd.f32 %v9592, %v9688
        %v9690 = vpop.f32.mrb[0].mxu0
        %v9691 = vpop.f32.mrb[0].mxu0
        %v9692 = vadd.f32 %v9595, %v9691
        %v9693 = vpop.f32.mrb[0].mxu0
        %9694 = vmatprep.mubr.bf16.mxu0 %v8657
        %9695 = vmatmul.mubr.bf16.gmra.mrb[0].mxu0 %v8656
        %v9696 = vpop.f32.mrb[0].mxu0
        %v9697 = vadd.f32 %v9600, %v9696
        %v9698 = vpop.f32.mrb[0].mxu0
        %v9699 = vpop.f32.mrb[0].mxu0
        %v9700 = vadd.f32 %v9603, %v9699
        %v9701 = vpop.f32.mrb[0].mxu0
        %9702 = vmatprep.mubr.bf16.mxu0 %v8667
        %9703 = vmatmul.mubr.bf16.gmra.mrb[0].mxu0 %v8666
        %v9704 = vpop.f32.mrb[0].mxu0
        %v9705 = vadd.f32 %v9608, %v9704
        %v9706 = vpop.f32.mrb[0].mxu0
        %v9707 = vpop.f32.mrb[0].mxu0
        %v9708 = vadd.f32 %v9611, %v9707
        %v9709 = vpop.f32.mrb[0].mxu0
        %9710 = vmatprep.mubr.bf16.mxu0 %v8677
        %9711 = vmatmul.mubr.bf16.gmra.mrb[0].mxu0 %v8676
        %v9712 = vpop.f32.mrb[0].mxu0
        %v9713 = vadd.f32 %v9616, %v9712
        %v9714 = vpop.f32.mrb[0].mxu0
        %v9715 = vpop.f32.mrb[0].mxu0
        %v9716 = vadd.f32 %v9619, %v9715
        %v9717 = vpop.f32.mrb[0].mxu0
        %9718 = vmatprep.mubr.bf16.mxu0 %v8687
        %9719 = vmatmul.mubr.bf16.gmra.mrb[0].mxu0 %v8686
        %v9720 = vpop.f32.mrb[0].mxu0
        %v9721 = vadd.f32 %v9624, %v9720
        %v9722 = vpop.f32.mrb[0].mxu0
        %v9723 = vpop.f32.mrb[0].mxu0
        %v9724 = vadd.f32 %v9627, %v9723
        %v9725 = vpop.f32.mrb[0].mxu0
        %9726 = vmatprep.mubr.bf16.mxu0 %v8697
        %9727 = vmatmul.mubr.bf16.gmra.mrb[0].mxu0 %v8696
        %v9728 = vpop.f32.mrb[0].mxu0
        %v9729 = vadd.f32 %v9632, %v9728
        %v9730 = vpop.f32.mrb[0].mxu0
        %v9731 = vpop.f32.mrb[0].mxu0
        %v9732 = vadd.f32 %v9635, %v9731
        %v9733 = vpop.f32.mrb[0].mxu0
        %9734 = vdwg.mxu0
        %9735 = vmatprep.subr.bf16.mxu0 0
        %9736 = vmatpush1.bf16.msra.mxu0 %v9251
        %9737 = vmatprep.subr.bf16.mxu0 0
        %9738 = vmatpush1.bf16.msra.mxu0 %v9252
        %9739 = vmatprep.subr.bf16.mxu0 0
        %9740 = vmatpush1.bf16.msra.mxu0 %v9253
        %9741 = vmatprep.subr.bf16.mxu0 0
        %9742 = vmatpush1.bf16.msra.mxu0 %v9254
        %9743 = vmatprep.subr.bf16.mxu0 0
        %9744 = vmatpush1.bf16.msra.mxu0 %v9255
        %9745 = vmatprep.subr.bf16.mxu0 0
        %9746 = vmatpush1.bf16.msra.mxu0 %v9256
        %9747 = vmatprep.subr.bf16.mxu0 0
        %9748 = vmatpush1.bf16.msra.mxu0 %v9257
        %9749 = vmatprep.subr.bf16.mxu0 0
        %9750 = vmatpush1.bf16.msra.mxu0 %v9258
        %9751 = vmatprep.subr.bf16.mxu0 0
        %9752 = vmatpush1.bf16.msra.mxu0 %v9259
        %9753 = vmatprep.subr.bf16.mxu0 0
        %9754 = vmatpush1.bf16.msra.mxu0 %v9260
        %9755 = vmatprep.subr.bf16.mxu0 0
        %9756 = vmatpush1.bf16.msra.mxu0 %v9261
        %9757 = vmatprep.subr.bf16.mxu0 0
        %9758 = vmatpush1.bf16.msra.mxu0 %v9262
        %9759 = vmatprep.subr.bf16.mxu0 0
        %9760 = vmatpush1.bf16.msra.mxu0 %v9263
        %9761 = vmatprep.subr.bf16.mxu0 0
        %9762 = vmatpush1.bf16.msra.mxu0 %v9264
        %9763 = vmatprep.subr.bf16.mxu0 0
        %9764 = vmatpush1.bf16.msra.mxu0 %v9265
        %9765 = vmatprep.subr.bf16.mxu0 0
        %9766 = vmatpush1.bf16.msra.mxu0 %v9266
        %9767 = vmatprep.mubr.bf16.mxu0 %v8629
        %9768 = vmatmul.mubr.bf16.gmra.mrb[0].mxu0 %v8628
        %v9769 = vpop.f32.mrb[0].mxu0
        %v9770 = vadd.f32 %v9673, %v9769
        %v9771 = vpop.f32.mrb[0].mxu0
        %v9772 = vpop.f32.mrb[0].mxu0
        %v9773 = vadd.f32 %v9676, %v9772
        %v9774 = vpop.f32.mrb[0].mxu0
        %9775 = vmatprep.mubr.bf16.mxu0 %v8639
        %9776 = vmatmul.mubr.bf16.gmra.mrb[0].mxu0 %v8638
        %v9777 = vpop.f32.mrb[0].mxu0
        %v9778 = vadd.f32 %v9681, %v9777
        %v9779 = vpop.f32.mrb[0].mxu0
        %v9780 = vpop.f32.mrb[0].mxu0
        %v9781 = vadd.f32 %v9684, %v9780
        %v9782 = vpop.f32.mrb[0].mxu0
        %9783 = vmatprep.mubr.bf16.mxu0 %v8649
        %9784 = vmatmul.mubr.bf16.gmra.mrb[0].mxu0 %v8648
        %v9785 = vpop.f32.mrb[0].mxu0
        %v9786 = vadd.f32 %v9689, %v9785
        %v9787 = vpop.f32.mrb[0].mxu0
        %v9788 = vpop.f32.mrb[0].mxu0
        %v9789 = vadd.f32 %v9692, %v9788
        %v9790 = vpop.f32.mrb[0].mxu0
        %9791 = vmatprep.mubr.bf16.mxu0 %v8659
        %9792 = vmatmul.mubr.bf16.gmra.mrb[0].mxu0 %v8658
        %v9793 = vpop.f32.mrb[0].mxu0
        %v9794 = vadd.f32 %v9697, %v9793
        %v9795 = vpop.f32.mrb[0].mxu0
        %v9796 = vpop.f32.mrb[0].mxu0
        %v9797 = vadd.f32 %v9700, %v9796
        %v9798 = vpop.f32.mrb[0].mxu0
        %9799 = vmatprep.mubr.bf16.mxu0 %v8669
        %9800 = vmatmul.mubr.bf16.gmra.mrb[0].mxu0 %v8668
        %v9801 = vpop.f32.mrb[0].mxu0
        %v9802 = vadd.f32 %v9705, %v9801
        %v9803 = vpop.f32.mrb[0].mxu0
        %v9804 = vpop.f32.mrb[0].mxu0
        %v9805 = vadd.f32 %v9708, %v9804
        %v9806 = vpop.f32.mrb[0].mxu0
        %9807 = vmatprep.mubr.bf16.mxu0 %v8679
        %9808 = vmatmul.mubr.bf16.gmra.mrb[0].mxu0 %v8678
        %v9809 = vpop.f32.mrb[0].mxu0
        %v9810 = vadd.f32 %v9713, %v9809
        %v9811 = vpop.f32.mrb[0].mxu0
        %v9812 = vpop.f32.mrb[0].mxu0
        %v9813 = vadd.f32 %v9716, %v9812
        %v9814 = vpop.f32.mrb[0].mxu0
        %9815 = vmatprep.mubr.bf16.mxu0 %v8689
        %9816 = vmatmul.mubr.bf16.gmra.mrb[0].mxu0 %v8688
        %v9817 = vpop.f32.mrb[0].mxu0
        %v9818 = vadd.f32 %v9721, %v9817
        %v9819 = vpop.f32.mrb[0].mxu0
        %v9820 = vpop.f32.mrb[0].mxu0
        %v9821 = vadd.f32 %v9724, %v9820
        %v9822 = vpop.f32.mrb[0].mxu0
        %9823 = vmatprep.mubr.bf16.mxu0 %v8699
        %9824 = vmatmul.mubr.bf16.gmra.mrb[0].mxu0 %v8698
        %v9825 = vpop.f32.mrb[0].mxu0
        %v9826 = vadd.f32 %v9729, %v9825
        %v9827 = vpop.f32.mrb[0].mxu0
        %v9828 = vpop.f32.mrb[0].mxu0
        %v9829 = vadd.f32 %v9732, %v9828
        %v9830 = vpop.f32.mrb[0].mxu0
        %9831 = vdwg.mxu0
        %v9832 = vmax.f32 %v9770, 0.0
        %v9833 = vmax.f32 %v9773, 0.0
        %v9834 = vmax.f32 %v9778, 0.0
        %v9835 = vmax.f32 %v9781, 0.0
        %v9836 = vmax.f32 %v9786, 0.0
        %v9837 = vmax.f32 %v9789, 0.0
        %v9838 = vmax.f32 %v9794, 0.0
        %v9839 = vmax.f32 %v9797, 0.0
        %v9840 = vmax.f32 %v9802, 0.0
        %v9841 = vmax.f32 %v9805, 0.0
        %v9842 = vmax.f32 %v9810, 0.0
        %v9843 = vmax.f32 %v9813, 0.0
        %v9844 = vmax.f32 %v9818, 0.0
        %v9845 = vmax.f32 %v9821, 0.0
        %v9846 = vmax.f32 %v9826, 0.0
        %v9847 = vmax.f32 %v9829, 0.0
        %v9848 = vpack.c.bf16 %v9833, %v9832
        %v9849 = vpack.c.bf16 %v9835, %v9834
        %v9850 = vpack.c.bf16 %v9837, %v9836
        %v9851 = vpack.c.bf16 %v9839, %v9838
        %v9852 = vpack.c.bf16 %v9841, %v9840
        %v9853 = vpack.c.bf16 %v9843, %v9842
        %v9854 = vpack.c.bf16 %v9845, %v9844
        %v9855 = vpack.c.bf16 %v9847, %v9846
        %v9856 = vld [vmem:[#allocation6 + $0x280] sm:$0xf]
        %v9857 = vld [vmem:[#allocation6 + $0x284] sm:$0xf]
        %v9858 = vld [vmem:[#allocation6 + $0x288] sm:$0xf]
        %v9859 = vld [vmem:[#allocation6 + $0x28c] sm:$0xf]
        %v9860 = vld [vmem:[#allocation6 + $0x290] sm:$0xf]
        %v9861 = vld [vmem:[#allocation6 + $0x294] sm:$0xf]
        %v9862 = vld [vmem:[#allocation6 + $0x298] sm:$0xf]
        %v9863 = vld [vmem:[#allocation6 + $0x29c] sm:$0xf]
        %v9864 = vld [vmem:[#allocation6 + $0x2a0] sm:$0xf]
        %v9865 = vld [vmem:[#allocation6 + $0x2a4] sm:$0xf]
        %v9866 = vld [vmem:[#allocation6 + $0x2a8] sm:$0xf]
        %v9867 = vld [vmem:[#allocation6 + $0x2ac] sm:$0xf]
        %v9868 = vld [vmem:[#allocation6 + $0x2b0] sm:$0xf]
        %v9869 = vld [vmem:[#allocation6 + $0x2b4] sm:$0xf]
        %v9870 = vld [vmem:[#allocation6 + $0x2b8] sm:$0xf]
        %v9871 = vld [vmem:[#allocation6 + $0x2bc] sm:$0xf]
        %v9872 = vld [vmem:[#allocation7 + $0x14] sm:$0x1]
        %v9874 = vlaneseq
        %v9875 = vshrl.u32 %v9874, 7
        %v9876 = vsub.s32 0, %v9875
        %v9877 = vrot.slane %v9872, %v9876
        %v9895 = vunpack.c.l.b16 %v9856
        %v9896 = vunpack.c.l.b16 %v9857
        %v9897 = vunpack.c.l.b16 %v9858
        %v9898 = vunpack.c.l.b16 %v9859
        %v9899 = vunpack.c.l.b16 %v9860
        %v9900 = vunpack.c.l.b16 %v9861
        %v9901 = vunpack.c.l.b16 %v9862
        %v9902 = vunpack.c.l.b16 %v9863
        %v9903 = vunpack.c.l.b16 %v9864
        %v9904 = vunpack.c.l.b16 %v9865
        %v9905 = vunpack.c.l.b16 %v9866
        %v9906 = vunpack.c.l.b16 %v9867
        %v9907 = vunpack.c.l.b16 %v9868
        %v9908 = vunpack.c.l.b16 %v9869
        %v9909 = vunpack.c.l.b16 %v9870
        %v9910 = vunpack.c.l.b16 %v9871
        %v9911 = vpack.c.b16 %v9896, %v9895
        %v9912 = vpack.c.b16 %v9898, %v9897
        %v9913 = vpack.c.b16 %v9900, %v9899
        %v9914 = vpack.c.b16 %v9902, %v9901
        %v9915 = vpack.c.b16 %v9904, %v9903
        %v9916 = vpack.c.b16 %v9906, %v9905
        %v9917 = vpack.c.b16 %v9908, %v9907
        %v9918 = vpack.c.b16 %v9910, %v9909
        %9927 = vmatprep.subr.bf16.mxu0 0
        %9928 = vmatpush1.bf16.msra.mxu0 %v9911
        %9929 = vmatprep.subr.bf16.mxu0 0
        %9930 = vmatpush1.bf16.msra.mxu0 %v9912
        %9931 = vmatprep.subr.bf16.mxu0 0
        %9932 = vmatpush1.bf16.msra.mxu0 %v9913
        %9933 = vmatprep.subr.bf16.mxu0 0
        %9934 = vmatpush1.bf16.msra.mxu0 %v9914
        %9935 = vmatprep.subr.bf16.mxu0 0
        %9936 = vmatpush1.bf16.msra.mxu0 %v9915
        %9937 = vmatprep.subr.bf16.mxu0 0
        %9938 = vmatpush1.bf16.msra.mxu0 %v9916
        %9939 = vmatprep.subr.bf16.mxu0 0
        %9940 = vmatpush1.bf16.msra.mxu0 %v9917
        %9941 = vmatprep.subr.bf16.mxu0 0
        %9942 = vmatpush1.bf16.msra.mxu0 %v9918
        %9943 = vmatprep.subr.bf16.mxu0 0
        %9944 = vmatpush1.bf16.msra.mxu0 0
        %9945 = vmatprep.subr.bf16.mxu0 0
        %9946 = vmatpush1.bf16.msra.mxu0 0
        %9947 = vmatprep.subr.bf16.mxu0 0
        %9948 = vmatpush1.bf16.msra.mxu0 0
        %9949 = vmatprep.subr.bf16.mxu0 0
        %9950 = vmatpush1.bf16.msra.mxu0 0
        %9951 = vmatprep.subr.bf16.mxu0 0
        %9952 = vmatpush1.bf16.msra.mxu0 0
        %9953 = vmatprep.subr.bf16.mxu0 0
        %9954 = vmatpush1.bf16.msra.mxu0 0
        %9955 = vmatprep.subr.bf16.mxu0 0
        %9956 = vmatpush1.bf16.msra.mxu0 0
        %9957 = vmatprep.subr.bf16.mxu0 0
        %9958 = vmatpush1.bf16.msra.mxu0 0
        %9959 = vmatprep.mubr.bf16.mxu0 0
        %9960 = vmatmul.mubr.bf16.gmra.mrb[0].mxu0 %v9848
        %v9961 = vpop.f32.mrb[0].mxu0
        %v9962 = vadd.f32 %v9877, %v9961
        %v9963 = vpop.f32.mrb[0].mxu0
        %v9964 = vpop.f32.mrb[0].mxu0
        %v9965 = vadd.f32 %v9877, %v9964
        %v9966 = vpop.f32.mrb[0].mxu0
        %9967 = vmatprep.mubr.bf16.mxu0 0
        %9968 = vmatmul.mubr.bf16.gmra.mrb[0].mxu0 %v9849
        %v9969 = vpop.f32.mrb[0].mxu0
        %v9970 = vadd.f32 %v9877, %v9969
        %v9971 = vpop.f32.mrb[0].mxu0
        %v9972 = vpop.f32.mrb[0].mxu0
        %v9973 = vadd.f32 %v9877, %v9972
        %v9974 = vpop.f32.mrb[0].mxu0
        %9975 = vmatprep.mubr.bf16.mxu0 0
        %9976 = vmatmul.mubr.bf16.gmra.mrb[0].mxu0 %v9850
        %v9977 = vpop.f32.mrb[0].mxu0
        %v9978 = vadd.f32 %v9877, %v9977
        %v9979 = vpop.f32.mrb[0].mxu0
        %v9980 = vpop.f32.mrb[0].mxu0
        %v9981 = vadd.f32 %v9877, %v9980
        %v9982 = vpop.f32.mrb[0].mxu0
        %9983 = vmatprep.mubr.bf16.mxu0 0
        %9984 = vmatmul.mubr.bf16.gmra.mrb[0].mxu0 %v9851
        %v9985 = vpop.f32.mrb[0].mxu0
        %v9986 = vadd.f32 %v9877, %v9985
        %v9987 = vpop.f32.mrb[0].mxu0
        %v9988 = vpop.f32.mrb[0].mxu0
        %v9989 = vadd.f32 %v9877, %v9988
        %v9990 = vpop.f32.mrb[0].mxu0
        %9991 = vmatprep.mubr.bf16.mxu0 0
        %9992 = vmatmul.mubr.bf16.gmra.mrb[0].mxu0 %v9852
        %v9993 = vpop.f32.mrb[0].mxu0
        %v9994 = vadd.f32 %v9877, %v9993
        %v9995 = vpop.f32.mrb[0].mxu0
        %v9996 = vpop.f32.mrb[0].mxu0
        %v9997 = vadd.f32 %v9877, %v9996
        %v9998 = vpop.f32.mrb[0].mxu0
        %9999 = vmatprep.mubr.bf16.mxu0 0
        %10000 = vmatmul.mubr.bf16.gmra.mrb[0].mxu0 %v9853
        %v10001 = vpop.f32.mrb[0].mxu0
        %v10002 = vadd.f32 %v9877, %v10001
        %v10003 = vpop.f32.mrb[0].mxu0
        %v10004 = vpop.f32.mrb[0].mxu0
        %v10005 = vadd.f32 %v9877, %v10004
        %v10006 = vpop.f32.mrb[0].mxu0
        %10007 = vmatprep.mubr.bf16.mxu0 0
        %10008 = vmatmul.mubr.bf16.gmra.mrb[0].mxu0 %v9854
        %v10009 = vpop.f32.mrb[0].mxu0
        %v10010 = vadd.f32 %v9877, %v10009
        %v10011 = vpop.f32.mrb[0].mxu0
        %v10012 = vpop.f32.mrb[0].mxu0
        %v10013 = vadd.f32 %v9877, %v10012
        %v10014 = vpop.f32.mrb[0].mxu0
        %10015 = vmatprep.mubr.bf16.mxu0 0
        %10016 = vmatmul.mubr.bf16.gmra.mrb[0].mxu0 %v9855
        %v10017 = vpop.f32.mrb[0].mxu0
        %v10018 = vadd.f32 %v9877, %v10017
        %v10019 = vpop.f32.mrb[0].mxu0
        %v10020 = vpop.f32.mrb[0].mxu0
        %v10021 = vadd.f32 %v9877, %v10020
        %v10022 = vpop.f32.mrb[0].mxu0
        %10023 = vdwg.mxu0
        %10024 = vst [vmem:[%s283] sm:$0xff] %v9962
        %10025 = vst [vmem:[%s283 + $0x8] sm:$0xff] %v9965
        %10026 = vst [vmem:[%s283 + $0x10] sm:$0xff] %v9970
        %10027 = vst [vmem:[%s283 + $0x18] sm:$0xff] %v9973
        %10028 = vst [vmem:[%s283 + $0x20] sm:$0xff] %v9978
        %10029 = vst [vmem:[%s283 + $0x28] sm:$0xff] %v9981
        %10030 = vst [vmem:[%s283 + $0x30] sm:$0xff] %v9986
        %10031 = vst [vmem:[%s283 + $0x38] sm:$0xff] %v9989
        %10032 = vst [vmem:[%s283 + $0x40] sm:$0xff] %v9994
        %10033 = vst [vmem:[%s283 + $0x48] sm:$0xff] %v9997
        %10034 = vst [vmem:[%s283 + $0x50] sm:$0xff] %v10002
        %10035 = vst [vmem:[%s283 + $0x58] sm:$0xff] %v10005
        %10036 = vst [vmem:[%s283 + $0x60] sm:$0xff] %v10010
        %10037 = vst [vmem:[%s283 + $0x68] sm:$0xff] %v10013
        %10038 = vst [vmem:[%s283 + $0x70] sm:$0xff] %v10018
        %10039 = vst [vmem:[%s283 + $0x78] sm:$0xff] %v10021
        %s10040 = smul.u32 16, %s19
        %p10041 = scmp.lt.s32.totalorder %s10040, 31
        %s10042 = scalar_select %p10041, %s10040, 31
        %s10043 = smul.addr %s10042, 8
        %s10044 = scalar_lea.vmem %s5, %s10043
        // Predicated region
        $region57: #{cnn_forward.1} parent=39 // pred_check
          %p10045 = pneg %p147
        $region58: #{cnn_forward.1} parent=39 // pred_check_branch
          %10047 = sbr.rel (%p10045) target = $region60
        $region59: #{cnn_forward.1} parent=39 // pred_region
          %s10048 = smul.u32 16, %s19
        $region60: #{cnn_forward.1} parent=39 // pred_fallthru
          _
      $region40: #{cnn_forward.1} parent=5 // pred_fallthru
        _
      %p10049 = scmp.le.s32.totalorder 2, %s14
      // Predicated region
      $region61: #{cnn_forward.1} parent=5 // pred_check
        %p10050 = pneg %p10049
      $region62: #{cnn_forward.1} parent=5 // pred_check_branch
        %10052 = sbr.rel (%p10050) target = $region64
      $region63: #{cnn_forward.1} parent=5 // pred_region
        %s10053 = ssub.s32 %s14, 2
        // Predicated region
        $region65: #{cnn_forward.1} parent=63 // pred_check
          %p10054 = pneg %p153
        $region66: #{cnn_forward.1} parent=63 // pred_check_branch
          %10056 = sbr.rel (%p10054) target = $region68
        $region67: #{cnn_forward.1} parent=63 // pred_region
          %s10057 = smul.u32 16, %s20
          %p10058 = scmp.lt.s32.totalorder %s10057, 31
          %s10059 = scalar_select %p10058, %s10057, 31
          %s10060 = smul.addr %s10059, 8
          %s10061 = scalar_lea.vmem %s5, %s10060
        $region68: #{cnn_forward.1} parent=63 // pred_fallthru
          _
      $region64: #{cnn_forward.1} parent=5 // pred_fallthru
        _
    $region6: #{cnn_forward.1} parent=1 // loop_footer
      %s18 = sadd.s32 1, %s14
    $region7: #{cnn_forward.1} parent=1 // loop_footer_branch
      %13 = sbr.rel target = $region3
    $region8: #{cnn_forward.1} parent=1 // loop_exit
      _
    %10062 = vsyncpa [#allocation3], 1
    %s10063 = scalar_lea.sflag [#allocation3], 1
    %10064 = vsyncpa %s10063, 1
    %10065 = vsyncpa [#allocation5], 1
    %10066 = vsyncpa [#allocation8], 1

</llo_original>
